<compile_context>
chip_gen: v7x
topology: tpu7x:2x2x1
jax: 0.10.0
libtpu: 0.0.40
codegen_flags: <defaults>
</compile_context>

<pallas_src>
import functools
import math

import jax
import jax.numpy as jnp
from jax import lax
from jax.experimental import pallas as pl
from jax.experimental.pallas import tpu as pltpu

LN_EPS = 1e-12


def _layernorm(x, gamma, beta):
    mu = jnp.mean(x, axis=-1, keepdims=True)
    d = x - mu
    var = jnp.mean(d * d, axis=-1, keepdims=True)
    return gamma * d * lax.rsqrt(var + LN_EPS) + beta


def _softmax_rows(s):
    # TODO(synk): on v6e/v7x the single EUP unit can become the limiter for small dk;
    # bf16 exp would roughly double its throughput there (keep f32 exp on v5e).
    s = s - jnp.max(s, axis=-1, keepdims=True)
    e = jnp.exp(s)
    inv = pl.reciprocal(jnp.sum(e, axis=-1, keepdims=True), approx=True)  # EUP, off the VPU path
    return e * inv


def _attention(x_b, k3, v3, wq3, bq3, wo3, bo, residual, gamma, beta, *, want_probs):
    """Head-batched attention + output projection + residual + LayerNorm.

    x_b:  (Tq, D)      bf16  query-side activations
    k3:   (H, Lk, dk)  bf16  precomputed keys   (head-major)
    v3:   (H, Lk, dv)  bf16  precomputed values (head-major)
    wq3:  (H, D, dk)   bf16  query projection, head-major
    bq3:  (H, 1, dk)   f32
    wo3:  (H, dv, D)   bf16  output projection, head-major
    bo:   (1, D)       f32
    residual (Tq, D) / gamma, beta (1, D): f32
    """
    n_head, _, dk = wq3.shape
    tq, dm = x_b.shape

    # Head-batched Q projection: broadcast the query slab across heads. Same total MXU
    # flops as one (Tq,D)x(D,H*dk) matmul, but keeps everything head-major so no
    # in-kernel reshape/transpose (relayout) is needed.
    xb3 = jnp.broadcast_to(x_b[None], (n_head, tq, dm))
    q3 = jnp.einsum("hqd,hdc->hqc", xb3, wq3,
                    preferred_element_type=jnp.float32) + bq3            # (H, Tq, dk) f32
    q3 = (q3 * (1.0 / math.sqrt(float(dk)))).astype(jnp.bfloat16)

    # All-head scores, ONE softmax over the whole (H, Tq, Lk) block, ONE batched PV.
    # TODO(synk): with small head dims (dk, dv < 128) the MXU contraction is shallow;
    # pad dk/dv to 128 for production shapes.
    s = jnp.einsum("hqc,hkc->hqk", q3, k3, preferred_element_type=jnp.float32)
    p = _softmax_rows(s)                                                 # (H, Tq, Lk) f32
    o3 = jnp.einsum("hqk,hkv->hqv", p.astype(jnp.bfloat16), v3,
                    preferred_element_type=jnp.float32)                  # (H, Tq, dv) f32

    # Output projection accumulated per head in f32: keeps the live intermediate at
    # (Tq, D) (not (H, Tq, D)) and avoids the lane-axis concatenate entirely.
    o = bo + residual
    for h in range(n_head):
        o = o + jnp.dot(o3[h].astype(jnp.bfloat16), wo3[h],
                        preferred_element_type=jnp.float32)
    out = _layernorm(o, gamma, beta)
    probs = jnp.mean(p, axis=0) if want_probs else None                  # head-averaged
    return out, probs


def _decoder_layer_kernel(
        xq_ref, ks_ref, vs_ref, kc_ref, vc_ref,
        wq_s_ref, bq_s_ref, wo_s_ref, bo_s_ref, g1_ref, be1_ref,
        wq_c_ref, bq_c_ref, wo_c_ref, bo_c_ref, g2_ref, be2_ref,
        w1_ref, b1_ref, w2_ref, b2_ref, g3_ref, be3_ref,
        out_ref, *score_refs, return_scores):
    x_q = xq_ref[0]                                   # (tq, D) f32  queries / residual
    x_q_b = x_q.astype(jnp.bfloat16)

    # ---- self attention + residual + LN1 --------------------------------------------
    out1, p_self = _attention(
        x_q_b, ks_ref[0], vs_ref[0],
        wq_s_ref[...], bq_s_ref[...], wo_s_ref[...], bo_s_ref[...],
        x_q, g1_ref[...], be1_ref[...], want_probs=return_scores)

    # ---- cross (decoder-encoder) attention + residual + LN2 --------------------------
    out2, p_enc = _attention(
        out1.astype(jnp.bfloat16), kc_ref[0], vc_ref[0],
        wq_c_ref[...], bq_c_ref[...], wo_c_ref[...], bo_c_ref[...],
        out1, g2_ref[...], be2_ref[...], want_probs=return_scores)

    # ---- position-wise FFN + LN3 (reference adds no residual around the FFN) ---------
    # TODO(synk): chunk the hidden dim here if the fused layer gets VMEM-tight on v7x.
    h = jnp.dot(out2.astype(jnp.bfloat16), w1_ref[...],
                preferred_element_type=jnp.float32) + b1_ref[...]
    h = jnp.maximum(h, 0.0)
    y = jnp.dot(h.astype(jnp.bfloat16), w2_ref[...],
                preferred_element_type=jnp.float32) + b2_ref[...]
    out_ref[0] = _layernorm(y, g3_ref[...], be3_ref[...]).astype(out_ref.dtype)

    if return_scores:
        self_sc_ref, enc_sc_ref = score_refs
        self_sc_ref[0] = p_self.astype(self_sc_ref.dtype)
        enc_sc_ref[0] = p_enc.astype(enc_sc_ref.dtype)


def _hardware_defaults():
    """(q_tile, vmem_limit_bytes) per TPU generation, with safe fallbacks."""
    vmem_cap = 128 * 1024 * 1024
    try:
        vmem_cap = int(getattr(pltpu.get_tpu_info(), "vmem_capacity_bytes", vmem_cap))
    except Exception:
        pass
    kind = ""
    try:
        kind = (jax.devices()[0].device_kind or "").lower()
    except Exception:
        pass
    if "v7" in kind:
        vmem_cap = min(vmem_cap, 64 * 1024 * 1024)          # v7x: 64 MiB per TC
    q_tile = 128 if "v5" in kind else 256                    # 128-wide MXU / small VMEM on v5e
    vmem_limit = max(32 * 1024 * 1024, (vmem_cap * 3) // 4)  # ~48 MiB v7x, ~96 MiB v5e/v6e
    return q_tile, vmem_limit


def decoder_layer(inp, enc_out, params, n_head, key_dim, value_dim,
                  q_tile=None, return_scores=True,
                  out_dtype=jnp.float32, scores_dtype=jnp.float32):
    B, Lq, D = inp.shape
    _, Lk, _ = enc_out.shape
    H, dk, dv = n_head, key_dim, value_dim
    bf16 = jnp.bfloat16

    default_tile, vmem_limit = _hardware_defaults()
    if q_tile is None:
        q_tile = default_tile
    if Lq <= q_tile:
        q_tile, Lq_pad = Lq, Lq                     # single full-extent query block
    else:
        q_tile = max(8, (q_tile // 8) * 8)
        Lq_pad = ((Lq + q_tile - 1) // q_tile) * q_tile   # pad query axis only
    nq = Lq_pad // q_tile

    sa, ca, ff = params["self_attn"], params["enc_attn"], params["ffn"]
    hidden = ff["w1"].shape[1]

    # ---- batch-level K/V projections, hoisted out of the q-tile loop (plain XLA) -----
    def _kv(x, w, b, d):
        L = x.shape[1]
        y = jnp.einsum("bld,df->blf", x.astype(bf16), w.astype(bf16),
                       preferred_element_type=jnp.float32) + b
        return y.reshape(B, L, H, d).transpose(0, 2, 1, 3).astype(bf16)   # (B, H, L, d)

    k_s = _kv(inp, sa["wk"], sa["bk"], dk)
    v_s = _kv(inp, sa["wv"], sa["bv"], dv)
    k_c = _kv(enc_out, ca["wk"], ca["bk"], dk)
    v_c = _kv(enc_out, ca["wv"], ca["bv"], dv)

    # ---- head-major weights (layout plumbing done once, outside the kernel) ----------
    def _q_weights(a):
        wq3 = a["wq"].reshape(D, H, dk).transpose(1, 0, 2).astype(bf16)   # (H, D, dk)
        bq3 = a["bq"].reshape(H, dk)[:, None, :]                          # (H, 1, dk)
        wo3 = a["wo"].reshape(H, dv, D).astype(bf16)                      # (H, dv, D)
        return wq3, bq3, wo3

    wq3_s, bq3_s, wo3_s = _q_weights(sa)
    wq3_c, bq3_c, wo3_c = _q_weights(ca)
    w1 = ff["w1"].astype(bf16)
    w2 = ff["w2"].astype(bf16)

    x_pad = inp if Lq_pad == Lq else jnp.pad(inp, ((0, 0), (0, Lq_pad - Lq), (0, 0)))

    args = (x_pad, k_s, v_s, k_c, v_c,
            wq3_s, bq3_s, wo3_s, sa["bo"], sa["gamma"], sa["beta"],
            wq3_c, bq3_c, wo3_c, ca["bo"], ca["gamma"], ca["beta"],
            w1, ff["b1"], w2, ff["b2"], ff["gamma"], ff["beta"])

    weight_shapes = [
        (H, D, dk), (H, 1, dk), (H, dv, D), (1, D), (1, D), (1, D),
        (H, D, dk), (H, 1, dk), (H, dv, D), (1, D), (1, D), (1, D),
        (D, hidden), (1, hidden), (hidden, D), (1, D), (1, D), (1, D),
    ]

    out_shapes = [jax.ShapeDtypeStruct((B, Lq_pad, D), out_dtype)]
    out_specs = [pl.BlockSpec((1, q_tile, D), lambda b, i: (b, i, 0))]
    if return_scores:
        out_shapes += [jax.ShapeDtypeStruct((B, Lq_pad, Lq), scores_dtype),
                       jax.ShapeDtypeStruct((B, Lq_pad, Lk), scores_dtype)]
        out_specs += [pl.BlockSpec((1, q_tile, Lq), lambda b, i: (b, i, 0)),
                      pl.BlockSpec((1, q_tile, Lk), lambda b, i: (b, i, 0))]

    kernel = functools.partial(_decoder_layer_kernel, return_scores=return_scores)

    def _run(weight_mode):
        def wspec(shape):
            ndim = len(shape)
            index_map = lambda b, i: (0,) * ndim            # constant -> fetched once
            if weight_mode is None:
                return pl.BlockSpec(shape, index_map)
            return pl.BlockSpec(shape, index_map, pipeline_mode=weight_mode)

        in_specs = [
            pl.BlockSpec((1, q_tile, D), lambda b, i: (b, i, 0)),      # query/residual tile
            pl.BlockSpec((1, H, Lq, dk), lambda b, i: (b, 0, 0, 0)),   # self K (per batch)
            pl.BlockSpec((1, H, Lq, dv), lambda b, i: (b, 0, 0, 0)),   # self V
            pl.BlockSpec((1, H, Lk, dk), lambda b, i: (b, 0, 0, 0)),   # cross K
            pl.BlockSpec((1, H, Lk, dv), lambda b, i: (b, 0, 0, 0)),   # cross V
        ] + [wspec(s) for s in weight_shapes]

        return pl.pallas_call(
            kernel,
            out_shape=tuple(out_shapes),
            grid=(B, nq),
            in_specs=in_specs,
            out_specs=tuple(out_specs),
            compiler_params=pltpu.CompilerParams(
                dimension_semantics=("parallel", "parallel"),
                vmem_limit_bytes=vmem_limit),
        )(*args)

    try:
        weight_mode = pl.Buffered(1)   # constant weights: a 2nd pipeline buffer only wastes VMEM
    except Exception:
        weight_mode = None
    try:
        outs = _run(weight_mode)
    except Exception:
        if weight_mode is None:
            raise
        outs = _run(None)              # fall back to default (double) buffering

    if return_scores:
        out, self_scores, enc_scores = outs
        return out[:, :Lq], self_scores[:, :Lq], enc_scores[:, :Lq]
    return outs[0][:, :Lq], None, None


# ------------------------------ reference & test harness ---------------------------------
def _reference(inp, enc_out, params, n_head, dk, dv):
    """Pure-JAX f32 reference mirroring the PyTorch module's forward."""
    def ln(x, g, b):
        mu = x.mean(-1, keepdims=True)
        var = ((x - mu) ** 2).mean(-1, keepdims=True)
        return g * (x - mu) / jnp.sqrt(var + LN_EPS) + b

    def mha(q_in, k_in, v_in, p):
        B, Lq, _ = q_in.shape
        Lk = k_in.shape[1]
        q = (q_in @ p["wq"] + p["bq"]).reshape(B, Lq, n_head, dk).transpose(0, 2, 1, 3)
        k = (k_in @ p["wk"] + p["bk"]).reshape(B, Lk, n_head, dk).transpose(0, 2, 1, 3)
        v = (v_in @ p["wv"] + p["bv"]).reshape(B, Lk, n_head, dv).transpose(0, 2, 1, 3)
        s = jnp.einsum("bhqd,bhkd->bhqk", q, k) / math.sqrt(float(dk))
        pr = jax.nn.softmax(s, axis=-1)
        o = jnp.einsum("bhqk,bhkd->bhqd", pr, v)
        o = o.transpose(0, 2, 1, 3).reshape(B, Lq, n_head * dv) @ p["wo"] + p["bo"]
        return o, pr.mean(axis=1)

    sa, ca, ff = params["self_attn"], params["enc_attn"], params["ffn"]
    o, p_self = mha(inp, inp, inp, sa)
    out1 = ln(o + inp, sa["gamma"], sa["beta"])
    o, p_enc = mha(out1, enc_out, enc_out, ca)
    out2 = ln(o + out1, ca["gamma"], ca["beta"])
    h = jnp.maximum(out2 @ ff["w1"] + ff["b1"], 0.0)
    y = h @ ff["w2"] + ff["b2"]
    return ln(y, ff["gamma"], ff["beta"]), p_self, p_enc


def _init_params(key, model_dim, n_head, key_dim, value_dim, hidden_dim):
    def lin(k, fan_in, fan_out):
        kw, kb = jax.random.split(k)
        s = 1.0 / math.sqrt(fan_in)
        w = jax.random.uniform(kw, (fan_in, fan_out), jnp.float32, -s, s)
        b = jax.random.uniform(kb, (1, fan_out), jnp.float32, -s, s)
        return w, b

    keys = jax.random.split(key, 12)

    def attn_params(ks):
        wq, bq = lin(ks[0], model_dim, n_head * key_dim)
        wk, bk = lin(ks[1], model_dim, n_head * key_dim)
        wv, bv = lin(ks[2], model_dim, n_head * value_dim)
        wo, bo = lin(ks[3], n_head * value_dim, model_dim)
        return dict(wq=wq, bq=bq, wk=wk, bk=bk, wv=wv, bv=bv, wo=wo, bo=bo,
                    gamma=jnp.ones((1, model_dim), jnp.float32),
                    beta=jnp.zeros((1, model_dim), jnp.float32))

    w1, b1 = lin(keys[8], model_dim, hidden_dim)
    w2, b2 = lin(keys[9], hidden_dim, model_dim)
    return dict(
        self_attn=attn_params(keys[0:4]),
        enc_attn=attn_params(keys[4:8]),
        ffn=dict(w1=w1, b1=b1, w2=w2, b2=b2,
                 gamma=jnp.ones((1, model_dim), jnp.float32),
                 beta=jnp.zeros((1, model_dim), jnp.float32)),
    )


if __name__ == "__main__":
    B, Lq, Lk = 2, 8, 16
    model_dim, n_head, key_dim, value_dim, hidden_dim = 32, 4, 8, 8, 64

    root = jax.random.PRNGKey(0)
    k_in, k_enc, k_par = jax.random.split(root, 3)
    x = jax.random.normal(k_in, (B, Lq, model_dim), jnp.float32)
    enc = jax.random.normal(k_enc, (B, Lk, model_dim), jnp.float32)
    params = _init_params(k_par, model_dim, n_head, key_dim, value_dim, hidden_dim)

    out, self_scores, enc_scores = decoder_layer(x, enc, params, n_head, key_dim, value_dim)
    jax.block_until_ready((out, self_scores, enc_scores))

    assert out.shape == (B, Lq, model_dim)
    assert self_scores.shape == (B, Lq, Lq)
    assert enc_scores.shape == (B, Lq, Lk)
    assert bool(jnp.isfinite(out).all())

    ref_out, ref_ps, ref_pe = _reference(x, enc, params, n_head, key_dim, value_dim)
    assert bool(jnp.allclose(out, ref_out, atol=1e-1, rtol=1e-1)), "output mismatch vs reference"
    assert float(jnp.max(jnp.abs(self_scores - ref_ps))) < 5e-2, "self-attn scores mismatch"
    assert float(jnp.max(jnp.abs(enc_scores - ref_pe))) < 5e-2, "enc-attn scores mismatch"
    print("KERNEL_OK")
</pallas_src>

<mosaic_0001>
module attributes {stable_mosaic.version = 11 : i64} {
  func.func @_decoder_layer_kernel(%arg0: i32, %arg1: i32, %arg2: memref<1x8x32xf32, #tpu.memory_space<vmem>>, %arg3: memref<1x4x8x8xbf16, #tpu.memory_space<vmem>>, %arg4: memref<1x4x8x8xbf16, #tpu.memory_space<vmem>>, %arg5: memref<1x4x16x8xbf16, #tpu.memory_space<vmem>>, %arg6: memref<1x4x16x8xbf16, #tpu.memory_space<vmem>>, %arg7: memref<4x32x8xbf16, #tpu.memory_space<vmem>>, %arg8: memref<4x1x8xf32, #tpu.memory_space<vmem>>, %arg9: memref<4x8x32xbf16, #tpu.memory_space<vmem>>, %arg10: memref<1x32xf32, #tpu.memory_space<vmem>>, %arg11: memref<1x32xf32, #tpu.memory_space<vmem>>, %arg12: memref<1x32xf32, #tpu.memory_space<vmem>>, %arg13: memref<4x32x8xbf16, #tpu.memory_space<vmem>>, %arg14: memref<4x1x8xf32, #tpu.memory_space<vmem>>, %arg15: memref<4x8x32xbf16, #tpu.memory_space<vmem>>, %arg16: memref<1x32xf32, #tpu.memory_space<vmem>>, %arg17: memref<1x32xf32, #tpu.memory_space<vmem>>, %arg18: memref<1x32xf32, #tpu.memory_space<vmem>>, %arg19: memref<32x64xbf16, #tpu.memory_space<vmem>>, %arg20: memref<1x64xf32, #tpu.memory_space<vmem>>, %arg21: memref<64x32xbf16, #tpu.memory_space<vmem>>, %arg22: memref<1x32xf32, #tpu.memory_space<vmem>>, %arg23: memref<1x32xf32, #tpu.memory_space<vmem>>, %arg24: memref<1x32xf32, #tpu.memory_space<vmem>>, %arg25: memref<1x8x32xf32, #tpu.memory_space<vmem>>, %arg26: memref<1x8x8xf32, #tpu.memory_space<vmem>>, %arg27: memref<1x8x16xf32, #tpu.memory_space<vmem>>) attributes {dimension_semantics = [#tpu.dimension_semantics<parallel>, #tpu.dimension_semantics<parallel>], iteration_bounds = array<i64: 2, 1>, scalar_prefetch = 0 : i64, scratch_operands = 0 : i64, tpu.core_type = #tpu.core_type<tc>, window_params = [{transform_indices = @transform_0, window_bounds = array<i64: 1, 8, 32>}, {transform_indices = @transform_1, window_bounds = array<i64: 1, 4, 8, 8>}, {transform_indices = @transform_2, window_bounds = array<i64: 1, 4, 8, 8>}, {transform_indices = @transform_3, window_bounds = array<i64: 1, 4, 16, 8>}, {transform_indices = @transform_4, window_bounds = array<i64: 1, 4, 16, 8>}, {pipeline_mode = #tpu.pipeline_mode<synchronous>, transform_indices = @transform_5, window_bounds = array<i64: 4, 32, 8>}, {pipeline_mode = #tpu.pipeline_mode<synchronous>, transform_indices = @transform_6, window_bounds = array<i64: 4, 1, 8>}, {pipeline_mode = #tpu.pipeline_mode<synchronous>, transform_indices = @transform_7, window_bounds = array<i64: 4, 8, 32>}, {pipeline_mode = #tpu.pipeline_mode<synchronous>, transform_indices = @transform_8, window_bounds = array<i64: 1, 32>}, {pipeline_mode = #tpu.pipeline_mode<synchronous>, transform_indices = @transform_9, window_bounds = array<i64: 1, 32>}, {pipeline_mode = #tpu.pipeline_mode<synchronous>, transform_indices = @transform_10, window_bounds = array<i64: 1, 32>}, {pipeline_mode = #tpu.pipeline_mode<synchronous>, transform_indices = @transform_11, window_bounds = array<i64: 4, 32, 8>}, {pipeline_mode = #tpu.pipeline_mode<synchronous>, transform_indices = @transform_12, window_bounds = array<i64: 4, 1, 8>}, {pipeline_mode = #tpu.pipeline_mode<synchronous>, transform_indices = @transform_13, window_bounds = array<i64: 4, 8, 32>}, {pipeline_mode = #tpu.pipeline_mode<synchronous>, transform_indices = @transform_14, window_bounds = array<i64: 1, 32>}, {pipeline_mode = #tpu.pipeline_mode<synchronous>, transform_indices = @transform_15, window_bounds = array<i64: 1, 32>}, {pipeline_mode = #tpu.pipeline_mode<synchronous>, transform_indices = @transform_16, window_bounds = array<i64: 1, 32>}, {pipeline_mode = #tpu.pipeline_mode<synchronous>, transform_indices = @transform_17, window_bounds = array<i64: 32, 64>}, {pipeline_mode = #tpu.pipeline_mode<synchronous>, transform_indices = @transform_18, window_bounds = array<i64: 1, 64>}, {pipeline_mode = #tpu.pipeline_mode<synchronous>, transform_indices = @transform_19, window_bounds = array<i64: 64, 32>}, {pipeline_mode = #tpu.pipeline_mode<synchronous>, transform_indices = @transform_20, window_bounds = array<i64: 1, 32>}, {pipeline_mode = #tpu.pipeline_mode<synchronous>, transform_indices = @transform_21, window_bounds = array<i64: 1, 32>}, {pipeline_mode = #tpu.pipeline_mode<synchronous>, transform_indices = @transform_22, window_bounds = array<i64: 1, 32>}, {transform_indices = @transform_23, window_bounds = array<i64: 1, 8, 32>}, {transform_indices = @transform_24, window_bounds = array<i64: 1, 8, 8>}, {transform_indices = @transform_25, window_bounds = array<i64: 1, 8, 16>}]} {
    %c0 = arith.constant 0 : index
    %c0_0 = arith.constant 0 : index
    %c0_1 = arith.constant 0 : index
    %0 = vector.load %arg2[%c0, %c0_0, %c0_1] : memref<1x8x32xf32, #tpu.memory_space<vmem>>, vector<1x8x32xf32>
    %1 = vector.shape_cast %0 : vector<1x8x32xf32> to vector<8x32xf32>
    %2 = arith.truncf %1 : vector<8x32xf32> to vector<8x32xbf16>
    %c0_2 = arith.constant 0 : index
    %c0_3 = arith.constant 0 : index
    %c0_4 = arith.constant 0 : index
    %c0_5 = arith.constant 0 : index
    %3 = vector.load %arg3[%c0_2, %c0_3, %c0_4, %c0_5] : memref<1x4x8x8xbf16, #tpu.memory_space<vmem>>, vector<1x4x8x8xbf16>
    %4 = vector.shape_cast %3 : vector<1x4x8x8xbf16> to vector<4x8x8xbf16>
    %c0_6 = arith.constant 0 : index
    %c0_7 = arith.constant 0 : index
    %c0_8 = arith.constant 0 : index
    %c0_9 = arith.constant 0 : index
    %5 = vector.load %arg4[%c0_6, %c0_7, %c0_8, %c0_9] : memref<1x4x8x8xbf16, #tpu.memory_space<vmem>>, vector<1x4x8x8xbf16>
    %6 = vector.shape_cast %5 : vector<1x4x8x8xbf16> to vector<4x8x8xbf16>
    %c0_10 = arith.constant 0 : index
    %c0_11 = arith.constant 0 : index
    %c0_12 = arith.constant 0 : index
    %7 = vector.load %arg7[%c0_10, %c0_11, %c0_12] : memref<4x32x8xbf16, #tpu.memory_space<vmem>>, vector<4x32x8xbf16>
    %c0_13 = arith.constant 0 : index
    %c0_14 = arith.constant 0 : index
    %c0_15 = arith.constant 0 : index
    %8 = vector.load %arg8[%c0_13, %c0_14, %c0_15] : memref<4x1x8xf32, #tpu.memory_space<vmem>>, vector<4x1x8xf32>
    %c0_16 = arith.constant 0 : index
    %c0_17 = arith.constant 0 : index
    %c0_18 = arith.constant 0 : index
    %9 = vector.load %arg9[%c0_16, %c0_17, %c0_18] : memref<4x8x32xbf16, #tpu.memory_space<vmem>>, vector<4x8x32xbf16>
    %c0_19 = arith.constant 0 : index
    %c0_20 = arith.constant 0 : index
    %10 = vector.load %arg10[%c0_19, %c0_20] : memref<1x32xf32, #tpu.memory_space<vmem>>, vector<1x32xf32>
    %c0_21 = arith.constant 0 : index
    %c0_22 = arith.constant 0 : index
    %11 = vector.load %arg11[%c0_21, %c0_22] : memref<1x32xf32, #tpu.memory_space<vmem>>, vector<1x32xf32>
    %c0_23 = arith.constant 0 : index
    %c0_24 = arith.constant 0 : index
    %12 = vector.load %arg12[%c0_23, %c0_24] : memref<1x32xf32, #tpu.memory_space<vmem>>, vector<1x32xf32>
    %13 = vector.shape_cast %2 : vector<8x32xbf16> to vector<1x8x32xbf16>
    %14 = vector.shape_cast %13 : vector<1x8x32xbf16> to vector<1x8x32xbf16>
    %15 = vector.broadcast %14 : vector<1x8x32xbf16> to vector<4x8x32xbf16>
    "tpu.trace_start"() <{level = 10 : i32, message = "hqd,hdc->hqc"}> : () -> ()
    %cst = arith.constant dense<0.000000e+00> : vector<4x8x8xf32>
    %16 = tpu.matmul %15, %7, %cst {dimension_numbers = #tpu.dot_dimension_numbers<[2], [1], [1], [2], [0, 0, 0, 1, 1, 2], [0], [0]>} : vector<4x8x32xbf16>, vector<4x32x8xbf16>, vector<4x8x8xf32> -> vector<4x8x8xf32>
    "tpu.trace_stop"() : () -> ()
    %17 = vector.broadcast %8 : vector<4x1x8xf32> to vector<4x8x8xf32>
    %18 = arith.addf %16, %17 : vector<4x8x8xf32>
    %cst_25 = arith.constant 0.353553385 : f32
    %19 = vector.broadcast %cst_25 : f32 to vector<4x8x8xf32>
    %20 = arith.mulf %18, %19 : vector<4x8x8xf32>
    %21 = arith.truncf %20 : vector<4x8x8xf32> to vector<4x8x8xbf16>
    "tpu.trace_start"() <{level = 10 : i32, message = "hqc,hkc->hqk"}> : () -> ()
    %cst_26 = arith.constant dense<0.000000e+00> : vector<4x8x8xf32>
    %22 = tpu.matmul %21, %4, %cst_26 {dimension_numbers = #tpu.dot_dimension_numbers<[2], [2], [1], [1], [0, 0, 0, 1, 1, 1], [0], [0]>} : vector<4x8x8xbf16>, vector<4x8x8xbf16>, vector<4x8x8xf32> -> vector<4x8x8xf32>
    "tpu.trace_stop"() : () -> ()
    %cst_27 = arith.constant dense<0xFF800000> : vector<4x8xf32>
    %23 = vector.multi_reduction <maximumf>, %22, %cst_27 [2] : vector<4x8x8xf32> to vector<4x8xf32>
    %24 = vector.shape_cast %23 : vector<4x8xf32> to vector<4x8x1xf32>
    %25 = vector.broadcast %24 : vector<4x8x1xf32> to vector<4x8x8xf32>
    %26 = arith.subf %22, %25 : vector<4x8x8xf32>
    %27 = math.exp %26 : vector<4x8x8xf32>
    %cst_28 = arith.constant dense<0.000000e+00> : vector<4x8xf32>
    %28 = vector.multi_reduction <add>, %27, %cst_28 [2] : vector<4x8x8xf32> to vector<4x8xf32>
    %29 = vector.shape_cast %28 : vector<4x8xf32> to vector<4x8x1xf32>
    %30 = tpu.reciprocal %29 {approx = true} : vector<4x8x1xf32> -> vector<4x8x1xf32>
    %31 = vector.broadcast %30 : vector<4x8x1xf32> to vector<4x8x8xf32>
    %32 = arith.mulf %27, %31 : vector<4x8x8xf32>
    %33 = arith.truncf %32 : vector<4x8x8xf32> to vector<4x8x8xbf16>
    "tpu.trace_start"() <{level = 10 : i32, message = "hqk,hkv->hqv"}> : () -> ()
    %cst_29 = arith.constant dense<0.000000e+00> : vector<4x8x8xf32>
    %34 = tpu.matmul %33, %6, %cst_29 {dimension_numbers = #tpu.dot_dimension_numbers<[2], [1], [1], [2], [0, 0, 0, 1, 1, 2], [0], [0]>} : vector<4x8x8xbf16>, vector<4x8x8xbf16>, vector<4x8x8xf32> -> vector<4x8x8xf32>
    "tpu.trace_stop"() : () -> ()
    %35 = vector.broadcast %10 : vector<1x32xf32> to vector<8x32xf32>
    %36 = arith.addf %35, %1 : vector<8x32xf32>
    %37 = vector.extract_strided_slice %34 {offsets = [0, 0, 0], sizes = [1, 8, 8], strides = [1, 1, 1]} : vector<4x8x8xf32> to vector<1x8x8xf32>
    %38 = vector.shape_cast %37 : vector<1x8x8xf32> to vector<8x8xf32>
    %39 = arith.truncf %38 : vector<8x8xf32> to vector<8x8xbf16>
    %40 = vector.extract_strided_slice %9 {offsets = [0, 0, 0], sizes = [1, 8, 32], strides = [1, 1, 1]} : vector<4x8x32xbf16> to vector<1x8x32xbf16>
    %41 = vector.shape_cast %40 : vector<1x8x32xbf16> to vector<8x32xbf16>
    %cst_30 = arith.constant dense<0.000000e+00> : vector<8x32xf32>
    %42 = tpu.matmul %39, %41, %cst_30 {dimension_numbers = #tpu.dot_dimension_numbers<[1], [0], [0], [1], [0, 0, 1, 1], [], []>} : vector<8x8xbf16>, vector<8x32xbf16>, vector<8x32xf32> -> vector<8x32xf32>
    %43 = arith.addf %36, %42 : vector<8x32xf32>
    %44 = vector.extract_strided_slice %34 {offsets = [1, 0, 0], sizes = [1, 8, 8], strides = [1, 1, 1]} : vector<4x8x8xf32> to vector<1x8x8xf32>
    %45 = vector.shape_cast %44 : vector<1x8x8xf32> to vector<8x8xf32>
    %46 = arith.truncf %45 : vector<8x8xf32> to vector<8x8xbf16>
    %47 = vector.extract_strided_slice %9 {offsets = [1, 0, 0], sizes = [1, 8, 32], strides = [1, 1, 1]} : vector<4x8x32xbf16> to vector<1x8x32xbf16>
    %48 = vector.shape_cast %47 : vector<1x8x32xbf16> to vector<8x32xbf16>
    %cst_31 = arith.constant dense<0.000000e+00> : vector<8x32xf32>
    %49 = tpu.matmul %46, %48, %cst_31 {dimension_numbers = #tpu.dot_dimension_numbers<[1], [0], [0], [1], [0, 0, 1, 1], [], []>} : vector<8x8xbf16>, vector<8x32xbf16>, vector<8x32xf32> -> vector<8x32xf32>
    %50 = arith.addf %43, %49 : vector<8x32xf32>
    %51 = vector.extract_strided_slice %34 {offsets = [2, 0, 0], sizes = [1, 8, 8], strides = [1, 1, 1]} : vector<4x8x8xf32> to vector<1x8x8xf32>
    %52 = vector.shape_cast %51 : vector<1x8x8xf32> to vector<8x8xf32>
    %53 = arith.truncf %52 : vector<8x8xf32> to vector<8x8xbf16>
    %54 = vector.extract_strided_slice %9 {offsets = [2, 0, 0], sizes = [1, 8, 32], strides = [1, 1, 1]} : vector<4x8x32xbf16> to vector<1x8x32xbf16>
    %55 = vector.shape_cast %54 : vector<1x8x32xbf16> to vector<8x32xbf16>
    %cst_32 = arith.constant dense<0.000000e+00> : vector<8x32xf32>
    %56 = tpu.matmul %53, %55, %cst_32 {dimension_numbers = #tpu.dot_dimension_numbers<[1], [0], [0], [1], [0, 0, 1, 1], [], []>} : vector<8x8xbf16>, vector<8x32xbf16>, vector<8x32xf32> -> vector<8x32xf32>
    %57 = arith.addf %50, %56 : vector<8x32xf32>
    %58 = vector.extract_strided_slice %34 {offsets = [3, 0, 0], sizes = [1, 8, 8], strides = [1, 1, 1]} : vector<4x8x8xf32> to vector<1x8x8xf32>
    %59 = vector.shape_cast %58 : vector<1x8x8xf32> to vector<8x8xf32>
    %60 = arith.truncf %59 : vector<8x8xf32> to vector<8x8xbf16>
    %61 = vector.extract_strided_slice %9 {offsets = [3, 0, 0], sizes = [1, 8, 32], strides = [1, 1, 1]} : vector<4x8x32xbf16> to vector<1x8x32xbf16>
    %62 = vector.shape_cast %61 : vector<1x8x32xbf16> to vector<8x32xbf16>
    %cst_33 = arith.constant dense<0.000000e+00> : vector<8x32xf32>
    %63 = tpu.matmul %60, %62, %cst_33 {dimension_numbers = #tpu.dot_dimension_numbers<[1], [0], [0], [1], [0, 0, 1, 1], [], []>} : vector<8x8xbf16>, vector<8x32xbf16>, vector<8x32xf32> -> vector<8x32xf32>
    %64 = arith.addf %57, %63 : vector<8x32xf32>
    %cst_34 = arith.constant dense<0.000000e+00> : vector<8xf32>
    %65 = vector.multi_reduction <add>, %64, %cst_34 [1] : vector<8x32xf32> to vector<8xf32>
    %66 = vector.shape_cast %65 : vector<8xf32> to vector<8x1xf32>
    %cst_35 = arith.constant 3.200000e+01 : f32
    %67 = vector.broadcast %cst_35 : f32 to vector<8x1xf32>
    %68 = arith.divf %66, %67 : vector<8x1xf32>
    %69 = vector.broadcast %68 : vector<8x1xf32> to vector<8x32xf32>
    %70 = arith.subf %64, %69 : vector<8x32xf32>
    %71 = arith.mulf %70, %70 : vector<8x32xf32>
    %cst_36 = arith.constant dense<0.000000e+00> : vector<8xf32>
    %72 = vector.multi_reduction <add>, %71, %cst_36 [1] : vector<8x32xf32> to vector<8xf32>
    %73 = vector.shape_cast %72 : vector<8xf32> to vector<8x1xf32>
    %cst_37 = arith.constant 3.200000e+01 : f32
    %74 = vector.broadcast %cst_37 : f32 to vector<8x1xf32>
    %75 = arith.divf %73, %74 : vector<8x1xf32>
    %76 = vector.broadcast %11 : vector<1x32xf32> to vector<8x32xf32>
    %77 = arith.mulf %76, %70 : vector<8x32xf32>
    %cst_38 = arith.constant 9.99999996E-13 : f32
    %78 = vector.broadcast %cst_38 : f32 to vector<8x1xf32>
    %79 = arith.addf %75, %78 : vector<8x1xf32>
    %80 = math.rsqrt %79 : vector<8x1xf32>
    %81 = vector.broadcast %80 : vector<8x1xf32> to vector<8x32xf32>
    %82 = arith.mulf %77, %81 : vector<8x32xf32>
    %83 = vector.broadcast %12 : vector<1x32xf32> to vector<8x32xf32>
    %84 = arith.addf %82, %83 : vector<8x32xf32>
    %cst_39 = arith.constant dense<0.000000e+00> : vector<8x8xf32>
    %85 = vector.multi_reduction <add>, %32, %cst_39 [0] : vector<4x8x8xf32> to vector<8x8xf32>
    %cst_40 = arith.constant 4.000000e+00 : f32
    %86 = vector.broadcast %cst_40 : f32 to vector<8x8xf32>
    %87 = arith.divf %85, %86 : vector<8x8xf32>
    %88 = arith.truncf %84 : vector<8x32xf32> to vector<8x32xbf16>
    %c0_41 = arith.constant 0 : index
    %c0_42 = arith.constant 0 : index
    %c0_43 = arith.constant 0 : index
    %c0_44 = arith.constant 0 : index
    %89 = vector.load %arg5[%c0_41, %c0_42, %c0_43, %c0_44] : memref<1x4x16x8xbf16, #tpu.memory_space<vmem>>, vector<1x4x16x8xbf16>
    %90 = vector.shape_cast %89 : vector<1x4x16x8xbf16> to vector<4x16x8xbf16>
    %c0_45 = arith.constant 0 : index
    %c0_46 = arith.constant 0 : index
    %c0_47 = arith.constant 0 : index
    %c0_48 = arith.constant 0 : index
    %91 = vector.load %arg6[%c0_45, %c0_46, %c0_47, %c0_48] : memref<1x4x16x8xbf16, #tpu.memory_space<vmem>>, vector<1x4x16x8xbf16>
    %92 = vector.shape_cast %91 : vector<1x4x16x8xbf16> to vector<4x16x8xbf16>
    %c0_49 = arith.constant 0 : index
    %c0_50 = arith.constant 0 : index
    %c0_51 = arith.constant 0 : index
    %93 = vector.load %arg13[%c0_49, %c0_50, %c0_51] : memref<4x32x8xbf16, #tpu.memory_space<vmem>>, vector<4x32x8xbf16>
    %c0_52 = arith.constant 0 : index
    %c0_53 = arith.constant 0 : index
    %c0_54 = arith.constant 0 : index
    %94 = vector.load %arg14[%c0_52, %c0_53, %c0_54] : memref<4x1x8xf32, #tpu.memory_space<vmem>>, vector<4x1x8xf32>
    %c0_55 = arith.constant 0 : index
    %c0_56 = arith.constant 0 : index
    %c0_57 = arith.constant 0 : index
    %95 = vector.load %arg15[%c0_55, %c0_56, %c0_57] : memref<4x8x32xbf16, #tpu.memory_space<vmem>>, vector<4x8x32xbf16>
    %c0_58 = arith.constant 0 : index
    %c0_59 = arith.constant 0 : index
    %96 = vector.load %arg16[%c0_58, %c0_59] : memref<1x32xf32, #tpu.memory_space<vmem>>, vector<1x32xf32>
    %c0_60 = arith.constant 0 : index
    %c0_61 = arith.constant 0 : index
    %97 = vector.load %arg17[%c0_60, %c0_61] : memref<1x32xf32, #tpu.memory_space<vmem>>, vector<1x32xf32>
    %c0_62 = arith.constant 0 : index
    %c0_63 = arith.constant 0 : index
    %98 = vector.load %arg18[%c0_62, %c0_63] : memref<1x32xf32, #tpu.memory_space<vmem>>, vector<1x32xf32>
    %99 = vector.shape_cast %88 : vector<8x32xbf16> to vector<1x8x32xbf16>
    %100 = vector.shape_cast %99 : vector<1x8x32xbf16> to vector<1x8x32xbf16>
    %101 = vector.broadcast %100 : vector<1x8x32xbf16> to vector<4x8x32xbf16>
    "tpu.trace_start"() <{level = 10 : i32, message = "hqd,hdc->hqc"}> : () -> ()
    %cst_64 = arith.constant dense<0.000000e+00> : vector<4x8x8xf32>
    %102 = tpu.matmul %101, %93, %cst_64 {dimension_numbers = #tpu.dot_dimension_numbers<[2], [1], [1], [2], [0, 0, 0, 1, 1, 2], [0], [0]>} : vector<4x8x32xbf16>, vector<4x32x8xbf16>, vector<4x8x8xf32> -> vector<4x8x8xf32>
    "tpu.trace_stop"() : () -> ()
    %103 = vector.broadcast %94 : vector<4x1x8xf32> to vector<4x8x8xf32>
    %104 = arith.addf %102, %103 : vector<4x8x8xf32>
    %cst_65 = arith.constant 0.353553385 : f32
    %105 = vector.broadcast %cst_65 : f32 to vector<4x8x8xf32>
    %106 = arith.mulf %104, %105 : vector<4x8x8xf32>
    %107 = arith.truncf %106 : vector<4x8x8xf32> to vector<4x8x8xbf16>
    "tpu.trace_start"() <{level = 10 : i32, message = "hqc,hkc->hqk"}> : () -> ()
    %cst_66 = arith.constant dense<0.000000e+00> : vector<4x8x16xf32>
    %108 = tpu.matmul %107, %90, %cst_66 {dimension_numbers = #tpu.dot_dimension_numbers<[2], [2], [1], [1], [0, 0, 0, 1, 1, 1], [0], [0]>} : vector<4x8x8xbf16>, vector<4x16x8xbf16>, vector<4x8x16xf32> -> vector<4x8x16xf32>
    "tpu.trace_stop"() : () -> ()
    %cst_67 = arith.constant dense<0xFF800000> : vector<4x8xf32>
    %109 = vector.multi_reduction <maximumf>, %108, %cst_67 [2] : vector<4x8x16xf32> to vector<4x8xf32>
    %110 = vector.shape_cast %109 : vector<4x8xf32> to vector<4x8x1xf32>
    %111 = vector.broadcast %110 : vector<4x8x1xf32> to vector<4x8x16xf32>
    %112 = arith.subf %108, %111 : vector<4x8x16xf32>
    %113 = math.exp %112 : vector<4x8x16xf32>
    %cst_68 = arith.constant dense<0.000000e+00> : vector<4x8xf32>
    %114 = vector.multi_reduction <add>, %113, %cst_68 [2] : vector<4x8x16xf32> to vector<4x8xf32>
    %115 = vector.shape_cast %114 : vector<4x8xf32> to vector<4x8x1xf32>
    %116 = tpu.reciprocal %115 {approx = true} : vector<4x8x1xf32> -> vector<4x8x1xf32>
    %117 = vector.broadcast %116 : vector<4x8x1xf32> to vector<4x8x16xf32>
    %118 = arith.mulf %113, %117 : vector<4x8x16xf32>
    %119 = arith.truncf %118 : vector<4x8x16xf32> to vector<4x8x16xbf16>
    "tpu.trace_start"() <{level = 10 : i32, message = "hqk,hkv->hqv"}> : () -> ()
    %cst_69 = arith.constant dense<0.000000e+00> : vector<4x8x8xf32>
    %120 = tpu.matmul %119, %92, %cst_69 {dimension_numbers = #tpu.dot_dimension_numbers<[2], [1], [1], [2], [0, 0, 0, 1, 1, 2], [0], [0]>} : vector<4x8x16xbf16>, vector<4x16x8xbf16>, vector<4x8x8xf32> -> vector<4x8x8xf32>
    "tpu.trace_stop"() : () -> ()
    %121 = vector.broadcast %96 : vector<1x32xf32> to vector<8x32xf32>
    %122 = arith.addf %121, %84 : vector<8x32xf32>
    %123 = vector.extract_strided_slice %120 {offsets = [0, 0, 0], sizes = [1, 8, 8], strides = [1, 1, 1]} : vector<4x8x8xf32> to vector<1x8x8xf32>
    %124 = vector.shape_cast %123 : vector<1x8x8xf32> to vector<8x8xf32>
    %125 = arith.truncf %124 : vector<8x8xf32> to vector<8x8xbf16>
    %126 = vector.extract_strided_slice %95 {offsets = [0, 0, 0], sizes = [1, 8, 32], strides = [1, 1, 1]} : vector<4x8x32xbf16> to vector<1x8x32xbf16>
    %127 = vector.shape_cast %126 : vector<1x8x32xbf16> to vector<8x32xbf16>
    %cst_70 = arith.constant dense<0.000000e+00> : vector<8x32xf32>
    %128 = tpu.matmul %125, %127, %cst_70 {dimension_numbers = #tpu.dot_dimension_numbers<[1], [0], [0], [1], [0, 0, 1, 1], [], []>} : vector<8x8xbf16>, vector<8x32xbf16>, vector<8x32xf32> -> vector<8x32xf32>
    %129 = arith.addf %122, %128 : vector<8x32xf32>
    %130 = vector.extract_strided_slice %120 {offsets = [1, 0, 0], sizes = [1, 8, 8], strides = [1, 1, 1]} : vector<4x8x8xf32> to vector<1x8x8xf32>
    %131 = vector.shape_cast %130 : vector<1x8x8xf32> to vector<8x8xf32>
    %132 = arith.truncf %131 : vector<8x8xf32> to vector<8x8xbf16>
    %133 = vector.extract_strided_slice %95 {offsets = [1, 0, 0], sizes = [1, 8, 32], strides = [1, 1, 1]} : vector<4x8x32xbf16> to vector<1x8x32xbf16>
    %134 = vector.shape_cast %133 : vector<1x8x32xbf16> to vector<8x32xbf16>
    %cst_71 = arith.constant dense<0.000000e+00> : vector<8x32xf32>
    %135 = tpu.matmul %132, %134, %cst_71 {dimension_numbers = #tpu.dot_dimension_numbers<[1], [0], [0], [1], [0, 0, 1, 1], [], []>} : vector<8x8xbf16>, vector<8x32xbf16>, vector<8x32xf32> -> vector<8x32xf32>
    %136 = arith.addf %129, %135 : vector<8x32xf32>
    %137 = vector.extract_strided_slice %120 {offsets = [2, 0, 0], sizes = [1, 8, 8], strides = [1, 1, 1]} : vector<4x8x8xf32> to vector<1x8x8xf32>
    %138 = vector.shape_cast %137 : vector<1x8x8xf32> to vector<8x8xf32>
    %139 = arith.truncf %138 : vector<8x8xf32> to vector<8x8xbf16>
    %140 = vector.extract_strided_slice %95 {offsets = [2, 0, 0], sizes = [1, 8, 32], strides = [1, 1, 1]} : vector<4x8x32xbf16> to vector<1x8x32xbf16>
    %141 = vector.shape_cast %140 : vector<1x8x32xbf16> to vector<8x32xbf16>
    %cst_72 = arith.constant dense<0.000000e+00> : vector<8x32xf32>
    %142 = tpu.matmul %139, %141, %cst_72 {dimension_numbers = #tpu.dot_dimension_numbers<[1], [0], [0], [1], [0, 0, 1, 1], [], []>} : vector<8x8xbf16>, vector<8x32xbf16>, vector<8x32xf32> -> vector<8x32xf32>
    %143 = arith.addf %136, %142 : vector<8x32xf32>
    %144 = vector.extract_strided_slice %120 {offsets = [3, 0, 0], sizes = [1, 8, 8], strides = [1, 1, 1]} : vector<4x8x8xf32> to vector<1x8x8xf32>
    %145 = vector.shape_cast %144 : vector<1x8x8xf32> to vector<8x8xf32>
    %146 = arith.truncf %145 : vector<8x8xf32> to vector<8x8xbf16>
    %147 = vector.extract_strided_slice %95 {offsets = [3, 0, 0], sizes = [1, 8, 32], strides = [1, 1, 1]} : vector<4x8x32xbf16> to vector<1x8x32xbf16>
    %148 = vector.shape_cast %147 : vector<1x8x32xbf16> to vector<8x32xbf16>
    %cst_73 = arith.constant dense<0.000000e+00> : vector<8x32xf32>
    %149 = tpu.matmul %146, %148, %cst_73 {dimension_numbers = #tpu.dot_dimension_numbers<[1], [0], [0], [1], [0, 0, 1, 1], [], []>} : vector<8x8xbf16>, vector<8x32xbf16>, vector<8x32xf32> -> vector<8x32xf32>
    %150 = arith.addf %143, %149 : vector<8x32xf32>
    %cst_74 = arith.constant dense<0.000000e+00> : vector<8xf32>
    %151 = vector.multi_reduction <add>, %150, %cst_74 [1] : vector<8x32xf32> to vector<8xf32>
    %152 = vector.shape_cast %151 : vector<8xf32> to vector<8x1xf32>
    %cst_75 = arith.constant 3.200000e+01 : f32
    %153 = vector.broadcast %cst_75 : f32 to vector<8x1xf32>
    %154 = arith.divf %152, %153 : vector<8x1xf32>
    %155 = vector.broadcast %154 : vector<8x1xf32> to vector<8x32xf32>
    %156 = arith.subf %150, %155 : vector<8x32xf32>
    %157 = arith.mulf %156, %156 : vector<8x32xf32>
    %cst_76 = arith.constant dense<0.000000e+00> : vector<8xf32>
    %158 = vector.multi_reduction <add>, %157, %cst_76 [1] : vector<8x32xf32> to vector<8xf32>
    %159 = vector.shape_cast %158 : vector<8xf32> to vector<8x1xf32>
    %cst_77 = arith.constant 3.200000e+01 : f32
    %160 = vector.broadcast %cst_77 : f32 to vector<8x1xf32>
    %161 = arith.divf %159, %160 : vector<8x1xf32>
    %162 = vector.broadcast %97 : vector<1x32xf32> to vector<8x32xf32>
    %163 = arith.mulf %162, %156 : vector<8x32xf32>
    %cst_78 = arith.constant 9.99999996E-13 : f32
    %164 = vector.broadcast %cst_78 : f32 to vector<8x1xf32>
    %165 = arith.addf %161, %164 : vector<8x1xf32>
    %166 = math.rsqrt %165 : vector<8x1xf32>
    %167 = vector.broadcast %166 : vector<8x1xf32> to vector<8x32xf32>
    %168 = arith.mulf %163, %167 : vector<8x32xf32>
    %169 = vector.broadcast %98 : vector<1x32xf32> to vector<8x32xf32>
    %170 = arith.addf %168, %169 : vector<8x32xf32>
    %cst_79 = arith.constant dense<0.000000e+00> : vector<8x16xf32>
    %171 = vector.multi_reduction <add>, %118, %cst_79 [0] : vector<4x8x16xf32> to vector<8x16xf32>
    %cst_80 = arith.constant 4.000000e+00 : f32
    %172 = vector.broadcast %cst_80 : f32 to vector<8x16xf32>
    %173 = arith.divf %171, %172 : vector<8x16xf32>
    %174 = arith.truncf %170 : vector<8x32xf32> to vector<8x32xbf16>
    %c0_81 = arith.constant 0 : index
    %c0_82 = arith.constant 0 : index
    %175 = vector.load %arg19[%c0_81, %c0_82] : memref<32x64xbf16, #tpu.memory_space<vmem>>, vector<32x64xbf16>
    %cst_83 = arith.constant dense<0.000000e+00> : vector<8x64xf32>
    %176 = tpu.matmul %174, %175, %cst_83 {dimension_numbers = #tpu.dot_dimension_numbers<[1], [0], [0], [1], [0, 0, 1, 1], [], []>} : vector<8x32xbf16>, vector<32x64xbf16>, vector<8x64xf32> -> vector<8x64xf32>
    %c0_84 = arith.constant 0 : index
    %c0_85 = arith.constant 0 : index
    %177 = vector.load %arg20[%c0_84, %c0_85] : memref<1x64xf32, #tpu.memory_space<vmem>>, vector<1x64xf32>
    %178 = vector.broadcast %177 : vector<1x64xf32> to vector<8x64xf32>
    %179 = arith.addf %176, %178 : vector<8x64xf32>
    %cst_86 = arith.constant 0.000000e+00 : f32
    %180 = vector.broadcast %cst_86 : f32 to vector<8x64xf32>
    %181 = arith.maximumf %179, %180 : vector<8x64xf32>
    %182 = arith.truncf %181 : vector<8x64xf32> to vector<8x64xbf16>
    %c0_87 = arith.constant 0 : index
    %c0_88 = arith.constant 0 : index
    %183 = vector.load %arg21[%c0_87, %c0_88] : memref<64x32xbf16, #tpu.memory_space<vmem>>, vector<64x32xbf16>
    %cst_89 = arith.constant dense<0.000000e+00> : vector<8x32xf32>
    %184 = tpu.matmul %182, %183, %cst_89 {dimension_numbers = #tpu.dot_dimension_numbers<[1], [0], [0], [1], [0, 0, 1, 1], [], []>} : vector<8x64xbf16>, vector<64x32xbf16>, vector<8x32xf32> -> vector<8x32xf32>
    %c0_90 = arith.constant 0 : index
    %c0_91 = arith.constant 0 : index
    %185 = vector.load %arg22[%c0_90, %c0_91] : memref<1x32xf32, #tpu.memory_space<vmem>>, vector<1x32xf32>
    %186 = vector.broadcast %185 : vector<1x32xf32> to vector<8x32xf32>
    %187 = arith.addf %184, %186 : vector<8x32xf32>
    %c0_92 = arith.constant 0 : index
    %c0_93 = arith.constant 0 : index
    %188 = vector.load %arg23[%c0_92, %c0_93] : memref<1x32xf32, #tpu.memory_space<vmem>>, vector<1x32xf32>
    %c0_94 = arith.constant 0 : index
    %c0_95 = arith.constant 0 : index
    %189 = vector.load %arg24[%c0_94, %c0_95] : memref<1x32xf32, #tpu.memory_space<vmem>>, vector<1x32xf32>
    %cst_96 = arith.constant dense<0.000000e+00> : vector<8xf32>
    %190 = vector.multi_reduction <add>, %187, %cst_96 [1] : vector<8x32xf32> to vector<8xf32>
    %191 = vector.shape_cast %190 : vector<8xf32> to vector<8x1xf32>
    %cst_97 = arith.constant 3.200000e+01 : f32
    %192 = vector.broadcast %cst_97 : f32 to vector<8x1xf32>
    %193 = arith.divf %191, %192 : vector<8x1xf32>
    %194 = vector.broadcast %193 : vector<8x1xf32> to vector<8x32xf32>
    %195 = arith.subf %187, %194 : vector<8x32xf32>
    %196 = arith.mulf %195, %195 : vector<8x32xf32>
    %cst_98 = arith.constant dense<0.000000e+00> : vector<8xf32>
    %197 = vector.multi_reduction <add>, %196, %cst_98 [1] : vector<8x32xf32> to vector<8xf32>
    %198 = vector.shape_cast %197 : vector<8xf32> to vector<8x1xf32>
    %cst_99 = arith.constant 3.200000e+01 : f32
    %199 = vector.broadcast %cst_99 : f32 to vector<8x1xf32>
    %200 = arith.divf %198, %199 : vector<8x1xf32>
    %201 = vector.broadcast %188 : vector<1x32xf32> to vector<8x32xf32>
    %202 = arith.mulf %201, %195 : vector<8x32xf32>
    %cst_100 = arith.constant 9.99999996E-13 : f32
    %203 = vector.broadcast %cst_100 : f32 to vector<8x1xf32>
    %204 = arith.addf %200, %203 : vector<8x1xf32>
    %205 = math.rsqrt %204 : vector<8x1xf32>
    %206 = vector.broadcast %205 : vector<8x1xf32> to vector<8x32xf32>
    %207 = arith.mulf %202, %206 : vector<8x32xf32>
    %208 = vector.broadcast %189 : vector<1x32xf32> to vector<8x32xf32>
    %209 = arith.addf %207, %208 : vector<8x32xf32>
    %c0_101 = arith.constant 0 : index
    %c0_102 = arith.constant 0 : index
    %c0_103 = arith.constant 0 : index
    %210 = vector.load %arg25[%c0_101, %c0_102, %c0_103] : memref<1x8x32xf32, #tpu.memory_space<vmem>>, vector<1x8x32xf32>
    %211 = vector.shape_cast %210 : vector<1x8x32xf32> to vector<8x32xf32>
    %212 = vector.shape_cast %209 : vector<8x32xf32> to vector<1x8x32xf32>
    tpu.vector_store %arg25[%c0_101, %c0_102, %c0_103], %212 {strides = array<i32>} : memref<1x8x32xf32, #tpu.memory_space<vmem>>, vector<1x8x32xf32>,
    %c0_104 = arith.constant 0 : index
    %c0_105 = arith.constant 0 : index
    %c0_106 = arith.constant 0 : index
    %213 = vector.load %arg26[%c0_104, %c0_105, %c0_106] : memref<1x8x8xf32, #tpu.memory_space<vmem>>, vector<1x8x8xf32>
    %214 = vector.shape_cast %213 : vector<1x8x8xf32> to vector<8x8xf32>
    %215 = vector.shape_cast %87 : vector<8x8xf32> to vector<1x8x8xf32>
    tpu.vector_store %arg26[%c0_104, %c0_105, %c0_106], %215 {strides = array<i32>} : memref<1x8x8xf32, #tpu.memory_space<vmem>>, vector<1x8x8xf32>,
    %c0_107 = arith.constant 0 : index
    %c0_108 = arith.constant 0 : index
    %c0_109 = arith.constant 0 : index
    %216 = vector.load %arg27[%c0_107, %c0_108, %c0_109] : memref<1x8x16xf32, #tpu.memory_space<vmem>>, vector<1x8x16xf32>
    %217 = vector.shape_cast %216 : vector<1x8x16xf32> to vector<8x16xf32>
    %218 = vector.shape_cast %173 : vector<8x16xf32> to vector<1x8x16xf32>
    tpu.vector_store %arg27[%c0_107, %c0_108, %c0_109], %218 {strides = array<i32>} : memref<1x8x16xf32, #tpu.memory_space<vmem>>, vector<1x8x16xf32>,
    return
  }
  func.func @transform_0(%arg0: i32, %arg1: i32) -> (i32, i32, i32) {
    %c0_i32 = arith.constant 0 : i32
    %c0_i32_0 = arith.constant 0 : i32
    return %arg0, %arg1, %c0_i32 : i32, i32, i32
  }
  func.func @transform_1(%arg0: i32, %arg1: i32) -> (i32, i32, i32, i32) {
    %c0_i32 = arith.constant 0 : i32
    %c0_i32_0 = arith.constant 0 : i32
    %c0_i32_1 = arith.constant 0 : i32
    %c0_i32_2 = arith.constant 0 : i32
    return %arg0, %c0_i32, %c0_i32_0, %c0_i32_1 : i32, i32, i32, i32
  }
  func.func @transform_2(%arg0: i32, %arg1: i32) -> (i32, i32, i32, i32) {
    %c0_i32 = arith.constant 0 : i32
    %c0_i32_0 = arith.constant 0 : i32
    %c0_i32_1 = arith.constant 0 : i32
    %c0_i32_2 = arith.constant 0 : i32
    return %arg0, %c0_i32, %c0_i32_0, %c0_i32_1 : i32, i32, i32, i32
  }
  func.func @transform_3(%arg0: i32, %arg1: i32) -> (i32, i32, i32, i32) {
    %c0_i32 = arith.constant 0 : i32
    %c0_i32_0 = arith.constant 0 : i32
    %c0_i32_1 = arith.constant 0 : i32
    %c0_i32_2 = arith.constant 0 : i32
    return %arg0, %c0_i32, %c0_i32_0, %c0_i32_1 : i32, i32, i32, i32
  }
  func.func @transform_4(%arg0: i32, %arg1: i32) -> (i32, i32, i32, i32) {
    %c0_i32 = arith.constant 0 : i32
    %c0_i32_0 = arith.constant 0 : i32
    %c0_i32_1 = arith.constant 0 : i32
    %c0_i32_2 = arith.constant 0 : i32
    return %arg0, %c0_i32, %c0_i32_0, %c0_i32_1 : i32, i32, i32, i32
  }
  func.func @transform_5(%arg0: i32, %arg1: i32) -> (i32, i32, i32) {
    %c0_i32 = arith.constant 0 : i32
    %c0_i32_0 = arith.constant 0 : i32
    %c0_i32_1 = arith.constant 0 : i32
    %c0_i32_2 = arith.constant 0 : i32
    return %c0_i32, %c0_i32_0, %c0_i32_1 : i32, i32, i32
  }
  func.func @transform_6(%arg0: i32, %arg1: i32) -> (i32, i32, i32) {
    %c0_i32 = arith.constant 0 : i32
    %c0_i32_0 = arith.constant 0 : i32
    %c0_i32_1 = arith.constant 0 : i32
    %c0_i32_2 = arith.constant 0 : i32
    return %c0_i32, %c0_i32_0, %c0_i32_1 : i32, i32, i32
  }
  func.func @transform_7(%arg0: i32, %arg1: i32) -> (i32, i32, i32) {
    %c0_i32 = arith.constant 0 : i32
    %c0_i32_0 = arith.constant 0 : i32
    %c0_i32_1 = arith.constant 0 : i32
    %c0_i32_2 = arith.constant 0 : i32
    return %c0_i32, %c0_i32_0, %c0_i32_1 : i32, i32, i32
  }
  func.func @transform_8(%arg0: i32, %arg1: i32) -> (i32, i32) {
    %c0_i32 = arith.constant 0 : i32
    %c0_i32_0 = arith.constant 0 : i32
    %c0_i32_1 = arith.constant 0 : i32
    return %c0_i32, %c0_i32_0 : i32, i32
  }
  func.func @transform_9(%arg0: i32, %arg1: i32) -> (i32, i32) {
    %c0_i32 = arith.constant 0 : i32
    %c0_i32_0 = arith.constant 0 : i32
    %c0_i32_1 = arith.constant 0 : i32
    return %c0_i32, %c0_i32_0 : i32, i32
  }
  func.func @transform_10(%arg0: i32, %arg1: i32) -> (i32, i32) {
    %c0_i32 = arith.constant 0 : i32
    %c0_i32_0 = arith.constant 0 : i32
    %c0_i32_1 = arith.constant 0 : i32
    return %c0_i32, %c0_i32_0 : i32, i32
  }
  func.func @transform_11(%arg0: i32, %arg1: i32) -> (i32, i32, i32) {
    %c0_i32 = arith.constant 0 : i32
    %c0_i32_0 = arith.constant 0 : i32
    %c0_i32_1 = arith.constant 0 : i32
    %c0_i32_2 = arith.constant 0 : i32
    return %c0_i32, %c0_i32_0, %c0_i32_1 : i32, i32, i32
  }
  func.func @transform_12(%arg0: i32, %arg1: i32) -> (i32, i32, i32) {
    %c0_i32 = arith.constant 0 : i32
    %c0_i32_0 = arith.constant 0 : i32
    %c0_i32_1 = arith.constant 0 : i32
    %c0_i32_2 = arith.constant 0 : i32
    return %c0_i32, %c0_i32_0, %c0_i32_1 : i32, i32, i32
  }
  func.func @transform_13(%arg0: i32, %arg1: i32) -> (i32, i32, i32) {
    %c0_i32 = arith.constant 0 : i32
    %c0_i32_0 = arith.constant 0 : i32
    %c0_i32_1 = arith.constant 0 : i32
    %c0_i32_2 = arith.constant 0 : i32
    return %c0_i32, %c0_i32_0, %c0_i32_1 : i32, i32, i32
  }
  func.func @transform_14(%arg0: i32, %arg1: i32) -> (i32, i32) {
    %c0_i32 = arith.constant 0 : i32
    %c0_i32_0 = arith.constant 0 : i32
    %c0_i32_1 = arith.constant 0 : i32
    return %c0_i32, %c0_i32_0 : i32, i32
  }
  func.func @transform_15(%arg0: i32, %arg1: i32) -> (i32, i32) {
    %c0_i32 = arith.constant 0 : i32
    %c0_i32_0 = arith.constant 0 : i32
    %c0_i32_1 = arith.constant 0 : i32
    return %c0_i32, %c0_i32_0 : i32, i32
  }
  func.func @transform_16(%arg0: i32, %arg1: i32) -> (i32, i32) {
    %c0_i32 = arith.constant 0 : i32
    %c0_i32_0 = arith.constant 0 : i32
    %c0_i32_1 = arith.constant 0 : i32
    return %c0_i32, %c0_i32_0 : i32, i32
  }
  func.func @transform_17(%arg0: i32, %arg1: i32) -> (i32, i32) {
    %c0_i32 = arith.constant 0 : i32
    %c0_i32_0 = arith.constant 0 : i32
    %c0_i32_1 = arith.constant 0 : i32
    return %c0_i32, %c0_i32_0 : i32, i32
  }
  func.func @transform_18(%arg0: i32, %arg1: i32) -> (i32, i32) {
    %c0_i32 = arith.constant 0 : i32
    %c0_i32_0 = arith.constant 0 : i32
    %c0_i32_1 = arith.constant 0 : i32
    return %c0_i32, %c0_i32_0 : i32, i32
  }
  func.func @transform_19(%arg0: i32, %arg1: i32) -> (i32, i32) {
    %c0_i32 = arith.constant 0 : i32
    %c0_i32_0 = arith.constant 0 : i32
    %c0_i32_1 = arith.constant 0 : i32
    return %c0_i32, %c0_i32_0 : i32, i32
  }
  func.func @transform_20(%arg0: i32, %arg1: i32) -> (i32, i32) {
    %c0_i32 = arith.constant 0 : i32
    %c0_i32_0 = arith.constant 0 : i32
    %c0_i32_1 = arith.constant 0 : i32
    return %c0_i32, %c0_i32_0 : i32, i32
  }
  func.func @transform_21(%arg0: i32, %arg1: i32) -> (i32, i32) {
    %c0_i32 = arith.constant 0 : i32
    %c0_i32_0 = arith.constant 0 : i32
    %c0_i32_1 = arith.constant 0 : i32
    return %c0_i32, %c0_i32_0 : i32, i32
  }
  func.func @transform_22(%arg0: i32, %arg1: i32) -> (i32, i32) {
    %c0_i32 = arith.constant 0 : i32
    %c0_i32_0 = arith.constant 0 : i32
    %c0_i32_1 = arith.constant 0 : i32
    return %c0_i32, %c0_i32_0 : i32, i32
  }
  func.func @transform_23(%arg0: i32, %arg1: i32) -> (i32, i32, i32) {
    %c0_i32 = arith.constant 0 : i32
    %c0_i32_0 = arith.constant 0 : i32
    return %arg0, %arg1, %c0_i32 : i32, i32, i32
  }
  func.func @transform_24(%arg0: i32, %arg1: i32) -> (i32, i32, i32) {
    %c0_i32 = arith.constant 0 : i32
    %c0_i32_0 = arith.constant 0 : i32
    return %arg0, %arg1, %c0_i32 : i32, i32, i32
  }
  func.func @transform_25(%arg0: i32, %arg1: i32) -> (i32, i32, i32) {
    %c0_i32 = arith.constant 0 : i32
    %c0_i32_0 = arith.constant 0 : i32
    return %arg0, %arg1, %c0_i32 : i32, i32, i32
  }
}

module attributes {stable_mosaic.version = 11 : i64} {
  func.func @_decoder_layer_kernel(%arg0: i32, %arg1: i32, %arg2: memref<1x8x32xf32, #tpu.memory_space<vmem>>, %arg3: memref<1x4x8x8xbf16, #tpu.memory_space<vmem>>, %arg4: memref<1x4x8x8xbf16, #tpu.memory_space<vmem>>, %arg5: memref<1x4x16x8xbf16, #tpu.memory_space<vmem>>, %arg6: memref<1x4x16x8xbf16, #tpu.memory_space<vmem>>, %arg7: memref<4x32x8xbf16, #tpu.memory_space<vmem>>, %arg8: memref<4x1x8xf32, #tpu.memory_space<vmem>>, %arg9: memref<4x8x32xbf16, #tpu.memory_space<vmem>>, %arg10: memref<1x32xf32, #tpu.memory_space<vmem>>, %arg11: memref<1x32xf32, #tpu.memory_space<vmem>>, %arg12: memref<1x32xf32, #tpu.memory_space<vmem>>, %arg13: memref<4x32x8xbf16, #tpu.memory_space<vmem>>, %arg14: memref<4x1x8xf32, #tpu.memory_space<vmem>>, %arg15: memref<4x8x32xbf16, #tpu.memory_space<vmem>>, %arg16: memref<1x32xf32, #tpu.memory_space<vmem>>, %arg17: memref<1x32xf32, #tpu.memory_space<vmem>>, %arg18: memref<1x32xf32, #tpu.memory_space<vmem>>, %arg19: memref<32x64xbf16, #tpu.memory_space<vmem>>, %arg20: memref<1x64xf32, #tpu.memory_space<vmem>>, %arg21: memref<64x32xbf16, #tpu.memory_space<vmem>>, %arg22: memref<1x32xf32, #tpu.memory_space<vmem>>, %arg23: memref<1x32xf32, #tpu.memory_space<vmem>>, %arg24: memref<1x32xf32, #tpu.memory_space<vmem>>, %arg25: memref<1x8x32xf32, #tpu.memory_space<vmem>>, %arg26: memref<1x8x8xf32, #tpu.memory_space<vmem>>, %arg27: memref<1x8x16xf32, #tpu.memory_space<vmem>>) attributes {dimension_semantics = [#tpu.dimension_semantics<parallel>, #tpu.dimension_semantics<parallel>], iteration_bounds = array<i64: 2, 1>, scalar_prefetch = 0 : i64, scratch_operands = 0 : i64, tpu.core_type = #tpu.core_type<tc>, window_params = [{transform_indices = @transform_0, window_bounds = array<i64: 1, 8, 32>}, {transform_indices = @transform_1, window_bounds = array<i64: 1, 4, 8, 8>}, {transform_indices = @transform_2, window_bounds = array<i64: 1, 4, 8, 8>}, {transform_indices = @transform_3, window_bounds = array<i64: 1, 4, 16, 8>}, {transform_indices = @transform_4, window_bounds = array<i64: 1, 4, 16, 8>}, {pipeline_mode = #tpu.pipeline_mode<synchronous>, transform_indices = @transform_5, window_bounds = array<i64: 4, 32, 8>}, {pipeline_mode = #tpu.pipeline_mode<synchronous>, transform_indices = @transform_6, window_bounds = array<i64: 4, 1, 8>}, {pipeline_mode = #tpu.pipeline_mode<synchronous>, transform_indices = @transform_7, window_bounds = array<i64: 4, 8, 32>}, {pipeline_mode = #tpu.pipeline_mode<synchronous>, transform_indices = @transform_8, window_bounds = array<i64: 1, 32>}, {pipeline_mode = #tpu.pipeline_mode<synchronous>, transform_indices = @transform_9, window_bounds = array<i64: 1, 32>}, {pipeline_mode = #tpu.pipeline_mode<synchronous>, transform_indices = @transform_10, window_bounds = array<i64: 1, 32>}, {pipeline_mode = #tpu.pipeline_mode<synchronous>, transform_indices = @transform_11, window_bounds = array<i64: 4, 32, 8>}, {pipeline_mode = #tpu.pipeline_mode<synchronous>, transform_indices = @transform_12, window_bounds = array<i64: 4, 1, 8>}, {pipeline_mode = #tpu.pipeline_mode<synchronous>, transform_indices = @transform_13, window_bounds = array<i64: 4, 8, 32>}, {pipeline_mode = #tpu.pipeline_mode<synchronous>, transform_indices = @transform_14, window_bounds = array<i64: 1, 32>}, {pipeline_mode = #tpu.pipeline_mode<synchronous>, transform_indices = @transform_15, window_bounds = array<i64: 1, 32>}, {pipeline_mode = #tpu.pipeline_mode<synchronous>, transform_indices = @transform_16, window_bounds = array<i64: 1, 32>}, {pipeline_mode = #tpu.pipeline_mode<synchronous>, transform_indices = @transform_17, window_bounds = array<i64: 32, 64>}, {pipeline_mode = #tpu.pipeline_mode<synchronous>, transform_indices = @transform_18, window_bounds = array<i64: 1, 64>}, {pipeline_mode = #tpu.pipeline_mode<synchronous>, transform_indices = @transform_19, window_bounds = array<i64: 64, 32>}, {pipeline_mode = #tpu.pipeline_mode<synchronous>, transform_indices = @transform_20, window_bounds = array<i64: 1, 32>}, {pipeline_mode = #tpu.pipeline_mode<synchronous>, transform_indices = @transform_21, window_bounds = array<i64: 1, 32>}, {pipeline_mode = #tpu.pipeline_mode<synchronous>, transform_indices = @transform_22, window_bounds = array<i64: 1, 32>}, {transform_indices = @transform_23, window_bounds = array<i64: 1, 8, 32>}, {transform_indices = @transform_24, window_bounds = array<i64: 1, 8, 8>}, {transform_indices = @transform_25, window_bounds = array<i64: 1, 8, 16>}]} {
    %c0 = arith.constant 0 : index
    %c0_0 = arith.constant 0 : index
    %c0_1 = arith.constant 0 : index
    %0 = vector.load %arg2[%c0, %c0_0, %c0_1] : memref<1x8x32xf32, #tpu.memory_space<vmem>>, vector<1x8x32xf32>
    %1 = vector.shape_cast %0 : vector<1x8x32xf32> to vector<8x32xf32>
    %2 = arith.truncf %1 : vector<8x32xf32> to vector<8x32xbf16>
    %c0_2 = arith.constant 0 : index
    %c0_3 = arith.constant 0 : index
    %c0_4 = arith.constant 0 : index
    %c0_5 = arith.constant 0 : index
    %3 = vector.load %arg3[%c0_2, %c0_3, %c0_4, %c0_5] : memref<1x4x8x8xbf16, #tpu.memory_space<vmem>>, vector<1x4x8x8xbf16>
    %4 = vector.shape_cast %3 : vector<1x4x8x8xbf16> to vector<4x8x8xbf16>
    %c0_6 = arith.constant 0 : index
    %c0_7 = arith.constant 0 : index
    %c0_8 = arith.constant 0 : index
    %c0_9 = arith.constant 0 : index
    %5 = vector.load %arg4[%c0_6, %c0_7, %c0_8, %c0_9] : memref<1x4x8x8xbf16, #tpu.memory_space<vmem>>, vector<1x4x8x8xbf16>
    %6 = vector.shape_cast %5 : vector<1x4x8x8xbf16> to vector<4x8x8xbf16>
    %c0_10 = arith.constant 0 : index
    %c0_11 = arith.constant 0 : index
    %c0_12 = arith.constant 0 : index
    %7 = vector.load %arg7[%c0_10, %c0_11, %c0_12] : memref<4x32x8xbf16, #tpu.memory_space<vmem>>, vector<4x32x8xbf16>
    %c0_13 = arith.constant 0 : index
    %c0_14 = arith.constant 0 : index
    %c0_15 = arith.constant 0 : index
    %8 = vector.load %arg8[%c0_13, %c0_14, %c0_15] : memref<4x1x8xf32, #tpu.memory_space<vmem>>, vector<4x1x8xf32>
    %c0_16 = arith.constant 0 : index
    %c0_17 = arith.constant 0 : index
    %c0_18 = arith.constant 0 : index
    %9 = vector.load %arg9[%c0_16, %c0_17, %c0_18] : memref<4x8x32xbf16, #tpu.memory_space<vmem>>, vector<4x8x32xbf16>
    %c0_19 = arith.constant 0 : index
    %c0_20 = arith.constant 0 : index
    %10 = vector.load %arg10[%c0_19, %c0_20] : memref<1x32xf32, #tpu.memory_space<vmem>>, vector<1x32xf32>
    %c0_21 = arith.constant 0 : index
    %c0_22 = arith.constant 0 : index
    %11 = vector.load %arg11[%c0_21, %c0_22] : memref<1x32xf32, #tpu.memory_space<vmem>>, vector<1x32xf32>
    %c0_23 = arith.constant 0 : index
    %c0_24 = arith.constant 0 : index
    %12 = vector.load %arg12[%c0_23, %c0_24] : memref<1x32xf32, #tpu.memory_space<vmem>>, vector<1x32xf32>
    %13 = vector.shape_cast %2 : vector<8x32xbf16> to vector<1x8x32xbf16>
    %14 = vector.shape_cast %13 : vector<1x8x32xbf16> to vector<1x8x32xbf16>
    %15 = vector.broadcast %14 : vector<1x8x32xbf16> to vector<4x8x32xbf16>
    "tpu.trace_start"() <{level = 10 : i32, message = "hqd,hdc->hqc"}> : () -> ()
    %cst = arith.constant dense<0.000000e+00> : vector<4x8x8xf32>
    %16 = tpu.matmul %15, %7, %cst {dimension_numbers = #tpu.dot_dimension_numbers<[2], [1], [1], [2], [0, 0, 0, 1, 1, 2], [0], [0]>} : vector<4x8x32xbf16>, vector<4x32x8xbf16>, vector<4x8x8xf32> -> vector<4x8x8xf32>
    "tpu.trace_stop"() : () -> ()
    %17 = vector.broadcast %8 : vector<4x1x8xf32> to vector<4x8x8xf32>
    %18 = arith.addf %16, %17 : vector<4x8x8xf32>
    %cst_25 = arith.constant 0.353553385 : f32
    %19 = vector.broadcast %cst_25 : f32 to vector<4x8x8xf32>
    %20 = arith.mulf %18, %19 : vector<4x8x8xf32>
    %21 = arith.truncf %20 : vector<4x8x8xf32> to vector<4x8x8xbf16>
    "tpu.trace_start"() <{level = 10 : i32, message = "hqc,hkc->hqk"}> : () -> ()
    %cst_26 = arith.constant dense<0.000000e+00> : vector<4x8x8xf32>
    %22 = tpu.matmul %21, %4, %cst_26 {dimension_numbers = #tpu.dot_dimension_numbers<[2], [2], [1], [1], [0, 0, 0, 1, 1, 1], [0], [0]>} : vector<4x8x8xbf16>, vector<4x8x8xbf16>, vector<4x8x8xf32> -> vector<4x8x8xf32>
    "tpu.trace_stop"() : () -> ()
    %cst_27 = arith.constant dense<0xFF800000> : vector<4x8xf32>
    %23 = vector.multi_reduction <maximumf>, %22, %cst_27 [2] : vector<4x8x8xf32> to vector<4x8xf32>
    %24 = vector.shape_cast %23 : vector<4x8xf32> to vector<4x8x1xf32>
    %25 = vector.broadcast %24 : vector<4x8x1xf32> to vector<4x8x8xf32>
    %26 = arith.subf %22, %25 : vector<4x8x8xf32>
    %27 = math.exp %26 : vector<4x8x8xf32>
    %cst_28 = arith.constant dense<0.000000e+00> : vector<4x8xf32>
    %28 = vector.multi_reduction <add>, %27, %cst_28 [2] : vector<4x8x8xf32> to vector<4x8xf32>
    %29 = vector.shape_cast %28 : vector<4x8xf32> to vector<4x8x1xf32>
    %30 = tpu.reciprocal %29 {approx = true} : vector<4x8x1xf32> -> vector<4x8x1xf32>
    %31 = vector.broadcast %30 : vector<4x8x1xf32> to vector<4x8x8xf32>
    %32 = arith.mulf %27, %31 : vector<4x8x8xf32>
    %33 = arith.truncf %32 : vector<4x8x8xf32> to vector<4x8x8xbf16>
    "tpu.trace_start"() <{level = 10 : i32, message = "hqk,hkv->hqv"}> : () -> ()
    %cst_29 = arith.constant dense<0.000000e+00> : vector<4x8x8xf32>
    %34 = tpu.matmul %33, %6, %cst_29 {dimension_numbers = #tpu.dot_dimension_numbers<[2], [1], [1], [2], [0, 0, 0, 1, 1, 2], [0], [0]>} : vector<4x8x8xbf16>, vector<4x8x8xbf16>, vector<4x8x8xf32> -> vector<4x8x8xf32>
    "tpu.trace_stop"() : () -> ()
    %35 = vector.broadcast %10 : vector<1x32xf32> to vector<8x32xf32>
    %36 = arith.addf %35, %1 : vector<8x32xf32>
    %37 = vector.extract_strided_slice %34 {offsets = [0, 0, 0], sizes = [1, 8, 8], strides = [1, 1, 1]} : vector<4x8x8xf32> to vector<1x8x8xf32>
    %38 = vector.shape_cast %37 : vector<1x8x8xf32> to vector<8x8xf32>
    %39 = arith.truncf %38 : vector<8x8xf32> to vector<8x8xbf16>
    %40 = vector.extract_strided_slice %9 {offsets = [0, 0, 0], sizes = [1, 8, 32], strides = [1, 1, 1]} : vector<4x8x32xbf16> to vector<1x8x32xbf16>
    %41 = vector.shape_cast %40 : vector<1x8x32xbf16> to vector<8x32xbf16>
    %cst_30 = arith.constant dense<0.000000e+00> : vector<8x32xf32>
    %42 = tpu.matmul %39, %41, %cst_30 {dimension_numbers = #tpu.dot_dimension_numbers<[1], [0], [0], [1], [0, 0, 1, 1], [], []>} : vector<8x8xbf16>, vector<8x32xbf16>, vector<8x32xf32> -> vector<8x32xf32>
    %43 = arith.addf %36, %42 : vector<8x32xf32>
    %44 = vector.extract_strided_slice %34 {offsets = [1, 0, 0], sizes = [1, 8, 8], strides = [1, 1, 1]} : vector<4x8x8xf32> to vector<1x8x8xf32>
    %45 = vector.shape_cast %44 : vector<1x8x8xf32> to vector<8x8xf32>
    %46 = arith.truncf %45 : vector<8x8xf32> to vector<8x8xbf16>
    %47 = vector.extract_strided_slice %9 {offsets = [1, 0, 0], sizes = [1, 8, 32], strides = [1, 1, 1]} : vector<4x8x32xbf16> to vector<1x8x32xbf16>
    %48 = vector.shape_cast %47 : vector<1x8x32xbf16> to vector<8x32xbf16>
    %cst_31 = arith.constant dense<0.000000e+00> : vector<8x32xf32>
    %49 = tpu.matmul %46, %48, %cst_31 {dimension_numbers = #tpu.dot_dimension_numbers<[1], [0], [0], [1], [0, 0, 1, 1], [], []>} : vector<8x8xbf16>, vector<8x32xbf16>, vector<8x32xf32> -> vector<8x32xf32>
    %50 = arith.addf %43, %49 : vector<8x32xf32>
    %51 = vector.extract_strided_slice %34 {offsets = [2, 0, 0], sizes = [1, 8, 8], strides = [1, 1, 1]} : vector<4x8x8xf32> to vector<1x8x8xf32>
    %52 = vector.shape_cast %51 : vector<1x8x8xf32> to vector<8x8xf32>
    %53 = arith.truncf %52 : vector<8x8xf32> to vector<8x8xbf16>
    %54 = vector.extract_strided_slice %9 {offsets = [2, 0, 0], sizes = [1, 8, 32], strides = [1, 1, 1]} : vector<4x8x32xbf16> to vector<1x8x32xbf16>
    %55 = vector.shape_cast %54 : vector<1x8x32xbf16> to vector<8x32xbf16>
    %cst_32 = arith.constant dense<0.000000e+00> : vector<8x32xf32>
    %56 = tpu.matmul %53, %55, %cst_32 {dimension_numbers = #tpu.dot_dimension_numbers<[1], [0], [0], [1], [0, 0, 1, 1], [], []>} : vector<8x8xbf16>, vector<8x32xbf16>, vector<8x32xf32> -> vector<8x32xf32>
    %57 = arith.addf %50, %56 : vector<8x32xf32>
    %58 = vector.extract_strided_slice %34 {offsets = [3, 0, 0], sizes = [1, 8, 8], strides = [1, 1, 1]} : vector<4x8x8xf32> to vector<1x8x8xf32>
    %59 = vector.shape_cast %58 : vector<1x8x8xf32> to vector<8x8xf32>
    %60 = arith.truncf %59 : vector<8x8xf32> to vector<8x8xbf16>
    %61 = vector.extract_strided_slice %9 {offsets = [3, 0, 0], sizes = [1, 8, 32], strides = [1, 1, 1]} : vector<4x8x32xbf16> to vector<1x8x32xbf16>
    %62 = vector.shape_cast %61 : vector<1x8x32xbf16> to vector<8x32xbf16>
    %cst_33 = arith.constant dense<0.000000e+00> : vector<8x32xf32>
    %63 = tpu.matmul %60, %62, %cst_33 {dimension_numbers = #tpu.dot_dimension_numbers<[1], [0], [0], [1], [0, 0, 1, 1], [], []>} : vector<8x8xbf16>, vector<8x32xbf16>, vector<8x32xf32> -> vector<8x32xf32>
    %64 = arith.addf %57, %63 : vector<8x32xf32>
    %cst_34 = arith.constant dense<0.000000e+00> : vector<8xf32>
    %65 = vector.multi_reduction <add>, %64, %cst_34 [1] : vector<8x32xf32> to vector<8xf32>
    %66 = vector.shape_cast %65 : vector<8xf32> to vector<8x1xf32>
    %cst_35 = arith.constant 3.200000e+01 : f32
    %67 = vector.broadcast %cst_35 : f32 to vector<8x1xf32>
    %68 = arith.divf %66, %67 : vector<8x1xf32>
    %69 = vector.broadcast %68 : vector<8x1xf32> to vector<8x32xf32>
    %70 = arith.subf %64, %69 : vector<8x32xf32>
    %71 = arith.mulf %70, %70 : vector<8x32xf32>
    %cst_36 = arith.constant dense<0.000000e+00> : vector<8xf32>
    %72 = vector.multi_reduction <add>, %71, %cst_36 [1] : vector<8x32xf32> to vector<8xf32>
    %73 = vector.shape_cast %72 : vector<8xf32> to vector<8x1xf32>
    %cst_37 = arith.constant 3.200000e+01 : f32
    %74 = vector.broadcast %cst_37 : f32 to vector<8x1xf32>
    %75 = arith.divf %73, %74 : vector<8x1xf32>
    %76 = vector.broadcast %11 : vector<1x32xf32> to vector<8x32xf32>
    %77 = arith.mulf %76, %70 : vector<8x32xf32>
    %cst_38 = arith.constant 9.99999996E-13 : f32
    %78 = vector.broadcast %cst_38 : f32 to vector<8x1xf32>
    %79 = arith.addf %75, %78 : vector<8x1xf32>
    %80 = math.rsqrt %79 : vector<8x1xf32>
    %81 = vector.broadcast %80 : vector<8x1xf32> to vector<8x32xf32>
    %82 = arith.mulf %77, %81 : vector<8x32xf32>
    %83 = vector.broadcast %12 : vector<1x32xf32> to vector<8x32xf32>
    %84 = arith.addf %82, %83 : vector<8x32xf32>
    %cst_39 = arith.constant dense<0.000000e+00> : vector<8x8xf32>
    %85 = vector.multi_reduction <add>, %32, %cst_39 [0] : vector<4x8x8xf32> to vector<8x8xf32>
    %cst_40 = arith.constant 4.000000e+00 : f32
    %86 = vector.broadcast %cst_40 : f32 to vector<8x8xf32>
    %87 = arith.divf %85, %86 : vector<8x8xf32>
    %88 = arith.truncf %84 : vector<8x32xf32> to vector<8x32xbf16>
    %c0_41 = arith.constant 0 : index
    %c0_42 = arith.constant 0 : index
    %c0_43 = arith.constant 0 : index
    %c0_44 = arith.constant 0 : index
    %89 = vector.load %arg5[%c0_41, %c0_42, %c0_43, %c0_44] : memref<1x4x16x8xbf16, #tpu.memory_space<vmem>>, vector<1x4x16x8xbf16>
    %90 = vector.shape_cast %89 : vector<1x4x16x8xbf16> to vector<4x16x8xbf16>
    %c0_45 = arith.constant 0 : index
    %c0_46 = arith.constant 0 : index
    %c0_47 = arith.constant 0 : index
    %c0_48 = arith.constant 0 : index
    %91 = vector.load %arg6[%c0_45, %c0_46, %c0_47, %c0_48] : memref<1x4x16x8xbf16, #tpu.memory_space<vmem>>, vector<1x4x16x8xbf16>
    %92 = vector.shape_cast %91 : vector<1x4x16x8xbf16> to vector<4x16x8xbf16>
    %c0_49 = arith.constant 0 : index
    %c0_50 = arith.constant 0 : index
    %c0_51 = arith.constant 0 : index
    %93 = vector.load %arg13[%c0_49, %c0_50, %c0_51] : memref<4x32x8xbf16, #tpu.memory_space<vmem>>, vector<4x32x8xbf16>
    %c0_52 = arith.constant 0 : index
    %c0_53 = arith.constant 0 : index
    %c0_54 = arith.constant 0 : index
    %94 = vector.load %arg14[%c0_52, %c0_53, %c0_54] : memref<4x1x8xf32, #tpu.memory_space<vmem>>, vector<4x1x8xf32>
    %c0_55 = arith.constant 0 : index
    %c0_56 = arith.constant 0 : index
    %c0_57 = arith.constant 0 : index
    %95 = vector.load %arg15[%c0_55, %c0_56, %c0_57] : memref<4x8x32xbf16, #tpu.memory_space<vmem>>, vector<4x8x32xbf16>
    %c0_58 = arith.constant 0 : index
    %c0_59 = arith.constant 0 : index
    %96 = vector.load %arg16[%c0_58, %c0_59] : memref<1x32xf32, #tpu.memory_space<vmem>>, vector<1x32xf32>
    %c0_60 = arith.constant 0 : index
    %c0_61 = arith.constant 0 : index
    %97 = vector.load %arg17[%c0_60, %c0_61] : memref<1x32xf32, #tpu.memory_space<vmem>>, vector<1x32xf32>
    %c0_62 = arith.constant 0 : index
    %c0_63 = arith.constant 0 : index
    %98 = vector.load %arg18[%c0_62, %c0_63] : memref<1x32xf32, #tpu.memory_space<vmem>>, vector<1x32xf32>
    %99 = vector.shape_cast %88 : vector<8x32xbf16> to vector<1x8x32xbf16>
    %100 = vector.shape_cast %99 : vector<1x8x32xbf16> to vector<1x8x32xbf16>
    %101 = vector.broadcast %100 : vector<1x8x32xbf16> to vector<4x8x32xbf16>
    "tpu.trace_start"() <{level = 10 : i32, message = "hqd,hdc->hqc"}> : () -> ()
    %cst_64 = arith.constant dense<0.000000e+00> : vector<4x8x8xf32>
    %102 = tpu.matmul %101, %93, %cst_64 {dimension_numbers = #tpu.dot_dimension_numbers<[2], [1], [1], [2], [0, 0, 0, 1, 1, 2], [0], [0]>} : vector<4x8x32xbf16>, vector<4x32x8xbf16>, vector<4x8x8xf32> -> vector<4x8x8xf32>
    "tpu.trace_stop"() : () -> ()
    %103 = vector.broadcast %94 : vector<4x1x8xf32> to vector<4x8x8xf32>
    %104 = arith.addf %102, %103 : vector<4x8x8xf32>
    %cst_65 = arith.constant 0.353553385 : f32
    %105 = vector.broadcast %cst_65 : f32 to vector<4x8x8xf32>
    %106 = arith.mulf %104, %105 : vector<4x8x8xf32>
    %107 = arith.truncf %106 : vector<4x8x8xf32> to vector<4x8x8xbf16>
    "tpu.trace_start"() <{level = 10 : i32, message = "hqc,hkc->hqk"}> : () -> ()
    %cst_66 = arith.constant dense<0.000000e+00> : vector<4x8x16xf32>
    %108 = tpu.matmul %107, %90, %cst_66 {dimension_numbers = #tpu.dot_dimension_numbers<[2], [2], [1], [1], [0, 0, 0, 1, 1, 1], [0], [0]>} : vector<4x8x8xbf16>, vector<4x16x8xbf16>, vector<4x8x16xf32> -> vector<4x8x16xf32>
    "tpu.trace_stop"() : () -> ()
    %cst_67 = arith.constant dense<0xFF800000> : vector<4x8xf32>
    %109 = vector.multi_reduction <maximumf>, %108, %cst_67 [2] : vector<4x8x16xf32> to vector<4x8xf32>
    %110 = vector.shape_cast %109 : vector<4x8xf32> to vector<4x8x1xf32>
    %111 = vector.broadcast %110 : vector<4x8x1xf32> to vector<4x8x16xf32>
    %112 = arith.subf %108, %111 : vector<4x8x16xf32>
    %113 = math.exp %112 : vector<4x8x16xf32>
    %cst_68 = arith.constant dense<0.000000e+00> : vector<4x8xf32>
    %114 = vector.multi_reduction <add>, %113, %cst_68 [2] : vector<4x8x16xf32> to vector<4x8xf32>
    %115 = vector.shape_cast %114 : vector<4x8xf32> to vector<4x8x1xf32>
    %116 = tpu.reciprocal %115 {approx = true} : vector<4x8x1xf32> -> vector<4x8x1xf32>
    %117 = vector.broadcast %116 : vector<4x8x1xf32> to vector<4x8x16xf32>
    %118 = arith.mulf %113, %117 : vector<4x8x16xf32>
    %119 = arith.truncf %118 : vector<4x8x16xf32> to vector<4x8x16xbf16>
    "tpu.trace_start"() <{level = 10 : i32, message = "hqk,hkv->hqv"}> : () -> ()
    %cst_69 = arith.constant dense<0.000000e+00> : vector<4x8x8xf32>
    %120 = tpu.matmul %119, %92, %cst_69 {dimension_numbers = #tpu.dot_dimension_numbers<[2], [1], [1], [2], [0, 0, 0, 1, 1, 2], [0], [0]>} : vector<4x8x16xbf16>, vector<4x16x8xbf16>, vector<4x8x8xf32> -> vector<4x8x8xf32>
    "tpu.trace_stop"() : () -> ()
    %121 = vector.broadcast %96 : vector<1x32xf32> to vector<8x32xf32>
    %122 = arith.addf %121, %84 : vector<8x32xf32>
    %123 = vector.extract_strided_slice %120 {offsets = [0, 0, 0], sizes = [1, 8, 8], strides = [1, 1, 1]} : vector<4x8x8xf32> to vector<1x8x8xf32>
    %124 = vector.shape_cast %123 : vector<1x8x8xf32> to vector<8x8xf32>
    %125 = arith.truncf %124 : vector<8x8xf32> to vector<8x8xbf16>
    %126 = vector.extract_strided_slice %95 {offsets = [0, 0, 0], sizes = [1, 8, 32], strides = [1, 1, 1]} : vector<4x8x32xbf16> to vector<1x8x32xbf16>
    %127 = vector.shape_cast %126 : vector<1x8x32xbf16> to vector<8x32xbf16>
    %cst_70 = arith.constant dense<0.000000e+00> : vector<8x32xf32>
    %128 = tpu.matmul %125, %127, %cst_70 {dimension_numbers = #tpu.dot_dimension_numbers<[1], [0], [0], [1], [0, 0, 1, 1], [], []>} : vector<8x8xbf16>, vector<8x32xbf16>, vector<8x32xf32> -> vector<8x32xf32>
    %129 = arith.addf %122, %128 : vector<8x32xf32>
    %130 = vector.extract_strided_slice %120 {offsets = [1, 0, 0], sizes = [1, 8, 8], strides = [1, 1, 1]} : vector<4x8x8xf32> to vector<1x8x8xf32>
    %131 = vector.shape_cast %130 : vector<1x8x8xf32> to vector<8x8xf32>
    %132 = arith.truncf %131 : vector<8x8xf32> to vector<8x8xbf16>
    %133 = vector.extract_strided_slice %95 {offsets = [1, 0, 0], sizes = [1, 8, 32], strides = [1, 1, 1]} : vector<4x8x32xbf16> to vector<1x8x32xbf16>
    %134 = vector.shape_cast %133 : vector<1x8x32xbf16> to vector<8x32xbf16>
    %cst_71 = arith.constant dense<0.000000e+00> : vector<8x32xf32>
    %135 = tpu.matmul %132, %134, %cst_71 {dimension_numbers = #tpu.dot_dimension_numbers<[1], [0], [0], [1], [0, 0, 1, 1], [], []>} : vector<8x8xbf16>, vector<8x32xbf16>, vector<8x32xf32> -> vector<8x32xf32>
    %136 = arith.addf %129, %135 : vector<8x32xf32>
    %137 = vector.extract_strided_slice %120 {offsets = [2, 0, 0], sizes = [1, 8, 8], strides = [1, 1, 1]} : vector<4x8x8xf32> to vector<1x8x8xf32>
    %138 = vector.shape_cast %137 : vector<1x8x8xf32> to vector<8x8xf32>
    %139 = arith.truncf %138 : vector<8x8xf32> to vector<8x8xbf16>
    %140 = vector.extract_strided_slice %95 {offsets = [2, 0, 0], sizes = [1, 8, 32], strides = [1, 1, 1]} : vector<4x8x32xbf16> to vector<1x8x32xbf16>
    %141 = vector.shape_cast %140 : vector<1x8x32xbf16> to vector<8x32xbf16>
    %cst_72 = arith.constant dense<0.000000e+00> : vector<8x32xf32>
    %142 = tpu.matmul %139, %141, %cst_72 {dimension_numbers = #tpu.dot_dimension_numbers<[1], [0], [0], [1], [0, 0, 1, 1], [], []>} : vector<8x8xbf16>, vector<8x32xbf16>, vector<8x32xf32> -> vector<8x32xf32>
    %143 = arith.addf %136, %142 : vector<8x32xf32>
    %144 = vector.extract_strided_slice %120 {offsets = [3, 0, 0], sizes = [1, 8, 8], strides = [1, 1, 1]} : vector<4x8x8xf32> to vector<1x8x8xf32>
    %145 = vector.shape_cast %144 : vector<1x8x8xf32> to vector<8x8xf32>
    %146 = arith.truncf %145 : vector<8x8xf32> to vector<8x8xbf16>
    %147 = vector.extract_strided_slice %95 {offsets = [3, 0, 0], sizes = [1, 8, 32], strides = [1, 1, 1]} : vector<4x8x32xbf16> to vector<1x8x32xbf16>
    %148 = vector.shape_cast %147 : vector<1x8x32xbf16> to vector<8x32xbf16>
    %cst_73 = arith.constant dense<0.000000e+00> : vector<8x32xf32>
    %149 = tpu.matmul %146, %148, %cst_73 {dimension_numbers = #tpu.dot_dimension_numbers<[1], [0], [0], [1], [0, 0, 1, 1], [], []>} : vector<8x8xbf16>, vector<8x32xbf16>, vector<8x32xf32> -> vector<8x32xf32>
    %150 = arith.addf %143, %149 : vector<8x32xf32>
    %cst_74 = arith.constant dense<0.000000e+00> : vector<8xf32>
    %151 = vector.multi_reduction <add>, %150, %cst_74 [1] : vector<8x32xf32> to vector<8xf32>
    %152 = vector.shape_cast %151 : vector<8xf32> to vector<8x1xf32>
    %cst_75 = arith.constant 3.200000e+01 : f32
    %153 = vector.broadcast %cst_75 : f32 to vector<8x1xf32>
    %154 = arith.divf %152, %153 : vector<8x1xf32>
    %155 = vector.broadcast %154 : vector<8x1xf32> to vector<8x32xf32>
    %156 = arith.subf %150, %155 : vector<8x32xf32>
    %157 = arith.mulf %156, %156 : vector<8x32xf32>
    %cst_76 = arith.constant dense<0.000000e+00> : vector<8xf32>
    %158 = vector.multi_reduction <add>, %157, %cst_76 [1] : vector<8x32xf32> to vector<8xf32>
    %159 = vector.shape_cast %158 : vector<8xf32> to vector<8x1xf32>
    %cst_77 = arith.constant 3.200000e+01 : f32
    %160 = vector.broadcast %cst_77 : f32 to vector<8x1xf32>
    %161 = arith.divf %159, %160 : vector<8x1xf32>
    %162 = vector.broadcast %97 : vector<1x32xf32> to vector<8x32xf32>
    %163 = arith.mulf %162, %156 : vector<8x32xf32>
    %cst_78 = arith.constant 9.99999996E-13 : f32
    %164 = vector.broadcast %cst_78 : f32 to vector<8x1xf32>
    %165 = arith.addf %161, %164 : vector<8x1xf32>
    %166 = math.rsqrt %165 : vector<8x1xf32>
    %167 = vector.broadcast %166 : vector<8x1xf32> to vector<8x32xf32>
    %168 = arith.mulf %163, %167 : vector<8x32xf32>
    %169 = vector.broadcast %98 : vector<1x32xf32> to vector<8x32xf32>
    %170 = arith.addf %168, %169 : vector<8x32xf32>
    %cst_79 = arith.constant dense<0.000000e+00> : vector<8x16xf32>
    %171 = vector.multi_reduction <add>, %118, %cst_79 [0] : vector<4x8x16xf32> to vector<8x16xf32>
    %cst_80 = arith.constant 4.000000e+00 : f32
    %172 = vector.broadcast %cst_80 : f32 to vector<8x16xf32>
    %173 = arith.divf %171, %172 : vector<8x16xf32>
    %174 = arith.truncf %170 : vector<8x32xf32> to vector<8x32xbf16>
    %c0_81 = arith.constant 0 : index
    %c0_82 = arith.constant 0 : index
    %175 = vector.load %arg19[%c0_81, %c0_82] : memref<32x64xbf16, #tpu.memory_space<vmem>>, vector<32x64xbf16>
    %cst_83 = arith.constant dense<0.000000e+00> : vector<8x64xf32>
    %176 = tpu.matmul %174, %175, %cst_83 {dimension_numbers = #tpu.dot_dimension_numbers<[1], [0], [0], [1], [0, 0, 1, 1], [], []>} : vector<8x32xbf16>, vector<32x64xbf16>, vector<8x64xf32> -> vector<8x64xf32>
    %c0_84 = arith.constant 0 : index
    %c0_85 = arith.constant 0 : index
    %177 = vector.load %arg20[%c0_84, %c0_85] : memref<1x64xf32, #tpu.memory_space<vmem>>, vector<1x64xf32>
    %178 = vector.broadcast %177 : vector<1x64xf32> to vector<8x64xf32>
    %179 = arith.addf %176, %178 : vector<8x64xf32>
    %cst_86 = arith.constant 0.000000e+00 : f32
    %180 = vector.broadcast %cst_86 : f32 to vector<8x64xf32>
    %181 = arith.maximumf %179, %180 : vector<8x64xf32>
    %182 = arith.truncf %181 : vector<8x64xf32> to vector<8x64xbf16>
    %c0_87 = arith.constant 0 : index
    %c0_88 = arith.constant 0 : index
    %183 = vector.load %arg21[%c0_87, %c0_88] : memref<64x32xbf16, #tpu.memory_space<vmem>>, vector<64x32xbf16>
    %cst_89 = arith.constant dense<0.000000e+00> : vector<8x32xf32>
    %184 = tpu.matmul %182, %183, %cst_89 {dimension_numbers = #tpu.dot_dimension_numbers<[1], [0], [0], [1], [0, 0, 1, 1], [], []>} : vector<8x64xbf16>, vector<64x32xbf16>, vector<8x32xf32> -> vector<8x32xf32>
    %c0_90 = arith.constant 0 : index
    %c0_91 = arith.constant 0 : index
    %185 = vector.load %arg22[%c0_90, %c0_91] : memref<1x32xf32, #tpu.memory_space<vmem>>, vector<1x32xf32>
    %186 = vector.broadcast %185 : vector<1x32xf32> to vector<8x32xf32>
    %187 = arith.addf %184, %186 : vector<8x32xf32>
    %c0_92 = arith.constant 0 : index
    %c0_93 = arith.constant 0 : index
    %188 = vector.load %arg23[%c0_92, %c0_93] : memref<1x32xf32, #tpu.memory_space<vmem>>, vector<1x32xf32>
    %c0_94 = arith.constant 0 : index
    %c0_95 = arith.constant 0 : index
    %189 = vector.load %arg24[%c0_94, %c0_95] : memref<1x32xf32, #tpu.memory_space<vmem>>, vector<1x32xf32>
    %cst_96 = arith.constant dense<0.000000e+00> : vector<8xf32>
    %190 = vector.multi_reduction <add>, %187, %cst_96 [1] : vector<8x32xf32> to vector<8xf32>
    %191 = vector.shape_cast %190 : vector<8xf32> to vector<8x1xf32>
    %cst_97 = arith.constant 3.200000e+01 : f32
    %192 = vector.broadcast %cst_97 : f32 to vector<8x1xf32>
    %193 = arith.divf %191, %192 : vector<8x1xf32>
    %194 = vector.broadcast %193 : vector<8x1xf32> to vector<8x32xf32>
    %195 = arith.subf %187, %194 : vector<8x32xf32>
    %196 = arith.mulf %195, %195 : vector<8x32xf32>
    %cst_98 = arith.constant dense<0.000000e+00> : vector<8xf32>
    %197 = vector.multi_reduction <add>, %196, %cst_98 [1] : vector<8x32xf32> to vector<8xf32>
    %198 = vector.shape_cast %197 : vector<8xf32> to vector<8x1xf32>
    %cst_99 = arith.constant 3.200000e+01 : f32
    %199 = vector.broadcast %cst_99 : f32 to vector<8x1xf32>
    %200 = arith.divf %198, %199 : vector<8x1xf32>
    %201 = vector.broadcast %188 : vector<1x32xf32> to vector<8x32xf32>
    %202 = arith.mulf %201, %195 : vector<8x32xf32>
    %cst_100 = arith.constant 9.99999996E-13 : f32
    %203 = vector.broadcast %cst_100 : f32 to vector<8x1xf32>
    %204 = arith.addf %200, %203 : vector<8x1xf32>
    %205 = math.rsqrt %204 : vector<8x1xf32>
    %206 = vector.broadcast %205 : vector<8x1xf32> to vector<8x32xf32>
    %207 = arith.mulf %202, %206 : vector<8x32xf32>
    %208 = vector.broadcast %189 : vector<1x32xf32> to vector<8x32xf32>
    %209 = arith.addf %207, %208 : vector<8x32xf32>
    %c0_101 = arith.constant 0 : index
    %c0_102 = arith.constant 0 : index
    %c0_103 = arith.constant 0 : index
    %210 = vector.load %arg25[%c0_101, %c0_102, %c0_103] : memref<1x8x32xf32, #tpu.memory_space<vmem>>, vector<1x8x32xf32>
    %211 = vector.shape_cast %210 : vector<1x8x32xf32> to vector<8x32xf32>
    %212 = vector.shape_cast %209 : vector<8x32xf32> to vector<1x8x32xf32>
    tpu.vector_store %arg25[%c0_101, %c0_102, %c0_103], %212 {strides = array<i32>} : memref<1x8x32xf32, #tpu.memory_space<vmem>>, vector<1x8x32xf32>,
    %c0_104 = arith.constant 0 : index
    %c0_105 = arith.constant 0 : index
    %c0_106 = arith.constant 0 : index
    %213 = vector.load %arg26[%c0_104, %c0_105, %c0_106] : memref<1x8x8xf32, #tpu.memory_space<vmem>>, vector<1x8x8xf32>
    %214 = vector.shape_cast %213 : vector<1x8x8xf32> to vector<8x8xf32>
    %215 = vector.shape_cast %87 : vector<8x8xf32> to vector<1x8x8xf32>
    tpu.vector_store %arg26[%c0_104, %c0_105, %c0_106], %215 {strides = array<i32>} : memref<1x8x8xf32, #tpu.memory_space<vmem>>, vector<1x8x8xf32>,
    %c0_107 = arith.constant 0 : index
    %c0_108 = arith.constant 0 : index
    %c0_109 = arith.constant 0 : index
    %216 = vector.load %arg27[%c0_107, %c0_108, %c0_109] : memref<1x8x16xf32, #tpu.memory_space<vmem>>, vector<1x8x16xf32>
    %217 = vector.shape_cast %216 : vector<1x8x16xf32> to vector<8x16xf32>
    %218 = vector.shape_cast %173 : vector<8x16xf32> to vector<1x8x16xf32>
    tpu.vector_store %arg27[%c0_107, %c0_108, %c0_109], %218 {strides = array<i32>} : memref<1x8x16xf32, #tpu.memory_space<vmem>>, vector<1x8x16xf32>,
    return
  }
  func.func @transform_0(%arg0: i32, %arg1: i32) -> (i32, i32, i32) {
    %c0_i32 = arith.constant 0 : i32
    %c0_i32_0 = arith.constant 0 : i32
    return %arg0, %arg1, %c0_i32 : i32, i32, i32
  }
  func.func @transform_1(%arg0: i32, %arg1: i32) -> (i32, i32, i32, i32) {
    %c0_i32 = arith.constant 0 : i32
    %c0_i32_0 = arith.constant 0 : i32
    %c0_i32_1 = arith.constant 0 : i32
    %c0_i32_2 = arith.constant 0 : i32
    return %arg0, %c0_i32, %c0_i32_0, %c0_i32_1 : i32, i32, i32, i32
  }
  func.func @transform_2(%arg0: i32, %arg1: i32) -> (i32, i32, i32, i32) {
    %c0_i32 = arith.constant 0 : i32
    %c0_i32_0 = arith.constant 0 : i32
    %c0_i32_1 = arith.constant 0 : i32
    %c0_i32_2 = arith.constant 0 : i32
    return %arg0, %c0_i32, %c0_i32_0, %c0_i32_1 : i32, i32, i32, i32
  }
  func.func @transform_3(%arg0: i32, %arg1: i32) -> (i32, i32, i32, i32) {
    %c0_i32 = arith.constant 0 : i32
    %c0_i32_0 = arith.constant 0 : i32
    %c0_i32_1 = arith.constant 0 : i32
    %c0_i32_2 = arith.constant 0 : i32
    return %arg0, %c0_i32, %c0_i32_0, %c0_i32_1 : i32, i32, i32, i32
  }
  func.func @transform_4(%arg0: i32, %arg1: i32) -> (i32, i32, i32, i32) {
    %c0_i32 = arith.constant 0 : i32
    %c0_i32_0 = arith.constant 0 : i32
    %c0_i32_1 = arith.constant 0 : i32
    %c0_i32_2 = arith.constant 0 : i32
    return %arg0, %c0_i32, %c0_i32_0, %c0_i32_1 : i32, i32, i32, i32
  }
  func.func @transform_5(%arg0: i32, %arg1: i32) -> (i32, i32, i32) {
    %c0_i32 = arith.constant 0 : i32
    %c0_i32_0 = arith.constant 0 : i32
    %c0_i32_1 = arith.constant 0 : i32
    %c0_i32_2 = arith.constant 0 : i32
    return %c0_i32, %c0_i32_0, %c0_i32_1 : i32, i32, i32
  }
  func.func @transform_6(%arg0: i32, %arg1: i32) -> (i32, i32, i32) {
    %c0_i32 = arith.constant 0 : i32
    %c0_i32_0 = arith.constant 0 : i32
    %c0_i32_1 = arith.constant 0 : i32
    %c0_i32_2 = arith.constant 0 : i32
    return %c0_i32, %c0_i32_0, %c0_i32_1 : i32, i32, i32
  }
  func.func @transform_7(%arg0: i32, %arg1: i32) -> (i32, i32, i32) {
    %c0_i32 = arith.constant 0 : i32
    %c0_i32_0 = arith.constant 0 : i32
    %c0_i32_1 = arith.constant 0 : i32
    %c0_i32_2 = arith.constant 0 : i32
    return %c0_i32, %c0_i32_0, %c0_i32_1 : i32, i32, i32
  }
  func.func @transform_8(%arg0: i32, %arg1: i32) -> (i32, i32) {
    %c0_i32 = arith.constant 0 : i32
    %c0_i32_0 = arith.constant 0 : i32
    %c0_i32_1 = arith.constant 0 : i32
    return %c0_i32, %c0_i32_0 : i32, i32
  }
  func.func @transform_9(%arg0: i32, %arg1: i32) -> (i32, i32) {
    %c0_i32 = arith.constant 0 : i32
    %c0_i32_0 = arith.constant 0 : i32
    %c0_i32_1 = arith.constant 0 : i32
    return %c0_i32, %c0_i32_0 : i32, i32
  }
  func.func @transform_10(%arg0: i32, %arg1: i32) -> (i32, i32) {
    %c0_i32 = arith.constant 0 : i32
    %c0_i32_0 = arith.constant 0 : i32
    %c0_i32_1 = arith.constant 0 : i32
    return %c0_i32, %c0_i32_0 : i32, i32
  }
  func.func @transform_11(%arg0: i32, %arg1: i32) -> (i32, i32, i32) {
    %c0_i32 = arith.constant 0 : i32
    %c0_i32_0 = arith.constant 0 : i32
    %c0_i32_1 = arith.constant 0 : i32
    %c0_i32_2 = arith.constant 0 : i32
    return %c0_i32, %c0_i32_0, %c0_i32_1 : i32, i32, i32
  }
  func.func @transform_12(%arg0: i32, %arg1: i32) -> (i32, i32, i32) {
    %c0_i32 = arith.constant 0 : i32
    %c0_i32_0 = arith.constant 0 : i32
    %c0_i32_1 = arith.constant 0 : i32
    %c0_i32_2 = arith.constant 0 : i32
    return %c0_i32, %c0_i32_0, %c0_i32_1 : i32, i32, i32
  }
  func.func @transform_13(%arg0: i32, %arg1: i32) -> (i32, i32, i32) {
    %c0_i32 = arith.constant 0 : i32
    %c0_i32_0 = arith.constant 0 : i32
    %c0_i32_1 = arith.constant 0 : i32
    %c0_i32_2 = arith.constant 0 : i32
    return %c0_i32, %c0_i32_0, %c0_i32_1 : i32, i32, i32
  }
  func.func @transform_14(%arg0: i32, %arg1: i32) -> (i32, i32) {
    %c0_i32 = arith.constant 0 : i32
    %c0_i32_0 = arith.constant 0 : i32
    %c0_i32_1 = arith.constant 0 : i32
    return %c0_i32, %c0_i32_0 : i32, i32
  }
  func.func @transform_15(%arg0: i32, %arg1: i32) -> (i32, i32) {
    %c0_i32 = arith.constant 0 : i32
    %c0_i32_0 = arith.constant 0 : i32
    %c0_i32_1 = arith.constant 0 : i32
    return %c0_i32, %c0_i32_0 : i32, i32
  }
  func.func @transform_16(%arg0: i32, %arg1: i32) -> (i32, i32) {
    %c0_i32 = arith.constant 0 : i32
    %c0_i32_0 = arith.constant 0 : i32
    %c0_i32_1 = arith.constant 0 : i32
    return %c0_i32, %c0_i32_0 : i32, i32
  }
  func.func @transform_17(%arg0: i32, %arg1: i32) -> (i32, i32) {
    %c0_i32 = arith.constant 0 : i32
    %c0_i32_0 = arith.constant 0 : i32
    %c0_i32_1 = arith.constant 0 : i32
    return %c0_i32, %c0_i32_0 : i32, i32
  }
  func.func @transform_18(%arg0: i32, %arg1: i32) -> (i32, i32) {
    %c0_i32 = arith.constant 0 : i32
    %c0_i32_0 = arith.constant 0 : i32
    %c0_i32_1 = arith.constant 0 : i32
    return %c0_i32, %c0_i32_0 : i32, i32
  }
  func.func @transform_19(%arg0: i32, %arg1: i32) -> (i32, i32) {
    %c0_i32 = arith.constant 0 : i32
    %c0_i32_0 = arith.constant 0 : i32
    %c0_i32_1 = arith.constant 0 : i32
    return %c0_i32, %c0_i32_0 : i32, i32
  }
  func.func @transform_20(%arg0: i32, %arg1: i32) -> (i32, i32) {
    %c0_i32 = arith.constant 0 : i32
    %c0_i32_0 = arith.constant 0 : i32
    %c0_i32_1 = arith.constant 0 : i32
    return %c0_i32, %c0_i32_0 : i32, i32
  }
  func.func @transform_21(%arg0: i32, %arg1: i32) -> (i32, i32) {
    %c0_i32 = arith.constant 0 : i32
    %c0_i32_0 = arith.constant 0 : i32
    %c0_i32_1 = arith.constant 0 : i32
    return %c0_i32, %c0_i32_0 : i32, i32
  }
  func.func @transform_22(%arg0: i32, %arg1: i32) -> (i32, i32) {
    %c0_i32 = arith.constant 0 : i32
    %c0_i32_0 = arith.constant 0 : i32
    %c0_i32_1 = arith.constant 0 : i32
    return %c0_i32, %c0_i32_0 : i32, i32
  }
  func.func @transform_23(%arg0: i32, %arg1: i32) -> (i32, i32, i32) {
    %c0_i32 = arith.constant 0 : i32
    %c0_i32_0 = arith.constant 0 : i32
    return %arg0, %arg1, %c0_i32 : i32, i32, i32
  }
  func.func @transform_24(%arg0: i32, %arg1: i32) -> (i32, i32, i32) {
    %c0_i32 = arith.constant 0 : i32
    %c0_i32_0 = arith.constant 0 : i32
    return %arg0, %arg1, %c0_i32 : i32, i32, i32
  }
  func.func @transform_25(%arg0: i32, %arg1: i32) -> (i32, i32, i32) {
    %c0_i32 = arith.constant 0 : i32
    %c0_i32_0 = arith.constant 0 : i32
    return %arg0, %arg1, %c0_i32 : i32, i32, i32
  }
}

</mosaic_0001>

<llo_original>
// kernel: tpu_custom_call.1
$region0: #{tpu_custom_call.1}
  #allocation0 [shape = 'u32[]', space=smem, size = 0x4, offset = 0x4, fixed_abs, tag = 'smem constant byte address 0x4 - core index']
  #allocation1 [shape = 'u32[144,128]{1,0:T(1,128)}', space=vmem, size = 0x12000, scoped, tag = 'internal scratch']
  %s0 = inlined_call_operand.hbm [shape: f32[2,8,32], index: 0, kind: input, shape index: {}]
  %s1 = inlined_call_operand.hbm [shape: bf16[2,4,8,8], index: 1, kind: input, shape index: {}]
  %s2 = inlined_call_operand.hbm [shape: bf16[2,4,8,8], index: 2, kind: input, shape index: {}]
  %s3 = inlined_call_operand.hbm [shape: bf16[2,4,16,8], index: 3, kind: input, shape index: {}]
  %s4 = inlined_call_operand.hbm [shape: bf16[2,4,16,8], index: 4, kind: input, shape index: {}]
  %s5 = inlined_call_operand.hbm [shape: bf16[4,32,8], index: 5, kind: input, shape index: {}]
  %s6 = inlined_call_operand.hbm [shape: f32[4,1,8], index: 6, kind: input, shape index: {}]
  %s7 = inlined_call_operand.hbm [shape: bf16[4,8,32], index: 7, kind: input, shape index: {}]
  %s8 = inlined_call_operand.hbm [shape: f32[1,32], index: 8, kind: input, shape index: {}]
  %s9 = inlined_call_operand.hbm [shape: f32[1,32], index: 9, kind: input, shape index: {}]
  %s10 = inlined_call_operand.hbm [shape: f32[1,32], index: 10, kind: input, shape index: {}]
  %s11 = inlined_call_operand.hbm [shape: bf16[4,32,8], index: 11, kind: input, shape index: {}]
  %s12 = inlined_call_operand.hbm [shape: f32[4,1,8], index: 12, kind: input, shape index: {}]
  %s13 = inlined_call_operand.hbm [shape: bf16[4,8,32], index: 13, kind: input, shape index: {}]
  %s14 = inlined_call_operand.hbm [shape: f32[1,32], index: 14, kind: input, shape index: {}]
  %s15 = inlined_call_operand.hbm [shape: f32[1,32], index: 15, kind: input, shape index: {}]
  %s16 = inlined_call_operand.hbm [shape: f32[1,32], index: 16, kind: input, shape index: {}]
  %s17 = inlined_call_operand.hbm [shape: bf16[32,64], index: 17, kind: input, shape index: {}]
  %s18 = inlined_call_operand.hbm [shape: f32[1,64], index: 18, kind: input, shape index: {}]
  %s19 = inlined_call_operand.hbm [shape: bf16[64,32], index: 19, kind: input, shape index: {}]
  %s20 = inlined_call_operand.hbm [shape: f32[1,32], index: 20, kind: input, shape index: {}]
  %s21 = inlined_call_operand.hbm [shape: f32[1,32], index: 21, kind: input, shape index: {}]
  %s22 = inlined_call_operand.hbm [shape: f32[1,32], index: 22, kind: input, shape index: {}]
  %s23 = inlined_call_operand.hbm [shape: f32[2,8,32], index: 23, kind: output, shape index: {0}]
  %s24 = inlined_call_operand.hbm [shape: f32[2,8,8], index: 24, kind: output, shape index: {1}]
  %s25 = inlined_call_operand.hbm [shape: f32[2,8,16], index: 25, kind: output, shape index: {2}]
  %26 = xla_tuple %s23, %s24, %s25
  %s27 = sld [smem:[#allocation0]]
  $region233: #{tpu_custom_call.1} parent=0
    _
  %s29 = ssub.s32 1, %s27
  %s30 = scalar_select 0, %s29, %s27
  $region1: #{tpu_custom_call.1} parent=0
    #allocation2 [shape = 'u8[8192]{0}', space=vmem, size = 0x2000, scoped, tag = 'input window, operand 0']
    #allocation3 [shape = 's32[2]{0}', space=sflag, size = 0x8, scoped, tag = 'scoped memory for tpu_custom_call.1']
    #allocation4 [shape = 's32[2]{0}', space=sflag, size = 0x8, scoped, tag = 'scoped memory for tpu_custom_call.1']
    #allocation5 [shape = 'u8[16384]{0}', space=vmem, size = 0x4000, scoped, tag = 'input window, operand 1']
    #allocation6 [shape = 's32[2]{0}', space=sflag, size = 0x8, scoped, tag = 'scoped memory for tpu_custom_call.1']
    #allocation7 [shape = 'u8[16384]{0}', space=vmem, size = 0x4000, scoped, tag = 'input window, operand 2']
    #allocation8 [shape = 'u8[32768]{0}', space=vmem, size = 0x8000, scoped, tag = 'input window, operand 3']
    #allocation9 [shape = 's32[2]{0}', space=sflag, size = 0x8, scoped, tag = 'scoped memory for tpu_custom_call.1']
    #allocation10 [shape = 'u8[32768]{0}', space=vmem, size = 0x8000, scoped, tag = 'input window, operand 4']
    #allocation11 [shape = 'u8[32768]{0}', space=vmem, size = 0x8000, scoped, tag = 'input window, operand 5, single buffered']
    #allocation12 [shape = 's32[1]{0}', space=sflag, size = 0x4, scoped, tag = 'scoped memory for tpu_custom_call.1']
    #allocation13 [shape = 'u8[2048]{0}', space=vmem, size = 0x800, scoped, tag = 'input window, operand 6, single buffered']
    #allocation14 [shape = 'u8[8192]{0}', space=vmem, size = 0x2000, scoped, tag = 'input window, operand 7, single buffered']
    #allocation15 [shape = 's32[1]{0}', space=sflag, size = 0x4, scoped, tag = 'scoped memory for tpu_custom_call.1']
    #allocation16 [shape = 'u8[512]{0}', space=vmem, size = 0x400, scoped, tag = 'input window, operand 8, single buffered']
    #allocation17 [shape = 'u8[512]{0}', space=vmem, size = 0x400, scoped, tag = 'input window, operand 9, single buffered']
    #allocation18 [shape = 's32[1]{0}', space=sflag, size = 0x4, scoped, tag = 'scoped memory for tpu_custom_call.1']
    #allocation19 [shape = 'u8[512]{0}', space=vmem, size = 0x400, scoped, tag = 'input window, operand 10, single buffered']
    #allocation20 [shape = 'u8[32768]{0}', space=vmem, size = 0x8000, scoped, tag = 'input window, operand 11, single buffered']
    #allocation21 [shape = 's32[1]{0}', space=sflag, size = 0x4, scoped, tag = 'scoped memory for tpu_custom_call.1']
    #allocation22 [shape = 'u8[2048]{0}', space=vmem, size = 0x800, scoped, tag = 'input window, operand 12, single buffered']
    #allocation23 [shape = 'u8[8192]{0}', space=vmem, size = 0x2000, scoped, tag = 'input window, operand 13, single buffered']
    #allocation24 [shape = 's32[1]{0}', space=sflag, size = 0x4, scoped, tag = 'scoped memory for tpu_custom_call.1']
    #allocation25 [shape = 'u8[512]{0}', space=vmem, size = 0x400, scoped, tag = 'input window, operand 14, single buffered']
    #allocation26 [shape = 'u8[512]{0}', space=vmem, size = 0x400, scoped, tag = 'input window, operand 15, single buffered']
    #allocation27 [shape = 's32[1]{0}', space=sflag, size = 0x4, scoped, tag = 'scoped memory for tpu_custom_call.1']
    #allocation28 [shape = 'u8[512]{0}', space=vmem, size = 0x400, scoped, tag = 'input window, operand 16, single buffered']
    #allocation29 [shape = 'u8[8192]{0}', space=vmem, size = 0x2000, scoped, tag = 'input window, operand 17, single buffered']
    #allocation30 [shape = 's32[1]{0}', space=sflag, size = 0x4, scoped, tag = 'scoped memory for tpu_custom_call.1']
    #allocation31 [shape = 'u8[512]{0}', space=vmem, size = 0x400, scoped, tag = 'input window, operand 18, single buffered']
    #allocation32 [shape = 'u8[16384]{0}', space=vmem, size = 0x4000, scoped, tag = 'input window, operand 19, single buffered']
    #allocation33 [shape = 's32[1]{0}', space=sflag, size = 0x4, scoped, tag = 'scoped memory for tpu_custom_call.1']
    #allocation34 [shape = 'u8[512]{0}', space=vmem, size = 0x400, scoped, tag = 'input window, operand 20, single buffered']
    #allocation35 [shape = 'u8[512]{0}', space=vmem, size = 0x400, scoped, tag = 'input window, operand 21, single buffered']
    #allocation36 [shape = 's32[1]{0}', space=sflag, size = 0x4, scoped, tag = 'scoped memory for tpu_custom_call.1']
    #allocation37 [shape = 'u8[512]{0}', space=vmem, size = 0x400, scoped, tag = 'input window, operand 22, single buffered']
    #allocation38 [shape = 'u8[8192]{0}', space=vmem, size = 0x2000, scoped, tag = 'output window, operand 0']
    #allocation39 [shape = 'u8[8192]{0}', space=vmem, size = 0x2000, scoped, tag = 'output window, operand 1']
    #allocation40 [shape = 's32[2]{0}', space=sflag, size = 0x8, scoped, tag = 'scoped memory for tpu_custom_call.1']
    #allocation41 [shape = 'u8[8192]{0}', space=vmem, size = 0x2000, scoped, tag = 'output window, operand 2']
    %31 = vsyncpa [#allocation3], 0
    %s32 = scalar_lea.sflag [#allocation3], 1
    %33 = vsyncpa %s32, 0
    %34 = vsyncpa [#allocation6], 0
    %s35 = scalar_lea.sflag [#allocation6], 1
    %36 = vsyncpa %s35, 0
    %37 = vsyncpa [#allocation9], 0
    %s38 = scalar_lea.sflag [#allocation9], 1
    %39 = vsyncpa %s38, 0
    %40 = vsyncpa [#allocation12], 0
    %41 = vsyncpa [#allocation15], 0
    %42 = vsyncpa [#allocation18], 0
    %43 = vsyncpa [#allocation21], 0
    %44 = vsyncpa [#allocation24], 0
    %45 = vsyncpa [#allocation27], 0
    %46 = vsyncpa [#allocation30], 0
    %47 = vsyncpa [#allocation33], 0
    %48 = vsyncpa [#allocation36], 0
    %49 = vsyncpa [#allocation4], 0
    %s50 = scalar_lea.sflag [#allocation4], 1
    %51 = vsyncpa %s50, 0
    %52 = vsyncpa [#allocation40], 0
    %s53 = scalar_lea.sflag [#allocation40], 1
    %54 = vsyncpa %s53, 0
    loop: start=0, step=1, limit=4
    $region2: #{tpu_custom_call.1} parent=1 // loop_pre_header
      _
    $region3: #{tpu_custom_call.1} parent=1 // loop_header
      %s56 = sphi 0, %s60
      %p57 = scmp.ge.s32.totalorder %s56, 4
      %s63 = sphi 0, %s75
      %s64 = sphi 0, %s71
      %s65 = sphi 0, %s63
      %s66 = sphi 0, %s64
      %s67 = sphi 0, %s65
      %s68 = sphi 0, %s66
      %s80 = sphi 0, %s82
      %s83 = sphi 0, %s80
      %s84 = sphi 0, %s83
      %s100 = sphi 0, %s84
      %s106 = sphi 0, %s108
      %s109 = sphi 0, %s106
      %s110 = sphi 0, %s109
      %s126 = sphi 0, %s110
      %s132 = sphi 0, %s134
      %s135 = sphi 0, %s132
      %s136 = sphi 0, %s135
      %s152 = sphi 0, %s136
      %s158 = sphi 0, %s160
      %s161 = sphi 0, %s158
      %s162 = sphi 0, %s161
      %s178 = sphi 0, %s162
      %s184 = sphi 0, %s186
      %s187 = sphi 0, %s184
      %s188 = sphi 0, %s187
      %s204 = sphi 0, %s188
      %s208 = sphi 0, %s208
      %s210 = sphi 0, %s208
      %s211 = sphi 0, %s210
      %s225 = sphi 0, %s211
      %s229 = sphi 0, %s229
      %s231 = sphi 0, %s229
      %s232 = sphi 0, %s231
      %s246 = sphi 0, %s232
      %s250 = sphi 0, %s250
      %s252 = sphi 0, %s250
      %s253 = sphi 0, %s252
      %s267 = sphi 0, %s253
      %s271 = sphi 0, %s271
      %s273 = sphi 0, %s271
      %s274 = sphi 0, %s273
      %s288 = sphi 0, %s274
      %s292 = sphi 0, %s292
      %s294 = sphi 0, %s292
      %s295 = sphi 0, %s294
      %s309 = sphi 0, %s295
      %s313 = sphi 0, %s313
      %s315 = sphi 0, %s313
      %s316 = sphi 0, %s315
      %s330 = sphi 0, %s316
      %s334 = sphi 0, %s334
      %s336 = sphi 0, %s334
      %s337 = sphi 0, %s336
      %s351 = sphi 0, %s337
      %s355 = sphi 0, %s355
      %s357 = sphi 0, %s355
      %s358 = sphi 0, %s357
      %s372 = sphi 0, %s358
      %s376 = sphi 0, %s376
      %s378 = sphi 0, %s376
      %s379 = sphi 0, %s378
      %s393 = sphi 0, %s379
      %s397 = sphi 0, %s397
      %s399 = sphi 0, %s397
      %s400 = sphi 0, %s399
      %s414 = sphi 0, %s400
      %s418 = sphi 0, %s418
      %s420 = sphi 0, %s418
      %s421 = sphi 0, %s420
      %s435 = sphi 0, %s421
      %s439 = sphi 0, %s439
      %s441 = sphi 0, %s439
      %s442 = sphi 0, %s441
      %s456 = sphi 0, %s442
      %s460 = sphi 0, %s460
      %s462 = sphi 0, %s460
      %s463 = sphi 0, %s462
      %s477 = sphi 0, %s463
      %s481 = sphi 0, %s481
      %s483 = sphi 0, %s481
      %s484 = sphi 0, %s483
      %s498 = sphi 0, %s484
      %s502 = sphi 0, %s502
      %s504 = sphi 0, %s502
      %s505 = sphi 0, %s504
      %s519 = sphi 0, %s505
      %s523 = sphi 0, %s523
      %s525 = sphi 0, %s523
      %s526 = sphi 0, %s525
      %s540 = sphi 0, %s526
      %s544 = sphi 0, %s544
      %s546 = sphi 0, %s544
      %s547 = sphi 0, %s546
      %s561 = sphi 0, %s547
      %s565 = sphi 0, %s565
      %s567 = sphi 0, %s565
      %s568 = sphi 0, %s567
      %s582 = sphi 0, %s568
      %s590 = sphi 0, %s592
      %s593 = sphi 0, %s590
      %s594 = sphi 0, %s593
      %s610 = sphi 0, %s594
      %s618 = sphi 0, %s620
      %s621 = sphi 0, %s618
      %s622 = sphi 0, %s621
      %s638 = sphi 0, %s622
      %s646 = sphi 0, %s648
      %s649 = sphi 0, %s646
      %s650 = sphi 0, %s649
      %s666 = sphi 0, %s650
    $region4: #{tpu_custom_call.1} parent=1 // loop_header_branch
      %59 = sbr.rel (%p57) target = $region8
    $region5: #{tpu_custom_call.1} parent=1 // loop_body
      %s61 = ssub.s32 %s56, 1
      %s62 = ssub.s32 %s56, 2
      %s69 = sadd.s32 1, %s64
      %p70 = scmp.ge.s32.totalorder %s69, 1
      %s71 = scalar_select %p70, 0, %s69
      %s72 = sadd.s32 1, %s63
      %s73 = scalar_select %p70, %s72, %s63
      %p74 = scmp.ge.s32.totalorder %s73, 2
      %s75 = scalar_select %p74, 0, %s73
      %s76 = ssub.s32 %s63, %s75
      %s77 = ssub.s32 %s64, %s71
      %s78 = sor.u32 %s76, %s77
      %p79 = scmp.eq.s32.totalorder %s78, 0
      %s81 = sadd.s32 %s80, 1
      %s82 = scalar_select %p79, %s80, %s81
      %p85 = pneg %p79
      %p86 = scmp.eq.s32.totalorder %s56, 1
      %p87 = por %p85, %p86
      %p88 = scmp.ne.s32.totalorder %s80, %s83
      %p89 = scmp.eq.s32.totalorder %s56, 0
      %p90 = por %p88, %p89
      %p91 = scmp.ne.s32.totalorder %s80, %s83
      %p92 = scmp.eq.s32.totalorder %s61, 1
      %p93 = por %p91, %p92
      %p94 = scmp.ne.s32.totalorder %s83, %s84
      %p95 = scmp.eq.s32.totalorder %s61, 0
      %p96 = por %p94, %p95
      %p97 = scmp.ne.s32.totalorder %s83, %s84
      %p98 = scmp.eq.s32.totalorder %s62, 1
      %p99 = por %p97, %p98
      %p101 = scmp.ne.s32.totalorder %s84, %s100
      %p102 = scmp.eq.s32.totalorder %s62, 0
      %p103 = por %p101, %p102
      %s104 = ssub.s32 %s63, %s75
      %p105 = scmp.eq.s32.totalorder %s104, 0
      %s107 = sadd.s32 %s106, 1
      %s108 = scalar_select %p105, %s106, %s107
      %p111 = pneg %p105
      %p112 = scmp.eq.s32.totalorder %s56, 1
      %p113 = por %p111, %p112
      %p114 = scmp.ne.s32.totalorder %s106, %s109
      %p115 = scmp.eq.s32.totalorder %s56, 0
      %p116 = por %p114, %p115
      %p117 = scmp.ne.s32.totalorder %s106, %s109
      %p118 = scmp.eq.s32.totalorder %s61, 1
      %p119 = por %p117, %p118
      %p120 = scmp.ne.s32.totalorder %s109, %s110
      %p121 = scmp.eq.s32.totalorder %s61, 0
      %p122 = por %p120, %p121
      %p123 = scmp.ne.s32.totalorder %s109, %s110
      %p124 = scmp.eq.s32.totalorder %s62, 1
      %p125 = por %p123, %p124
      %p127 = scmp.ne.s32.totalorder %s110, %s126
      %p128 = scmp.eq.s32.totalorder %s62, 0
      %p129 = por %p127, %p128
      %s130 = ssub.s32 %s63, %s75
      %p131 = scmp.eq.s32.totalorder %s130, 0
      %s133 = sadd.s32 %s132, 1
      %s134 = scalar_select %p131, %s132, %s133
      %p137 = pneg %p131
      %p138 = scmp.eq.s32.totalorder %s56, 1
      %p139 = por %p137, %p138
      %p140 = scmp.ne.s32.totalorder %s132, %s135
      %p141 = scmp.eq.s32.totalorder %s56, 0
      %p142 = por %p140, %p141
      %p143 = scmp.ne.s32.totalorder %s132, %s135
      %p144 = scmp.eq.s32.totalorder %s61, 1
      %p145 = por %p143, %p144
      %p146 = scmp.ne.s32.totalorder %s135, %s136
      %p147 = scmp.eq.s32.totalorder %s61, 0
      %p148 = por %p146, %p147
      %p149 = scmp.ne.s32.totalorder %s135, %s136
      %p150 = scmp.eq.s32.totalorder %s62, 1
      %p151 = por %p149, %p150
      %p153 = scmp.ne.s32.totalorder %s136, %s152
      %p154 = scmp.eq.s32.totalorder %s62, 0
      %p155 = por %p153, %p154
      %s156 = ssub.s32 %s63, %s75
      %p157 = scmp.eq.s32.totalorder %s156, 0
      %s159 = sadd.s32 %s158, 1
      %s160 = scalar_select %p157, %s158, %s159
      %p163 = pneg %p157
      %p164 = scmp.eq.s32.totalorder %s56, 1
      %p165 = por %p163, %p164
      %p166 = scmp.ne.s32.totalorder %s158, %s161
      %p167 = scmp.eq.s32.totalorder %s56, 0
      %p168 = por %p166, %p167
      %p169 = scmp.ne.s32.totalorder %s158, %s161
      %p170 = scmp.eq.s32.totalorder %s61, 1
      %p171 = por %p169, %p170
      %p172 = scmp.ne.s32.totalorder %s161, %s162
      %p173 = scmp.eq.s32.totalorder %s61, 0
      %p174 = por %p172, %p173
      %p175 = scmp.ne.s32.totalorder %s161, %s162
      %p176 = scmp.eq.s32.totalorder %s62, 1
      %p177 = por %p175, %p176
      %p179 = scmp.ne.s32.totalorder %s162, %s178
      %p180 = scmp.eq.s32.totalorder %s62, 0
      %p181 = por %p179, %p180
      %s182 = ssub.s32 %s63, %s75
      %p183 = scmp.eq.s32.totalorder %s182, 0
      %s185 = sadd.s32 %s184, 1
      %s186 = scalar_select %p183, %s184, %s185
      %p189 = pneg %p183
      %p190 = scmp.eq.s32.totalorder %s56, 1
      %p191 = por %p189, %p190
      %p192 = scmp.ne.s32.totalorder %s184, %s187
      %p193 = scmp.eq.s32.totalorder %s56, 0
      %p194 = por %p192, %p193
      %p195 = scmp.ne.s32.totalorder %s184, %s187
      %p196 = scmp.eq.s32.totalorder %s61, 1
      %p197 = por %p195, %p196
      %p198 = scmp.ne.s32.totalorder %s187, %s188
      %p199 = scmp.eq.s32.totalorder %s61, 0
      %p200 = por %p198, %p199
      %p201 = scmp.ne.s32.totalorder %s187, %s188
      %p202 = scmp.eq.s32.totalorder %s62, 1
      %p203 = por %p201, %p202
      %p205 = scmp.ne.s32.totalorder %s188, %s204
      %p206 = scmp.eq.s32.totalorder %s62, 0
      %p207 = por %p205, %p206
      %s209 = sadd.s32 %s208, 1
      %p212 = scmp.eq.s32.totalorder %s56, 1
      %p213 = scmp.ne.s32.totalorder %s208, %s210
      %p214 = scmp.eq.s32.totalorder %s56, 0
      %p215 = por %p213, %p214
      %p216 = scmp.ne.s32.totalorder %s208, %s210
      %p217 = scmp.eq.s32.totalorder %s61, 1
      %p218 = por %p216, %p217
      %p219 = scmp.ne.s32.totalorder %s210, %s211
      %p220 = scmp.eq.s32.totalorder %s61, 0
      %p221 = por %p219, %p220
      %p222 = scmp.ne.s32.totalorder %s210, %s211
      %p223 = scmp.eq.s32.totalorder %s62, 1
      %p224 = por %p222, %p223
      %p226 = scmp.ne.s32.totalorder %s211, %s225
      %p227 = scmp.eq.s32.totalorder %s62, 0
      %p228 = por %p226, %p227
      %s230 = sadd.s32 %s229, 1
      %p233 = scmp.eq.s32.totalorder %s56, 1
      %p234 = scmp.ne.s32.totalorder %s229, %s231
      %p235 = scmp.eq.s32.totalorder %s56, 0
      %p236 = por %p234, %p235
      %p237 = scmp.ne.s32.totalorder %s229, %s231
      %p238 = scmp.eq.s32.totalorder %s61, 1
      %p239 = por %p237, %p238
      %p240 = scmp.ne.s32.totalorder %s231, %s232
      %p241 = scmp.eq.s32.totalorder %s61, 0
      %p242 = por %p240, %p241
      %p243 = scmp.ne.s32.totalorder %s231, %s232
      %p244 = scmp.eq.s32.totalorder %s62, 1
      %p245 = por %p243, %p244
      %p247 = scmp.ne.s32.totalorder %s232, %s246
      %p248 = scmp.eq.s32.totalorder %s62, 0
      %p249 = por %p247, %p248
      %s251 = sadd.s32 %s250, 1
      %p254 = scmp.eq.s32.totalorder %s56, 1
      %p255 = scmp.ne.s32.totalorder %s250, %s252
      %p256 = scmp.eq.s32.totalorder %s56, 0
      %p257 = por %p255, %p256
      %p258 = scmp.ne.s32.totalorder %s250, %s252
      %p259 = scmp.eq.s32.totalorder %s61, 1
      %p260 = por %p258, %p259
      %p261 = scmp.ne.s32.totalorder %s252, %s253
      %p262 = scmp.eq.s32.totalorder %s61, 0
      %p263 = por %p261, %p262
      %p264 = scmp.ne.s32.totalorder %s252, %s253
      %p265 = scmp.eq.s32.totalorder %s62, 1
      %p266 = por %p264, %p265
      %p268 = scmp.ne.s32.totalorder %s253, %s267
      %p269 = scmp.eq.s32.totalorder %s62, 0
      %p270 = por %p268, %p269
      %s272 = sadd.s32 %s271, 1
      %p275 = scmp.eq.s32.totalorder %s56, 1
      %p276 = scmp.ne.s32.totalorder %s271, %s273
      %p277 = scmp.eq.s32.totalorder %s56, 0
      %p278 = por %p276, %p277
      %p279 = scmp.ne.s32.totalorder %s271, %s273
      %p280 = scmp.eq.s32.totalorder %s61, 1
      %p281 = por %p279, %p280
      %p282 = scmp.ne.s32.totalorder %s273, %s274
      %p283 = scmp.eq.s32.totalorder %s61, 0
      %p284 = por %p282, %p283
      %p285 = scmp.ne.s32.totalorder %s273, %s274
      %p286 = scmp.eq.s32.totalorder %s62, 1
      %p287 = por %p285, %p286
      %p289 = scmp.ne.s32.totalorder %s274, %s288
      %p290 = scmp.eq.s32.totalorder %s62, 0
      %p291 = por %p289, %p290
      %s293 = sadd.s32 %s292, 1
      %p296 = scmp.eq.s32.totalorder %s56, 1
      %p297 = scmp.ne.s32.totalorder %s292, %s294
      %p298 = scmp.eq.s32.totalorder %s56, 0
      %p299 = por %p297, %p298
      %p300 = scmp.ne.s32.totalorder %s292, %s294
      %p301 = scmp.eq.s32.totalorder %s61, 1
      %p302 = por %p300, %p301
      %p303 = scmp.ne.s32.totalorder %s294, %s295
      %p304 = scmp.eq.s32.totalorder %s61, 0
      %p305 = por %p303, %p304
      %p306 = scmp.ne.s32.totalorder %s294, %s295
      %p307 = scmp.eq.s32.totalorder %s62, 1
      %p308 = por %p306, %p307
      %p310 = scmp.ne.s32.totalorder %s295, %s309
      %p311 = scmp.eq.s32.totalorder %s62, 0
      %p312 = por %p310, %p311
      %s314 = sadd.s32 %s313, 1
      %p317 = scmp.eq.s32.totalorder %s56, 1
      %p318 = scmp.ne.s32.totalorder %s313, %s315
      %p319 = scmp.eq.s32.totalorder %s56, 0
      %p320 = por %p318, %p319
      %p321 = scmp.ne.s32.totalorder %s313, %s315
      %p322 = scmp.eq.s32.totalorder %s61, 1
      %p323 = por %p321, %p322
      %p324 = scmp.ne.s32.totalorder %s315, %s316
      %p325 = scmp.eq.s32.totalorder %s61, 0
      %p326 = por %p324, %p325
      %p327 = scmp.ne.s32.totalorder %s315, %s316
      %p328 = scmp.eq.s32.totalorder %s62, 1
      %p329 = por %p327, %p328
      %p331 = scmp.ne.s32.totalorder %s316, %s330
      %p332 = scmp.eq.s32.totalorder %s62, 0
      %p333 = por %p331, %p332
      %s335 = sadd.s32 %s334, 1
      %p338 = scmp.eq.s32.totalorder %s56, 1
      %p339 = scmp.ne.s32.totalorder %s334, %s336
      %p340 = scmp.eq.s32.totalorder %s56, 0
      %p341 = por %p339, %p340
      %p342 = scmp.ne.s32.totalorder %s334, %s336
      %p343 = scmp.eq.s32.totalorder %s61, 1
      %p344 = por %p342, %p343
      %p345 = scmp.ne.s32.totalorder %s336, %s337
      %p346 = scmp.eq.s32.totalorder %s61, 0
      %p347 = por %p345, %p346
      %p348 = scmp.ne.s32.totalorder %s336, %s337
      %p349 = scmp.eq.s32.totalorder %s62, 1
      %p350 = por %p348, %p349
      %p352 = scmp.ne.s32.totalorder %s337, %s351
      %p353 = scmp.eq.s32.totalorder %s62, 0
      %p354 = por %p352, %p353
      %s356 = sadd.s32 %s355, 1
      %p359 = scmp.eq.s32.totalorder %s56, 1
      %p360 = scmp.ne.s32.totalorder %s355, %s357
      %p361 = scmp.eq.s32.totalorder %s56, 0
      %p362 = por %p360, %p361
      %p363 = scmp.ne.s32.totalorder %s355, %s357
      %p364 = scmp.eq.s32.totalorder %s61, 1
      %p365 = por %p363, %p364
      %p366 = scmp.ne.s32.totalorder %s357, %s358
      %p367 = scmp.eq.s32.totalorder %s61, 0
      %p368 = por %p366, %p367
      %p369 = scmp.ne.s32.totalorder %s357, %s358
      %p370 = scmp.eq.s32.totalorder %s62, 1
      %p371 = por %p369, %p370
      %p373 = scmp.ne.s32.totalorder %s358, %s372
      %p374 = scmp.eq.s32.totalorder %s62, 0
      %p375 = por %p373, %p374
      %s377 = sadd.s32 %s376, 1
      %p380 = scmp.eq.s32.totalorder %s56, 1
      %p381 = scmp.ne.s32.totalorder %s376, %s378
      %p382 = scmp.eq.s32.totalorder %s56, 0
      %p383 = por %p381, %p382
      %p384 = scmp.ne.s32.totalorder %s376, %s378
      %p385 = scmp.eq.s32.totalorder %s61, 1
      %p386 = por %p384, %p385
      %p387 = scmp.ne.s32.totalorder %s378, %s379
      %p388 = scmp.eq.s32.totalorder %s61, 0
      %p389 = por %p387, %p388
      %p390 = scmp.ne.s32.totalorder %s378, %s379
      %p391 = scmp.eq.s32.totalorder %s62, 1
      %p392 = por %p390, %p391
      %p394 = scmp.ne.s32.totalorder %s379, %s393
      %p395 = scmp.eq.s32.totalorder %s62, 0
      %p396 = por %p394, %p395
      %s398 = sadd.s32 %s397, 1
      %p401 = scmp.eq.s32.totalorder %s56, 1
      %p402 = scmp.ne.s32.totalorder %s397, %s399
      %p403 = scmp.eq.s32.totalorder %s56, 0
      %p404 = por %p402, %p403
      %p405 = scmp.ne.s32.totalorder %s397, %s399
      %p406 = scmp.eq.s32.totalorder %s61, 1
      %p407 = por %p405, %p406
      %p408 = scmp.ne.s32.totalorder %s399, %s400
      %p409 = scmp.eq.s32.totalorder %s61, 0
      %p410 = por %p408, %p409
      %p411 = scmp.ne.s32.totalorder %s399, %s400
      %p412 = scmp.eq.s32.totalorder %s62, 1
      %p413 = por %p411, %p412
      %p415 = scmp.ne.s32.totalorder %s400, %s414
      %p416 = scmp.eq.s32.totalorder %s62, 0
      %p417 = por %p415, %p416
      %s419 = sadd.s32 %s418, 1
      %p422 = scmp.eq.s32.totalorder %s56, 1
      %p423 = scmp.ne.s32.totalorder %s418, %s420
      %p424 = scmp.eq.s32.totalorder %s56, 0
      %p425 = por %p423, %p424
      %p426 = scmp.ne.s32.totalorder %s418, %s420
      %p427 = scmp.eq.s32.totalorder %s61, 1
      %p428 = por %p426, %p427
      %p429 = scmp.ne.s32.totalorder %s420, %s421
      %p430 = scmp.eq.s32.totalorder %s61, 0
      %p431 = por %p429, %p430
      %p432 = scmp.ne.s32.totalorder %s420, %s421
      %p433 = scmp.eq.s32.totalorder %s62, 1
      %p434 = por %p432, %p433
      %p436 = scmp.ne.s32.totalorder %s421, %s435
      %p437 = scmp.eq.s32.totalorder %s62, 0
      %p438 = por %p436, %p437
      %s440 = sadd.s32 %s439, 1
      %p443 = scmp.eq.s32.totalorder %s56, 1
      %p444 = scmp.ne.s32.totalorder %s439, %s441
      %p445 = scmp.eq.s32.totalorder %s56, 0
      %p446 = por %p444, %p445
      %p447 = scmp.ne.s32.totalorder %s439, %s441
      %p448 = scmp.eq.s32.totalorder %s61, 1
      %p449 = por %p447, %p448
      %p450 = scmp.ne.s32.totalorder %s441, %s442
      %p451 = scmp.eq.s32.totalorder %s61, 0
      %p452 = por %p450, %p451
      %p453 = scmp.ne.s32.totalorder %s441, %s442
      %p454 = scmp.eq.s32.totalorder %s62, 1
      %p455 = por %p453, %p454
      %p457 = scmp.ne.s32.totalorder %s442, %s456
      %p458 = scmp.eq.s32.totalorder %s62, 0
      %p459 = por %p457, %p458
      %s461 = sadd.s32 %s460, 1
      %p464 = scmp.eq.s32.totalorder %s56, 1
      %p465 = scmp.ne.s32.totalorder %s460, %s462
      %p466 = scmp.eq.s32.totalorder %s56, 0
      %p467 = por %p465, %p466
      %p468 = scmp.ne.s32.totalorder %s460, %s462
      %p469 = scmp.eq.s32.totalorder %s61, 1
      %p470 = por %p468, %p469
      %p471 = scmp.ne.s32.totalorder %s462, %s463
      %p472 = scmp.eq.s32.totalorder %s61, 0
      %p473 = por %p471, %p472
      %p474 = scmp.ne.s32.totalorder %s462, %s463
      %p475 = scmp.eq.s32.totalorder %s62, 1
      %p476 = por %p474, %p475
      %p478 = scmp.ne.s32.totalorder %s463, %s477
      %p479 = scmp.eq.s32.totalorder %s62, 0
      %p480 = por %p478, %p479
      %s482 = sadd.s32 %s481, 1
      %p485 = scmp.eq.s32.totalorder %s56, 1
      %p486 = scmp.ne.s32.totalorder %s481, %s483
      %p487 = scmp.eq.s32.totalorder %s56, 0
      %p488 = por %p486, %p487
      %p489 = scmp.ne.s32.totalorder %s481, %s483
      %p490 = scmp.eq.s32.totalorder %s61, 1
      %p491 = por %p489, %p490
      %p492 = scmp.ne.s32.totalorder %s483, %s484
      %p493 = scmp.eq.s32.totalorder %s61, 0
      %p494 = por %p492, %p493
      %p495 = scmp.ne.s32.totalorder %s483, %s484
      %p496 = scmp.eq.s32.totalorder %s62, 1
      %p497 = por %p495, %p496
      %p499 = scmp.ne.s32.totalorder %s484, %s498
      %p500 = scmp.eq.s32.totalorder %s62, 0
      %p501 = por %p499, %p500
      %s503 = sadd.s32 %s502, 1
      %p506 = scmp.eq.s32.totalorder %s56, 1
      %p507 = scmp.ne.s32.totalorder %s502, %s504
      %p508 = scmp.eq.s32.totalorder %s56, 0
      %p509 = por %p507, %p508
      %p510 = scmp.ne.s32.totalorder %s502, %s504
      %p511 = scmp.eq.s32.totalorder %s61, 1
      %p512 = por %p510, %p511
      %p513 = scmp.ne.s32.totalorder %s504, %s505
      %p514 = scmp.eq.s32.totalorder %s61, 0
      %p515 = por %p513, %p514
      %p516 = scmp.ne.s32.totalorder %s504, %s505
      %p517 = scmp.eq.s32.totalorder %s62, 1
      %p518 = por %p516, %p517
      %p520 = scmp.ne.s32.totalorder %s505, %s519
      %p521 = scmp.eq.s32.totalorder %s62, 0
      %p522 = por %p520, %p521
      %s524 = sadd.s32 %s523, 1
      %p527 = scmp.eq.s32.totalorder %s56, 1
      %p528 = scmp.ne.s32.totalorder %s523, %s525
      %p529 = scmp.eq.s32.totalorder %s56, 0
      %p530 = por %p528, %p529
      %p531 = scmp.ne.s32.totalorder %s523, %s525
      %p532 = scmp.eq.s32.totalorder %s61, 1
      %p533 = por %p531, %p532
      %p534 = scmp.ne.s32.totalorder %s525, %s526
      %p535 = scmp.eq.s32.totalorder %s61, 0
      %p536 = por %p534, %p535
      %p537 = scmp.ne.s32.totalorder %s525, %s526
      %p538 = scmp.eq.s32.totalorder %s62, 1
      %p539 = por %p537, %p538
      %p541 = scmp.ne.s32.totalorder %s526, %s540
      %p542 = scmp.eq.s32.totalorder %s62, 0
      %p543 = por %p541, %p542
      %s545 = sadd.s32 %s544, 1
      %p548 = scmp.eq.s32.totalorder %s56, 1
      %p549 = scmp.ne.s32.totalorder %s544, %s546
      %p550 = scmp.eq.s32.totalorder %s56, 0
      %p551 = por %p549, %p550
      %p552 = scmp.ne.s32.totalorder %s544, %s546
      %p553 = scmp.eq.s32.totalorder %s61, 1
      %p554 = por %p552, %p553
      %p555 = scmp.ne.s32.totalorder %s546, %s547
      %p556 = scmp.eq.s32.totalorder %s61, 0
      %p557 = por %p555, %p556
      %p558 = scmp.ne.s32.totalorder %s546, %s547
      %p559 = scmp.eq.s32.totalorder %s62, 1
      %p560 = por %p558, %p559
      %p562 = scmp.ne.s32.totalorder %s547, %s561
      %p563 = scmp.eq.s32.totalorder %s62, 0
      %p564 = por %p562, %p563
      %s566 = sadd.s32 %s565, 1
      %p569 = scmp.eq.s32.totalorder %s56, 1
      %p570 = scmp.ne.s32.totalorder %s565, %s567
      %p571 = scmp.eq.s32.totalorder %s56, 0
      %p572 = por %p570, %p571
      %p573 = scmp.ne.s32.totalorder %s565, %s567
      %p574 = scmp.eq.s32.totalorder %s61, 1
      %p575 = por %p573, %p574
      %p576 = scmp.ne.s32.totalorder %s567, %s568
      %p577 = scmp.eq.s32.totalorder %s61, 0
      %p578 = por %p576, %p577
      %p579 = scmp.ne.s32.totalorder %s567, %s568
      %p580 = scmp.eq.s32.totalorder %s62, 1
      %p581 = por %p579, %p580
      %p583 = scmp.ne.s32.totalorder %s568, %s582
      %p584 = scmp.eq.s32.totalorder %s62, 0
      %p585 = por %p583, %p584
      %s586 = ssub.s32 %s63, %s75
      %s587 = ssub.s32 %s64, %s71
      %s588 = sor.u32 %s586, %s587
      %p589 = scmp.eq.s32.totalorder %s588, 0
      %s591 = sadd.s32 %s590, 1
      %s592 = scalar_select %p589, %s590, %s591
      %p595 = pneg %p589
      %p596 = scmp.eq.s32.totalorder %s56, 1
      %p597 = por %p595, %p596
      %p598 = scmp.ne.s32.totalorder %s590, %s593
      %p599 = scmp.eq.s32.totalorder %s56, 0
      %p600 = por %p598, %p599
      %p601 = scmp.ne.s32.totalorder %s590, %s593
      %p602 = scmp.eq.s32.totalorder %s61, 1
      %p603 = por %p601, %p602
      %p604 = scmp.ne.s32.totalorder %s593, %s594
      %p605 = scmp.eq.s32.totalorder %s61, 0
      %p606 = por %p604, %p605
      %p607 = scmp.ne.s32.totalorder %s593, %s594
      %p608 = scmp.eq.s32.totalorder %s62, 1
      %p609 = por %p607, %p608
      %p611 = scmp.ne.s32.totalorder %s594, %s610
      %p612 = scmp.eq.s32.totalorder %s62, 0
      %p613 = por %p611, %p612
      %s614 = ssub.s32 %s63, %s75
      %s615 = ssub.s32 %s64, %s71
      %s616 = sor.u32 %s614, %s615
      %p617 = scmp.eq.s32.totalorder %s616, 0
      %s619 = sadd.s32 %s618, 1
      %s620 = scalar_select %p617, %s618, %s619
      %p623 = pneg %p617
      %p624 = scmp.eq.s32.totalorder %s56, 1
      %p625 = por %p623, %p624
      %p626 = scmp.ne.s32.totalorder %s618, %s621
      %p627 = scmp.eq.s32.totalorder %s56, 0
      %p628 = por %p626, %p627
      %p629 = scmp.ne.s32.totalorder %s618, %s621
      %p630 = scmp.eq.s32.totalorder %s61, 1
      %p631 = por %p629, %p630
      %p632 = scmp.ne.s32.totalorder %s621, %s622
      %p633 = scmp.eq.s32.totalorder %s61, 0
      %p634 = por %p632, %p633
      %p635 = scmp.ne.s32.totalorder %s621, %s622
      %p636 = scmp.eq.s32.totalorder %s62, 1
      %p637 = por %p635, %p636
      %p639 = scmp.ne.s32.totalorder %s622, %s638
      %p640 = scmp.eq.s32.totalorder %s62, 0
      %p641 = por %p639, %p640
      %s642 = ssub.s32 %s63, %s75
      %s643 = ssub.s32 %s64, %s71
      %s644 = sor.u32 %s642, %s643
      %p645 = scmp.eq.s32.totalorder %s644, 0
      %s647 = sadd.s32 %s646, 1
      %s648 = scalar_select %p645, %s646, %s647
      %p651 = pneg %p645
      %p652 = scmp.eq.s32.totalorder %s56, 1
      %p653 = por %p651, %p652
      %p654 = scmp.ne.s32.totalorder %s646, %s649
      %p655 = scmp.eq.s32.totalorder %s56, 0
      %p656 = por %p654, %p655
      %p657 = scmp.ne.s32.totalorder %s646, %s649
      %p658 = scmp.eq.s32.totalorder %s61, 1
      %p659 = por %p657, %p658
      %p660 = scmp.ne.s32.totalorder %s649, %s650
      %p661 = scmp.eq.s32.totalorder %s61, 0
      %p662 = por %p660, %p661
      %p663 = scmp.ne.s32.totalorder %s649, %s650
      %p664 = scmp.eq.s32.totalorder %s62, 1
      %p665 = por %p663, %p664
      %p667 = scmp.ne.s32.totalorder %s650, %s666
      %p668 = scmp.eq.s32.totalorder %s62, 0
      %p669 = por %p667, %p668
      %p670 = scmp.le.s32.totalorder 1, %s56
      %p671 = scmp.lt.s32.totalorder %s56, 3
      %p672 = pnand %p670, %p671
      %p673 = pneg %p672
      // Predicated region
      $region9: #{tpu_custom_call.1} parent=5 // pred_check
        _
      $region10: #{tpu_custom_call.1} parent=5 // pred_check_branch
        %675 = sbr.rel (%p672) target = $region12
      $region11: #{tpu_custom_call.1} parent=5 // pred_region
        %s676 = ssub.s32 %s56, 1
        // Predicated region
        $region13: #{tpu_custom_call.1} parent=11 // pred_check
          %p677 = pneg %p221
        $region14: #{tpu_custom_call.1} parent=11 // pred_check_branch
          %679 = sbr.rel (%p677) target = $region16
        $region15: #{tpu_custom_call.1} parent=11 // pred_region
          %s681 = ssub.s32 1024, 1024
          %682 = vsyncadd [#allocation12], %s681
          %s683 = sshll.u32 [#allocation11], 4
          %s684 = int_to_ptr.vmem [resolvable:$true] %s683
          %689 = dma.hbm_to_vmem [thread:$0]  %s5, 1024, %s684, [#allocation12], 64, 64, 4
        $region16: #{tpu_custom_call.1} parent=11 // pred_fallthru
          _
        // Predicated region
        $region17: #{tpu_custom_call.1} parent=11 // pred_check
          %p690 = pneg %p242
        $region18: #{tpu_custom_call.1} parent=11 // pred_check_branch
          %692 = sbr.rel (%p690) target = $region20
        $region19: #{tpu_custom_call.1} parent=11 // pred_region
          %s694 = ssub.s32 64, 64
          %695 = vsyncadd [#allocation12], %s694
          %s696 = sshll.u32 [#allocation13], 4
          %s697 = int_to_ptr.vmem [resolvable:$true] %s696
          %702 = dma.hbm_to_vmem [thread:$0]  %s6, 64, %s697, [#allocation12], 16, 16, 1
        $region20: #{tpu_custom_call.1} parent=11 // pred_fallthru
          _
        // Predicated region
        $region21: #{tpu_custom_call.1} parent=11 // pred_check
          %p703 = pneg %p263
        $region22: #{tpu_custom_call.1} parent=11 // pred_check_branch
          %705 = sbr.rel (%p703) target = $region24
        $region23: #{tpu_custom_call.1} parent=11 // pred_region
          %s707 = ssub.s32 256, 256
          %708 = vsyncadd [#allocation15], %s707
          %s709 = sshll.u32 [#allocation14], 4
          %s710 = int_to_ptr.vmem [resolvable:$true] %s709
          %715 = dma.hbm_to_vmem [thread:$0]  %s7, 256, %s710, [#allocation15], 64, 64, 4
        $region24: #{tpu_custom_call.1} parent=11 // pred_fallthru
          _
        // Predicated region
        $region25: #{tpu_custom_call.1} parent=11 // pred_check
          %p716 = pneg %p284
        $region26: #{tpu_custom_call.1} parent=11 // pred_check_branch
          %718 = sbr.rel (%p716) target = $region28
        $region27: #{tpu_custom_call.1} parent=11 // pred_region
          %s720 = ssub.s32 16, 16
          %721 = vsyncadd [#allocation15], %s720
          %s723 = sshll.u32 [#allocation16], 4
          %s724 = int_to_ptr.vmem [resolvable:$true] %s723
          %726 = dma.hbm_to_vmem [thread:$0]  %s8, 16, %s724, [#allocation15]
        $region28: #{tpu_custom_call.1} parent=11 // pred_fallthru
          _
        // Predicated region
        $region29: #{tpu_custom_call.1} parent=11 // pred_check
          %p727 = pneg %p305
        $region30: #{tpu_custom_call.1} parent=11 // pred_check_branch
          %729 = sbr.rel (%p727) target = $region32
        $region31: #{tpu_custom_call.1} parent=11 // pred_region
          %s731 = ssub.s32 16, 16
          %732 = vsyncadd [#allocation18], %s731
          %s734 = sshll.u32 [#allocation17], 4
          %s735 = int_to_ptr.vmem [resolvable:$true] %s734
          %737 = dma.hbm_to_vmem [thread:$0]  %s9, 16, %s735, [#allocation18]
        $region32: #{tpu_custom_call.1} parent=11 // pred_fallthru
          _
        // Predicated region
        $region33: #{tpu_custom_call.1} parent=11 // pred_check
          %p738 = pneg %p326
        $region34: #{tpu_custom_call.1} parent=11 // pred_check_branch
          %740 = sbr.rel (%p738) target = $region36
        $region35: #{tpu_custom_call.1} parent=11 // pred_region
          %s742 = ssub.s32 16, 16
          %743 = vsyncadd [#allocation18], %s742
          %s745 = sshll.u32 [#allocation19], 4
          %s746 = int_to_ptr.vmem [resolvable:$true] %s745
          %748 = dma.hbm_to_vmem [thread:$0]  %s10, 16, %s746, [#allocation18]
        $region36: #{tpu_custom_call.1} parent=11 // pred_fallthru
          _
        // Predicated region
        $region37: #{tpu_custom_call.1} parent=11 // pred_check
          %p749 = pneg %p347
        $region38: #{tpu_custom_call.1} parent=11 // pred_check_branch
          %751 = sbr.rel (%p749) target = $region40
        $region39: #{tpu_custom_call.1} parent=11 // pred_region
          %s753 = ssub.s32 1024, 1024
          %754 = vsyncadd [#allocation21], %s753
          %s755 = sshll.u32 [#allocation20], 4
          %s756 = int_to_ptr.vmem [resolvable:$true] %s755
          %761 = dma.hbm_to_vmem [thread:$0]  %s11, 1024, %s756, [#allocation21], 64, 64, 4
        $region40: #{tpu_custom_call.1} parent=11 // pred_fallthru
          _
        // Predicated region
        $region41: #{tpu_custom_call.1} parent=11 // pred_check
          %p762 = pneg %p368
        $region42: #{tpu_custom_call.1} parent=11 // pred_check_branch
          %764 = sbr.rel (%p762) target = $region44
        $region43: #{tpu_custom_call.1} parent=11 // pred_region
          %s766 = ssub.s32 64, 64
          %767 = vsyncadd [#allocation21], %s766
          %s768 = sshll.u32 [#allocation22], 4
          %s769 = int_to_ptr.vmem [resolvable:$true] %s768
          %774 = dma.hbm_to_vmem [thread:$0]  %s12, 64, %s769, [#allocation21], 16, 16, 1
        $region44: #{tpu_custom_call.1} parent=11 // pred_fallthru
          _
        // Predicated region
        $region45: #{tpu_custom_call.1} parent=11 // pred_check
          %p775 = pneg %p389
        $region46: #{tpu_custom_call.1} parent=11 // pred_check_branch
          %777 = sbr.rel (%p775) target = $region48
        $region47: #{tpu_custom_call.1} parent=11 // pred_region
          %s779 = ssub.s32 256, 256
          %780 = vsyncadd [#allocation24], %s779
          %s781 = sshll.u32 [#allocation23], 4
          %s782 = int_to_ptr.vmem [resolvable:$true] %s781
          %787 = dma.hbm_to_vmem [thread:$0]  %s13, 256, %s782, [#allocation24], 64, 64, 4
        $region48: #{tpu_custom_call.1} parent=11 // pred_fallthru
          _
        // Predicated region
        $region49: #{tpu_custom_call.1} parent=11 // pred_check
          %p788 = pneg %p410
        $region50: #{tpu_custom_call.1} parent=11 // pred_check_branch
          %790 = sbr.rel (%p788) target = $region52
        $region51: #{tpu_custom_call.1} parent=11 // pred_region
          %s792 = ssub.s32 16, 16
          %793 = vsyncadd [#allocation24], %s792
          %s795 = sshll.u32 [#allocation25], 4
          %s796 = int_to_ptr.vmem [resolvable:$true] %s795
          %798 = dma.hbm_to_vmem [thread:$0]  %s14, 16, %s796, [#allocation24]
        $region52: #{tpu_custom_call.1} parent=11 // pred_fallthru
          _
        // Predicated region
        $region53: #{tpu_custom_call.1} parent=11 // pred_check
          %p799 = pneg %p431
        $region54: #{tpu_custom_call.1} parent=11 // pred_check_branch
          %801 = sbr.rel (%p799) target = $region56
        $region55: #{tpu_custom_call.1} parent=11 // pred_region
          %s803 = ssub.s32 16, 16
          %804 = vsyncadd [#allocation27], %s803
          %s806 = sshll.u32 [#allocation26], 4
          %s807 = int_to_ptr.vmem [resolvable:$true] %s806
          %809 = dma.hbm_to_vmem [thread:$0]  %s15, 16, %s807, [#allocation27]
        $region56: #{tpu_custom_call.1} parent=11 // pred_fallthru
          _
        // Predicated region
        $region57: #{tpu_custom_call.1} parent=11 // pred_check
          %p810 = pneg %p452
        $region58: #{tpu_custom_call.1} parent=11 // pred_check_branch
          %812 = sbr.rel (%p810) target = $region60
        $region59: #{tpu_custom_call.1} parent=11 // pred_region
          %s814 = ssub.s32 16, 16
          %815 = vsyncadd [#allocation27], %s814
          %s817 = sshll.u32 [#allocation28], 4
          %s818 = int_to_ptr.vmem [resolvable:$true] %s817
          %820 = dma.hbm_to_vmem [thread:$0]  %s16, 16, %s818, [#allocation27]
        $region60: #{tpu_custom_call.1} parent=11 // pred_fallthru
          _
        // Predicated region
        $region61: #{tpu_custom_call.1} parent=11 // pred_check
          %p821 = pneg %p473
        $region62: #{tpu_custom_call.1} parent=11 // pred_check_branch
          %823 = sbr.rel (%p821) target = $region64
        $region63: #{tpu_custom_call.1} parent=11 // pred_region
          %s825 = ssub.s32 256, 256
          %826 = vsyncadd [#allocation30], %s825
          %s827 = sshll.u32 [#allocation29], 4
          %s828 = int_to_ptr.vmem [resolvable:$true] %s827
          %833 = dma.hbm_to_vmem [thread:$0]  %s17, 256, %s828, [#allocation30], 64, 64, 4
        $region64: #{tpu_custom_call.1} parent=11 // pred_fallthru
          _
        // Predicated region
        $region65: #{tpu_custom_call.1} parent=11 // pred_check
          %p834 = pneg %p494
        $region66: #{tpu_custom_call.1} parent=11 // pred_check_branch
          %836 = sbr.rel (%p834) target = $region68
        $region67: #{tpu_custom_call.1} parent=11 // pred_region
          %s838 = ssub.s32 16, 16
          %839 = vsyncadd [#allocation30], %s838
          %s841 = sshll.u32 [#allocation31], 4
          %s842 = int_to_ptr.vmem [resolvable:$true] %s841
          %844 = dma.hbm_to_vmem [thread:$0]  %s18, 16, %s842, [#allocation30]
        $region68: #{tpu_custom_call.1} parent=11 // pred_fallthru
          _
        // Predicated region
        $region69: #{tpu_custom_call.1} parent=11 // pred_check
          %p845 = pneg %p515
        $region70: #{tpu_custom_call.1} parent=11 // pred_check_branch
          %847 = sbr.rel (%p845) target = $region72
        $region71: #{tpu_custom_call.1} parent=11 // pred_region
          %s849 = ssub.s32 512, 512
          %850 = vsyncadd [#allocation33], %s849
          %s851 = sshll.u32 [#allocation32], 4
          %s852 = int_to_ptr.vmem [resolvable:$true] %s851
          %857 = dma.hbm_to_vmem [thread:$0]  %s19, 512, %s852, [#allocation33], 64, 64, 4
        $region72: #{tpu_custom_call.1} parent=11 // pred_fallthru
          _
        // Predicated region
        $region73: #{tpu_custom_call.1} parent=11 // pred_check
          %p858 = pneg %p536
        $region74: #{tpu_custom_call.1} parent=11 // pred_check_branch
          %860 = sbr.rel (%p858) target = $region76
        $region75: #{tpu_custom_call.1} parent=11 // pred_region
          %s862 = ssub.s32 16, 16
          %863 = vsyncadd [#allocation33], %s862
          %s865 = sshll.u32 [#allocation34], 4
          %s866 = int_to_ptr.vmem [resolvable:$true] %s865
          %868 = dma.hbm_to_vmem [thread:$0]  %s20, 16, %s866, [#allocation33]
        $region76: #{tpu_custom_call.1} parent=11 // pred_fallthru
          _
        // Predicated region
        $region77: #{tpu_custom_call.1} parent=11 // pred_check
          %p869 = pneg %p557
        $region78: #{tpu_custom_call.1} parent=11 // pred_check_branch
          %871 = sbr.rel (%p869) target = $region80
        $region79: #{tpu_custom_call.1} parent=11 // pred_region
          %s873 = ssub.s32 16, 16
          %874 = vsyncadd [#allocation36], %s873
          %s876 = sshll.u32 [#allocation35], 4
          %s877 = int_to_ptr.vmem [resolvable:$true] %s876
          %879 = dma.hbm_to_vmem [thread:$0]  %s21, 16, %s877, [#allocation36]
        $region80: #{tpu_custom_call.1} parent=11 // pred_fallthru
          _
        // Predicated region
        $region81: #{tpu_custom_call.1} parent=11 // pred_check
          %p880 = pneg %p578
        $region82: #{tpu_custom_call.1} parent=11 // pred_check_branch
          %882 = sbr.rel (%p880) target = $region84
        $region83: #{tpu_custom_call.1} parent=11 // pred_region
          %s884 = ssub.s32 16, 16
          %885 = vsyncadd [#allocation36], %s884
          %s887 = sshll.u32 [#allocation37], 4
          %s888 = int_to_ptr.vmem [resolvable:$true] %s887
          %890 = dma.hbm_to_vmem [thread:$0]  %s22, 16, %s888, [#allocation36]
        $region84: #{tpu_custom_call.1} parent=11 // pred_fallthru
          _
      $region12: #{tpu_custom_call.1} parent=5 // pred_fallthru
        _
      %p891 = scmp.lt.s32.totalorder %s56, 2
      // Predicated region
      $region85: #{tpu_custom_call.1} parent=5 // pred_check
        %p892 = pneg %p891
      $region86: #{tpu_custom_call.1} parent=5 // pred_check_branch
        %894 = sbr.rel (%p892) target = $region88
      $region87: #{tpu_custom_call.1} parent=5 // pred_region
        // Predicated region
        $region89: #{tpu_custom_call.1} parent=87 // pred_check
          %p895 = pneg %p90
        $region90: #{tpu_custom_call.1} parent=87 // pred_check_branch
          %897 = sbr.rel (%p895) target = $region92
        $region91: #{tpu_custom_call.1} parent=87 // pred_region
          %s898 = sand.u32 %s80, 1
          %s899 = scalar_lea.sflag [#allocation3], %s898
          %s900 = sand.u32 %s80, 1
          %s901 = smul.addr %s900, 8
          %s902 = scalar_lea.vmem [#allocation2], %s901
          %s904 = ssub.s32 128, 128
          %905 = vsyncadd %s899, %s904
          %s906 = sadd.s32 %s64, %s63
          %s907 = smul.addr %s906, 128
          %s908 = scalar_lea.hbm %s0, %s907
          %s910 = sshll.u32 %s902, 4
          %s911 = int_to_ptr.vmem [resolvable:$true] %s910
          %913 = dma.hbm_to_vmem [thread:$0]  %s908, 128, %s911, %s899
        $region92: #{tpu_custom_call.1} parent=87 // pred_fallthru
          _
        // Predicated region
        $region93: #{tpu_custom_call.1} parent=87 // pred_check
          %p914 = pneg %p116
        $region94: #{tpu_custom_call.1} parent=87 // pred_check_branch
          %916 = sbr.rel (%p914) target = $region96
        $region95: #{tpu_custom_call.1} parent=87 // pred_region
          %s917 = sand.u32 %s56, 1
          %s918 = scalar_lea.sflag [#allocation6], %s917
          %s919 = sand.u32 %s106, 1
          %s920 = smul.addr %s919, 16
          %s921 = scalar_lea.vmem [#allocation5], %s920
          %s923 = ssub.s32 256, 256
          %924 = vsyncadd %s918, %s923
          %s925 = smul.addr %s63, 4
          %s926 = smul.addr %s925, 64
          %s927 = scalar_lea.hbm %s1, %s926
          %s928 = sshll.u32 %s921, 4
          %s929 = int_to_ptr.vmem [resolvable:$true] %s928
          %934 = dma.hbm_to_vmem [thread:$0]  %s927, 256, %s929, %s918, 64, 64, 4
        $region96: #{tpu_custom_call.1} parent=87 // pred_fallthru
          _
        // Predicated region
        $region97: #{tpu_custom_call.1} parent=87 // pred_check
          %p935 = pneg %p142
        $region98: #{tpu_custom_call.1} parent=87 // pred_check_branch
          %937 = sbr.rel (%p935) target = $region100
        $region99: #{tpu_custom_call.1} parent=87 // pred_region
          %s938 = sand.u32 %s56, 1
          %s939 = scalar_lea.sflag [#allocation6], %s938
          %s940 = sand.u32 %s132, 1
          %s941 = smul.addr %s940, 16
          %s942 = scalar_lea.vmem [#allocation7], %s941
          %s944 = ssub.s32 256, 256
          %945 = vsyncadd %s939, %s944
          %s946 = smul.addr %s63, 4
          %s947 = smul.addr %s946, 64
          %s948 = scalar_lea.hbm %s2, %s947
          %s949 = sshll.u32 %s942, 4
          %s950 = int_to_ptr.vmem [resolvable:$true] %s949
          %955 = dma.hbm_to_vmem [thread:$0]  %s948, 256, %s950, %s939, 64, 64, 4
        $region100: #{tpu_custom_call.1} parent=87 // pred_fallthru
          _
        // Predicated region
        $region101: #{tpu_custom_call.1} parent=87 // pred_check
          %p956 = pneg %p168
        $region102: #{tpu_custom_call.1} parent=87 // pred_check_branch
          %958 = sbr.rel (%p956) target = $region104
        $region103: #{tpu_custom_call.1} parent=87 // pred_region
          %s959 = sand.u32 %s56, 1
          %s960 = scalar_lea.sflag [#allocation9], %s959
          %s961 = sand.u32 %s158, 1
          %s962 = smul.addr %s961, 32
          %s963 = scalar_lea.vmem [#allocation8], %s962
          %s965 = ssub.s32 512, 512
          %966 = vsyncadd %s960, %s965
          %s967 = smul.addr %s63, 8
          %s968 = smul.addr %s967, 64
          %s969 = scalar_lea.hbm %s3, %s968
          %s970 = sshll.u32 %s963, 4
          %s971 = int_to_ptr.vmem [resolvable:$true] %s970
          %976 = dma.hbm_to_vmem [thread:$0]  %s969, 512, %s971, %s960, 64, 64, 4
        $region104: #{tpu_custom_call.1} parent=87 // pred_fallthru
          _
        // Predicated region
        $region105: #{tpu_custom_call.1} parent=87 // pred_check
          %p977 = pneg %p194
        $region106: #{tpu_custom_call.1} parent=87 // pred_check_branch
          %979 = sbr.rel (%p977) target = $region108
        $region107: #{tpu_custom_call.1} parent=87 // pred_region
          %s980 = sand.u32 %s56, 1
          %s981 = scalar_lea.sflag [#allocation9], %s980
          %s982 = sand.u32 %s184, 1
          %s983 = smul.addr %s982, 32
          %s984 = scalar_lea.vmem [#allocation10], %s983
          %s986 = ssub.s32 512, 512
          %987 = vsyncadd %s981, %s986
          %s988 = smul.addr %s63, 8
          %s989 = smul.addr %s988, 64
          %s990 = scalar_lea.hbm %s4, %s989
          %s991 = sshll.u32 %s984, 4
          %s992 = int_to_ptr.vmem [resolvable:$true] %s991
          %997 = dma.hbm_to_vmem [thread:$0]  %s990, 512, %s992, %s981, 64, 64, 4
        $region108: #{tpu_custom_call.1} parent=87 // pred_fallthru
          _
      $region88: #{tpu_custom_call.1} parent=5 // pred_fallthru
        _
      %p998 = scmp.le.s32.totalorder 1, %s56
      %p999 = scmp.lt.s32.totalorder %s56, 3
      %p1000 = pnand %p998, %p999
      %p1001 = pneg %p1000
      // Predicated region
      $region109: #{tpu_custom_call.1} parent=5 // pred_check
        _
      $region110: #{tpu_custom_call.1} parent=5 // pred_check_branch
        %1003 = sbr.rel (%p1000) target = $region112
      $region111: #{tpu_custom_call.1} parent=5 // pred_region
        %s1004 = ssub.s32 %s56, 1
        %s1005 = sand.u32 %s83, 1
        %s1006 = scalar_lea.sflag [#allocation3], %s1005
        %s1007 = sand.u32 %s83, 1
        %s1008 = smul.addr %s1007, 8
        %s1009 = scalar_lea.vmem [#allocation2], %s1008
        // Predicated region
        $region113: #{tpu_custom_call.1} parent=111 // pred_check
          %p1010 = pneg %p96
        $region114: #{tpu_custom_call.1} parent=111 // pred_check_branch
          %1012 = sbr.rel (%p1010) target = $region116
        $region115: #{tpu_custom_call.1} parent=111 // pred_region
          %1013 = dma.done %s1006, 128
        $region116: #{tpu_custom_call.1} parent=111 // pred_fallthru
          _
        %s1014 = sand.u32 %s61, 1
        %s1015 = scalar_lea.sflag [#allocation6], %s1014
        %s1016 = sand.u32 %s109, 1
        %s1017 = smul.addr %s1016, 16
        %s1018 = scalar_lea.vmem [#allocation5], %s1017
        // Predicated region
        $region117: #{tpu_custom_call.1} parent=111 // pred_check
          %p1019 = pneg %p122
        $region118: #{tpu_custom_call.1} parent=111 // pred_check_branch
          %1021 = sbr.rel (%p1019) target = $region120
        $region119: #{tpu_custom_call.1} parent=111 // pred_region
          %1022 = dma.done %s1015, 256
        $region120: #{tpu_custom_call.1} parent=111 // pred_fallthru
          _
        %s1023 = sand.u32 %s61, 1
        %s1024 = scalar_lea.sflag [#allocation6], %s1023
        %s1025 = sand.u32 %s135, 1
        %s1026 = smul.addr %s1025, 16
        %s1027 = scalar_lea.vmem [#allocation7], %s1026
        // Predicated region
        $region121: #{tpu_custom_call.1} parent=111 // pred_check
          %p1028 = pneg %p148
        $region122: #{tpu_custom_call.1} parent=111 // pred_check_branch
          %1030 = sbr.rel (%p1028) target = $region124
        $region123: #{tpu_custom_call.1} parent=111 // pred_region
          %1031 = dma.done %s1024, 256
        $region124: #{tpu_custom_call.1} parent=111 // pred_fallthru
          _
        %s1032 = sand.u32 %s61, 1
        %s1033 = scalar_lea.sflag [#allocation9], %s1032
        %s1034 = sand.u32 %s161, 1
        %s1035 = smul.addr %s1034, 32
        %s1036 = scalar_lea.vmem [#allocation8], %s1035
        // Predicated region
        $region125: #{tpu_custom_call.1} parent=111 // pred_check
          %p1037 = pneg %p174
        $region126: #{tpu_custom_call.1} parent=111 // pred_check_branch
          %1039 = sbr.rel (%p1037) target = $region128
        $region127: #{tpu_custom_call.1} parent=111 // pred_region
          %1040 = dma.done %s1033, 512
        $region128: #{tpu_custom_call.1} parent=111 // pred_fallthru
          _
        %s1041 = sand.u32 %s61, 1
        %s1042 = scalar_lea.sflag [#allocation9], %s1041
        %s1043 = sand.u32 %s187, 1
        %s1044 = smul.addr %s1043, 32
        %s1045 = scalar_lea.vmem [#allocation10], %s1044
        // Predicated region
        $region129: #{tpu_custom_call.1} parent=111 // pred_check
          %p1046 = pneg %p200
        $region130: #{tpu_custom_call.1} parent=111 // pred_check_branch
          %1048 = sbr.rel (%p1046) target = $region132
        $region131: #{tpu_custom_call.1} parent=111 // pred_region
          %1049 = dma.done %s1042, 512
        $region132: #{tpu_custom_call.1} parent=111 // pred_fallthru
          _
        // Predicated region
        $region133: #{tpu_custom_call.1} parent=111 // pred_check
          %p1050 = pneg %p221
        $region134: #{tpu_custom_call.1} parent=111 // pred_check_branch
          %1052 = sbr.rel (%p1050) target = $region136
        $region135: #{tpu_custom_call.1} parent=111 // pred_region
          %1053 = dma.done [#allocation12], 1024
        $region136: #{tpu_custom_call.1} parent=111 // pred_fallthru
          _
        // Predicated region
        $region137: #{tpu_custom_call.1} parent=111 // pred_check
          %p1054 = pneg %p242
        $region138: #{tpu_custom_call.1} parent=111 // pred_check_branch
          %1056 = sbr.rel (%p1054) target = $region140
        $region139: #{tpu_custom_call.1} parent=111 // pred_region
          %1057 = dma.done [#allocation12], 64
        $region140: #{tpu_custom_call.1} parent=111 // pred_fallthru
          _
        // Predicated region
        $region141: #{tpu_custom_call.1} parent=111 // pred_check
          %p1058 = pneg %p263
        $region142: #{tpu_custom_call.1} parent=111 // pred_check_branch
          %1060 = sbr.rel (%p1058) target = $region144
        $region143: #{tpu_custom_call.1} parent=111 // pred_region
          %1061 = dma.done [#allocation15], 256
        $region144: #{tpu_custom_call.1} parent=111 // pred_fallthru
          _
        // Predicated region
        $region145: #{tpu_custom_call.1} parent=111 // pred_check
          %p1062 = pneg %p284
        $region146: #{tpu_custom_call.1} parent=111 // pred_check_branch
          %1064 = sbr.rel (%p1062) target = $region148
        $region147: #{tpu_custom_call.1} parent=111 // pred_region
          %1065 = dma.done [#allocation15], 16
        $region148: #{tpu_custom_call.1} parent=111 // pred_fallthru
          _
        // Predicated region
        $region149: #{tpu_custom_call.1} parent=111 // pred_check
          %p1066 = pneg %p305
        $region150: #{tpu_custom_call.1} parent=111 // pred_check_branch
          %1068 = sbr.rel (%p1066) target = $region152
        $region151: #{tpu_custom_call.1} parent=111 // pred_region
          %1069 = dma.done [#allocation18], 16
        $region152: #{tpu_custom_call.1} parent=111 // pred_fallthru
          _
        // Predicated region
        $region153: #{tpu_custom_call.1} parent=111 // pred_check
          %p1070 = pneg %p326
        $region154: #{tpu_custom_call.1} parent=111 // pred_check_branch
          %1072 = sbr.rel (%p1070) target = $region156
        $region155: #{tpu_custom_call.1} parent=111 // pred_region
          %1073 = dma.done [#allocation18], 16
        $region156: #{tpu_custom_call.1} parent=111 // pred_fallthru
          _
        // Predicated region
        $region157: #{tpu_custom_call.1} parent=111 // pred_check
          %p1074 = pneg %p347
        $region158: #{tpu_custom_call.1} parent=111 // pred_check_branch
          %1076 = sbr.rel (%p1074) target = $region160
        $region159: #{tpu_custom_call.1} parent=111 // pred_region
          %1077 = dma.done [#allocation21], 1024
        $region160: #{tpu_custom_call.1} parent=111 // pred_fallthru
          _
        // Predicated region
        $region161: #{tpu_custom_call.1} parent=111 // pred_check
          %p1078 = pneg %p368
        $region162: #{tpu_custom_call.1} parent=111 // pred_check_branch
          %1080 = sbr.rel (%p1078) target = $region164
        $region163: #{tpu_custom_call.1} parent=111 // pred_region
          %1081 = dma.done [#allocation21], 64
        $region164: #{tpu_custom_call.1} parent=111 // pred_fallthru
          _
        // Predicated region
        $region165: #{tpu_custom_call.1} parent=111 // pred_check
          %p1082 = pneg %p389
        $region166: #{tpu_custom_call.1} parent=111 // pred_check_branch
          %1084 = sbr.rel (%p1082) target = $region168
        $region167: #{tpu_custom_call.1} parent=111 // pred_region
          %1085 = dma.done [#allocation24], 256
        $region168: #{tpu_custom_call.1} parent=111 // pred_fallthru
          _
        // Predicated region
        $region169: #{tpu_custom_call.1} parent=111 // pred_check
          %p1086 = pneg %p410
        $region170: #{tpu_custom_call.1} parent=111 // pred_check_branch
          %1088 = sbr.rel (%p1086) target = $region172
        $region171: #{tpu_custom_call.1} parent=111 // pred_region
          %1089 = dma.done [#allocation24], 16
        $region172: #{tpu_custom_call.1} parent=111 // pred_fallthru
          _
        // Predicated region
        $region173: #{tpu_custom_call.1} parent=111 // pred_check
          %p1090 = pneg %p431
        $region174: #{tpu_custom_call.1} parent=111 // pred_check_branch
          %1092 = sbr.rel (%p1090) target = $region176
        $region175: #{tpu_custom_call.1} parent=111 // pred_region
          %1093 = dma.done [#allocation27], 16
        $region176: #{tpu_custom_call.1} parent=111 // pred_fallthru
          _
        // Predicated region
        $region177: #{tpu_custom_call.1} parent=111 // pred_check
          %p1094 = pneg %p452
        $region178: #{tpu_custom_call.1} parent=111 // pred_check_branch
          %1096 = sbr.rel (%p1094) target = $region180
        $region179: #{tpu_custom_call.1} parent=111 // pred_region
          %1097 = dma.done [#allocation27], 16
        $region180: #{tpu_custom_call.1} parent=111 // pred_fallthru
          _
        // Predicated region
        $region181: #{tpu_custom_call.1} parent=111 // pred_check
          %p1098 = pneg %p473
        $region182: #{tpu_custom_call.1} parent=111 // pred_check_branch
          %1100 = sbr.rel (%p1098) target = $region184
        $region183: #{tpu_custom_call.1} parent=111 // pred_region
          %1101 = dma.done [#allocation30], 256
        $region184: #{tpu_custom_call.1} parent=111 // pred_fallthru
          _
        // Predicated region
        $region185: #{tpu_custom_call.1} parent=111 // pred_check
          %p1102 = pneg %p494
        $region186: #{tpu_custom_call.1} parent=111 // pred_check_branch
          %1104 = sbr.rel (%p1102) target = $region188
        $region187: #{tpu_custom_call.1} parent=111 // pred_region
          %1105 = dma.done [#allocation30], 16
        $region188: #{tpu_custom_call.1} parent=111 // pred_fallthru
          _
        // Predicated region
        $region189: #{tpu_custom_call.1} parent=111 // pred_check
          %p1106 = pneg %p515
        $region190: #{tpu_custom_call.1} parent=111 // pred_check_branch
          %1108 = sbr.rel (%p1106) target = $region192
        $region191: #{tpu_custom_call.1} parent=111 // pred_region
          %1109 = dma.done [#allocation33], 512
        $region192: #{tpu_custom_call.1} parent=111 // pred_fallthru
          _
        // Predicated region
        $region193: #{tpu_custom_call.1} parent=111 // pred_check
          %p1110 = pneg %p536
        $region194: #{tpu_custom_call.1} parent=111 // pred_check_branch
          %1112 = sbr.rel (%p1110) target = $region196
        $region195: #{tpu_custom_call.1} parent=111 // pred_region
          %1113 = dma.done [#allocation33], 16
        $region196: #{tpu_custom_call.1} parent=111 // pred_fallthru
          _
        // Predicated region
        $region197: #{tpu_custom_call.1} parent=111 // pred_check
          %p1114 = pneg %p557
        $region198: #{tpu_custom_call.1} parent=111 // pred_check_branch
          %1116 = sbr.rel (%p1114) target = $region200
        $region199: #{tpu_custom_call.1} parent=111 // pred_region
          %1117 = dma.done [#allocation36], 16
        $region200: #{tpu_custom_call.1} parent=111 // pred_fallthru
          _
        // Predicated region
        $region201: #{tpu_custom_call.1} parent=111 // pred_check
          %p1118 = pneg %p578
        $region202: #{tpu_custom_call.1} parent=111 // pred_check_branch
          %1120 = sbr.rel (%p1118) target = $region204
        $region203: #{tpu_custom_call.1} parent=111 // pred_region
          %1121 = dma.done [#allocation36], 16
        $region204: #{tpu_custom_call.1} parent=111 // pred_fallthru
          _
        %s1122 = sand.u32 %s83, 1
        %s1123 = scalar_lea.sflag [#allocation3], %s1122
        %s1124 = sand.u32 %s83, 1
        %s1125 = smul.addr %s1124, 8
        %s1126 = scalar_lea.vmem [#allocation2], %s1125
        %p1127 = pneg %p96
        %p1128 = pneg %p93
        %s1129 = sand.u32 %s61, 1
        %s1130 = scalar_lea.sflag [#allocation6], %s1129
        %s1131 = sand.u32 %s109, 1
        %s1132 = smul.addr %s1131, 16
        %s1133 = scalar_lea.vmem [#allocation5], %s1132
        %p1134 = pneg %p122
        %p1135 = pneg %p119
        %s1136 = sand.u32 %s61, 1
        %s1137 = scalar_lea.sflag [#allocation6], %s1136
        %s1138 = sand.u32 %s135, 1
        %s1139 = smul.addr %s1138, 16
        %s1140 = scalar_lea.vmem [#allocation7], %s1139
        %p1141 = pneg %p148
        %p1142 = pneg %p145
        %s1143 = sand.u32 %s61, 1
        %s1144 = scalar_lea.sflag [#allocation9], %s1143
        %s1145 = sand.u32 %s161, 1
        %s1146 = smul.addr %s1145, 32
        %s1147 = scalar_lea.vmem [#allocation8], %s1146
        %p1148 = pneg %p174
        %p1149 = pneg %p171
        %s1150 = sand.u32 %s61, 1
        %s1151 = scalar_lea.sflag [#allocation9], %s1150
        %s1152 = sand.u32 %s187, 1
        %s1153 = smul.addr %s1152, 32
        %s1154 = scalar_lea.vmem [#allocation10], %s1153
        %p1155 = pneg %p200
        %p1156 = pneg %p197
        %p1157 = pneg %p221
        %p1158 = pneg %p218
        %p1159 = pneg %p242
        %p1160 = pneg %p239
        %p1161 = pneg %p263
        %p1162 = pneg %p260
        %p1163 = pneg %p284
        %p1164 = pneg %p281
        %p1165 = pneg %p305
        %p1166 = pneg %p302
        %p1167 = pneg %p326
        %p1168 = pneg %p323
        %p1169 = pneg %p347
        %p1170 = pneg %p344
        %p1171 = pneg %p368
        %p1172 = pneg %p365
        %p1173 = pneg %p389
        %p1174 = pneg %p386
        %p1175 = pneg %p410
        %p1176 = pneg %p407
        %p1177 = pneg %p431
        %p1178 = pneg %p428
        %p1179 = pneg %p452
        %p1180 = pneg %p449
        %p1181 = pneg %p473
        %p1182 = pneg %p470
        %p1183 = pneg %p494
        %p1184 = pneg %p491
        %p1185 = pneg %p515
        %p1186 = pneg %p512
        %p1187 = pneg %p536
        %p1188 = pneg %p533
        %p1189 = pneg %p557
        %p1190 = pneg %p554
        %p1191 = pneg %p578
        %p1192 = pneg %p575
        %p1193 = pneg %p606
        %p1194 = pneg %p603
        %s1195 = sand.u32 %s593, 1
        %s1196 = scalar_lea.sflag [#allocation4], %s1195
        %s1197 = sand.u32 %s593, 1
        %s1198 = smul.addr %s1197, 8
        %s1199 = scalar_lea.vmem [#allocation38], %s1198
        %p1200 = pneg %p634
        %p1201 = pneg %p631
        %s1202 = sand.u32 %s61, 1
        %s1203 = scalar_lea.sflag [#allocation40], %s1202
        %s1204 = sand.u32 %s621, 1
        %s1205 = smul.addr %s1204, 8
        %s1206 = scalar_lea.vmem [#allocation39], %s1205
        %p1207 = pneg %p662
        %p1208 = pneg %p659
        %s1209 = sand.u32 %s61, 1
        %s1210 = scalar_lea.sflag [#allocation40], %s1209
        %s1211 = sand.u32 %s649, 1
        %s1212 = smul.addr %s1211, 8
        %s1213 = scalar_lea.vmem [#allocation41], %s1212
        %v1215 = vld [vmem:[%s1009] sm:$0xff]
        %v1216 = vpack.c.bf16 %v1215, %v1215
        %v1217 = vld [vmem:[%s1018] sm:$0xf]
        %v1218 = vld [vmem:[%s1018 + $0x4] sm:$0xf]
        %v1219 = vld [vmem:[%s1018 + $0x8] sm:$0xf]
        %v1220 = vld [vmem:[%s1018 + $0xc] sm:$0xf]
        %v1221 = vld [vmem:[%s1027] sm:$0xf]
        %v1222 = vld [vmem:[%s1027 + $0x4] sm:$0xf]
        %v1223 = vld [vmem:[%s1027 + $0x8] sm:$0xf]
        %v1224 = vld [vmem:[%s1027 + $0xc] sm:$0xf]
        %v1225 = vld [vmem:[#allocation11] sm:$0xf]
        %v1226 = vld [vmem:[#allocation11 + $0x4] sm:$0xf]
        %v1227 = vld [vmem:[#allocation11 + $0x8] sm:$0xf]
        %v1228 = vld [vmem:[#allocation11 + $0xc] sm:$0xf]
        %v1229 = vld [vmem:[#allocation11 + $0x10] sm:$0xf]
        %v1230 = vld [vmem:[#allocation11 + $0x14] sm:$0xf]
        %v1231 = vld [vmem:[#allocation11 + $0x18] sm:$0xf]
        %v1232 = vld [vmem:[#allocation11 + $0x1c] sm:$0xf]
        %v1233 = vld [vmem:[#allocation11 + $0x20] sm:$0xf]
        %v1234 = vld [vmem:[#allocation11 + $0x24] sm:$0xf]
        %v1235 = vld [vmem:[#allocation11 + $0x28] sm:$0xf]
        %v1236 = vld [vmem:[#allocation11 + $0x2c] sm:$0xf]
        %v1237 = vld [vmem:[#allocation11 + $0x30] sm:$0xf]
        %v1238 = vld [vmem:[#allocation11 + $0x34] sm:$0xf]
        %v1239 = vld [vmem:[#allocation11 + $0x38] sm:$0xf]
        %v1240 = vld [vmem:[#allocation11 + $0x3c] sm:$0xf]
        %v1241 = vld [vmem:[#allocation13] sm:$0x1]
        %v1242 = vld [vmem:[#allocation13 + $0x1] sm:$0x1]
        %v1243 = vld [vmem:[#allocation13 + $0x2] sm:$0x1]
        %v1244 = vld [vmem:[#allocation13 + $0x3] sm:$0x1]
        %v1245 = vld [vmem:[#allocation14] sm:$0xf]
        %v1246 = vld [vmem:[#allocation14 + $0x4] sm:$0xf]
        %v1247 = vld [vmem:[#allocation14 + $0x8] sm:$0xf]
        %v1248 = vld [vmem:[#allocation14 + $0xc] sm:$0xf]
        %v1249 = vld [vmem:[#allocation16] sm:$0x1]
        %v1250 = vld [vmem:[#allocation17] sm:$0x1]
        %v1251 = vld [vmem:[#allocation19] sm:$0x1]
        %v1256 = vlaneseq
        %v1257 = vshrl.u32 %v1256, 7
        %v1258 = vsub.s32 0, %v1257
        %v1259 = vrot.slane %v1241, %v1258
        %v1260 = vlaneseq
        %v1261 = vshrl.u32 %v1260, 7
        %v1262 = vsub.s32 0, %v1261
        %v1263 = vrot.slane %v1242, %v1262
        %v1264 = vlaneseq
        %v1265 = vshrl.u32 %v1264, 7
        %v1266 = vsub.s32 0, %v1265
        %v1267 = vrot.slane %v1243, %v1266
        %v1268 = vlaneseq
        %v1269 = vshrl.u32 %v1268, 7
        %v1270 = vsub.s32 0, %v1269
        %v1271 = vrot.slane %v1244, %v1270
        %v1280 = vunpack.c.l.b16 %v1225
        %v1281 = vunpack.c.l.b16 %v1226
        %v1282 = vunpack.c.l.b16 %v1227
        %v1283 = vunpack.c.l.b16 %v1228
        %v1284 = vpack.c.b16 %v1281, %v1280
        %v1285 = vpack.c.b16 %v1283, %v1282
        %vm1288 = vcmask 261120
        %v1290 = vsel %vm1288, %v1216, 0
        %1292 = vmatprep.subr.bf16.mxu0 0
        %1293 = vmatpush1.bf16.msra.mxu0 %v1284
        %1294 = vmatprep.subr.bf16.mxu0 0
        %1295 = vmatpush1.bf16.msra.mxu0 %v1285
        %1296 = vmatprep.subr.bf16.mxu0 0
        %1297 = vmatpush1.bf16.msra.mxu0 0
        %1298 = vmatprep.subr.bf16.mxu0 0
        %1299 = vmatpush1.bf16.msra.mxu0 0
        %1300 = vmatprep.subr.bf16.mxu0 0
        %1301 = vmatpush1.bf16.msra.mxu0 0
        %1302 = vmatprep.subr.bf16.mxu0 0
        %1303 = vmatpush1.bf16.msra.mxu0 0
        %1304 = vmatprep.subr.bf16.mxu0 0
        %1305 = vmatpush1.bf16.msra.mxu0 0
        %1306 = vmatprep.subr.bf16.mxu0 0
        %1307 = vmatpush1.bf16.msra.mxu0 0
        %1308 = vmatprep.subr.bf16.mxu0 0
        %1309 = vmatpush1.bf16.msra.mxu0 0
        %1310 = vmatprep.subr.bf16.mxu0 0
        %1311 = vmatpush1.bf16.msra.mxu0 0
        %1312 = vmatprep.subr.bf16.mxu0 0
        %1313 = vmatpush1.bf16.msra.mxu0 0
        %1314 = vmatprep.subr.bf16.mxu0 0
        %1315 = vmatpush1.bf16.msra.mxu0 0
        %1316 = vmatprep.subr.bf16.mxu0 0
        %1317 = vmatpush1.bf16.msra.mxu0 0
        %1318 = vmatprep.subr.bf16.mxu0 0
        %1319 = vmatpush1.bf16.msra.mxu0 0
        %1320 = vmatprep.subr.bf16.mxu0 0
        %1321 = vmatpush1.bf16.msra.mxu0 0
        %1322 = vmatprep.subr.bf16.mxu0 0
        %1323 = vmatpush1.bf16.msra.mxu0 0
        %1324 = vmatprep.mubr.bf16.mxu0 0
        %1325 = vmatmul.mubr.bf16.gmra.mrb[0].mxu0 %v1290
        %v1326 = vpop.f32.mrb[0].mxu0
        %v1327 = vadd.f32 %v1259, %v1326
        %v1328 = vpop.f32.mrb[0].mxu0
        %v1329 = vpop.f32.mrb[0].mxu0
        %v1330 = vpop.f32.mrb[0].mxu0
        %1331 = vdwg.mxu0
        %v1336 = vunpack.c.l.b16 %v1229
        %v1337 = vunpack.c.l.b16 %v1230
        %v1338 = vunpack.c.l.b16 %v1231
        %v1339 = vunpack.c.l.b16 %v1232
        %v1340 = vpack.c.b16 %v1337, %v1336
        %v1341 = vpack.c.b16 %v1339, %v1338
        %1344 = vmatprep.subr.bf16.mxu0 0
        %1345 = vmatpush1.bf16.msra.mxu0 %v1340
        %1346 = vmatprep.subr.bf16.mxu0 0
        %1347 = vmatpush1.bf16.msra.mxu0 %v1341
        %1348 = vmatprep.subr.bf16.mxu0 0
        %1349 = vmatpush1.bf16.msra.mxu0 0
        %1350 = vmatprep.subr.bf16.mxu0 0
        %1351 = vmatpush1.bf16.msra.mxu0 0
        %1352 = vmatprep.subr.bf16.mxu0 0
        %1353 = vmatpush1.bf16.msra.mxu0 0
        %1354 = vmatprep.subr.bf16.mxu0 0
        %1355 = vmatpush1.bf16.msra.mxu0 0
        %1356 = vmatprep.subr.bf16.mxu0 0
        %1357 = vmatpush1.bf16.msra.mxu0 0
        %1358 = vmatprep.subr.bf16.mxu0 0
        %1359 = vmatpush1.bf16.msra.mxu0 0
        %1360 = vmatprep.subr.bf16.mxu0 0
        %1361 = vmatpush1.bf16.msra.mxu0 0
        %1362 = vmatprep.subr.bf16.mxu0 0
        %1363 = vmatpush1.bf16.msra.mxu0 0
        %1364 = vmatprep.subr.bf16.mxu0 0
        %1365 = vmatpush1.bf16.msra.mxu0 0
        %1366 = vmatprep.subr.bf16.mxu0 0
        %1367 = vmatpush1.bf16.msra.mxu0 0
        %1368 = vmatprep.subr.bf16.mxu0 0
        %1369 = vmatpush1.bf16.msra.mxu0 0
        %1370 = vmatprep.subr.bf16.mxu0 0
        %1371 = vmatpush1.bf16.msra.mxu0 0
        %1372 = vmatprep.subr.bf16.mxu0 0
        %1373 = vmatpush1.bf16.msra.mxu0 0
        %1374 = vmatprep.subr.bf16.mxu0 0
        %1375 = vmatpush1.bf16.msra.mxu0 0
        %1376 = vmatprep.mubr.bf16.mxu0 0
        %1377 = vmatmul.mubr.bf16.gmra.mrb[0].mxu0 %v1290
        %v1378 = vpop.f32.mrb[0].mxu0
        %v1379 = vadd.f32 %v1263, %v1378
        %v1380 = vpop.f32.mrb[0].mxu0
        %v1381 = vpop.f32.mrb[0].mxu0
        %v1382 = vpop.f32.mrb[0].mxu0
        %1383 = vdwg.mxu0
        %v1388 = vunpack.c.l.b16 %v1233
        %v1389 = vunpack.c.l.b16 %v1234
        %v1390 = vunpack.c.l.b16 %v1235
        %v1391 = vunpack.c.l.b16 %v1236
        %v1392 = vpack.c.b16 %v1389, %v1388
        %v1393 = vpack.c.b16 %v1391, %v1390
        %1396 = vmatprep.subr.bf16.mxu0 0
        %1397 = vmatpush1.bf16.msra.mxu0 %v1392
        %1398 = vmatprep.subr.bf16.mxu0 0
        %1399 = vmatpush1.bf16.msra.mxu0 %v1393
        %1400 = vmatprep.subr.bf16.mxu0 0
        %1401 = vmatpush1.bf16.msra.mxu0 0
        %1402 = vmatprep.subr.bf16.mxu0 0
        %1403 = vmatpush1.bf16.msra.mxu0 0
        %1404 = vmatprep.subr.bf16.mxu0 0
        %1405 = vmatpush1.bf16.msra.mxu0 0
        %1406 = vmatprep.subr.bf16.mxu0 0
        %1407 = vmatpush1.bf16.msra.mxu0 0
        %1408 = vmatprep.subr.bf16.mxu0 0
        %1409 = vmatpush1.bf16.msra.mxu0 0
        %1410 = vmatprep.subr.bf16.mxu0 0
        %1411 = vmatpush1.bf16.msra.mxu0 0
        %1412 = vmatprep.subr.bf16.mxu0 0
        %1413 = vmatpush1.bf16.msra.mxu0 0
        %1414 = vmatprep.subr.bf16.mxu0 0
        %1415 = vmatpush1.bf16.msra.mxu0 0
        %1416 = vmatprep.subr.bf16.mxu0 0
        %1417 = vmatpush1.bf16.msra.mxu0 0
        %1418 = vmatprep.subr.bf16.mxu0 0
        %1419 = vmatpush1.bf16.msra.mxu0 0
        %1420 = vmatprep.subr.bf16.mxu0 0
        %1421 = vmatpush1.bf16.msra.mxu0 0
        %1422 = vmatprep.subr.bf16.mxu0 0
        %1423 = vmatpush1.bf16.msra.mxu0 0
        %1424 = vmatprep.subr.bf16.mxu0 0
        %1425 = vmatpush1.bf16.msra.mxu0 0
        %1426 = vmatprep.subr.bf16.mxu0 0
        %1427 = vmatpush1.bf16.msra.mxu0 0
        %1428 = vmatprep.mubr.bf16.mxu0 0
        %1429 = vmatmul.mubr.bf16.gmra.mrb[0].mxu0 %v1290
        %v1430 = vpop.f32.mrb[0].mxu0
        %v1431 = vadd.f32 %v1267, %v1430
        %v1432 = vpop.f32.mrb[0].mxu0
        %v1433 = vpop.f32.mrb[0].mxu0
        %v1434 = vpop.f32.mrb[0].mxu0
        %1435 = vdwg.mxu0
        %v1440 = vunpack.c.l.b16 %v1237
        %v1441 = vunpack.c.l.b16 %v1238
        %v1442 = vunpack.c.l.b16 %v1239
        %v1443 = vunpack.c.l.b16 %v1240
        %v1444 = vpack.c.b16 %v1441, %v1440
        %v1445 = vpack.c.b16 %v1443, %v1442
        %1448 = vmatprep.subr.bf16.mxu0 0
        %1449 = vmatpush1.bf16.msra.mxu0 %v1444
        %1450 = vmatprep.subr.bf16.mxu0 0
        %1451 = vmatpush1.bf16.msra.mxu0 %v1445
        %1452 = vmatprep.subr.bf16.mxu0 0
        %1453 = vmatpush1.bf16.msra.mxu0 0
        %1454 = vmatprep.subr.bf16.mxu0 0
        %1455 = vmatpush1.bf16.msra.mxu0 0
        %1456 = vmatprep.subr.bf16.mxu0 0
        %1457 = vmatpush1.bf16.msra.mxu0 0
        %1458 = vmatprep.subr.bf16.mxu0 0
        %1459 = vmatpush1.bf16.msra.mxu0 0
        %1460 = vmatprep.subr.bf16.mxu0 0
        %1461 = vmatpush1.bf16.msra.mxu0 0
        %1462 = vmatprep.subr.bf16.mxu0 0
        %1463 = vmatpush1.bf16.msra.mxu0 0
        %1464 = vmatprep.subr.bf16.mxu0 0
        %1465 = vmatpush1.bf16.msra.mxu0 0
        %1466 = vmatprep.subr.bf16.mxu0 0
        %1467 = vmatpush1.bf16.msra.mxu0 0
        %1468 = vmatprep.subr.bf16.mxu0 0
        %1469 = vmatpush1.bf16.msra.mxu0 0
        %1470 = vmatprep.subr.bf16.mxu0 0
        %1471 = vmatpush1.bf16.msra.mxu0 0
        %1472 = vmatprep.subr.bf16.mxu0 0
        %1473 = vmatpush1.bf16.msra.mxu0 0
        %1474 = vmatprep.subr.bf16.mxu0 0
        %1475 = vmatpush1.bf16.msra.mxu0 0
        %1476 = vmatprep.subr.bf16.mxu0 0
        %1477 = vmatpush1.bf16.msra.mxu0 0
        %1478 = vmatprep.subr.bf16.mxu0 0
        %1479 = vmatpush1.bf16.msra.mxu0 0
        %1480 = vmatprep.mubr.bf16.mxu0 0
        %1481 = vmatmul.mubr.bf16.gmra.mrb[0].mxu0 %v1290
        %v1482 = vpop.f32.mrb[0].mxu0
        %v1483 = vadd.f32 %v1271, %v1482
        %v1484 = vpop.f32.mrb[0].mxu0
        %v1485 = vpop.f32.mrb[0].mxu0
        %v1486 = vpop.f32.mrb[0].mxu0
        %1487 = vdwg.mxu0
        %v1488 = vmul.f32 %v1327, 0.35355338
        %v1489 = vmul.f32 %v1379, 0.35355338
        %v1490 = vmul.f32 %v1431, 0.35355338
        %v1491 = vmul.f32 %v1483, 0.35355338
        %v1492 = vpack.c.bf16 %v1488, %v1488
        %v1493 = vpack.c.bf16 %v1489, %v1489
        %v1494 = vpack.c.bf16 %v1490, %v1490
        %v1495 = vpack.c.bf16 %v1491, %v1491
        %vm1496 = vcmask 64512
        %v1498 = vsel %vm1496, %v1492, 0
        %v1501 = vsel %vm1496, %v1217, 0
        %1503 = vmatprep.subr.bf16.mxu0 0
        %1504 = vmatpush1.bf16.xpose.msra.mxu0 %v1501
        %1505 = vmatprep.subr.bf16.mxu0 0
        %1506 = vmatpush1.bf16.xpose.msra.mxu0 0
        %1507 = vmatprep.subr.bf16.mxu0 0
        %1508 = vmatpush1.bf16.xpose.msra.mxu0 0
        %1509 = vmatprep.subr.bf16.mxu0 0
        %1510 = vmatpush1.bf16.xpose.msra.mxu0 0
        %1511 = vmatprep.subr.bf16.mxu0 0
        %1512 = vmatpush1.bf16.xpose.msra.mxu0 0
        %1513 = vmatprep.subr.bf16.mxu0 0
        %1514 = vmatpush1.bf16.xpose.msra.mxu0 0
        %1515 = vmatprep.subr.bf16.mxu0 0
        %1516 = vmatpush1.bf16.xpose.msra.mxu0 0
        %1517 = vmatprep.subr.bf16.mxu0 0
        %1518 = vmatpush1.bf16.xpose.msra.mxu0 0
        %1519 = vmatprep.subr.bf16.mxu0 0
        %1520 = vmatpush1.bf16.xpose.msra.mxu0 0
        %1521 = vmatprep.subr.bf16.mxu0 0
        %1522 = vmatpush1.bf16.xpose.msra.mxu0 0
        %1523 = vmatprep.subr.bf16.mxu0 0
        %1524 = vmatpush1.bf16.xpose.msra.mxu0 0
        %1525 = vmatprep.subr.bf16.mxu0 0
        %1526 = vmatpush1.bf16.xpose.msra.mxu0 0
        %1527 = vmatprep.subr.bf16.mxu0 0
        %1528 = vmatpush1.bf16.xpose.msra.mxu0 0
        %1529 = vmatprep.subr.bf16.mxu0 0
        %1530 = vmatpush1.bf16.xpose.msra.mxu0 0
        %1531 = vmatprep.subr.bf16.mxu0 0
        %1532 = vmatpush1.bf16.xpose.msra.mxu0 0
        %1533 = vmatprep.subr.bf16.mxu0 0
        %1534 = vmatpush1.bf16.xpose.msra.mxu0 0
        %1535 = vmatprep.mubr.bf16.mxu0 0
        %1536 = vmatmul.mubr.bf16.gmra.mrb[0].mxu0 %v1498
        %v1537 = vpop.f32.mrb[0].mxu0
        %v1538 = vadd.f32 0.0, %v1537
        %v1539 = vpop.f32.mrb[0].mxu0
        %v1540 = vpop.f32.mrb[0].mxu0
        %v1541 = vpop.f32.mrb[0].mxu0
        %1542 = vdwg.mxu0
        %v1544 = vsel %vm1496, %v1493, 0
        %v1547 = vsel %vm1496, %v1218, 0
        %1549 = vmatprep.subr.bf16.mxu0 0
        %1550 = vmatpush1.bf16.xpose.msra.mxu0 %v1547
        %1551 = vmatprep.subr.bf16.mxu0 0
        %1552 = vmatpush1.bf16.xpose.msra.mxu0 0
        %1553 = vmatprep.subr.bf16.mxu0 0
        %1554 = vmatpush1.bf16.xpose.msra.mxu0 0
        %1555 = vmatprep.subr.bf16.mxu0 0
        %1556 = vmatpush1.bf16.xpose.msra.mxu0 0
        %1557 = vmatprep.subr.bf16.mxu0 0
        %1558 = vmatpush1.bf16.xpose.msra.mxu0 0
        %1559 = vmatprep.subr.bf16.mxu0 0
        %1560 = vmatpush1.bf16.xpose.msra.mxu0 0
        %1561 = vmatprep.subr.bf16.mxu0 0
        %1562 = vmatpush1.bf16.xpose.msra.mxu0 0
        %1563 = vmatprep.subr.bf16.mxu0 0
        %1564 = vmatpush1.bf16.xpose.msra.mxu0 0
        %1565 = vmatprep.subr.bf16.mxu0 0
        %1566 = vmatpush1.bf16.xpose.msra.mxu0 0
        %1567 = vmatprep.subr.bf16.mxu0 0
        %1568 = vmatpush1.bf16.xpose.msra.mxu0 0
        %1569 = vmatprep.subr.bf16.mxu0 0
        %1570 = vmatpush1.bf16.xpose.msra.mxu0 0
        %1571 = vmatprep.subr.bf16.mxu0 0
        %1572 = vmatpush1.bf16.xpose.msra.mxu0 0
        %1573 = vmatprep.subr.bf16.mxu0 0
        %1574 = vmatpush1.bf16.xpose.msra.mxu0 0
        %1575 = vmatprep.subr.bf16.mxu0 0
        %1576 = vmatpush1.bf16.xpose.msra.mxu0 0
        %1577 = vmatprep.subr.bf16.mxu0 0
        %1578 = vmatpush1.bf16.xpose.msra.mxu0 0
        %1579 = vmatprep.subr.bf16.mxu0 0
        %1580 = vmatpush1.bf16.xpose.msra.mxu0 0
        %1581 = vmatprep.mubr.bf16.mxu0 0
        %1582 = vmatmul.mubr.bf16.gmra.mrb[0].mxu0 %v1544
        %v1583 = vpop.f32.mrb[0].mxu0
        %v1584 = vadd.f32 0.0, %v1583
        %v1585 = vpop.f32.mrb[0].mxu0
        %v1586 = vpop.f32.mrb[0].mxu0
        %v1587 = vpop.f32.mrb[0].mxu0
        %1588 = vdwg.mxu0
        %v1590 = vsel %vm1496, %v1494, 0
        %v1593 = vsel %vm1496, %v1219, 0
        %1595 = vmatprep.subr.bf16.mxu0 0
        %1596 = vmatpush1.bf16.xpose.msra.mxu0 %v1593
        %1597 = vmatprep.subr.bf16.mxu0 0
        %1598 = vmatpush1.bf16.xpose.msra.mxu0 0
        %1599 = vmatprep.subr.bf16.mxu0 0
        %1600 = vmatpush1.bf16.xpose.msra.mxu0 0
        %1601 = vmatprep.subr.bf16.mxu0 0
        %1602 = vmatpush1.bf16.xpose.msra.mxu0 0
        %1603 = vmatprep.subr.bf16.mxu0 0
        %1604 = vmatpush1.bf16.xpose.msra.mxu0 0
        %1605 = vmatprep.subr.bf16.mxu0 0
        %1606 = vmatpush1.bf16.xpose.msra.mxu0 0
        %1607 = vmatprep.subr.bf16.mxu0 0
        %1608 = vmatpush1.bf16.xpose.msra.mxu0 0
        %1609 = vmatprep.subr.bf16.mxu0 0
        %1610 = vmatpush1.bf16.xpose.msra.mxu0 0
        %1611 = vmatprep.subr.bf16.mxu0 0
        %1612 = vmatpush1.bf16.xpose.msra.mxu0 0
        %1613 = vmatprep.subr.bf16.mxu0 0
        %1614 = vmatpush1.bf16.xpose.msra.mxu0 0
        %1615 = vmatprep.subr.bf16.mxu0 0
        %1616 = vmatpush1.bf16.xpose.msra.mxu0 0
        %1617 = vmatprep.subr.bf16.mxu0 0
        %1618 = vmatpush1.bf16.xpose.msra.mxu0 0
        %1619 = vmatprep.subr.bf16.mxu0 0
        %1620 = vmatpush1.bf16.xpose.msra.mxu0 0
        %1621 = vmatprep.subr.bf16.mxu0 0
        %1622 = vmatpush1.bf16.xpose.msra.mxu0 0
        %1623 = vmatprep.subr.bf16.mxu0 0
        %1624 = vmatpush1.bf16.xpose.msra.mxu0 0
        %1625 = vmatprep.subr.bf16.mxu0 0
        %1626 = vmatpush1.bf16.xpose.msra.mxu0 0
        %1627 = vmatprep.mubr.bf16.mxu0 0
        %1628 = vmatmul.mubr.bf16.gmra.mrb[0].mxu0 %v1590
        %v1629 = vpop.f32.mrb[0].mxu0
        %v1630 = vadd.f32 0.0, %v1629
        %v1631 = vpop.f32.mrb[0].mxu0
        %v1632 = vpop.f32.mrb[0].mxu0
        %v1633 = vpop.f32.mrb[0].mxu0
        %1634 = vdwg.mxu0
        %v1636 = vsel %vm1496, %v1495, 0
        %v1639 = vsel %vm1496, %v1220, 0
        %1641 = vmatprep.subr.bf16.mxu0 0
        %1642 = vmatpush1.bf16.xpose.msra.mxu0 %v1639
        %1643 = vmatprep.subr.bf16.mxu0 0
        %1644 = vmatpush1.bf16.xpose.msra.mxu0 0
        %1645 = vmatprep.subr.bf16.mxu0 0
        %1646 = vmatpush1.bf16.xpose.msra.mxu0 0
        %1647 = vmatprep.subr.bf16.mxu0 0
        %1648 = vmatpush1.bf16.xpose.msra.mxu0 0
        %1649 = vmatprep.subr.bf16.mxu0 0
        %1650 = vmatpush1.bf16.xpose.msra.mxu0 0
        %1651 = vmatprep.subr.bf16.mxu0 0
        %1652 = vmatpush1.bf16.xpose.msra.mxu0 0
        %1653 = vmatprep.subr.bf16.mxu0 0
        %1654 = vmatpush1.bf16.xpose.msra.mxu0 0
        %1655 = vmatprep.subr.bf16.mxu0 0
        %1656 = vmatpush1.bf16.xpose.msra.mxu0 0
        %1657 = vmatprep.subr.bf16.mxu0 0
        %1658 = vmatpush1.bf16.xpose.msra.mxu0 0
        %1659 = vmatprep.subr.bf16.mxu0 0
        %1660 = vmatpush1.bf16.xpose.msra.mxu0 0
        %1661 = vmatprep.subr.bf16.mxu0 0
        %1662 = vmatpush1.bf16.xpose.msra.mxu0 0
        %1663 = vmatprep.subr.bf16.mxu0 0
        %1664 = vmatpush1.bf16.xpose.msra.mxu0 0
        %1665 = vmatprep.subr.bf16.mxu0 0
        %1666 = vmatpush1.bf16.xpose.msra.mxu0 0
        %1667 = vmatprep.subr.bf16.mxu0 0
        %1668 = vmatpush1.bf16.xpose.msra.mxu0 0
        %1669 = vmatprep.subr.bf16.mxu0 0
        %1670 = vmatpush1.bf16.xpose.msra.mxu0 0
        %1671 = vmatprep.subr.bf16.mxu0 0
        %1672 = vmatpush1.bf16.xpose.msra.mxu0 0
        %1673 = vmatprep.mubr.bf16.mxu0 0
        %1674 = vmatmul.mubr.bf16.gmra.mrb[0].mxu0 %v1636
        %v1675 = vpop.f32.mrb[0].mxu0
        %v1676 = vadd.f32 0.0, %v1675
        %v1677 = vpop.f32.mrb[0].mxu0
        %v1678 = vpop.f32.mrb[0].mxu0
        %v1679 = vpop.f32.mrb[0].mxu0
        %1680 = vdwg.mxu0
        %v1681 = vsel %vm1496, %v1538, -inf
        %1682 = vmax.xlane.f32.xlu0 %v1681
        %v1683 = vpop.xlane.xlu0 %1682
        %v1684 = vsel %vm1496, %v1584, -inf
        %1685 = vmax.xlane.f32.xlu0 %v1684
        %v1686 = vpop.xlane.xlu0 %1685
        %v1687 = vsel %vm1496, %v1630, -inf
        %1688 = vmax.xlane.f32.xlu0 %v1687
        %v1689 = vpop.xlane.xlu0 %1688
        %v1690 = vsel %vm1496, %v1676, -inf
        %1691 = vmax.xlane.f32.xlu0 %v1690
        %v1692 = vpop.xlane.xlu0 %1691
        %v1693 = vsub.f32 %v1538, %v1683
        %v1694 = vsub.f32 %v1584, %v1686
        %v1695 = vsub.f32 %v1630, %v1689
        %v1696 = vsub.f32 %v1676, %v1692
        %v1697 = vmul.f32 %v1693, 1.442695
        %v1698 = vpow.pop %v1697
        %v1699 = vmul.f32 %v1694, 1.442695
        %v1700 = vpow.pop %v1699
        %v1701 = vmul.f32 %v1695, 1.442695
        %v1702 = vpow.pop %v1701
        %v1703 = vmul.f32 %v1696, 1.442695
        %v1704 = vpow.pop %v1703
        %v1705 = vsel %vm1496, %v1698, 0.0
        %1706 = vadd.xlane.f32.xlu0 %v1705
        %v1707 = vpop.xlane.xlu0 %1706
        %v1708 = vsel %vm1496, %v1700, 0.0
        %1709 = vadd.xlane.f32.xlu0 %v1708
        %v1710 = vpop.xlane.xlu0 %1709
        %v1711 = vsel %vm1496, %v1702, 0.0
        %1712 = vadd.xlane.f32.xlu0 %v1711
        %v1713 = vpop.xlane.xlu0 %1712
        %v1714 = vsel %vm1496, %v1704, 0.0
        %1715 = vadd.xlane.f32.xlu0 %v1714
        %v1716 = vpop.xlane.xlu0 %1715
        %v1717 = vrcp.pop %v1707
        %v1718 = vrcp.pop %v1710
        %v1719 = vrcp.pop %v1713
        %v1720 = vrcp.pop %v1716
        %v1721 = vmul.f32 %v1698, %v1717
        %v1722 = vmul.f32 %v1700, %v1718
        %v1723 = vmul.f32 %v1702, %v1719
        %v1724 = vmul.f32 %v1704, %v1720
        %v1725 = vpack.c.bf16 %v1721, %v1721
        %v1726 = vpack.c.bf16 %v1722, %v1722
        %v1727 = vpack.c.bf16 %v1723, %v1723
        %v1728 = vpack.c.bf16 %v1724, %v1724
        %v1730 = vsel %vm1496, %v1725, 0
        %vm1732 = vcmask 1043456
        %v1734 = vsel %vm1732, %v1221, 0
        %1736 = vmatprep.subr.bf16.mxu0 0
        %1737 = vmatpush1.bf16.msra.mxu0 %v1734
        %1738 = vmatprep.subr.bf16.mxu0 0
        %1739 = vmatpush1.bf16.msra.mxu0 0
        %1740 = vmatprep.subr.bf16.mxu0 0
        %1741 = vmatpush1.bf16.msra.mxu0 0
        %1742 = vmatprep.subr.bf16.mxu0 0
        %1743 = vmatpush1.bf16.msra.mxu0 0
        %1744 = vmatprep.subr.bf16.mxu0 0
        %1745 = vmatpush1.bf16.msra.mxu0 0
        %1746 = vmatprep.subr.bf16.mxu0 0
        %1747 = vmatpush1.bf16.msra.mxu0 0
        %1748 = vmatprep.subr.bf16.mxu0 0
        %1749 = vmatpush1.bf16.msra.mxu0 0
        %1750 = vmatprep.subr.bf16.mxu0 0
        %1751 = vmatpush1.bf16.msra.mxu0 0
        %1752 = vmatprep.subr.bf16.mxu0 0
        %1753 = vmatpush1.bf16.msra.mxu0 0
        %1754 = vmatprep.subr.bf16.mxu0 0
        %1755 = vmatpush1.bf16.msra.mxu0 0
        %1756 = vmatprep.subr.bf16.mxu0 0
        %1757 = vmatpush1.bf16.msra.mxu0 0
        %1758 = vmatprep.subr.bf16.mxu0 0
        %1759 = vmatpush1.bf16.msra.mxu0 0
        %1760 = vmatprep.subr.bf16.mxu0 0
        %1761 = vmatpush1.bf16.msra.mxu0 0
        %1762 = vmatprep.subr.bf16.mxu0 0
        %1763 = vmatpush1.bf16.msra.mxu0 0
        %1764 = vmatprep.subr.bf16.mxu0 0
        %1765 = vmatpush1.bf16.msra.mxu0 0
        %1766 = vmatprep.subr.bf16.mxu0 0
        %1767 = vmatpush1.bf16.msra.mxu0 0
        %1768 = vmatprep.mubr.bf16.mxu0 0
        %1769 = vmatmul.mubr.bf16.gmra.mrb[0].mxu0 %v1730
        %v1770 = vpop.f32.mrb[0].mxu0
        %v1771 = vadd.f32 0.0, %v1770
        %v1772 = vpop.f32.mrb[0].mxu0
        %v1773 = vpop.f32.mrb[0].mxu0
        %v1774 = vpop.f32.mrb[0].mxu0
        %1775 = vdwg.mxu0
        %v1777 = vsel %vm1496, %v1726, 0
        %v1780 = vsel %vm1732, %v1222, 0
        %1782 = vmatprep.subr.bf16.mxu0 0
        %1783 = vmatpush1.bf16.msra.mxu0 %v1780
        %1784 = vmatprep.subr.bf16.mxu0 0
        %1785 = vmatpush1.bf16.msra.mxu0 0
        %1786 = vmatprep.subr.bf16.mxu0 0
        %1787 = vmatpush1.bf16.msra.mxu0 0
        %1788 = vmatprep.subr.bf16.mxu0 0
        %1789 = vmatpush1.bf16.msra.mxu0 0
        %1790 = vmatprep.subr.bf16.mxu0 0
        %1791 = vmatpush1.bf16.msra.mxu0 0
        %1792 = vmatprep.subr.bf16.mxu0 0
        %1793 = vmatpush1.bf16.msra.mxu0 0
        %1794 = vmatprep.subr.bf16.mxu0 0
        %1795 = vmatpush1.bf16.msra.mxu0 0
        %1796 = vmatprep.subr.bf16.mxu0 0
        %1797 = vmatpush1.bf16.msra.mxu0 0
        %1798 = vmatprep.subr.bf16.mxu0 0
        %1799 = vmatpush1.bf16.msra.mxu0 0
        %1800 = vmatprep.subr.bf16.mxu0 0
        %1801 = vmatpush1.bf16.msra.mxu0 0
        %1802 = vmatprep.subr.bf16.mxu0 0
        %1803 = vmatpush1.bf16.msra.mxu0 0
        %1804 = vmatprep.subr.bf16.mxu0 0
        %1805 = vmatpush1.bf16.msra.mxu0 0
        %1806 = vmatprep.subr.bf16.mxu0 0
        %1807 = vmatpush1.bf16.msra.mxu0 0
        %1808 = vmatprep.subr.bf16.mxu0 0
        %1809 = vmatpush1.bf16.msra.mxu0 0
        %1810 = vmatprep.subr.bf16.mxu0 0
        %1811 = vmatpush1.bf16.msra.mxu0 0
        %1812 = vmatprep.subr.bf16.mxu0 0
        %1813 = vmatpush1.bf16.msra.mxu0 0
        %1814 = vmatprep.mubr.bf16.mxu0 0
        %1815 = vmatmul.mubr.bf16.gmra.mrb[0].mxu0 %v1777
        %v1816 = vpop.f32.mrb[0].mxu0
        %v1817 = vadd.f32 0.0, %v1816
        %v1818 = vpop.f32.mrb[0].mxu0
        %v1819 = vpop.f32.mrb[0].mxu0
        %v1820 = vpop.f32.mrb[0].mxu0
        %1821 = vdwg.mxu0
        %v1823 = vsel %vm1496, %v1727, 0
        %v1826 = vsel %vm1732, %v1223, 0
        %1828 = vmatprep.subr.bf16.mxu0 0
        %1829 = vmatpush1.bf16.msra.mxu0 %v1826
        %1830 = vmatprep.subr.bf16.mxu0 0
        %1831 = vmatpush1.bf16.msra.mxu0 0
        %1832 = vmatprep.subr.bf16.mxu0 0
        %1833 = vmatpush1.bf16.msra.mxu0 0
        %1834 = vmatprep.subr.bf16.mxu0 0
        %1835 = vmatpush1.bf16.msra.mxu0 0
        %1836 = vmatprep.subr.bf16.mxu0 0
        %1837 = vmatpush1.bf16.msra.mxu0 0
        %1838 = vmatprep.subr.bf16.mxu0 0
        %1839 = vmatpush1.bf16.msra.mxu0 0
        %1840 = vmatprep.subr.bf16.mxu0 0
        %1841 = vmatpush1.bf16.msra.mxu0 0
        %1842 = vmatprep.subr.bf16.mxu0 0
        %1843 = vmatpush1.bf16.msra.mxu0 0
        %1844 = vmatprep.subr.bf16.mxu0 0
        %1845 = vmatpush1.bf16.msra.mxu0 0
        %1846 = vmatprep.subr.bf16.mxu0 0
        %1847 = vmatpush1.bf16.msra.mxu0 0
        %1848 = vmatprep.subr.bf16.mxu0 0
        %1849 = vmatpush1.bf16.msra.mxu0 0
        %1850 = vmatprep.subr.bf16.mxu0 0
        %1851 = vmatpush1.bf16.msra.mxu0 0
        %1852 = vmatprep.subr.bf16.mxu0 0
        %1853 = vmatpush1.bf16.msra.mxu0 0
        %1854 = vmatprep.subr.bf16.mxu0 0
        %1855 = vmatpush1.bf16.msra.mxu0 0
        %1856 = vmatprep.subr.bf16.mxu0 0
        %1857 = vmatpush1.bf16.msra.mxu0 0
        %1858 = vmatprep.subr.bf16.mxu0 0
        %1859 = vmatpush1.bf16.msra.mxu0 0
        %1860 = vmatprep.mubr.bf16.mxu0 0
        %1861 = vmatmul.mubr.bf16.gmra.mrb[0].mxu0 %v1823
        %v1862 = vpop.f32.mrb[0].mxu0
        %v1863 = vadd.f32 0.0, %v1862
        %v1864 = vpop.f32.mrb[0].mxu0
        %v1865 = vpop.f32.mrb[0].mxu0
        %v1866 = vpop.f32.mrb[0].mxu0
        %1867 = vdwg.mxu0
        %v1869 = vsel %vm1496, %v1728, 0
        %v1872 = vsel %vm1732, %v1224, 0
        %1874 = vmatprep.subr.bf16.mxu0 0
        %1875 = vmatpush1.bf16.msra.mxu0 %v1872
        %1876 = vmatprep.subr.bf16.mxu0 0
        %1877 = vmatpush1.bf16.msra.mxu0 0
        %1878 = vmatprep.subr.bf16.mxu0 0
        %1879 = vmatpush1.bf16.msra.mxu0 0
        %1880 = vmatprep.subr.bf16.mxu0 0
        %1881 = vmatpush1.bf16.msra.mxu0 0
        %1882 = vmatprep.subr.bf16.mxu0 0
        %1883 = vmatpush1.bf16.msra.mxu0 0
        %1884 = vmatprep.subr.bf16.mxu0 0
        %1885 = vmatpush1.bf16.msra.mxu0 0
        %1886 = vmatprep.subr.bf16.mxu0 0
        %1887 = vmatpush1.bf16.msra.mxu0 0
        %1888 = vmatprep.subr.bf16.mxu0 0
        %1889 = vmatpush1.bf16.msra.mxu0 0
        %1890 = vmatprep.subr.bf16.mxu0 0
        %1891 = vmatpush1.bf16.msra.mxu0 0
        %1892 = vmatprep.subr.bf16.mxu0 0
        %1893 = vmatpush1.bf16.msra.mxu0 0
        %1894 = vmatprep.subr.bf16.mxu0 0
        %1895 = vmatpush1.bf16.msra.mxu0 0
        %1896 = vmatprep.subr.bf16.mxu0 0
        %1897 = vmatpush1.bf16.msra.mxu0 0
        %1898 = vmatprep.subr.bf16.mxu0 0
        %1899 = vmatpush1.bf16.msra.mxu0 0
        %1900 = vmatprep.subr.bf16.mxu0 0
        %1901 = vmatpush1.bf16.msra.mxu0 0
        %1902 = vmatprep.subr.bf16.mxu0 0
        %1903 = vmatpush1.bf16.msra.mxu0 0
        %1904 = vmatprep.subr.bf16.mxu0 0
        %1905 = vmatpush1.bf16.msra.mxu0 0
        %1906 = vmatprep.mubr.bf16.mxu0 0
        %1907 = vmatmul.mubr.bf16.gmra.mrb[0].mxu0 %v1869
        %v1908 = vpop.f32.mrb[0].mxu0
        %v1909 = vadd.f32 0.0, %v1908
        %v1910 = vpop.f32.mrb[0].mxu0
        %v1911 = vpop.f32.mrb[0].mxu0
        %v1912 = vpop.f32.mrb[0].mxu0
        %1913 = vdwg.mxu0
        %v1915 = vlaneseq
        %v1916 = vshrl.u32 %v1915, 7
        %v1917 = vsub.s32 0, %v1916
        %v1918 = vrot.slane %v1249, %v1917
        %v1920 = vadd.f32 %v1918, %v1215
        %v1921 = vpack.c.bf16 %v1771, %v1771
        %v1923 = vsel %vm1496, %v1921, 0
        %v1926 = vsel %vm1732, %v1245, 0
        %1928 = vmatprep.subr.bf16.mxu0 0
        %1929 = vmatpush1.bf16.msra.mxu0 %v1926
        %1930 = vmatprep.subr.bf16.mxu0 0
        %1931 = vmatpush1.bf16.msra.mxu0 0
        %1932 = vmatprep.subr.bf16.mxu0 0
        %1933 = vmatpush1.bf16.msra.mxu0 0
        %1934 = vmatprep.subr.bf16.mxu0 0
        %1935 = vmatpush1.bf16.msra.mxu0 0
        %1936 = vmatprep.subr.bf16.mxu0 0
        %1937 = vmatpush1.bf16.msra.mxu0 0
        %1938 = vmatprep.subr.bf16.mxu0 0
        %1939 = vmatpush1.bf16.msra.mxu0 0
        %1940 = vmatprep.subr.bf16.mxu0 0
        %1941 = vmatpush1.bf16.msra.mxu0 0
        %1942 = vmatprep.subr.bf16.mxu0 0
        %1943 = vmatpush1.bf16.msra.mxu0 0
        %1944 = vmatprep.subr.bf16.mxu0 0
        %1945 = vmatpush1.bf16.msra.mxu0 0
        %1946 = vmatprep.subr.bf16.mxu0 0
        %1947 = vmatpush1.bf16.msra.mxu0 0
        %1948 = vmatprep.subr.bf16.mxu0 0
        %1949 = vmatpush1.bf16.msra.mxu0 0
        %1950 = vmatprep.subr.bf16.mxu0 0
        %1951 = vmatpush1.bf16.msra.mxu0 0
        %1952 = vmatprep.subr.bf16.mxu0 0
        %1953 = vmatpush1.bf16.msra.mxu0 0
        %1954 = vmatprep.subr.bf16.mxu0 0
        %1955 = vmatpush1.bf16.msra.mxu0 0
        %1956 = vmatprep.subr.bf16.mxu0 0
        %1957 = vmatpush1.bf16.msra.mxu0 0
        %1958 = vmatprep.subr.bf16.mxu0 0
        %1959 = vmatpush1.bf16.msra.mxu0 0
        %1960 = vmatprep.mubr.bf16.mxu0 0
        %1961 = vmatmul.mubr.bf16.gmra.mrb[0].mxu0 %v1923
        %v1962 = vpop.f32.mrb[0].mxu0
        %v1963 = vadd.f32 0.0, %v1962
        %v1964 = vpop.f32.mrb[0].mxu0
        %v1965 = vpop.f32.mrb[0].mxu0
        %v1966 = vpop.f32.mrb[0].mxu0
        %1967 = vdwg.mxu0
        %v1968 = vadd.f32 %v1920, %v1963
        %v1969 = vpack.c.bf16 %v1817, %v1817
        %v1971 = vsel %vm1496, %v1969, 0
        %v1974 = vsel %vm1732, %v1246, 0
        %1976 = vmatprep.subr.bf16.mxu0 0
        %1977 = vmatpush1.bf16.msra.mxu0 %v1974
        %1978 = vmatprep.subr.bf16.mxu0 0
        %1979 = vmatpush1.bf16.msra.mxu0 0
        %1980 = vmatprep.subr.bf16.mxu0 0
        %1981 = vmatpush1.bf16.msra.mxu0 0
        %1982 = vmatprep.subr.bf16.mxu0 0
        %1983 = vmatpush1.bf16.msra.mxu0 0
        %1984 = vmatprep.subr.bf16.mxu0 0
        %1985 = vmatpush1.bf16.msra.mxu0 0
        %1986 = vmatprep.subr.bf16.mxu0 0
        %1987 = vmatpush1.bf16.msra.mxu0 0
        %1988 = vmatprep.subr.bf16.mxu0 0
        %1989 = vmatpush1.bf16.msra.mxu0 0
        %1990 = vmatprep.subr.bf16.mxu0 0
        %1991 = vmatpush1.bf16.msra.mxu0 0
        %1992 = vmatprep.subr.bf16.mxu0 0
        %1993 = vmatpush1.bf16.msra.mxu0 0
        %1994 = vmatprep.subr.bf16.mxu0 0
        %1995 = vmatpush1.bf16.msra.mxu0 0
        %1996 = vmatprep.subr.bf16.mxu0 0
        %1997 = vmatpush1.bf16.msra.mxu0 0
        %1998 = vmatprep.subr.bf16.mxu0 0
        %1999 = vmatpush1.bf16.msra.mxu0 0
        %2000 = vmatprep.subr.bf16.mxu0 0
        %2001 = vmatpush1.bf16.msra.mxu0 0
        %2002 = vmatprep.subr.bf16.mxu0 0
        %2003 = vmatpush1.bf16.msra.mxu0 0
        %2004 = vmatprep.subr.bf16.mxu0 0
        %2005 = vmatpush1.bf16.msra.mxu0 0
        %2006 = vmatprep.subr.bf16.mxu0 0
        %2007 = vmatpush1.bf16.msra.mxu0 0
        %2008 = vmatprep.mubr.bf16.mxu0 0
        %2009 = vmatmul.mubr.bf16.gmra.mrb[0].mxu0 %v1971
        %v2010 = vpop.f32.mrb[0].mxu0
        %v2011 = vadd.f32 0.0, %v2010
        %v2012 = vpop.f32.mrb[0].mxu0
        %v2013 = vpop.f32.mrb[0].mxu0
        %v2014 = vpop.f32.mrb[0].mxu0
        %2015 = vdwg.mxu0
        %v2016 = vadd.f32 %v1968, %v2011
        %v2017 = vpack.c.bf16 %v1863, %v1863
        %v2019 = vsel %vm1496, %v2017, 0
        %v2022 = vsel %vm1732, %v1247, 0
        %2024 = vmatprep.subr.bf16.mxu0 0
        %2025 = vmatpush1.bf16.msra.mxu0 %v2022
        %2026 = vmatprep.subr.bf16.mxu0 0
        %2027 = vmatpush1.bf16.msra.mxu0 0
        %2028 = vmatprep.subr.bf16.mxu0 0
        %2029 = vmatpush1.bf16.msra.mxu0 0
        %2030 = vmatprep.subr.bf16.mxu0 0
        %2031 = vmatpush1.bf16.msra.mxu0 0
        %2032 = vmatprep.subr.bf16.mxu0 0
        %2033 = vmatpush1.bf16.msra.mxu0 0
        %2034 = vmatprep.subr.bf16.mxu0 0
        %2035 = vmatpush1.bf16.msra.mxu0 0
        %2036 = vmatprep.subr.bf16.mxu0 0
        %2037 = vmatpush1.bf16.msra.mxu0 0
        %2038 = vmatprep.subr.bf16.mxu0 0
        %2039 = vmatpush1.bf16.msra.mxu0 0
        %2040 = vmatprep.subr.bf16.mxu0 0
        %2041 = vmatpush1.bf16.msra.mxu0 0
        %2042 = vmatprep.subr.bf16.mxu0 0
        %2043 = vmatpush1.bf16.msra.mxu0 0
        %2044 = vmatprep.subr.bf16.mxu0 0
        %2045 = vmatpush1.bf16.msra.mxu0 0
        %2046 = vmatprep.subr.bf16.mxu0 0
        %2047 = vmatpush1.bf16.msra.mxu0 0
        %2048 = vmatprep.subr.bf16.mxu0 0
        %2049 = vmatpush1.bf16.msra.mxu0 0
        %2050 = vmatprep.subr.bf16.mxu0 0
        %2051 = vmatpush1.bf16.msra.mxu0 0
        %2052 = vmatprep.subr.bf16.mxu0 0
        %2053 = vmatpush1.bf16.msra.mxu0 0
        %2054 = vmatprep.subr.bf16.mxu0 0
        %2055 = vmatpush1.bf16.msra.mxu0 0
        %2056 = vmatprep.mubr.bf16.mxu0 0
        %2057 = vmatmul.mubr.bf16.gmra.mrb[0].mxu0 %v2019
        %v2058 = vpop.f32.mrb[0].mxu0
        %v2059 = vadd.f32 0.0, %v2058
        %v2060 = vpop.f32.mrb[0].mxu0
        %v2061 = vpop.f32.mrb[0].mxu0
        %v2062 = vpop.f32.mrb[0].mxu0
        %2063 = vdwg.mxu0
        %v2064 = vadd.f32 %v2016, %v2059
        %v2065 = vpack.c.bf16 %v1909, %v1909
        %v2067 = vsel %vm1496, %v2065, 0
        %v2070 = vsel %vm1732, %v1248, 0
        %2072 = vmatprep.subr.bf16.mxu0 0
        %2073 = vmatpush1.bf16.msra.mxu0 %v2070
        %2074 = vmatprep.subr.bf16.mxu0 0
        %2075 = vmatpush1.bf16.msra.mxu0 0
        %2076 = vmatprep.subr.bf16.mxu0 0
        %2077 = vmatpush1.bf16.msra.mxu0 0
        %2078 = vmatprep.subr.bf16.mxu0 0
        %2079 = vmatpush1.bf16.msra.mxu0 0
        %2080 = vmatprep.subr.bf16.mxu0 0
        %2081 = vmatpush1.bf16.msra.mxu0 0
        %2082 = vmatprep.subr.bf16.mxu0 0
        %2083 = vmatpush1.bf16.msra.mxu0 0
        %2084 = vmatprep.subr.bf16.mxu0 0
        %2085 = vmatpush1.bf16.msra.mxu0 0
        %2086 = vmatprep.subr.bf16.mxu0 0
        %2087 = vmatpush1.bf16.msra.mxu0 0
        %2088 = vmatprep.subr.bf16.mxu0 0
        %2089 = vmatpush1.bf16.msra.mxu0 0
        %2090 = vmatprep.subr.bf16.mxu0 0
        %2091 = vmatpush1.bf16.msra.mxu0 0
        %2092 = vmatprep.subr.bf16.mxu0 0
        %2093 = vmatpush1.bf16.msra.mxu0 0
        %2094 = vmatprep.subr.bf16.mxu0 0
        %2095 = vmatpush1.bf16.msra.mxu0 0
        %2096 = vmatprep.subr.bf16.mxu0 0
        %2097 = vmatpush1.bf16.msra.mxu0 0
        %2098 = vmatprep.subr.bf16.mxu0 0
        %2099 = vmatpush1.bf16.msra.mxu0 0
        %2100 = vmatprep.subr.bf16.mxu0 0
        %2101 = vmatpush1.bf16.msra.mxu0 0
        %2102 = vmatprep.subr.bf16.mxu0 0
        %2103 = vmatpush1.bf16.msra.mxu0 0
        %2104 = vmatprep.mubr.bf16.mxu0 0
        %2105 = vmatmul.mubr.bf16.gmra.mrb[0].mxu0 %v2067
        %v2106 = vpop.f32.mrb[0].mxu0
        %v2107 = vadd.f32 0.0, %v2106
        %v2108 = vpop.f32.mrb[0].mxu0
        %v2109 = vpop.f32.mrb[0].mxu0
        %v2110 = vpop.f32.mrb[0].mxu0
        %2111 = vdwg.mxu0
        %v2112 = vadd.f32 %v2064, %v2107
        %v2113 = vsel %vm1288, %v2112, 0.0
        %2114 = vadd.xlane.f32.xlu0 %v2113
        %v2115 = vpop.xlane.xlu0 %2114
        %v2116 = vrcp.pop 32.0
        %v2117 = vmul.f32 %v2115, %v2116
        %v2118 = vsub.f32 %v2112, %v2117
        %v2119 = vmul.f32 %v2118, %v2118
        %v2120 = vsel %vm1288, %v2119, 0.0
        %2121 = vadd.xlane.f32.xlu0 %v2120
        %v2122 = vpop.xlane.xlu0 %2121
        %v2123 = vmul.f32 %v2122, %v2116
        %v2125 = vlaneseq
        %v2126 = vshrl.u32 %v2125, 7
        %v2127 = vsub.s32 0, %v2126
        %v2128 = vrot.slane %v1250, %v2127
        %v2130 = vmul.f32 %v2128, %v2118
        %v2131 = vadd.f32 %v2123, 1e-12
        %v2132 = vrsqrt.pop %v2131
        %v2133 = vmul.f32 %v2130, %v2132
        %v2135 = vlaneseq
        %v2136 = vshrl.u32 %v2135, 7
        %v2137 = vsub.s32 0, %v2136
        %v2138 = vrot.slane %v1251, %v2137
        %v2140 = vadd.f32 %v2133, %v2138
        %v2141 = vsel %vm1496, %v1721, 0.0
        %v2142 = vsel %vm1496, %v1722, 0.0
        %v2143 = vadd.f32 %v2141, %v2142
        %v2144 = vsel %vm1496, %v1723, 0.0
        %v2145 = vadd.f32 %v2143, %v2144
        %v2146 = vsel %vm1496, %v1724, 0.0
        %v2147 = vadd.f32 %v2145, %v2146
        %v2148 = vrcp.pop 4.0
        %v2149 = vmul.f32 %v2147, %v2148
        %v2150 = vpack.c.bf16 %v2140, %v2140
        %v2151 = vld [vmem:[%s1036] sm:$0xf]
        %v2152 = vld [vmem:[%s1036 + $0x4] sm:$0xf]
        %v2153 = vld [vmem:[%s1036 + $0x8] sm:$0xf]
        %v2154 = vld [vmem:[%s1036 + $0xc] sm:$0xf]
        %v2155 = vld [vmem:[%s1036 + $0x10] sm:$0xf]
        %v2156 = vld [vmem:[%s1036 + $0x14] sm:$0xf]
        %v2157 = vld [vmem:[%s1036 + $0x18] sm:$0xf]
        %v2158 = vld [vmem:[%s1036 + $0x1c] sm:$0xf]
        %v2159 = vld [vmem:[%s1045] sm:$0xf]
        %v2160 = vld [vmem:[%s1045 + $0x4] sm:$0xf]
        %v2161 = vld [vmem:[%s1045 + $0x8] sm:$0xf]
        %v2162 = vld [vmem:[%s1045 + $0xc] sm:$0xf]
        %v2163 = vld [vmem:[%s1045 + $0x10] sm:$0xf]
        %v2164 = vld [vmem:[%s1045 + $0x14] sm:$0xf]
        %v2165 = vld [vmem:[%s1045 + $0x18] sm:$0xf]
        %v2166 = vld [vmem:[%s1045 + $0x1c] sm:$0xf]
        %v2167 = vld [vmem:[#allocation20] sm:$0xf]
        %v2168 = vld [vmem:[#allocation20 + $0x4] sm:$0xf]
        %v2169 = vld [vmem:[#allocation20 + $0x8] sm:$0xf]
        %v2170 = vld [vmem:[#allocation20 + $0xc] sm:$0xf]
        %v2171 = vld [vmem:[#allocation20 + $0x10] sm:$0xf]
        %v2172 = vld [vmem:[#allocation20 + $0x14] sm:$0xf]
        %v2173 = vld [vmem:[#allocation20 + $0x18] sm:$0xf]
        %v2174 = vld [vmem:[#allocation20 + $0x1c] sm:$0xf]
        %v2175 = vld [vmem:[#allocation20 + $0x20] sm:$0xf]
        %v2176 = vld [vmem:[#allocation20 + $0x24] sm:$0xf]
        %v2177 = vld [vmem:[#allocation20 + $0x28] sm:$0xf]
        %v2178 = vld [vmem:[#allocation20 + $0x2c] sm:$0xf]
        %v2179 = vld [vmem:[#allocation20 + $0x30] sm:$0xf]
        %v2180 = vld [vmem:[#allocation20 + $0x34] sm:$0xf]
        %v2181 = vld [vmem:[#allocation20 + $0x38] sm:$0xf]
        %v2182 = vld [vmem:[#allocation20 + $0x3c] sm:$0xf]
        %v2183 = vld [vmem:[#allocation22] sm:$0x1]
        %v2184 = vld [vmem:[#allocation22 + $0x1] sm:$0x1]
        %v2185 = vld [vmem:[#allocation22 + $0x2] sm:$0x1]
        %v2186 = vld [vmem:[#allocation22 + $0x3] sm:$0x1]
        %v2187 = vld [vmem:[#allocation23] sm:$0xf]
        %v2188 = vld [vmem:[#allocation23 + $0x4] sm:$0xf]
        %v2189 = vld [vmem:[#allocation23 + $0x8] sm:$0xf]
        %v2190 = vld [vmem:[#allocation23 + $0xc] sm:$0xf]
        %v2191 = vld [vmem:[#allocation25] sm:$0x1]
        %v2192 = vld [vmem:[#allocation26] sm:$0x1]
        %v2193 = vld [vmem:[#allocation28] sm:$0x1]
        %v2198 = vlaneseq
        %v2199 = vshrl.u32 %v2198, 7
        %v2200 = vsub.s32 0, %v2199
        %v2201 = vrot.slane %v2183, %v2200
        %v2202 = vlaneseq
        %v2203 = vshrl.u32 %v2202, 7
        %v2204 = vsub.s32 0, %v2203
        %v2205 = vrot.slane %v2184, %v2204
        %v2206 = vlaneseq
        %v2207 = vshrl.u32 %v2206, 7
        %v2208 = vsub.s32 0, %v2207
        %v2209 = vrot.slane %v2185, %v2208
        %v2210 = vlaneseq
        %v2211 = vshrl.u32 %v2210, 7
        %v2212 = vsub.s32 0, %v2211
        %v2213 = vrot.slane %v2186, %v2212
        %v2222 = vunpack.c.l.b16 %v2167
        %v2223 = vunpack.c.l.b16 %v2168
        %v2224 = vunpack.c.l.b16 %v2169
        %v2225 = vunpack.c.l.b16 %v2170
        %v2226 = vpack.c.b16 %v2223, %v2222
        %v2227 = vpack.c.b16 %v2225, %v2224
        %v2231 = vsel %vm1288, %v2150, 0
        %2233 = vmatprep.subr.bf16.mxu0 0
        %2234 = vmatpush1.bf16.msra.mxu0 %v2226
        %2235 = vmatprep.subr.bf16.mxu0 0
        %2236 = vmatpush1.bf16.msra.mxu0 %v2227
        %2237 = vmatprep.subr.bf16.mxu0 0
        %2238 = vmatpush1.bf16.msra.mxu0 0
        %2239 = vmatprep.subr.bf16.mxu0 0
        %2240 = vmatpush1.bf16.msra.mxu0 0
        %2241 = vmatprep.subr.bf16.mxu0 0
        %2242 = vmatpush1.bf16.msra.mxu0 0
        %2243 = vmatprep.subr.bf16.mxu0 0
        %2244 = vmatpush1.bf16.msra.mxu0 0
        %2245 = vmatprep.subr.bf16.mxu0 0
        %2246 = vmatpush1.bf16.msra.mxu0 0
        %2247 = vmatprep.subr.bf16.mxu0 0
        %2248 = vmatpush1.bf16.msra.mxu0 0
        %2249 = vmatprep.subr.bf16.mxu0 0
        %2250 = vmatpush1.bf16.msra.mxu0 0
        %2251 = vmatprep.subr.bf16.mxu0 0
        %2252 = vmatpush1.bf16.msra.mxu0 0
        %2253 = vmatprep.subr.bf16.mxu0 0
        %2254 = vmatpush1.bf16.msra.mxu0 0
        %2255 = vmatprep.subr.bf16.mxu0 0
        %2256 = vmatpush1.bf16.msra.mxu0 0
        %2257 = vmatprep.subr.bf16.mxu0 0
        %2258 = vmatpush1.bf16.msra.mxu0 0
        %2259 = vmatprep.subr.bf16.mxu0 0
        %2260 = vmatpush1.bf16.msra.mxu0 0
        %2261 = vmatprep.subr.bf16.mxu0 0
        %2262 = vmatpush1.bf16.msra.mxu0 0
        %2263 = vmatprep.subr.bf16.mxu0 0
        %2264 = vmatpush1.bf16.msra.mxu0 0
        %2265 = vmatprep.mubr.bf16.mxu0 0
        %2266 = vmatmul.mubr.bf16.gmra.mrb[0].mxu0 %v2231
        %v2267 = vpop.f32.mrb[0].mxu0
        %v2268 = vadd.f32 %v2201, %v2267
        %v2269 = vpop.f32.mrb[0].mxu0
        %v2270 = vpop.f32.mrb[0].mxu0
        %v2271 = vpop.f32.mrb[0].mxu0
        %2272 = vdwg.mxu0
        %v2277 = vunpack.c.l.b16 %v2171
        %v2278 = vunpack.c.l.b16 %v2172
        %v2279 = vunpack.c.l.b16 %v2173
        %v2280 = vunpack.c.l.b16 %v2174
        %v2281 = vpack.c.b16 %v2278, %v2277
        %v2282 = vpack.c.b16 %v2280, %v2279
        %2285 = vmatprep.subr.bf16.mxu0 0
        %2286 = vmatpush1.bf16.msra.mxu0 %v2281
        %2287 = vmatprep.subr.bf16.mxu0 0
        %2288 = vmatpush1.bf16.msra.mxu0 %v2282
        %2289 = vmatprep.subr.bf16.mxu0 0
        %2290 = vmatpush1.bf16.msra.mxu0 0
        %2291 = vmatprep.subr.bf16.mxu0 0
        %2292 = vmatpush1.bf16.msra.mxu0 0
        %2293 = vmatprep.subr.bf16.mxu0 0
        %2294 = vmatpush1.bf16.msra.mxu0 0
        %2295 = vmatprep.subr.bf16.mxu0 0
        %2296 = vmatpush1.bf16.msra.mxu0 0
        %2297 = vmatprep.subr.bf16.mxu0 0
        %2298 = vmatpush1.bf16.msra.mxu0 0
        %2299 = vmatprep.subr.bf16.mxu0 0
        %2300 = vmatpush1.bf16.msra.mxu0 0
        %2301 = vmatprep.subr.bf16.mxu0 0
        %2302 = vmatpush1.bf16.msra.mxu0 0
        %2303 = vmatprep.subr.bf16.mxu0 0
        %2304 = vmatpush1.bf16.msra.mxu0 0
        %2305 = vmatprep.subr.bf16.mxu0 0
        %2306 = vmatpush1.bf16.msra.mxu0 0
        %2307 = vmatprep.subr.bf16.mxu0 0
        %2308 = vmatpush1.bf16.msra.mxu0 0
        %2309 = vmatprep.subr.bf16.mxu0 0
        %2310 = vmatpush1.bf16.msra.mxu0 0
        %2311 = vmatprep.subr.bf16.mxu0 0
        %2312 = vmatpush1.bf16.msra.mxu0 0
        %2313 = vmatprep.subr.bf16.mxu0 0
        %2314 = vmatpush1.bf16.msra.mxu0 0
        %2315 = vmatprep.subr.bf16.mxu0 0
        %2316 = vmatpush1.bf16.msra.mxu0 0
        %2317 = vmatprep.mubr.bf16.mxu0 0
        %2318 = vmatmul.mubr.bf16.gmra.mrb[0].mxu0 %v2231
        %v2319 = vpop.f32.mrb[0].mxu0
        %v2320 = vadd.f32 %v2205, %v2319
        %v2321 = vpop.f32.mrb[0].mxu0
        %v2322 = vpop.f32.mrb[0].mxu0
        %v2323 = vpop.f32.mrb[0].mxu0
        %2324 = vdwg.mxu0
        %v2329 = vunpack.c.l.b16 %v2175
        %v2330 = vunpack.c.l.b16 %v2176
        %v2331 = vunpack.c.l.b16 %v2177
        %v2332 = vunpack.c.l.b16 %v2178
        %v2333 = vpack.c.b16 %v2330, %v2329
        %v2334 = vpack.c.b16 %v2332, %v2331
        %2337 = vmatprep.subr.bf16.mxu0 0
        %2338 = vmatpush1.bf16.msra.mxu0 %v2333
        %2339 = vmatprep.subr.bf16.mxu0 0
        %2340 = vmatpush1.bf16.msra.mxu0 %v2334
        %2341 = vmatprep.subr.bf16.mxu0 0
        %2342 = vmatpush1.bf16.msra.mxu0 0
        %2343 = vmatprep.subr.bf16.mxu0 0
        %2344 = vmatpush1.bf16.msra.mxu0 0
        %2345 = vmatprep.subr.bf16.mxu0 0
        %2346 = vmatpush1.bf16.msra.mxu0 0
        %2347 = vmatprep.subr.bf16.mxu0 0
        %2348 = vmatpush1.bf16.msra.mxu0 0
        %2349 = vmatprep.subr.bf16.mxu0 0
        %2350 = vmatpush1.bf16.msra.mxu0 0
        %2351 = vmatprep.subr.bf16.mxu0 0
        %2352 = vmatpush1.bf16.msra.mxu0 0
        %2353 = vmatprep.subr.bf16.mxu0 0
        %2354 = vmatpush1.bf16.msra.mxu0 0
        %2355 = vmatprep.subr.bf16.mxu0 0
        %2356 = vmatpush1.bf16.msra.mxu0 0
        %2357 = vmatprep.subr.bf16.mxu0 0
        %2358 = vmatpush1.bf16.msra.mxu0 0
        %2359 = vmatprep.subr.bf16.mxu0 0
        %2360 = vmatpush1.bf16.msra.mxu0 0
        %2361 = vmatprep.subr.bf16.mxu0 0
        %2362 = vmatpush1.bf16.msra.mxu0 0
        %2363 = vmatprep.subr.bf16.mxu0 0
        %2364 = vmatpush1.bf16.msra.mxu0 0
        %2365 = vmatprep.subr.bf16.mxu0 0
        %2366 = vmatpush1.bf16.msra.mxu0 0
        %2367 = vmatprep.subr.bf16.mxu0 0
        %2368 = vmatpush1.bf16.msra.mxu0 0
        %2369 = vmatprep.mubr.bf16.mxu0 0
        %2370 = vmatmul.mubr.bf16.gmra.mrb[0].mxu0 %v2231
        %v2371 = vpop.f32.mrb[0].mxu0
        %v2372 = vadd.f32 %v2209, %v2371
        %v2373 = vpop.f32.mrb[0].mxu0
        %v2374 = vpop.f32.mrb[0].mxu0
        %v2375 = vpop.f32.mrb[0].mxu0
        %2376 = vdwg.mxu0
        %v2381 = vunpack.c.l.b16 %v2179
        %v2382 = vunpack.c.l.b16 %v2180
        %v2383 = vunpack.c.l.b16 %v2181
        %v2384 = vunpack.c.l.b16 %v2182
        %v2385 = vpack.c.b16 %v2382, %v2381
        %v2386 = vpack.c.b16 %v2384, %v2383
        %2389 = vmatprep.subr.bf16.mxu0 0
        %2390 = vmatpush1.bf16.msra.mxu0 %v2385
        %2391 = vmatprep.subr.bf16.mxu0 0
        %2392 = vmatpush1.bf16.msra.mxu0 %v2386
        %2393 = vmatprep.subr.bf16.mxu0 0
        %2394 = vmatpush1.bf16.msra.mxu0 0
        %2395 = vmatprep.subr.bf16.mxu0 0
        %2396 = vmatpush1.bf16.msra.mxu0 0
        %2397 = vmatprep.subr.bf16.mxu0 0
        %2398 = vmatpush1.bf16.msra.mxu0 0
        %2399 = vmatprep.subr.bf16.mxu0 0
        %2400 = vmatpush1.bf16.msra.mxu0 0
        %2401 = vmatprep.subr.bf16.mxu0 0
        %2402 = vmatpush1.bf16.msra.mxu0 0
        %2403 = vmatprep.subr.bf16.mxu0 0
        %2404 = vmatpush1.bf16.msra.mxu0 0
        %2405 = vmatprep.subr.bf16.mxu0 0
        %2406 = vmatpush1.bf16.msra.mxu0 0
        %2407 = vmatprep.subr.bf16.mxu0 0
        %2408 = vmatpush1.bf16.msra.mxu0 0
        %2409 = vmatprep.subr.bf16.mxu0 0
        %2410 = vmatpush1.bf16.msra.mxu0 0
        %2411 = vmatprep.subr.bf16.mxu0 0
        %2412 = vmatpush1.bf16.msra.mxu0 0
        %2413 = vmatprep.subr.bf16.mxu0 0
        %2414 = vmatpush1.bf16.msra.mxu0 0
        %2415 = vmatprep.subr.bf16.mxu0 0
        %2416 = vmatpush1.bf16.msra.mxu0 0
        %2417 = vmatprep.subr.bf16.mxu0 0
        %2418 = vmatpush1.bf16.msra.mxu0 0
        %2419 = vmatprep.subr.bf16.mxu0 0
        %2420 = vmatpush1.bf16.msra.mxu0 0
        %2421 = vmatprep.mubr.bf16.mxu0 0
        %2422 = vmatmul.mubr.bf16.gmra.mrb[0].mxu0 %v2231
        %v2423 = vpop.f32.mrb[0].mxu0
        %v2424 = vadd.f32 %v2213, %v2423
        %v2425 = vpop.f32.mrb[0].mxu0
        %v2426 = vpop.f32.mrb[0].mxu0
        %v2427 = vpop.f32.mrb[0].mxu0
        %2428 = vdwg.mxu0
        %v2429 = vmul.f32 %v2268, 0.35355338
        %v2430 = vmul.f32 %v2320, 0.35355338
        %v2431 = vmul.f32 %v2372, 0.35355338
        %v2432 = vmul.f32 %v2424, 0.35355338
        %v2433 = vpack.c.bf16 %v2429, %v2429
        %v2434 = vpack.c.bf16 %v2430, %v2430
        %v2435 = vpack.c.bf16 %v2431, %v2431
        %v2436 = vpack.c.bf16 %v2432, %v2432
        %v2439 = vunpack.c.l.b16 %v2151
        %v2440 = vunpack.c.l.b16 %v2152
        %v2441 = vpack.c.b16 %v2440, %v2439
        %v2443 = vsel %vm1496, %v2433, 0
        %v2446 = vsel %vm1496, %v2441, 0
        %2448 = vmatprep.subr.bf16.mxu0 0
        %2449 = vmatpush1.bf16.xpose.msra.mxu0 %v2446
        %2450 = vmatprep.subr.bf16.mxu0 0
        %2451 = vmatpush1.bf16.xpose.msra.mxu0 0
        %2452 = vmatprep.subr.bf16.mxu0 0
        %2453 = vmatpush1.bf16.xpose.msra.mxu0 0
        %2454 = vmatprep.subr.bf16.mxu0 0
        %2455 = vmatpush1.bf16.xpose.msra.mxu0 0
        %2456 = vmatprep.subr.bf16.mxu0 0
        %2457 = vmatpush1.bf16.xpose.msra.mxu0 0
        %2458 = vmatprep.subr.bf16.mxu0 0
        %2459 = vmatpush1.bf16.xpose.msra.mxu0 0
        %2460 = vmatprep.subr.bf16.mxu0 0
        %2461 = vmatpush1.bf16.xpose.msra.mxu0 0
        %2462 = vmatprep.subr.bf16.mxu0 0
        %2463 = vmatpush1.bf16.xpose.msra.mxu0 0
        %2464 = vmatprep.subr.bf16.mxu0 0
        %2465 = vmatpush1.bf16.xpose.msra.mxu0 0
        %2466 = vmatprep.subr.bf16.mxu0 0
        %2467 = vmatpush1.bf16.xpose.msra.mxu0 0
        %2468 = vmatprep.subr.bf16.mxu0 0
        %2469 = vmatpush1.bf16.xpose.msra.mxu0 0
        %2470 = vmatprep.subr.bf16.mxu0 0
        %2471 = vmatpush1.bf16.xpose.msra.mxu0 0
        %2472 = vmatprep.subr.bf16.mxu0 0
        %2473 = vmatpush1.bf16.xpose.msra.mxu0 0
        %2474 = vmatprep.subr.bf16.mxu0 0
        %2475 = vmatpush1.bf16.xpose.msra.mxu0 0
        %2476 = vmatprep.subr.bf16.mxu0 0
        %2477 = vmatpush1.bf16.xpose.msra.mxu0 0
        %2478 = vmatprep.subr.bf16.mxu0 0
        %2479 = vmatpush1.bf16.xpose.msra.mxu0 0
        %2480 = vmatprep.mubr.bf16.mxu0 0
        %2481 = vmatmul.mubr.bf16.gmra.mrb[0].mxu0 %v2443
        %v2482 = vpop.f32.mrb[0].mxu0
        %v2483 = vadd.f32 0.0, %v2482
        %v2484 = vpop.f32.mrb[0].mxu0
        %v2485 = vpop.f32.mrb[0].mxu0
        %v2486 = vpop.f32.mrb[0].mxu0
        %2487 = vdwg.mxu0
        %v2490 = vunpack.c.l.b16 %v2153
        %v2491 = vunpack.c.l.b16 %v2154
        %v2492 = vpack.c.b16 %v2491, %v2490
        %v2494 = vsel %vm1496, %v2434, 0
        %v2497 = vsel %vm1496, %v2492, 0
        %2499 = vmatprep.subr.bf16.mxu0 0
        %2500 = vmatpush1.bf16.xpose.msra.mxu0 %v2497
        %2501 = vmatprep.subr.bf16.mxu0 0
        %2502 = vmatpush1.bf16.xpose.msra.mxu0 0
        %2503 = vmatprep.subr.bf16.mxu0 0
        %2504 = vmatpush1.bf16.xpose.msra.mxu0 0
        %2505 = vmatprep.subr.bf16.mxu0 0
        %2506 = vmatpush1.bf16.xpose.msra.mxu0 0
        %2507 = vmatprep.subr.bf16.mxu0 0
        %2508 = vmatpush1.bf16.xpose.msra.mxu0 0
        %2509 = vmatprep.subr.bf16.mxu0 0
        %2510 = vmatpush1.bf16.xpose.msra.mxu0 0
        %2511 = vmatprep.subr.bf16.mxu0 0
        %2512 = vmatpush1.bf16.xpose.msra.mxu0 0
        %2513 = vmatprep.subr.bf16.mxu0 0
        %2514 = vmatpush1.bf16.xpose.msra.mxu0 0
        %2515 = vmatprep.subr.bf16.mxu0 0
        %2516 = vmatpush1.bf16.xpose.msra.mxu0 0
        %2517 = vmatprep.subr.bf16.mxu0 0
        %2518 = vmatpush1.bf16.xpose.msra.mxu0 0
        %2519 = vmatprep.subr.bf16.mxu0 0
        %2520 = vmatpush1.bf16.xpose.msra.mxu0 0
        %2521 = vmatprep.subr.bf16.mxu0 0
        %2522 = vmatpush1.bf16.xpose.msra.mxu0 0
        %2523 = vmatprep.subr.bf16.mxu0 0
        %2524 = vmatpush1.bf16.xpose.msra.mxu0 0
        %2525 = vmatprep.subr.bf16.mxu0 0
        %2526 = vmatpush1.bf16.xpose.msra.mxu0 0
        %2527 = vmatprep.subr.bf16.mxu0 0
        %2528 = vmatpush1.bf16.xpose.msra.mxu0 0
        %2529 = vmatprep.subr.bf16.mxu0 0
        %2530 = vmatpush1.bf16.xpose.msra.mxu0 0
        %2531 = vmatprep.mubr.bf16.mxu0 0
        %2532 = vmatmul.mubr.bf16.gmra.mrb[0].mxu0 %v2494
        %v2533 = vpop.f32.mrb[0].mxu0
        %v2534 = vadd.f32 0.0, %v2533
        %v2535 = vpop.f32.mrb[0].mxu0
        %v2536 = vpop.f32.mrb[0].mxu0
        %v2537 = vpop.f32.mrb[0].mxu0
        %2538 = vdwg.mxu0
        %v2541 = vunpack.c.l.b16 %v2155
        %v2542 = vunpack.c.l.b16 %v2156
        %v2543 = vpack.c.b16 %v2542, %v2541
        %v2545 = vsel %vm1496, %v2435, 0
        %v2548 = vsel %vm1496, %v2543, 0
        %2550 = vmatprep.subr.bf16.mxu0 0
        %2551 = vmatpush1.bf16.xpose.msra.mxu0 %v2548
        %2552 = vmatprep.subr.bf16.mxu0 0
        %2553 = vmatpush1.bf16.xpose.msra.mxu0 0
        %2554 = vmatprep.subr.bf16.mxu0 0
        %2555 = vmatpush1.bf16.xpose.msra.mxu0 0
        %2556 = vmatprep.subr.bf16.mxu0 0
        %2557 = vmatpush1.bf16.xpose.msra.mxu0 0
        %2558 = vmatprep.subr.bf16.mxu0 0
        %2559 = vmatpush1.bf16.xpose.msra.mxu0 0
        %2560 = vmatprep.subr.bf16.mxu0 0
        %2561 = vmatpush1.bf16.xpose.msra.mxu0 0
        %2562 = vmatprep.subr.bf16.mxu0 0
        %2563 = vmatpush1.bf16.xpose.msra.mxu0 0
        %2564 = vmatprep.subr.bf16.mxu0 0
        %2565 = vmatpush1.bf16.xpose.msra.mxu0 0
        %2566 = vmatprep.subr.bf16.mxu0 0
        %2567 = vmatpush1.bf16.xpose.msra.mxu0 0
        %2568 = vmatprep.subr.bf16.mxu0 0
        %2569 = vmatpush1.bf16.xpose.msra.mxu0 0
        %2570 = vmatprep.subr.bf16.mxu0 0
        %2571 = vmatpush1.bf16.xpose.msra.mxu0 0
        %2572 = vmatprep.subr.bf16.mxu0 0
        %2573 = vmatpush1.bf16.xpose.msra.mxu0 0
        %2574 = vmatprep.subr.bf16.mxu0 0
        %2575 = vmatpush1.bf16.xpose.msra.mxu0 0
        %2576 = vmatprep.subr.bf16.mxu0 0
        %2577 = vmatpush1.bf16.xpose.msra.mxu0 0
        %2578 = vmatprep.subr.bf16.mxu0 0
        %2579 = vmatpush1.bf16.xpose.msra.mxu0 0
        %2580 = vmatprep.subr.bf16.mxu0 0
        %2581 = vmatpush1.bf16.xpose.msra.mxu0 0
        %2582 = vmatprep.mubr.bf16.mxu0 0
        %2583 = vmatmul.mubr.bf16.gmra.mrb[0].mxu0 %v2545
        %v2584 = vpop.f32.mrb[0].mxu0
        %v2585 = vadd.f32 0.0, %v2584
        %v2586 = vpop.f32.mrb[0].mxu0
        %v2587 = vpop.f32.mrb[0].mxu0
        %v2588 = vpop.f32.mrb[0].mxu0
        %2589 = vdwg.mxu0
        %v2592 = vunpack.c.l.b16 %v2157
        %v2593 = vunpack.c.l.b16 %v2158
        %v2594 = vpack.c.b16 %v2593, %v2592
        %v2596 = vsel %vm1496, %v2436, 0
        %v2599 = vsel %vm1496, %v2594, 0
        %2601 = vmatprep.subr.bf16.mxu0 0
        %2602 = vmatpush1.bf16.xpose.msra.mxu0 %v2599
        %2603 = vmatprep.subr.bf16.mxu0 0
        %2604 = vmatpush1.bf16.xpose.msra.mxu0 0
        %2605 = vmatprep.subr.bf16.mxu0 0
        %2606 = vmatpush1.bf16.xpose.msra.mxu0 0
        %2607 = vmatprep.subr.bf16.mxu0 0
        %2608 = vmatpush1.bf16.xpose.msra.mxu0 0
        %2609 = vmatprep.subr.bf16.mxu0 0
        %2610 = vmatpush1.bf16.xpose.msra.mxu0 0
        %2611 = vmatprep.subr.bf16.mxu0 0
        %2612 = vmatpush1.bf16.xpose.msra.mxu0 0
        %2613 = vmatprep.subr.bf16.mxu0 0
        %2614 = vmatpush1.bf16.xpose.msra.mxu0 0
        %2615 = vmatprep.subr.bf16.mxu0 0
        %2616 = vmatpush1.bf16.xpose.msra.mxu0 0
        %2617 = vmatprep.subr.bf16.mxu0 0
        %2618 = vmatpush1.bf16.xpose.msra.mxu0 0
        %2619 = vmatprep.subr.bf16.mxu0 0
        %2620 = vmatpush1.bf16.xpose.msra.mxu0 0
        %2621 = vmatprep.subr.bf16.mxu0 0
        %2622 = vmatpush1.bf16.xpose.msra.mxu0 0
        %2623 = vmatprep.subr.bf16.mxu0 0
        %2624 = vmatpush1.bf16.xpose.msra.mxu0 0
        %2625 = vmatprep.subr.bf16.mxu0 0
        %2626 = vmatpush1.bf16.xpose.msra.mxu0 0
        %2627 = vmatprep.subr.bf16.mxu0 0
        %2628 = vmatpush1.bf16.xpose.msra.mxu0 0
        %2629 = vmatprep.subr.bf16.mxu0 0
        %2630 = vmatpush1.bf16.xpose.msra.mxu0 0
        %2631 = vmatprep.subr.bf16.mxu0 0
        %2632 = vmatpush1.bf16.xpose.msra.mxu0 0
        %2633 = vmatprep.mubr.bf16.mxu0 0
        %2634 = vmatmul.mubr.bf16.gmra.mrb[0].mxu0 %v2596
        %v2635 = vpop.f32.mrb[0].mxu0
        %v2636 = vadd.f32 0.0, %v2635
        %v2637 = vpop.f32.mrb[0].mxu0
        %v2638 = vpop.f32.mrb[0].mxu0
        %v2639 = vpop.f32.mrb[0].mxu0
        %2640 = vdwg.mxu0
        %vm2641 = vcmask 130048
        %v2642 = vsel %vm2641, %v2483, -inf
        %2643 = vmax.xlane.f32.xlu0 %v2642
        %v2644 = vpop.xlane.xlu0 %2643
        %v2645 = vsel %vm2641, %v2534, -inf
        %2646 = vmax.xlane.f32.xlu0 %v2645
        %v2647 = vpop.xlane.xlu0 %2646
        %v2648 = vsel %vm2641, %v2585, -inf
        %2649 = vmax.xlane.f32.xlu0 %v2648
        %v2650 = vpop.xlane.xlu0 %2649
        %v2651 = vsel %vm2641, %v2636, -inf
        %2652 = vmax.xlane.f32.xlu0 %v2651
        %v2653 = vpop.xlane.xlu0 %2652
        %v2654 = vsub.f32 %v2483, %v2644
        %v2655 = vsub.f32 %v2534, %v2647
        %v2656 = vsub.f32 %v2585, %v2650
        %v2657 = vsub.f32 %v2636, %v2653
        %v2658 = vmul.f32 %v2654, 1.442695
        %v2659 = vpow.pop %v2658
        %v2660 = vmul.f32 %v2655, 1.442695
        %v2661 = vpow.pop %v2660
        %v2662 = vmul.f32 %v2656, 1.442695
        %v2663 = vpow.pop %v2662
        %v2664 = vmul.f32 %v2657, 1.442695
        %v2665 = vpow.pop %v2664
        %v2666 = vsel %vm2641, %v2659, 0.0
        %2667 = vadd.xlane.f32.xlu0 %v2666
        %v2668 = vpop.xlane.xlu0 %2667
        %v2669 = vsel %vm2641, %v2661, 0.0
        %2670 = vadd.xlane.f32.xlu0 %v2669
        %v2671 = vpop.xlane.xlu0 %2670
        %v2672 = vsel %vm2641, %v2663, 0.0
        %2673 = vadd.xlane.f32.xlu0 %v2672
        %v2674 = vpop.xlane.xlu0 %2673
        %v2675 = vsel %vm2641, %v2665, 0.0
        %2676 = vadd.xlane.f32.xlu0 %v2675
        %v2677 = vpop.xlane.xlu0 %2676
        %v2678 = vrcp.pop %v2668
        %v2679 = vrcp.pop %v2671
        %v2680 = vrcp.pop %v2674
        %v2681 = vrcp.pop %v2677
        %v2682 = vmul.f32 %v2659, %v2678
        %v2683 = vmul.f32 %v2661, %v2679
        %v2684 = vmul.f32 %v2663, %v2680
        %v2685 = vmul.f32 %v2665, %v2681
        %v2686 = vpack.c.bf16 %v2682, %v2682
        %v2687 = vpack.c.bf16 %v2683, %v2683
        %v2688 = vpack.c.bf16 %v2684, %v2684
        %v2689 = vpack.c.bf16 %v2685, %v2685
        %v2692 = vunpack.c.l.b16 %v2159
        %v2693 = vunpack.c.l.b16 %v2160
        %v2694 = vpack.c.b16 %v2693, %v2692
        %v2697 = vsel %vm2641, %v2686, 0
        %2699 = vmatprep.subr.bf16.mxu0 0
        %2700 = vmatpush1.bf16.msra.mxu0 %v2694
        %2701 = vmatprep.subr.bf16.mxu0 0
        %2702 = vmatpush1.bf16.msra.mxu0 0
        %2703 = vmatprep.subr.bf16.mxu0 0
        %2704 = vmatpush1.bf16.msra.mxu0 0
        %2705 = vmatprep.subr.bf16.mxu0 0
        %2706 = vmatpush1.bf16.msra.mxu0 0
        %2707 = vmatprep.subr.bf16.mxu0 0
        %2708 = vmatpush1.bf16.msra.mxu0 0
        %2709 = vmatprep.subr.bf16.mxu0 0
        %2710 = vmatpush1.bf16.msra.mxu0 0
        %2711 = vmatprep.subr.bf16.mxu0 0
        %2712 = vmatpush1.bf16.msra.mxu0 0
        %2713 = vmatprep.subr.bf16.mxu0 0
        %2714 = vmatpush1.bf16.msra.mxu0 0
        %2715 = vmatprep.subr.bf16.mxu0 0
        %2716 = vmatpush1.bf16.msra.mxu0 0
        %2717 = vmatprep.subr.bf16.mxu0 0
        %2718 = vmatpush1.bf16.msra.mxu0 0
        %2719 = vmatprep.subr.bf16.mxu0 0
        %2720 = vmatpush1.bf16.msra.mxu0 0
        %2721 = vmatprep.subr.bf16.mxu0 0
        %2722 = vmatpush1.bf16.msra.mxu0 0
        %2723 = vmatprep.subr.bf16.mxu0 0
        %2724 = vmatpush1.bf16.msra.mxu0 0
        %2725 = vmatprep.subr.bf16.mxu0 0
        %2726 = vmatpush1.bf16.msra.mxu0 0
        %2727 = vmatprep.subr.bf16.mxu0 0
        %2728 = vmatpush1.bf16.msra.mxu0 0
        %2729 = vmatprep.subr.bf16.mxu0 0
        %2730 = vmatpush1.bf16.msra.mxu0 0
        %2731 = vmatprep.mubr.bf16.mxu0 0
        %2732 = vmatmul.mubr.bf16.gmra.mrb[0].mxu0 %v2697
        %v2733 = vpop.f32.mrb[0].mxu0
        %v2734 = vadd.f32 0.0, %v2733
        %v2735 = vpop.f32.mrb[0].mxu0
        %v2736 = vpop.f32.mrb[0].mxu0
        %v2737 = vpop.f32.mrb[0].mxu0
        %2738 = vdwg.mxu0
        %v2741 = vunpack.c.l.b16 %v2161
        %v2742 = vunpack.c.l.b16 %v2162
        %v2743 = vpack.c.b16 %v2742, %v2741
        %v2746 = vsel %vm2641, %v2687, 0
        %2748 = vmatprep.subr.bf16.mxu0 0
        %2749 = vmatpush1.bf16.msra.mxu0 %v2743
        %2750 = vmatprep.subr.bf16.mxu0 0
        %2751 = vmatpush1.bf16.msra.mxu0 0
        %2752 = vmatprep.subr.bf16.mxu0 0
        %2753 = vmatpush1.bf16.msra.mxu0 0
        %2754 = vmatprep.subr.bf16.mxu0 0
        %2755 = vmatpush1.bf16.msra.mxu0 0
        %2756 = vmatprep.subr.bf16.mxu0 0
        %2757 = vmatpush1.bf16.msra.mxu0 0
        %2758 = vmatprep.subr.bf16.mxu0 0
        %2759 = vmatpush1.bf16.msra.mxu0 0
        %2760 = vmatprep.subr.bf16.mxu0 0
        %2761 = vmatpush1.bf16.msra.mxu0 0
        %2762 = vmatprep.subr.bf16.mxu0 0
        %2763 = vmatpush1.bf16.msra.mxu0 0
        %2764 = vmatprep.subr.bf16.mxu0 0
        %2765 = vmatpush1.bf16.msra.mxu0 0
        %2766 = vmatprep.subr.bf16.mxu0 0
        %2767 = vmatpush1.bf16.msra.mxu0 0
        %2768 = vmatprep.subr.bf16.mxu0 0
        %2769 = vmatpush1.bf16.msra.mxu0 0
        %2770 = vmatprep.subr.bf16.mxu0 0
        %2771 = vmatpush1.bf16.msra.mxu0 0
        %2772 = vmatprep.subr.bf16.mxu0 0
        %2773 = vmatpush1.bf16.msra.mxu0 0
        %2774 = vmatprep.subr.bf16.mxu0 0
        %2775 = vmatpush1.bf16.msra.mxu0 0
        %2776 = vmatprep.subr.bf16.mxu0 0
        %2777 = vmatpush1.bf16.msra.mxu0 0
        %2778 = vmatprep.subr.bf16.mxu0 0
        %2779 = vmatpush1.bf16.msra.mxu0 0
        %2780 = vmatprep.mubr.bf16.mxu0 0
        %2781 = vmatmul.mubr.bf16.gmra.mrb[0].mxu0 %v2746
        %v2782 = vpop.f32.mrb[0].mxu0
        %v2783 = vadd.f32 0.0, %v2782
        %v2784 = vpop.f32.mrb[0].mxu0
        %v2785 = vpop.f32.mrb[0].mxu0
        %v2786 = vpop.f32.mrb[0].mxu0
        %2787 = vdwg.mxu0
        %v2790 = vunpack.c.l.b16 %v2163
        %v2791 = vunpack.c.l.b16 %v2164
        %v2792 = vpack.c.b16 %v2791, %v2790
        %v2795 = vsel %vm2641, %v2688, 0
        %2797 = vmatprep.subr.bf16.mxu0 0
        %2798 = vmatpush1.bf16.msra.mxu0 %v2792
        %2799 = vmatprep.subr.bf16.mxu0 0
        %2800 = vmatpush1.bf16.msra.mxu0 0
        %2801 = vmatprep.subr.bf16.mxu0 0
        %2802 = vmatpush1.bf16.msra.mxu0 0
        %2803 = vmatprep.subr.bf16.mxu0 0
        %2804 = vmatpush1.bf16.msra.mxu0 0
        %2805 = vmatprep.subr.bf16.mxu0 0
        %2806 = vmatpush1.bf16.msra.mxu0 0
        %2807 = vmatprep.subr.bf16.mxu0 0
        %2808 = vmatpush1.bf16.msra.mxu0 0
        %2809 = vmatprep.subr.bf16.mxu0 0
        %2810 = vmatpush1.bf16.msra.mxu0 0
        %2811 = vmatprep.subr.bf16.mxu0 0
        %2812 = vmatpush1.bf16.msra.mxu0 0
        %2813 = vmatprep.subr.bf16.mxu0 0
        %2814 = vmatpush1.bf16.msra.mxu0 0
        %2815 = vmatprep.subr.bf16.mxu0 0
        %2816 = vmatpush1.bf16.msra.mxu0 0
        %2817 = vmatprep.subr.bf16.mxu0 0
        %2818 = vmatpush1.bf16.msra.mxu0 0
        %2819 = vmatprep.subr.bf16.mxu0 0
        %2820 = vmatpush1.bf16.msra.mxu0 0
        %2821 = vmatprep.subr.bf16.mxu0 0
        %2822 = vmatpush1.bf16.msra.mxu0 0
        %2823 = vmatprep.subr.bf16.mxu0 0
        %2824 = vmatpush1.bf16.msra.mxu0 0
        %2825 = vmatprep.subr.bf16.mxu0 0
        %2826 = vmatpush1.bf16.msra.mxu0 0
        %2827 = vmatprep.subr.bf16.mxu0 0
        %2828 = vmatpush1.bf16.msra.mxu0 0
        %2829 = vmatprep.mubr.bf16.mxu0 0
        %2830 = vmatmul.mubr.bf16.gmra.mrb[0].mxu0 %v2795
        %v2831 = vpop.f32.mrb[0].mxu0
        %v2832 = vadd.f32 0.0, %v2831
        %v2833 = vpop.f32.mrb[0].mxu0
        %v2834 = vpop.f32.mrb[0].mxu0
        %v2835 = vpop.f32.mrb[0].mxu0
        %2836 = vdwg.mxu0
        %v2839 = vunpack.c.l.b16 %v2165
        %v2840 = vunpack.c.l.b16 %v2166
        %v2841 = vpack.c.b16 %v2840, %v2839
        %v2844 = vsel %vm2641, %v2689, 0
        %2846 = vmatprep.subr.bf16.mxu0 0
        %2847 = vmatpush1.bf16.msra.mxu0 %v2841
        %2848 = vmatprep.subr.bf16.mxu0 0
        %2849 = vmatpush1.bf16.msra.mxu0 0
        %2850 = vmatprep.subr.bf16.mxu0 0
        %2851 = vmatpush1.bf16.msra.mxu0 0
        %2852 = vmatprep.subr.bf16.mxu0 0
        %2853 = vmatpush1.bf16.msra.mxu0 0
        %2854 = vmatprep.subr.bf16.mxu0 0
        %2855 = vmatpush1.bf16.msra.mxu0 0
        %2856 = vmatprep.subr.bf16.mxu0 0
        %2857 = vmatpush1.bf16.msra.mxu0 0
        %2858 = vmatprep.subr.bf16.mxu0 0
        %2859 = vmatpush1.bf16.msra.mxu0 0
        %2860 = vmatprep.subr.bf16.mxu0 0
        %2861 = vmatpush1.bf16.msra.mxu0 0
        %2862 = vmatprep.subr.bf16.mxu0 0
        %2863 = vmatpush1.bf16.msra.mxu0 0
        %2864 = vmatprep.subr.bf16.mxu0 0
        %2865 = vmatpush1.bf16.msra.mxu0 0
        %2866 = vmatprep.subr.bf16.mxu0 0
        %2867 = vmatpush1.bf16.msra.mxu0 0
        %2868 = vmatprep.subr.bf16.mxu0 0
        %2869 = vmatpush1.bf16.msra.mxu0 0
        %2870 = vmatprep.subr.bf16.mxu0 0
        %2871 = vmatpush1.bf16.msra.mxu0 0
        %2872 = vmatprep.subr.bf16.mxu0 0
        %2873 = vmatpush1.bf16.msra.mxu0 0
        %2874 = vmatprep.subr.bf16.mxu0 0
        %2875 = vmatpush1.bf16.msra.mxu0 0
        %2876 = vmatprep.subr.bf16.mxu0 0
        %2877 = vmatpush1.bf16.msra.mxu0 0
        %2878 = vmatprep.mubr.bf16.mxu0 0
        %2879 = vmatmul.mubr.bf16.gmra.mrb[0].mxu0 %v2844
        %v2880 = vpop.f32.mrb[0].mxu0
        %v2881 = vadd.f32 0.0, %v2880
        %v2882 = vpop.f32.mrb[0].mxu0
        %v2883 = vpop.f32.mrb[0].mxu0
        %v2884 = vpop.f32.mrb[0].mxu0
        %2885 = vdwg.mxu0
        %v2887 = vlaneseq
        %v2888 = vshrl.u32 %v2887, 7
        %v2889 = vsub.s32 0, %v2888
        %v2890 = vrot.slane %v2191, %v2889
        %v2892 = vadd.f32 %v2890, %v2140
        %v2893 = vpack.c.bf16 %v2734, %v2734
        %v2895 = vsel %vm1496, %v2893, 0
        %v2898 = vsel %vm1732, %v2187, 0
        %2900 = vmatprep.subr.bf16.mxu0 0
        %2901 = vmatpush1.bf16.msra.mxu0 %v2898
        %2902 = vmatprep.subr.bf16.mxu0 0
        %2903 = vmatpush1.bf16.msra.mxu0 0
        %2904 = vmatprep.subr.bf16.mxu0 0
        %2905 = vmatpush1.bf16.msra.mxu0 0
        %2906 = vmatprep.subr.bf16.mxu0 0
        %2907 = vmatpush1.bf16.msra.mxu0 0
        %2908 = vmatprep.subr.bf16.mxu0 0
        %2909 = vmatpush1.bf16.msra.mxu0 0
        %2910 = vmatprep.subr.bf16.mxu0 0
        %2911 = vmatpush1.bf16.msra.mxu0 0
        %2912 = vmatprep.subr.bf16.mxu0 0
        %2913 = vmatpush1.bf16.msra.mxu0 0
        %2914 = vmatprep.subr.bf16.mxu0 0
        %2915 = vmatpush1.bf16.msra.mxu0 0
        %2916 = vmatprep.subr.bf16.mxu0 0
        %2917 = vmatpush1.bf16.msra.mxu0 0
        %2918 = vmatprep.subr.bf16.mxu0 0
        %2919 = vmatpush1.bf16.msra.mxu0 0
        %2920 = vmatprep.subr.bf16.mxu0 0
        %2921 = vmatpush1.bf16.msra.mxu0 0
        %2922 = vmatprep.subr.bf16.mxu0 0
        %2923 = vmatpush1.bf16.msra.mxu0 0
        %2924 = vmatprep.subr.bf16.mxu0 0
        %2925 = vmatpush1.bf16.msra.mxu0 0
        %2926 = vmatprep.subr.bf16.mxu0 0
        %2927 = vmatpush1.bf16.msra.mxu0 0
        %2928 = vmatprep.subr.bf16.mxu0 0
        %2929 = vmatpush1.bf16.msra.mxu0 0
        %2930 = vmatprep.subr.bf16.mxu0 0
        %2931 = vmatpush1.bf16.msra.mxu0 0
        %2932 = vmatprep.mubr.bf16.mxu0 0
        %2933 = vmatmul.mubr.bf16.gmra.mrb[0].mxu0 %v2895
        %v2934 = vpop.f32.mrb[0].mxu0
        %v2935 = vadd.f32 0.0, %v2934
        %v2936 = vpop.f32.mrb[0].mxu0
        %v2937 = vpop.f32.mrb[0].mxu0
        %v2938 = vpop.f32.mrb[0].mxu0
        %2939 = vdwg.mxu0
        %v2940 = vadd.f32 %v2892, %v2935
        %v2941 = vpack.c.bf16 %v2783, %v2783
        %v2943 = vsel %vm1496, %v2941, 0
        %v2946 = vsel %vm1732, %v2188, 0
        %2948 = vmatprep.subr.bf16.mxu0 0
        %2949 = vmatpush1.bf16.msra.mxu0 %v2946
        %2950 = vmatprep.subr.bf16.mxu0 0
        %2951 = vmatpush1.bf16.msra.mxu0 0
        %2952 = vmatprep.subr.bf16.mxu0 0
        %2953 = vmatpush1.bf16.msra.mxu0 0
        %2954 = vmatprep.subr.bf16.mxu0 0
        %2955 = vmatpush1.bf16.msra.mxu0 0
        %2956 = vmatprep.subr.bf16.mxu0 0
        %2957 = vmatpush1.bf16.msra.mxu0 0
        %2958 = vmatprep.subr.bf16.mxu0 0
        %2959 = vmatpush1.bf16.msra.mxu0 0
        %2960 = vmatprep.subr.bf16.mxu0 0
        %2961 = vmatpush1.bf16.msra.mxu0 0
        %2962 = vmatprep.subr.bf16.mxu0 0
        %2963 = vmatpush1.bf16.msra.mxu0 0
        %2964 = vmatprep.subr.bf16.mxu0 0
        %2965 = vmatpush1.bf16.msra.mxu0 0
        %2966 = vmatprep.subr.bf16.mxu0 0
        %2967 = vmatpush1.bf16.msra.mxu0 0
        %2968 = vmatprep.subr.bf16.mxu0 0
        %2969 = vmatpush1.bf16.msra.mxu0 0
        %2970 = vmatprep.subr.bf16.mxu0 0
        %2971 = vmatpush1.bf16.msra.mxu0 0
        %2972 = vmatprep.subr.bf16.mxu0 0
        %2973 = vmatpush1.bf16.msra.mxu0 0
        %2974 = vmatprep.subr.bf16.mxu0 0
        %2975 = vmatpush1.bf16.msra.mxu0 0
        %2976 = vmatprep.subr.bf16.mxu0 0
        %2977 = vmatpush1.bf16.msra.mxu0 0
        %2978 = vmatprep.subr.bf16.mxu0 0
        %2979 = vmatpush1.bf16.msra.mxu0 0
        %2980 = vmatprep.mubr.bf16.mxu0 0
        %2981 = vmatmul.mubr.bf16.gmra.mrb[0].mxu0 %v2943
        %v2982 = vpop.f32.mrb[0].mxu0
        %v2983 = vadd.f32 0.0, %v2982
        %v2984 = vpop.f32.mrb[0].mxu0
        %v2985 = vpop.f32.mrb[0].mxu0
        %v2986 = vpop.f32.mrb[0].mxu0
        %2987 = vdwg.mxu0
        %v2988 = vadd.f32 %v2940, %v2983
        %v2989 = vpack.c.bf16 %v2832, %v2832
        %v2991 = vsel %vm1496, %v2989, 0
        %v2994 = vsel %vm1732, %v2189, 0
        %2996 = vmatprep.subr.bf16.mxu0 0
        %2997 = vmatpush1.bf16.msra.mxu0 %v2994
        %2998 = vmatprep.subr.bf16.mxu0 0
        %2999 = vmatpush1.bf16.msra.mxu0 0
        %3000 = vmatprep.subr.bf16.mxu0 0
        %3001 = vmatpush1.bf16.msra.mxu0 0
        %3002 = vmatprep.subr.bf16.mxu0 0
        %3003 = vmatpush1.bf16.msra.mxu0 0
        %3004 = vmatprep.subr.bf16.mxu0 0
        %3005 = vmatpush1.bf16.msra.mxu0 0
        %3006 = vmatprep.subr.bf16.mxu0 0
        %3007 = vmatpush1.bf16.msra.mxu0 0
        %3008 = vmatprep.subr.bf16.mxu0 0
        %3009 = vmatpush1.bf16.msra.mxu0 0
        %3010 = vmatprep.subr.bf16.mxu0 0
        %3011 = vmatpush1.bf16.msra.mxu0 0
        %3012 = vmatprep.subr.bf16.mxu0 0
        %3013 = vmatpush1.bf16.msra.mxu0 0
        %3014 = vmatprep.subr.bf16.mxu0 0
        %3015 = vmatpush1.bf16.msra.mxu0 0
        %3016 = vmatprep.subr.bf16.mxu0 0
        %3017 = vmatpush1.bf16.msra.mxu0 0
        %3018 = vmatprep.subr.bf16.mxu0 0
        %3019 = vmatpush1.bf16.msra.mxu0 0
        %3020 = vmatprep.subr.bf16.mxu0 0
        %3021 = vmatpush1.bf16.msra.mxu0 0
        %3022 = vmatprep.subr.bf16.mxu0 0
        %3023 = vmatpush1.bf16.msra.mxu0 0
        %3024 = vmatprep.subr.bf16.mxu0 0
        %3025 = vmatpush1.bf16.msra.mxu0 0
        %3026 = vmatprep.subr.bf16.mxu0 0
        %3027 = vmatpush1.bf16.msra.mxu0 0
        %3028 = vmatprep.mubr.bf16.mxu0 0
        %3029 = vmatmul.mubr.bf16.gmra.mrb[0].mxu0 %v2991
        %v3030 = vpop.f32.mrb[0].mxu0
        %v3031 = vadd.f32 0.0, %v3030
        %v3032 = vpop.f32.mrb[0].mxu0
        %v3033 = vpop.f32.mrb[0].mxu0
        %v3034 = vpop.f32.mrb[0].mxu0
        %3035 = vdwg.mxu0
        %v3036 = vadd.f32 %v2988, %v3031
        %v3037 = vpack.c.bf16 %v2881, %v2881
        %v3039 = vsel %vm1496, %v3037, 0
        %v3042 = vsel %vm1732, %v2190, 0
        %3044 = vmatprep.subr.bf16.mxu0 0
        %3045 = vmatpush1.bf16.msra.mxu0 %v3042
        %3046 = vmatprep.subr.bf16.mxu0 0
        %3047 = vmatpush1.bf16.msra.mxu0 0
        %3048 = vmatprep.subr.bf16.mxu0 0
        %3049 = vmatpush1.bf16.msra.mxu0 0
        %3050 = vmatprep.subr.bf16.mxu0 0
        %3051 = vmatpush1.bf16.msra.mxu0 0
        %3052 = vmatprep.subr.bf16.mxu0 0
        %3053 = vmatpush1.bf16.msra.mxu0 0
        %3054 = vmatprep.subr.bf16.mxu0 0
        %3055 = vmatpush1.bf16.msra.mxu0 0
        %3056 = vmatprep.subr.bf16.mxu0 0
        %3057 = vmatpush1.bf16.msra.mxu0 0
        %3058 = vmatprep.subr.bf16.mxu0 0
        %3059 = vmatpush1.bf16.msra.mxu0 0
        %3060 = vmatprep.subr.bf16.mxu0 0
        %3061 = vmatpush1.bf16.msra.mxu0 0
        %3062 = vmatprep.subr.bf16.mxu0 0
        %3063 = vmatpush1.bf16.msra.mxu0 0
        %3064 = vmatprep.subr.bf16.mxu0 0
        %3065 = vmatpush1.bf16.msra.mxu0 0
        %3066 = vmatprep.subr.bf16.mxu0 0
        %3067 = vmatpush1.bf16.msra.mxu0 0
        %3068 = vmatprep.subr.bf16.mxu0 0
        %3069 = vmatpush1.bf16.msra.mxu0 0
        %3070 = vmatprep.subr.bf16.mxu0 0
        %3071 = vmatpush1.bf16.msra.mxu0 0
        %3072 = vmatprep.subr.bf16.mxu0 0
        %3073 = vmatpush1.bf16.msra.mxu0 0
        %3074 = vmatprep.subr.bf16.mxu0 0
        %3075 = vmatpush1.bf16.msra.mxu0 0
        %3076 = vmatprep.mubr.bf16.mxu0 0
        %3077 = vmatmul.mubr.bf16.gmra.mrb[0].mxu0 %v3039
        %v3078 = vpop.f32.mrb[0].mxu0
        %v3079 = vadd.f32 0.0, %v3078
        %v3080 = vpop.f32.mrb[0].mxu0
        %v3081 = vpop.f32.mrb[0].mxu0
        %v3082 = vpop.f32.mrb[0].mxu0
        %3083 = vdwg.mxu0
        %v3084 = vadd.f32 %v3036, %v3079
        %v3085 = vsel %vm1288, %v3084, 0.0
        %3086 = vadd.xlane.f32.xlu0 %v3085
        %v3087 = vpop.xlane.xlu0 %3086
        %v3088 = vmul.f32 %v3087, %v2116
        %v3089 = vsub.f32 %v3084, %v3088
        %v3090 = vmul.f32 %v3089, %v3089
        %v3091 = vsel %vm1288, %v3090, 0.0
        %3092 = vadd.xlane.f32.xlu0 %v3091
        %v3093 = vpop.xlane.xlu0 %3092
        %v3094 = vmul.f32 %v3093, %v2116
        %v3096 = vlaneseq
        %v3097 = vshrl.u32 %v3096, 7
        %v3098 = vsub.s32 0, %v3097
        %v3099 = vrot.slane %v2192, %v3098
        %v3101 = vmul.f32 %v3099, %v3089
        %v3102 = vadd.f32 %v3094, 1e-12
        %v3103 = vrsqrt.pop %v3102
        %v3104 = vmul.f32 %v3101, %v3103
        %v3106 = vlaneseq
        %v3107 = vshrl.u32 %v3106, 7
        %v3108 = vsub.s32 0, %v3107
        %v3109 = vrot.slane %v2193, %v3108
        %v3111 = vadd.f32 %v3104, %v3109
        %v3112 = vsel %vm2641, %v2682, 0.0
        %v3113 = vsel %vm2641, %v2683, 0.0
        %v3114 = vadd.f32 %v3112, %v3113
        %v3115 = vsel %vm2641, %v2684, 0.0
        %v3116 = vadd.f32 %v3114, %v3115
        %v3117 = vsel %vm2641, %v2685, 0.0
        %v3118 = vadd.f32 %v3116, %v3117
        %v3119 = vmul.f32 %v3118, %v2148
        %v3120 = vpack.c.bf16 %v3111, %v3111
        %v3121 = vld [vmem:[#allocation29] sm:$0xf]
        %v3122 = vld [vmem:[#allocation29 + $0x4] sm:$0xf]
        %v3123 = vld [vmem:[#allocation29 + $0x8] sm:$0xf]
        %v3124 = vld [vmem:[#allocation29 + $0xc] sm:$0xf]
        %v3125 = vld [vmem:[#allocation31] sm:$0x1]
        %v3127 = vlaneseq
        %v3128 = vshrl.u32 %v3127, 7
        %v3129 = vsub.s32 0, %v3128
        %v3130 = vrot.slane %v3125, %v3129
        %v3136 = vunpack.c.l.b16 %v3121
        %v3137 = vunpack.c.l.b16 %v3122
        %v3138 = vunpack.c.l.b16 %v3123
        %v3139 = vunpack.c.l.b16 %v3124
        %v3140 = vpack.c.b16 %v3137, %v3136
        %v3141 = vpack.c.b16 %v3139, %v3138
        %v3145 = vsel %vm1288, %v3120, 0
        %3147 = vmatprep.subr.bf16.mxu0 0
        %3148 = vmatpush1.bf16.msra.mxu0 %v3140
        %3149 = vmatprep.subr.bf16.mxu0 0
        %3150 = vmatpush1.bf16.msra.mxu0 %v3141
        %3151 = vmatprep.subr.bf16.mxu0 0
        %3152 = vmatpush1.bf16.msra.mxu0 0
        %3153 = vmatprep.subr.bf16.mxu0 0
        %3154 = vmatpush1.bf16.msra.mxu0 0
        %3155 = vmatprep.subr.bf16.mxu0 0
        %3156 = vmatpush1.bf16.msra.mxu0 0
        %3157 = vmatprep.subr.bf16.mxu0 0
        %3158 = vmatpush1.bf16.msra.mxu0 0
        %3159 = vmatprep.subr.bf16.mxu0 0
        %3160 = vmatpush1.bf16.msra.mxu0 0
        %3161 = vmatprep.subr.bf16.mxu0 0
        %3162 = vmatpush1.bf16.msra.mxu0 0
        %3163 = vmatprep.subr.bf16.mxu0 0
        %3164 = vmatpush1.bf16.msra.mxu0 0
        %3165 = vmatprep.subr.bf16.mxu0 0
        %3166 = vmatpush1.bf16.msra.mxu0 0
        %3167 = vmatprep.subr.bf16.mxu0 0
        %3168 = vmatpush1.bf16.msra.mxu0 0
        %3169 = vmatprep.subr.bf16.mxu0 0
        %3170 = vmatpush1.bf16.msra.mxu0 0
        %3171 = vmatprep.subr.bf16.mxu0 0
        %3172 = vmatpush1.bf16.msra.mxu0 0
        %3173 = vmatprep.subr.bf16.mxu0 0
        %3174 = vmatpush1.bf16.msra.mxu0 0
        %3175 = vmatprep.subr.bf16.mxu0 0
        %3176 = vmatpush1.bf16.msra.mxu0 0
        %3177 = vmatprep.subr.bf16.mxu0 0
        %3178 = vmatpush1.bf16.msra.mxu0 0
        %3179 = vmatprep.mubr.bf16.mxu0 0
        %3180 = vmatmul.mubr.bf16.gmra.mrb[0].mxu0 %v3145
        %v3181 = vpop.f32.mrb[0].mxu0
        %v3182 = vadd.f32 %v3130, %v3181
        %v3183 = vpop.f32.mrb[0].mxu0
        %v3184 = vpop.f32.mrb[0].mxu0
        %v3185 = vpop.f32.mrb[0].mxu0
        %3186 = vdwg.mxu0
        %v3187 = vmax.f32 %v3182, 0.0
        %v3188 = vpack.c.bf16 %v3187, %v3187
        %v3189 = vld [vmem:[#allocation32] sm:$0xf]
        %v3190 = vld [vmem:[#allocation32 + $0x4] sm:$0xf]
        %v3191 = vld [vmem:[#allocation32 + $0x8] sm:$0xf]
        %v3192 = vld [vmem:[#allocation32 + $0xc] sm:$0xf]
        %v3193 = vld [vmem:[#allocation32 + $0x10] sm:$0xf]
        %v3194 = vld [vmem:[#allocation32 + $0x14] sm:$0xf]
        %v3195 = vld [vmem:[#allocation32 + $0x18] sm:$0xf]
        %v3196 = vld [vmem:[#allocation32 + $0x1c] sm:$0xf]
        %v3197 = vld [vmem:[#allocation34] sm:$0x1]
        %v3199 = vlaneseq
        %v3200 = vshrl.u32 %v3199, 7
        %v3201 = vsub.s32 0, %v3200
        %v3202 = vrot.slane %v3197, %v3201
        %v3212 = vunpack.c.l.b16 %v3189
        %v3213 = vunpack.c.l.b16 %v3190
        %v3214 = vunpack.c.l.b16 %v3191
        %v3215 = vunpack.c.l.b16 %v3192
        %v3216 = vunpack.c.l.b16 %v3193
        %v3217 = vunpack.c.l.b16 %v3194
        %v3218 = vunpack.c.l.b16 %v3195
        %v3219 = vunpack.c.l.b16 %v3196
        %v3220 = vpack.c.b16 %v3213, %v3212
        %v3221 = vpack.c.b16 %v3215, %v3214
        %v3222 = vpack.c.b16 %v3217, %v3216
        %v3223 = vpack.c.b16 %v3219, %v3218
        %vm3228 = vcmask 523264
        %v3230 = vsel %vm3228, %v3188, 0
        %3232 = vmatprep.subr.bf16.mxu0 0
        %3233 = vmatpush1.bf16.msra.mxu0 %v3220
        %3234 = vmatprep.subr.bf16.mxu0 0
        %3235 = vmatpush1.bf16.msra.mxu0 %v3221
        %3236 = vmatprep.subr.bf16.mxu0 0
        %3237 = vmatpush1.bf16.msra.mxu0 %v3222
        %3238 = vmatprep.subr.bf16.mxu0 0
        %3239 = vmatpush1.bf16.msra.mxu0 %v3223
        %3240 = vmatprep.subr.bf16.mxu0 0
        %3241 = vmatpush1.bf16.msra.mxu0 0
        %3242 = vmatprep.subr.bf16.mxu0 0
        %3243 = vmatpush1.bf16.msra.mxu0 0
        %3244 = vmatprep.subr.bf16.mxu0 0
        %3245 = vmatpush1.bf16.msra.mxu0 0
        %3246 = vmatprep.subr.bf16.mxu0 0
        %3247 = vmatpush1.bf16.msra.mxu0 0
        %3248 = vmatprep.subr.bf16.mxu0 0
        %3249 = vmatpush1.bf16.msra.mxu0 0
        %3250 = vmatprep.subr.bf16.mxu0 0
        %3251 = vmatpush1.bf16.msra.mxu0 0
        %3252 = vmatprep.subr.bf16.mxu0 0
        %3253 = vmatpush1.bf16.msra.mxu0 0
        %3254 = vmatprep.subr.bf16.mxu0 0
        %3255 = vmatpush1.bf16.msra.mxu0 0
        %3256 = vmatprep.subr.bf16.mxu0 0
        %3257 = vmatpush1.bf16.msra.mxu0 0
        %3258 = vmatprep.subr.bf16.mxu0 0
        %3259 = vmatpush1.bf16.msra.mxu0 0
        %3260 = vmatprep.subr.bf16.mxu0 0
        %3261 = vmatpush1.bf16.msra.mxu0 0
        %3262 = vmatprep.subr.bf16.mxu0 0
        %3263 = vmatpush1.bf16.msra.mxu0 0
        %3264 = vmatprep.mubr.bf16.mxu0 0
        %3265 = vmatmul.mubr.bf16.gmra.mrb[0].mxu0 %v3230
        %v3266 = vpop.f32.mrb[0].mxu0
        %v3267 = vadd.f32 %v3202, %v3266
        %v3268 = vpop.f32.mrb[0].mxu0
        %v3269 = vpop.f32.mrb[0].mxu0
        %v3270 = vpop.f32.mrb[0].mxu0
        %3271 = vdwg.mxu0
        %v3272 = vld [vmem:[#allocation35] sm:$0x1]
        %v3273 = vld [vmem:[#allocation37] sm:$0x1]
        %v3274 = vsel %vm1288, %v3267, 0.0
        %3275 = vadd.xlane.f32.xlu0 %v3274
        %v3276 = vpop.xlane.xlu0 %3275
        %v3277 = vmul.f32 %v3276, %v2116
        %v3278 = vsub.f32 %v3267, %v3277
        %v3279 = vmul.f32 %v3278, %v3278
        %v3280 = vsel %vm1288, %v3279, 0.0
        %3281 = vadd.xlane.f32.xlu0 %v3280
        %v3282 = vpop.xlane.xlu0 %3281
        %v3283 = vmul.f32 %v3282, %v2116
        %v3285 = vlaneseq
        %v3286 = vshrl.u32 %v3285, 7
        %v3287 = vsub.s32 0, %v3286
        %v3288 = vrot.slane %v3272, %v3287
        %v3290 = vmul.f32 %v3288, %v3278
        %v3291 = vadd.f32 %v3283, 1e-12
        %v3292 = vrsqrt.pop %v3291
        %v3293 = vmul.f32 %v3290, %v3292
        %v3295 = vlaneseq
        %v3296 = vshrl.u32 %v3295, 7
        %v3297 = vsub.s32 0, %v3296
        %v3298 = vrot.slane %v3273, %v3297
        %v3300 = vadd.f32 %v3293, %v3298
        %3301 = vst.msk [vmem:[%s1199] sm:$0xff] %vm1288, %v3300
        %3302 = vst.msk [vmem:[%s1206] sm:$0xff] %vm1496, %v2149
        %3303 = vst.msk [vmem:[%s1213] sm:$0xff] %vm2641, %v3119
        %s3304 = sand.u32 %s593, 1
        %s3305 = scalar_lea.sflag [#allocation4], %s3304
        %s3306 = sand.u32 %s593, 1
        %s3307 = smul.addr %s3306, 8
        %s3308 = scalar_lea.vmem [#allocation38], %s3307
        %s3309 = sand.u32 %s61, 1
        %s3310 = scalar_lea.sflag [#allocation40], %s3309
        %s3311 = sand.u32 %s621, 1
        %s3312 = smul.addr %s3311, 8
        %s3313 = scalar_lea.vmem [#allocation39], %s3312
        %s3314 = sand.u32 %s61, 1
        %s3315 = scalar_lea.sflag [#allocation40], %s3314
        %s3316 = sand.u32 %s649, 1
        %s3317 = smul.addr %s3316, 8
        %s3318 = scalar_lea.vmem [#allocation41], %s3317
        // Predicated region
        $region205: #{tpu_custom_call.1} parent=111 // pred_check
          %p3319 = pneg %p603
        $region206: #{tpu_custom_call.1} parent=111 // pred_check_branch
          %3321 = sbr.rel (%p3319) target = $region208
        $region207: #{tpu_custom_call.1} parent=111 // pred_region
          %s3323 = ssub.s32 128, 128
          %3324 = vsyncadd %s3305, %s3323
          %s3325 = sadd.s32 %s66, %s65
          %s3326 = smul.addr %s3325, 128
          %s3327 = scalar_lea.hbm %s23, %s3326
          %s3329 = sshll.u32 %s3308, 4
          %s3330 = int_to_ptr.vmem [resolvable:$true] %s3329
          %3332 = dma.vmem_to_hbm [thread:$0]  %s3330, 128, %s3327, %s3305
        $region208: #{tpu_custom_call.1} parent=111 // pred_fallthru
          _
        // Predicated region
        $region209: #{tpu_custom_call.1} parent=111 // pred_check
          %p3333 = pneg %p631
        $region210: #{tpu_custom_call.1} parent=111 // pred_check_branch
          %3335 = sbr.rel (%p3333) target = $region212
        $region211: #{tpu_custom_call.1} parent=111 // pred_region
          %s3337 = ssub.s32 128, 128
          %3338 = vsyncadd %s3310, %s3337
          %s3339 = sadd.s32 %s66, %s65
          %s3340 = smul.addr %s3339, 128
          %s3341 = scalar_lea.hbm %s24, %s3340
          %s3343 = sshll.u32 %s3313, 4
          %s3344 = int_to_ptr.vmem [resolvable:$true] %s3343
          %3346 = dma.vmem_to_hbm [thread:$0]  %s3344, 128, %s3341, %s3310
        $region212: #{tpu_custom_call.1} parent=111 // pred_fallthru
          _
        // Predicated region
        $region213: #{tpu_custom_call.1} parent=111 // pred_check
          %p3347 = pneg %p659
        $region214: #{tpu_custom_call.1} parent=111 // pred_check_branch
          %3349 = sbr.rel (%p3347) target = $region216
        $region215: #{tpu_custom_call.1} parent=111 // pred_region
          %s3351 = ssub.s32 128, 128
          %3352 = vsyncadd %s3315, %s3351
          %s3353 = sadd.s32 %s66, %s65
          %s3354 = smul.addr %s3353, 128
          %s3355 = scalar_lea.hbm %s25, %s3354
          %s3357 = sshll.u32 %s3318, 4
          %s3358 = int_to_ptr.vmem [resolvable:$true] %s3357
          %3360 = dma.vmem_to_hbm [thread:$0]  %s3358, 128, %s3355, %s3315
        $region216: #{tpu_custom_call.1} parent=111 // pred_fallthru
          _
      $region112: #{tpu_custom_call.1} parent=5 // pred_fallthru
        _
      %p3361 = scmp.le.s32.totalorder 2, %s56
      // Predicated region
      $region217: #{tpu_custom_call.1} parent=5 // pred_check
        %p3362 = pneg %p3361
      $region218: #{tpu_custom_call.1} parent=5 // pred_check_branch
        %3364 = sbr.rel (%p3362) target = $region220
      $region219: #{tpu_custom_call.1} parent=5 // pred_region
        %s3365 = ssub.s32 %s56, 2
        // Predicated region
        $region221: #{tpu_custom_call.1} parent=219 // pred_check
          %p3366 = pneg %p609
        $region222: #{tpu_custom_call.1} parent=219 // pred_check_branch
          %3368 = sbr.rel (%p3366) target = $region224
        $region223: #{tpu_custom_call.1} parent=219 // pred_region
          %s3369 = sand.u32 %s594, 1
          %s3370 = scalar_lea.sflag [#allocation4], %s3369
          %s3371 = sand.u32 %s594, 1
          %s3372 = smul.addr %s3371, 8
          %s3373 = scalar_lea.vmem [#allocation38], %s3372
          %3374 = dma.done %s3370, 128
        $region224: #{tpu_custom_call.1} parent=219 // pred_fallthru
          _
        // Predicated region
        $region225: #{tpu_custom_call.1} parent=219 // pred_check
          %p3375 = pneg %p637
        $region226: #{tpu_custom_call.1} parent=219 // pred_check_branch
          %3377 = sbr.rel (%p3375) target = $region228
        $region227: #{tpu_custom_call.1} parent=219 // pred_region
          %s3378 = sand.u32 %s62, 1
          %s3379 = scalar_lea.sflag [#allocation40], %s3378
          %s3380 = sand.u32 %s622, 1
          %s3381 = smul.addr %s3380, 8
          %s3382 = scalar_lea.vmem [#allocation39], %s3381
          %3383 = dma.done %s3379, 128
        $region228: #{tpu_custom_call.1} parent=219 // pred_fallthru
          _
        // Predicated region
        $region229: #{tpu_custom_call.1} parent=219 // pred_check
          %p3384 = pneg %p665
        $region230: #{tpu_custom_call.1} parent=219 // pred_check_branch
          %3386 = sbr.rel (%p3384) target = $region232
        $region231: #{tpu_custom_call.1} parent=219 // pred_region
          %s3387 = sand.u32 %s62, 1
          %s3388 = scalar_lea.sflag [#allocation40], %s3387
          %s3389 = sand.u32 %s650, 1
          %s3390 = smul.addr %s3389, 8
          %s3391 = scalar_lea.vmem [#allocation41], %s3390
          %3392 = dma.done %s3388, 128
        $region232: #{tpu_custom_call.1} parent=219 // pred_fallthru
          _
      $region220: #{tpu_custom_call.1} parent=5 // pred_fallthru
        _
    $region6: #{tpu_custom_call.1} parent=1 // loop_footer
      %s60 = sadd.s32 1, %s56
    $region7: #{tpu_custom_call.1} parent=1 // loop_footer_branch
      %55 = sbr.rel target = $region3
    $region8: #{tpu_custom_call.1} parent=1 // loop_exit
      _
    %3393 = vsyncpa [#allocation3], 1
    %s3394 = scalar_lea.sflag [#allocation3], 1
    %3395 = vsyncpa %s3394, 1
    %3396 = vsyncpa [#allocation6], 1
    %s3397 = scalar_lea.sflag [#allocation6], 1
    %3398 = vsyncpa %s3397, 1
    %3399 = vsyncpa [#allocation9], 1
    %s3400 = scalar_lea.sflag [#allocation9], 1
    %3401 = vsyncpa %s3400, 1
    %3402 = vsyncpa [#allocation12], 1
    %3403 = vsyncpa [#allocation15], 1
    %3404 = vsyncpa [#allocation18], 1
    %3405 = vsyncpa [#allocation21], 1
    %3406 = vsyncpa [#allocation24], 1
    %3407 = vsyncpa [#allocation27], 1
    %3408 = vsyncpa [#allocation30], 1
    %3409 = vsyncpa [#allocation33], 1
    %3410 = vsyncpa [#allocation36], 1
    %3411 = vsyncpa [#allocation4], 1
    %s3412 = scalar_lea.sflag [#allocation4], 1
    %3413 = vsyncpa %s3412, 1
    %3414 = vsyncpa [#allocation40], 1
    %s3415 = scalar_lea.sflag [#allocation40], 1
    %3416 = vsyncpa %s3415, 1

// kernel: tpu_custom_call.1
$region0: #{tpu_custom_call.1}
  #allocation0 [shape = 'u32[]', space=smem, size = 0x4, offset = 0x4, fixed_abs, tag = 'smem constant byte address 0x4 - core index']
  #allocation1 [shape = 'u32[144,128]{1,0:T(1,128)}', space=vmem, size = 0x12000, scoped, tag = 'internal scratch']
  %s0 = inlined_call_operand.hbm [shape: f32[2,8,32], index: 0, kind: input, shape index: {}]
  %s1 = inlined_call_operand.hbm [shape: bf16[2,4,8,8], index: 1, kind: input, shape index: {}]
  %s2 = inlined_call_operand.hbm [shape: bf16[2,4,8,8], index: 2, kind: input, shape index: {}]
  %s3 = inlined_call_operand.hbm [shape: bf16[2,4,16,8], index: 3, kind: input, shape index: {}]
  %s4 = inlined_call_operand.hbm [shape: bf16[2,4,16,8], index: 4, kind: input, shape index: {}]
  %s5 = inlined_call_operand.hbm [shape: bf16[4,32,8], index: 5, kind: input, shape index: {}]
  %s6 = inlined_call_operand.hbm [shape: f32[4,1,8], index: 6, kind: input, shape index: {}]
  %s7 = inlined_call_operand.hbm [shape: bf16[4,8,32], index: 7, kind: input, shape index: {}]
  %s8 = inlined_call_operand.hbm [shape: f32[1,32], index: 8, kind: input, shape index: {}]
  %s9 = inlined_call_operand.hbm [shape: f32[1,32], index: 9, kind: input, shape index: {}]
  %s10 = inlined_call_operand.hbm [shape: f32[1,32], index: 10, kind: input, shape index: {}]
  %s11 = inlined_call_operand.hbm [shape: bf16[4,32,8], index: 11, kind: input, shape index: {}]
  %s12 = inlined_call_operand.hbm [shape: f32[4,1,8], index: 12, kind: input, shape index: {}]
  %s13 = inlined_call_operand.hbm [shape: bf16[4,8,32], index: 13, kind: input, shape index: {}]
  %s14 = inlined_call_operand.hbm [shape: f32[1,32], index: 14, kind: input, shape index: {}]
  %s15 = inlined_call_operand.hbm [shape: f32[1,32], index: 15, kind: input, shape index: {}]
  %s16 = inlined_call_operand.hbm [shape: f32[1,32], index: 16, kind: input, shape index: {}]
  %s17 = inlined_call_operand.hbm [shape: bf16[32,64], index: 17, kind: input, shape index: {}]
  %s18 = inlined_call_operand.hbm [shape: f32[1,64], index: 18, kind: input, shape index: {}]
  %s19 = inlined_call_operand.hbm [shape: bf16[64,32], index: 19, kind: input, shape index: {}]
  %s20 = inlined_call_operand.hbm [shape: f32[1,32], index: 20, kind: input, shape index: {}]
  %s21 = inlined_call_operand.hbm [shape: f32[1,32], index: 21, kind: input, shape index: {}]
  %s22 = inlined_call_operand.hbm [shape: f32[1,32], index: 22, kind: input, shape index: {}]
  %s23 = inlined_call_operand.hbm [shape: f32[2,8,32], index: 23, kind: output, shape index: {0}]
  %s24 = inlined_call_operand.hbm [shape: f32[2,8,8], index: 24, kind: output, shape index: {1}]
  %s25 = inlined_call_operand.hbm [shape: f32[2,8,16], index: 25, kind: output, shape index: {2}]
  %26 = xla_tuple %s23, %s24, %s25
  %s27 = sld [smem:[#allocation0]]
  $region233: #{tpu_custom_call.1} parent=0
    _
  %s29 = ssub.s32 1, %s27
  %s30 = scalar_select 0, %s29, %s27
  $region1: #{tpu_custom_call.1} parent=0
    #allocation2 [shape = 'u8[8192]{0}', space=vmem, size = 0x2000, scoped, tag = 'input window, operand 0']
    #allocation3 [shape = 's32[2]{0}', space=sflag, size = 0x8, scoped, tag = 'scoped memory for tpu_custom_call.1']
    #allocation4 [shape = 's32[2]{0}', space=sflag, size = 0x8, scoped, tag = 'scoped memory for tpu_custom_call.1']
    #allocation5 [shape = 'u8[16384]{0}', space=vmem, size = 0x4000, scoped, tag = 'input window, operand 1']
    #allocation6 [shape = 's32[2]{0}', space=sflag, size = 0x8, scoped, tag = 'scoped memory for tpu_custom_call.1']
    #allocation7 [shape = 'u8[16384]{0}', space=vmem, size = 0x4000, scoped, tag = 'input window, operand 2']
    #allocation8 [shape = 'u8[32768]{0}', space=vmem, size = 0x8000, scoped, tag = 'input window, operand 3']
    #allocation9 [shape = 's32[2]{0}', space=sflag, size = 0x8, scoped, tag = 'scoped memory for tpu_custom_call.1']
    #allocation10 [shape = 'u8[32768]{0}', space=vmem, size = 0x8000, scoped, tag = 'input window, operand 4']
    #allocation11 [shape = 'u8[32768]{0}', space=vmem, size = 0x8000, scoped, tag = 'input window, operand 5, single buffered']
    #allocation12 [shape = 's32[1]{0}', space=sflag, size = 0x4, scoped, tag = 'scoped memory for tpu_custom_call.1']
    #allocation13 [shape = 'u8[2048]{0}', space=vmem, size = 0x800, scoped, tag = 'input window, operand 6, single buffered']
    #allocation14 [shape = 'u8[8192]{0}', space=vmem, size = 0x2000, scoped, tag = 'input window, operand 7, single buffered']
    #allocation15 [shape = 's32[1]{0}', space=sflag, size = 0x4, scoped, tag = 'scoped memory for tpu_custom_call.1']
    #allocation16 [shape = 'u8[512]{0}', space=vmem, size = 0x400, scoped, tag = 'input window, operand 8, single buffered']
    #allocation17 [shape = 'u8[512]{0}', space=vmem, size = 0x400, scoped, tag = 'input window, operand 9, single buffered']
    #allocation18 [shape = 's32[1]{0}', space=sflag, size = 0x4, scoped, tag = 'scoped memory for tpu_custom_call.1']
    #allocation19 [shape = 'u8[512]{0}', space=vmem, size = 0x400, scoped, tag = 'input window, operand 10, single buffered']
    #allocation20 [shape = 'u8[32768]{0}', space=vmem, size = 0x8000, scoped, tag = 'input window, operand 11, single buffered']
    #allocation21 [shape = 's32[1]{0}', space=sflag, size = 0x4, scoped, tag = 'scoped memory for tpu_custom_call.1']
    #allocation22 [shape = 'u8[2048]{0}', space=vmem, size = 0x800, scoped, tag = 'input window, operand 12, single buffered']
    #allocation23 [shape = 'u8[8192]{0}', space=vmem, size = 0x2000, scoped, tag = 'input window, operand 13, single buffered']
    #allocation24 [shape = 's32[1]{0}', space=sflag, size = 0x4, scoped, tag = 'scoped memory for tpu_custom_call.1']
    #allocation25 [shape = 'u8[512]{0}', space=vmem, size = 0x400, scoped, tag = 'input window, operand 14, single buffered']
    #allocation26 [shape = 'u8[512]{0}', space=vmem, size = 0x400, scoped, tag = 'input window, operand 15, single buffered']
    #allocation27 [shape = 's32[1]{0}', space=sflag, size = 0x4, scoped, tag = 'scoped memory for tpu_custom_call.1']
    #allocation28 [shape = 'u8[512]{0}', space=vmem, size = 0x400, scoped, tag = 'input window, operand 16, single buffered']
    #allocation29 [shape = 'u8[8192]{0}', space=vmem, size = 0x2000, scoped, tag = 'input window, operand 17, single buffered']
    #allocation30 [shape = 's32[1]{0}', space=sflag, size = 0x4, scoped, tag = 'scoped memory for tpu_custom_call.1']
    #allocation31 [shape = 'u8[512]{0}', space=vmem, size = 0x400, scoped, tag = 'input window, operand 18, single buffered']
    #allocation32 [shape = 'u8[16384]{0}', space=vmem, size = 0x4000, scoped, tag = 'input window, operand 19, single buffered']
    #allocation33 [shape = 's32[1]{0}', space=sflag, size = 0x4, scoped, tag = 'scoped memory for tpu_custom_call.1']
    #allocation34 [shape = 'u8[512]{0}', space=vmem, size = 0x400, scoped, tag = 'input window, operand 20, single buffered']
    #allocation35 [shape = 'u8[512]{0}', space=vmem, size = 0x400, scoped, tag = 'input window, operand 21, single buffered']
    #allocation36 [shape = 's32[1]{0}', space=sflag, size = 0x4, scoped, tag = 'scoped memory for tpu_custom_call.1']
    #allocation37 [shape = 'u8[512]{0}', space=vmem, size = 0x400, scoped, tag = 'input window, operand 22, single buffered']
    #allocation38 [shape = 'u8[8192]{0}', space=vmem, size = 0x2000, scoped, tag = 'output window, operand 0']
    #allocation39 [shape = 'u8[8192]{0}', space=vmem, size = 0x2000, scoped, tag = 'output window, operand 1']
    #allocation40 [shape = 's32[2]{0}', space=sflag, size = 0x8, scoped, tag = 'scoped memory for tpu_custom_call.1']
    #allocation41 [shape = 'u8[8192]{0}', space=vmem, size = 0x2000, scoped, tag = 'output window, operand 2']
    %31 = vsyncpa [#allocation3], 0
    %s32 = scalar_lea.sflag [#allocation3], 1
    %33 = vsyncpa %s32, 0
    %34 = vsyncpa [#allocation6], 0
    %s35 = scalar_lea.sflag [#allocation6], 1
    %36 = vsyncpa %s35, 0
    %37 = vsyncpa [#allocation9], 0
    %s38 = scalar_lea.sflag [#allocation9], 1
    %39 = vsyncpa %s38, 0
    %40 = vsyncpa [#allocation12], 0
    %41 = vsyncpa [#allocation15], 0
    %42 = vsyncpa [#allocation18], 0
    %43 = vsyncpa [#allocation21], 0
    %44 = vsyncpa [#allocation24], 0
    %45 = vsyncpa [#allocation27], 0
    %46 = vsyncpa [#allocation30], 0
    %47 = vsyncpa [#allocation33], 0
    %48 = vsyncpa [#allocation36], 0
    %49 = vsyncpa [#allocation4], 0
    %s50 = scalar_lea.sflag [#allocation4], 1
    %51 = vsyncpa %s50, 0
    %52 = vsyncpa [#allocation40], 0
    %s53 = scalar_lea.sflag [#allocation40], 1
    %54 = vsyncpa %s53, 0
    loop: start=0, step=1, limit=4
    $region2: #{tpu_custom_call.1} parent=1 // loop_pre_header
      _
    $region3: #{tpu_custom_call.1} parent=1 // loop_header
      %s56 = sphi 0, %s60
      %p57 = scmp.ge.s32.totalorder %s56, 4
      %s63 = sphi 0, %s75
      %s64 = sphi 0, %s71
      %s65 = sphi 0, %s63
      %s66 = sphi 0, %s64
      %s67 = sphi 0, %s65
      %s68 = sphi 0, %s66
      %s80 = sphi 0, %s82
      %s83 = sphi 0, %s80
      %s84 = sphi 0, %s83
      %s100 = sphi 0, %s84
      %s106 = sphi 0, %s108
      %s109 = sphi 0, %s106
      %s110 = sphi 0, %s109
      %s126 = sphi 0, %s110
      %s132 = sphi 0, %s134
      %s135 = sphi 0, %s132
      %s136 = sphi 0, %s135
      %s152 = sphi 0, %s136
      %s158 = sphi 0, %s160
      %s161 = sphi 0, %s158
      %s162 = sphi 0, %s161
      %s178 = sphi 0, %s162
      %s184 = sphi 0, %s186
      %s187 = sphi 0, %s184
      %s188 = sphi 0, %s187
      %s204 = sphi 0, %s188
      %s208 = sphi 0, %s208
      %s210 = sphi 0, %s208
      %s211 = sphi 0, %s210
      %s225 = sphi 0, %s211
      %s229 = sphi 0, %s229
      %s231 = sphi 0, %s229
      %s232 = sphi 0, %s231
      %s246 = sphi 0, %s232
      %s250 = sphi 0, %s250
      %s252 = sphi 0, %s250
      %s253 = sphi 0, %s252
      %s267 = sphi 0, %s253
      %s271 = sphi 0, %s271
      %s273 = sphi 0, %s271
      %s274 = sphi 0, %s273
      %s288 = sphi 0, %s274
      %s292 = sphi 0, %s292
      %s294 = sphi 0, %s292
      %s295 = sphi 0, %s294
      %s309 = sphi 0, %s295
      %s313 = sphi 0, %s313
      %s315 = sphi 0, %s313
      %s316 = sphi 0, %s315
      %s330 = sphi 0, %s316
      %s334 = sphi 0, %s334
      %s336 = sphi 0, %s334
      %s337 = sphi 0, %s336
      %s351 = sphi 0, %s337
      %s355 = sphi 0, %s355
      %s357 = sphi 0, %s355
      %s358 = sphi 0, %s357
      %s372 = sphi 0, %s358
      %s376 = sphi 0, %s376
      %s378 = sphi 0, %s376
      %s379 = sphi 0, %s378
      %s393 = sphi 0, %s379
      %s397 = sphi 0, %s397
      %s399 = sphi 0, %s397
      %s400 = sphi 0, %s399
      %s414 = sphi 0, %s400
      %s418 = sphi 0, %s418
      %s420 = sphi 0, %s418
      %s421 = sphi 0, %s420
      %s435 = sphi 0, %s421
      %s439 = sphi 0, %s439
      %s441 = sphi 0, %s439
      %s442 = sphi 0, %s441
      %s456 = sphi 0, %s442
      %s460 = sphi 0, %s460
      %s462 = sphi 0, %s460
      %s463 = sphi 0, %s462
      %s477 = sphi 0, %s463
      %s481 = sphi 0, %s481
      %s483 = sphi 0, %s481
      %s484 = sphi 0, %s483
      %s498 = sphi 0, %s484
      %s502 = sphi 0, %s502
      %s504 = sphi 0, %s502
      %s505 = sphi 0, %s504
      %s519 = sphi 0, %s505
      %s523 = sphi 0, %s523
      %s525 = sphi 0, %s523
      %s526 = sphi 0, %s525
      %s540 = sphi 0, %s526
      %s544 = sphi 0, %s544
      %s546 = sphi 0, %s544
      %s547 = sphi 0, %s546
      %s561 = sphi 0, %s547
      %s565 = sphi 0, %s565
      %s567 = sphi 0, %s565
      %s568 = sphi 0, %s567
      %s582 = sphi 0, %s568
      %s590 = sphi 0, %s592
      %s593 = sphi 0, %s590
      %s594 = sphi 0, %s593
      %s610 = sphi 0, %s594
      %s618 = sphi 0, %s620
      %s621 = sphi 0, %s618
      %s622 = sphi 0, %s621
      %s638 = sphi 0, %s622
      %s646 = sphi 0, %s648
      %s649 = sphi 0, %s646
      %s650 = sphi 0, %s649
      %s666 = sphi 0, %s650
    $region4: #{tpu_custom_call.1} parent=1 // loop_header_branch
      %59 = sbr.rel (%p57) target = $region8
    $region5: #{tpu_custom_call.1} parent=1 // loop_body
      %s61 = ssub.s32 %s56, 1
      %s62 = ssub.s32 %s56, 2
      %s69 = sadd.s32 1, %s64
      %p70 = scmp.ge.s32.totalorder %s69, 1
      %s71 = scalar_select %p70, 0, %s69
      %s72 = sadd.s32 1, %s63
      %s73 = scalar_select %p70, %s72, %s63
      %p74 = scmp.ge.s32.totalorder %s73, 2
      %s75 = scalar_select %p74, 0, %s73
      %s76 = ssub.s32 %s63, %s75
      %s77 = ssub.s32 %s64, %s71
      %s78 = sor.u32 %s76, %s77
      %p79 = scmp.eq.s32.totalorder %s78, 0
      %s81 = sadd.s32 %s80, 1
      %s82 = scalar_select %p79, %s80, %s81
      %p85 = pneg %p79
      %p86 = scmp.eq.s32.totalorder %s56, 1
      %p87 = por %p85, %p86
      %p88 = scmp.ne.s32.totalorder %s80, %s83
      %p89 = scmp.eq.s32.totalorder %s56, 0
      %p90 = por %p88, %p89
      %p91 = scmp.ne.s32.totalorder %s80, %s83
      %p92 = scmp.eq.s32.totalorder %s61, 1
      %p93 = por %p91, %p92
      %p94 = scmp.ne.s32.totalorder %s83, %s84
      %p95 = scmp.eq.s32.totalorder %s61, 0
      %p96 = por %p94, %p95
      %p97 = scmp.ne.s32.totalorder %s83, %s84
      %p98 = scmp.eq.s32.totalorder %s62, 1
      %p99 = por %p97, %p98
      %p101 = scmp.ne.s32.totalorder %s84, %s100
      %p102 = scmp.eq.s32.totalorder %s62, 0
      %p103 = por %p101, %p102
      %s104 = ssub.s32 %s63, %s75
      %p105 = scmp.eq.s32.totalorder %s104, 0
      %s107 = sadd.s32 %s106, 1
      %s108 = scalar_select %p105, %s106, %s107
      %p111 = pneg %p105
      %p112 = scmp.eq.s32.totalorder %s56, 1
      %p113 = por %p111, %p112
      %p114 = scmp.ne.s32.totalorder %s106, %s109
      %p115 = scmp.eq.s32.totalorder %s56, 0
      %p116 = por %p114, %p115
      %p117 = scmp.ne.s32.totalorder %s106, %s109
      %p118 = scmp.eq.s32.totalorder %s61, 1
      %p119 = por %p117, %p118
      %p120 = scmp.ne.s32.totalorder %s109, %s110
      %p121 = scmp.eq.s32.totalorder %s61, 0
      %p122 = por %p120, %p121
      %p123 = scmp.ne.s32.totalorder %s109, %s110
      %p124 = scmp.eq.s32.totalorder %s62, 1
      %p125 = por %p123, %p124
      %p127 = scmp.ne.s32.totalorder %s110, %s126
      %p128 = scmp.eq.s32.totalorder %s62, 0
      %p129 = por %p127, %p128
      %s130 = ssub.s32 %s63, %s75
      %p131 = scmp.eq.s32.totalorder %s130, 0
      %s133 = sadd.s32 %s132, 1
      %s134 = scalar_select %p131, %s132, %s133
      %p137 = pneg %p131
      %p138 = scmp.eq.s32.totalorder %s56, 1
      %p139 = por %p137, %p138
      %p140 = scmp.ne.s32.totalorder %s132, %s135
      %p141 = scmp.eq.s32.totalorder %s56, 0
      %p142 = por %p140, %p141
      %p143 = scmp.ne.s32.totalorder %s132, %s135
      %p144 = scmp.eq.s32.totalorder %s61, 1
      %p145 = por %p143, %p144
      %p146 = scmp.ne.s32.totalorder %s135, %s136
      %p147 = scmp.eq.s32.totalorder %s61, 0
      %p148 = por %p146, %p147
      %p149 = scmp.ne.s32.totalorder %s135, %s136
      %p150 = scmp.eq.s32.totalorder %s62, 1
      %p151 = por %p149, %p150
      %p153 = scmp.ne.s32.totalorder %s136, %s152
      %p154 = scmp.eq.s32.totalorder %s62, 0
      %p155 = por %p153, %p154
      %s156 = ssub.s32 %s63, %s75
      %p157 = scmp.eq.s32.totalorder %s156, 0
      %s159 = sadd.s32 %s158, 1
      %s160 = scalar_select %p157, %s158, %s159
      %p163 = pneg %p157
      %p164 = scmp.eq.s32.totalorder %s56, 1
      %p165 = por %p163, %p164
      %p166 = scmp.ne.s32.totalorder %s158, %s161
      %p167 = scmp.eq.s32.totalorder %s56, 0
      %p168 = por %p166, %p167
      %p169 = scmp.ne.s32.totalorder %s158, %s161
      %p170 = scmp.eq.s32.totalorder %s61, 1
      %p171 = por %p169, %p170
      %p172 = scmp.ne.s32.totalorder %s161, %s162
      %p173 = scmp.eq.s32.totalorder %s61, 0
      %p174 = por %p172, %p173
      %p175 = scmp.ne.s32.totalorder %s161, %s162
      %p176 = scmp.eq.s32.totalorder %s62, 1
      %p177 = por %p175, %p176
      %p179 = scmp.ne.s32.totalorder %s162, %s178
      %p180 = scmp.eq.s32.totalorder %s62, 0
      %p181 = por %p179, %p180
      %s182 = ssub.s32 %s63, %s75
      %p183 = scmp.eq.s32.totalorder %s182, 0
      %s185 = sadd.s32 %s184, 1
      %s186 = scalar_select %p183, %s184, %s185
      %p189 = pneg %p183
      %p190 = scmp.eq.s32.totalorder %s56, 1
      %p191 = por %p189, %p190
      %p192 = scmp.ne.s32.totalorder %s184, %s187
      %p193 = scmp.eq.s32.totalorder %s56, 0
      %p194 = por %p192, %p193
      %p195 = scmp.ne.s32.totalorder %s184, %s187
      %p196 = scmp.eq.s32.totalorder %s61, 1
      %p197 = por %p195, %p196
      %p198 = scmp.ne.s32.totalorder %s187, %s188
      %p199 = scmp.eq.s32.totalorder %s61, 0
      %p200 = por %p198, %p199
      %p201 = scmp.ne.s32.totalorder %s187, %s188
      %p202 = scmp.eq.s32.totalorder %s62, 1
      %p203 = por %p201, %p202
      %p205 = scmp.ne.s32.totalorder %s188, %s204
      %p206 = scmp.eq.s32.totalorder %s62, 0
      %p207 = por %p205, %p206
      %s209 = sadd.s32 %s208, 1
      %p212 = scmp.eq.s32.totalorder %s56, 1
      %p213 = scmp.ne.s32.totalorder %s208, %s210
      %p214 = scmp.eq.s32.totalorder %s56, 0
      %p215 = por %p213, %p214
      %p216 = scmp.ne.s32.totalorder %s208, %s210
      %p217 = scmp.eq.s32.totalorder %s61, 1
      %p218 = por %p216, %p217
      %p219 = scmp.ne.s32.totalorder %s210, %s211
      %p220 = scmp.eq.s32.totalorder %s61, 0
      %p221 = por %p219, %p220
      %p222 = scmp.ne.s32.totalorder %s210, %s211
      %p223 = scmp.eq.s32.totalorder %s62, 1
      %p224 = por %p222, %p223
      %p226 = scmp.ne.s32.totalorder %s211, %s225
      %p227 = scmp.eq.s32.totalorder %s62, 0
      %p228 = por %p226, %p227
      %s230 = sadd.s32 %s229, 1
      %p233 = scmp.eq.s32.totalorder %s56, 1
      %p234 = scmp.ne.s32.totalorder %s229, %s231
      %p235 = scmp.eq.s32.totalorder %s56, 0
      %p236 = por %p234, %p235
      %p237 = scmp.ne.s32.totalorder %s229, %s231
      %p238 = scmp.eq.s32.totalorder %s61, 1
      %p239 = por %p237, %p238
      %p240 = scmp.ne.s32.totalorder %s231, %s232
      %p241 = scmp.eq.s32.totalorder %s61, 0
      %p242 = por %p240, %p241
      %p243 = scmp.ne.s32.totalorder %s231, %s232
      %p244 = scmp.eq.s32.totalorder %s62, 1
      %p245 = por %p243, %p244
      %p247 = scmp.ne.s32.totalorder %s232, %s246
      %p248 = scmp.eq.s32.totalorder %s62, 0
      %p249 = por %p247, %p248
      %s251 = sadd.s32 %s250, 1
      %p254 = scmp.eq.s32.totalorder %s56, 1
      %p255 = scmp.ne.s32.totalorder %s250, %s252
      %p256 = scmp.eq.s32.totalorder %s56, 0
      %p257 = por %p255, %p256
      %p258 = scmp.ne.s32.totalorder %s250, %s252
      %p259 = scmp.eq.s32.totalorder %s61, 1
      %p260 = por %p258, %p259
      %p261 = scmp.ne.s32.totalorder %s252, %s253
      %p262 = scmp.eq.s32.totalorder %s61, 0
      %p263 = por %p261, %p262
      %p264 = scmp.ne.s32.totalorder %s252, %s253
      %p265 = scmp.eq.s32.totalorder %s62, 1
      %p266 = por %p264, %p265
      %p268 = scmp.ne.s32.totalorder %s253, %s267
      %p269 = scmp.eq.s32.totalorder %s62, 0
      %p270 = por %p268, %p269
      %s272 = sadd.s32 %s271, 1
      %p275 = scmp.eq.s32.totalorder %s56, 1
      %p276 = scmp.ne.s32.totalorder %s271, %s273
      %p277 = scmp.eq.s32.totalorder %s56, 0
      %p278 = por %p276, %p277
      %p279 = scmp.ne.s32.totalorder %s271, %s273
      %p280 = scmp.eq.s32.totalorder %s61, 1
      %p281 = por %p279, %p280
      %p282 = scmp.ne.s32.totalorder %s273, %s274
      %p283 = scmp.eq.s32.totalorder %s61, 0
      %p284 = por %p282, %p283
      %p285 = scmp.ne.s32.totalorder %s273, %s274
      %p286 = scmp.eq.s32.totalorder %s62, 1
      %p287 = por %p285, %p286
      %p289 = scmp.ne.s32.totalorder %s274, %s288
      %p290 = scmp.eq.s32.totalorder %s62, 0
      %p291 = por %p289, %p290
      %s293 = sadd.s32 %s292, 1
      %p296 = scmp.eq.s32.totalorder %s56, 1
      %p297 = scmp.ne.s32.totalorder %s292, %s294
      %p298 = scmp.eq.s32.totalorder %s56, 0
      %p299 = por %p297, %p298
      %p300 = scmp.ne.s32.totalorder %s292, %s294
      %p301 = scmp.eq.s32.totalorder %s61, 1
      %p302 = por %p300, %p301
      %p303 = scmp.ne.s32.totalorder %s294, %s295
      %p304 = scmp.eq.s32.totalorder %s61, 0
      %p305 = por %p303, %p304
      %p306 = scmp.ne.s32.totalorder %s294, %s295
      %p307 = scmp.eq.s32.totalorder %s62, 1
      %p308 = por %p306, %p307
      %p310 = scmp.ne.s32.totalorder %s295, %s309
      %p311 = scmp.eq.s32.totalorder %s62, 0
      %p312 = por %p310, %p311
      %s314 = sadd.s32 %s313, 1
      %p317 = scmp.eq.s32.totalorder %s56, 1
      %p318 = scmp.ne.s32.totalorder %s313, %s315
      %p319 = scmp.eq.s32.totalorder %s56, 0
      %p320 = por %p318, %p319
      %p321 = scmp.ne.s32.totalorder %s313, %s315
      %p322 = scmp.eq.s32.totalorder %s61, 1
      %p323 = por %p321, %p322
      %p324 = scmp.ne.s32.totalorder %s315, %s316
      %p325 = scmp.eq.s32.totalorder %s61, 0
      %p326 = por %p324, %p325
      %p327 = scmp.ne.s32.totalorder %s315, %s316
      %p328 = scmp.eq.s32.totalorder %s62, 1
      %p329 = por %p327, %p328
      %p331 = scmp.ne.s32.totalorder %s316, %s330
      %p332 = scmp.eq.s32.totalorder %s62, 0
      %p333 = por %p331, %p332
      %s335 = sadd.s32 %s334, 1
      %p338 = scmp.eq.s32.totalorder %s56, 1
      %p339 = scmp.ne.s32.totalorder %s334, %s336
      %p340 = scmp.eq.s32.totalorder %s56, 0
      %p341 = por %p339, %p340
      %p342 = scmp.ne.s32.totalorder %s334, %s336
      %p343 = scmp.eq.s32.totalorder %s61, 1
      %p344 = por %p342, %p343
      %p345 = scmp.ne.s32.totalorder %s336, %s337
      %p346 = scmp.eq.s32.totalorder %s61, 0
      %p347 = por %p345, %p346
      %p348 = scmp.ne.s32.totalorder %s336, %s337
      %p349 = scmp.eq.s32.totalorder %s62, 1
      %p350 = por %p348, %p349
      %p352 = scmp.ne.s32.totalorder %s337, %s351
      %p353 = scmp.eq.s32.totalorder %s62, 0
      %p354 = por %p352, %p353
      %s356 = sadd.s32 %s355, 1
      %p359 = scmp.eq.s32.totalorder %s56, 1
      %p360 = scmp.ne.s32.totalorder %s355, %s357
      %p361 = scmp.eq.s32.totalorder %s56, 0
      %p362 = por %p360, %p361
      %p363 = scmp.ne.s32.totalorder %s355, %s357
      %p364 = scmp.eq.s32.totalorder %s61, 1
      %p365 = por %p363, %p364
      %p366 = scmp.ne.s32.totalorder %s357, %s358
      %p367 = scmp.eq.s32.totalorder %s61, 0
      %p368 = por %p366, %p367
      %p369 = scmp.ne.s32.totalorder %s357, %s358
      %p370 = scmp.eq.s32.totalorder %s62, 1
      %p371 = por %p369, %p370
      %p373 = scmp.ne.s32.totalorder %s358, %s372
      %p374 = scmp.eq.s32.totalorder %s62, 0
      %p375 = por %p373, %p374
      %s377 = sadd.s32 %s376, 1
      %p380 = scmp.eq.s32.totalorder %s56, 1
      %p381 = scmp.ne.s32.totalorder %s376, %s378
      %p382 = scmp.eq.s32.totalorder %s56, 0
      %p383 = por %p381, %p382
      %p384 = scmp.ne.s32.totalorder %s376, %s378
      %p385 = scmp.eq.s32.totalorder %s61, 1
      %p386 = por %p384, %p385
      %p387 = scmp.ne.s32.totalorder %s378, %s379
      %p388 = scmp.eq.s32.totalorder %s61, 0
      %p389 = por %p387, %p388
      %p390 = scmp.ne.s32.totalorder %s378, %s379
      %p391 = scmp.eq.s32.totalorder %s62, 1
      %p392 = por %p390, %p391
      %p394 = scmp.ne.s32.totalorder %s379, %s393
      %p395 = scmp.eq.s32.totalorder %s62, 0
      %p396 = por %p394, %p395
      %s398 = sadd.s32 %s397, 1
      %p401 = scmp.eq.s32.totalorder %s56, 1
      %p402 = scmp.ne.s32.totalorder %s397, %s399
      %p403 = scmp.eq.s32.totalorder %s56, 0
      %p404 = por %p402, %p403
      %p405 = scmp.ne.s32.totalorder %s397, %s399
      %p406 = scmp.eq.s32.totalorder %s61, 1
      %p407 = por %p405, %p406
      %p408 = scmp.ne.s32.totalorder %s399, %s400
      %p409 = scmp.eq.s32.totalorder %s61, 0
      %p410 = por %p408, %p409
      %p411 = scmp.ne.s32.totalorder %s399, %s400
      %p412 = scmp.eq.s32.totalorder %s62, 1
      %p413 = por %p411, %p412
      %p415 = scmp.ne.s32.totalorder %s400, %s414
      %p416 = scmp.eq.s32.totalorder %s62, 0
      %p417 = por %p415, %p416
      %s419 = sadd.s32 %s418, 1
      %p422 = scmp.eq.s32.totalorder %s56, 1
      %p423 = scmp.ne.s32.totalorder %s418, %s420
      %p424 = scmp.eq.s32.totalorder %s56, 0
      %p425 = por %p423, %p424
      %p426 = scmp.ne.s32.totalorder %s418, %s420
      %p427 = scmp.eq.s32.totalorder %s61, 1
      %p428 = por %p426, %p427
      %p429 = scmp.ne.s32.totalorder %s420, %s421
      %p430 = scmp.eq.s32.totalorder %s61, 0
      %p431 = por %p429, %p430
      %p432 = scmp.ne.s32.totalorder %s420, %s421
      %p433 = scmp.eq.s32.totalorder %s62, 1
      %p434 = por %p432, %p433
      %p436 = scmp.ne.s32.totalorder %s421, %s435
      %p437 = scmp.eq.s32.totalorder %s62, 0
      %p438 = por %p436, %p437
      %s440 = sadd.s32 %s439, 1
      %p443 = scmp.eq.s32.totalorder %s56, 1
      %p444 = scmp.ne.s32.totalorder %s439, %s441
      %p445 = scmp.eq.s32.totalorder %s56, 0
      %p446 = por %p444, %p445
      %p447 = scmp.ne.s32.totalorder %s439, %s441
      %p448 = scmp.eq.s32.totalorder %s61, 1
      %p449 = por %p447, %p448
      %p450 = scmp.ne.s32.totalorder %s441, %s442
      %p451 = scmp.eq.s32.totalorder %s61, 0
      %p452 = por %p450, %p451
      %p453 = scmp.ne.s32.totalorder %s441, %s442
      %p454 = scmp.eq.s32.totalorder %s62, 1
      %p455 = por %p453, %p454
      %p457 = scmp.ne.s32.totalorder %s442, %s456
      %p458 = scmp.eq.s32.totalorder %s62, 0
      %p459 = por %p457, %p458
      %s461 = sadd.s32 %s460, 1
      %p464 = scmp.eq.s32.totalorder %s56, 1
      %p465 = scmp.ne.s32.totalorder %s460, %s462
      %p466 = scmp.eq.s32.totalorder %s56, 0
      %p467 = por %p465, %p466
      %p468 = scmp.ne.s32.totalorder %s460, %s462
      %p469 = scmp.eq.s32.totalorder %s61, 1
      %p470 = por %p468, %p469
      %p471 = scmp.ne.s32.totalorder %s462, %s463
      %p472 = scmp.eq.s32.totalorder %s61, 0
      %p473 = por %p471, %p472
      %p474 = scmp.ne.s32.totalorder %s462, %s463
      %p475 = scmp.eq.s32.totalorder %s62, 1
      %p476 = por %p474, %p475
      %p478 = scmp.ne.s32.totalorder %s463, %s477
      %p479 = scmp.eq.s32.totalorder %s62, 0
      %p480 = por %p478, %p479
      %s482 = sadd.s32 %s481, 1
      %p485 = scmp.eq.s32.totalorder %s56, 1
      %p486 = scmp.ne.s32.totalorder %s481, %s483
      %p487 = scmp.eq.s32.totalorder %s56, 0
      %p488 = por %p486, %p487
      %p489 = scmp.ne.s32.totalorder %s481, %s483
      %p490 = scmp.eq.s32.totalorder %s61, 1
      %p491 = por %p489, %p490
      %p492 = scmp.ne.s32.totalorder %s483, %s484
      %p493 = scmp.eq.s32.totalorder %s61, 0
      %p494 = por %p492, %p493
      %p495 = scmp.ne.s32.totalorder %s483, %s484
      %p496 = scmp.eq.s32.totalorder %s62, 1
      %p497 = por %p495, %p496
      %p499 = scmp.ne.s32.totalorder %s484, %s498
      %p500 = scmp.eq.s32.totalorder %s62, 0
      %p501 = por %p499, %p500
      %s503 = sadd.s32 %s502, 1
      %p506 = scmp.eq.s32.totalorder %s56, 1
      %p507 = scmp.ne.s32.totalorder %s502, %s504
      %p508 = scmp.eq.s32.totalorder %s56, 0
      %p509 = por %p507, %p508
      %p510 = scmp.ne.s32.totalorder %s502, %s504
      %p511 = scmp.eq.s32.totalorder %s61, 1
      %p512 = por %p510, %p511
      %p513 = scmp.ne.s32.totalorder %s504, %s505
      %p514 = scmp.eq.s32.totalorder %s61, 0
      %p515 = por %p513, %p514
      %p516 = scmp.ne.s32.totalorder %s504, %s505
      %p517 = scmp.eq.s32.totalorder %s62, 1
      %p518 = por %p516, %p517
      %p520 = scmp.ne.s32.totalorder %s505, %s519
      %p521 = scmp.eq.s32.totalorder %s62, 0
      %p522 = por %p520, %p521
      %s524 = sadd.s32 %s523, 1
      %p527 = scmp.eq.s32.totalorder %s56, 1
      %p528 = scmp.ne.s32.totalorder %s523, %s525
      %p529 = scmp.eq.s32.totalorder %s56, 0
      %p530 = por %p528, %p529
      %p531 = scmp.ne.s32.totalorder %s523, %s525
      %p532 = scmp.eq.s32.totalorder %s61, 1
      %p533 = por %p531, %p532
      %p534 = scmp.ne.s32.totalorder %s525, %s526
      %p535 = scmp.eq.s32.totalorder %s61, 0
      %p536 = por %p534, %p535
      %p537 = scmp.ne.s32.totalorder %s525, %s526
      %p538 = scmp.eq.s32.totalorder %s62, 1
      %p539 = por %p537, %p538
      %p541 = scmp.ne.s32.totalorder %s526, %s540
      %p542 = scmp.eq.s32.totalorder %s62, 0
      %p543 = por %p541, %p542
      %s545 = sadd.s32 %s544, 1
      %p548 = scmp.eq.s32.totalorder %s56, 1
      %p549 = scmp.ne.s32.totalorder %s544, %s546
      %p550 = scmp.eq.s32.totalorder %s56, 0
      %p551 = por %p549, %p550
      %p552 = scmp.ne.s32.totalorder %s544, %s546
      %p553 = scmp.eq.s32.totalorder %s61, 1
      %p554 = por %p552, %p553
      %p555 = scmp.ne.s32.totalorder %s546, %s547
      %p556 = scmp.eq.s32.totalorder %s61, 0
      %p557 = por %p555, %p556
      %p558 = scmp.ne.s32.totalorder %s546, %s547
      %p559 = scmp.eq.s32.totalorder %s62, 1
      %p560 = por %p558, %p559
      %p562 = scmp.ne.s32.totalorder %s547, %s561
      %p563 = scmp.eq.s32.totalorder %s62, 0
      %p564 = por %p562, %p563
      %s566 = sadd.s32 %s565, 1
      %p569 = scmp.eq.s32.totalorder %s56, 1
      %p570 = scmp.ne.s32.totalorder %s565, %s567
      %p571 = scmp.eq.s32.totalorder %s56, 0
      %p572 = por %p570, %p571
      %p573 = scmp.ne.s32.totalorder %s565, %s567
      %p574 = scmp.eq.s32.totalorder %s61, 1
      %p575 = por %p573, %p574
      %p576 = scmp.ne.s32.totalorder %s567, %s568
      %p577 = scmp.eq.s32.totalorder %s61, 0
      %p578 = por %p576, %p577
      %p579 = scmp.ne.s32.totalorder %s567, %s568
      %p580 = scmp.eq.s32.totalorder %s62, 1
      %p581 = por %p579, %p580
      %p583 = scmp.ne.s32.totalorder %s568, %s582
      %p584 = scmp.eq.s32.totalorder %s62, 0
      %p585 = por %p583, %p584
      %s586 = ssub.s32 %s63, %s75
      %s587 = ssub.s32 %s64, %s71
      %s588 = sor.u32 %s586, %s587
      %p589 = scmp.eq.s32.totalorder %s588, 0
      %s591 = sadd.s32 %s590, 1
      %s592 = scalar_select %p589, %s590, %s591
      %p595 = pneg %p589
      %p596 = scmp.eq.s32.totalorder %s56, 1
      %p597 = por %p595, %p596
      %p598 = scmp.ne.s32.totalorder %s590, %s593
      %p599 = scmp.eq.s32.totalorder %s56, 0
      %p600 = por %p598, %p599
      %p601 = scmp.ne.s32.totalorder %s590, %s593
      %p602 = scmp.eq.s32.totalorder %s61, 1
      %p603 = por %p601, %p602
      %p604 = scmp.ne.s32.totalorder %s593, %s594
      %p605 = scmp.eq.s32.totalorder %s61, 0
      %p606 = por %p604, %p605
      %p607 = scmp.ne.s32.totalorder %s593, %s594
      %p608 = scmp.eq.s32.totalorder %s62, 1
      %p609 = por %p607, %p608
      %p611 = scmp.ne.s32.totalorder %s594, %s610
      %p612 = scmp.eq.s32.totalorder %s62, 0
      %p613 = por %p611, %p612
      %s614 = ssub.s32 %s63, %s75
      %s615 = ssub.s32 %s64, %s71
      %s616 = sor.u32 %s614, %s615
      %p617 = scmp.eq.s32.totalorder %s616, 0
      %s619 = sadd.s32 %s618, 1
      %s620 = scalar_select %p617, %s618, %s619
      %p623 = pneg %p617
      %p624 = scmp.eq.s32.totalorder %s56, 1
      %p625 = por %p623, %p624
      %p626 = scmp.ne.s32.totalorder %s618, %s621
      %p627 = scmp.eq.s32.totalorder %s56, 0
      %p628 = por %p626, %p627
      %p629 = scmp.ne.s32.totalorder %s618, %s621
      %p630 = scmp.eq.s32.totalorder %s61, 1
      %p631 = por %p629, %p630
      %p632 = scmp.ne.s32.totalorder %s621, %s622
      %p633 = scmp.eq.s32.totalorder %s61, 0
      %p634 = por %p632, %p633
      %p635 = scmp.ne.s32.totalorder %s621, %s622
      %p636 = scmp.eq.s32.totalorder %s62, 1
      %p637 = por %p635, %p636
      %p639 = scmp.ne.s32.totalorder %s622, %s638
      %p640 = scmp.eq.s32.totalorder %s62, 0
      %p641 = por %p639, %p640
      %s642 = ssub.s32 %s63, %s75
      %s643 = ssub.s32 %s64, %s71
      %s644 = sor.u32 %s642, %s643
      %p645 = scmp.eq.s32.totalorder %s644, 0
      %s647 = sadd.s32 %s646, 1
      %s648 = scalar_select %p645, %s646, %s647
      %p651 = pneg %p645
      %p652 = scmp.eq.s32.totalorder %s56, 1
      %p653 = por %p651, %p652
      %p654 = scmp.ne.s32.totalorder %s646, %s649
      %p655 = scmp.eq.s32.totalorder %s56, 0
      %p656 = por %p654, %p655
      %p657 = scmp.ne.s32.totalorder %s646, %s649
      %p658 = scmp.eq.s32.totalorder %s61, 1
      %p659 = por %p657, %p658
      %p660 = scmp.ne.s32.totalorder %s649, %s650
      %p661 = scmp.eq.s32.totalorder %s61, 0
      %p662 = por %p660, %p661
      %p663 = scmp.ne.s32.totalorder %s649, %s650
      %p664 = scmp.eq.s32.totalorder %s62, 1
      %p665 = por %p663, %p664
      %p667 = scmp.ne.s32.totalorder %s650, %s666
      %p668 = scmp.eq.s32.totalorder %s62, 0
      %p669 = por %p667, %p668
      %p670 = scmp.le.s32.totalorder 1, %s56
      %p671 = scmp.lt.s32.totalorder %s56, 3
      %p672 = pnand %p670, %p671
      %p673 = pneg %p672
      // Predicated region
      $region9: #{tpu_custom_call.1} parent=5 // pred_check
        _
      $region10: #{tpu_custom_call.1} parent=5 // pred_check_branch
        %675 = sbr.rel (%p672) target = $region12
      $region11: #{tpu_custom_call.1} parent=5 // pred_region
        %s676 = ssub.s32 %s56, 1
        // Predicated region
        $region13: #{tpu_custom_call.1} parent=11 // pred_check
          %p677 = pneg %p221
        $region14: #{tpu_custom_call.1} parent=11 // pred_check_branch
          %679 = sbr.rel (%p677) target = $region16
        $region15: #{tpu_custom_call.1} parent=11 // pred_region
          %s681 = ssub.s32 1024, 1024
          %682 = vsyncadd [#allocation12], %s681
          %s683 = sshll.u32 [#allocation11], 4
          %s684 = int_to_ptr.vmem [resolvable:$true] %s683
          %689 = dma.hbm_to_vmem [thread:$0]  %s5, 1024, %s684, [#allocation12], 64, 64, 4
        $region16: #{tpu_custom_call.1} parent=11 // pred_fallthru
          _
        // Predicated region
        $region17: #{tpu_custom_call.1} parent=11 // pred_check
          %p690 = pneg %p242
        $region18: #{tpu_custom_call.1} parent=11 // pred_check_branch
          %692 = sbr.rel (%p690) target = $region20
        $region19: #{tpu_custom_call.1} parent=11 // pred_region
          %s694 = ssub.s32 64, 64
          %695 = vsyncadd [#allocation12], %s694
          %s696 = sshll.u32 [#allocation13], 4
          %s697 = int_to_ptr.vmem [resolvable:$true] %s696
          %702 = dma.hbm_to_vmem [thread:$0]  %s6, 64, %s697, [#allocation12], 16, 16, 1
        $region20: #{tpu_custom_call.1} parent=11 // pred_fallthru
          _
        // Predicated region
        $region21: #{tpu_custom_call.1} parent=11 // pred_check
          %p703 = pneg %p263
        $region22: #{tpu_custom_call.1} parent=11 // pred_check_branch
          %705 = sbr.rel (%p703) target = $region24
        $region23: #{tpu_custom_call.1} parent=11 // pred_region
          %s707 = ssub.s32 256, 256
          %708 = vsyncadd [#allocation15], %s707
          %s709 = sshll.u32 [#allocation14], 4
          %s710 = int_to_ptr.vmem [resolvable:$true] %s709
          %715 = dma.hbm_to_vmem [thread:$0]  %s7, 256, %s710, [#allocation15], 64, 64, 4
        $region24: #{tpu_custom_call.1} parent=11 // pred_fallthru
          _
        // Predicated region
        $region25: #{tpu_custom_call.1} parent=11 // pred_check
          %p716 = pneg %p284
        $region26: #{tpu_custom_call.1} parent=11 // pred_check_branch
          %718 = sbr.rel (%p716) target = $region28
        $region27: #{tpu_custom_call.1} parent=11 // pred_region
          %s720 = ssub.s32 16, 16
          %721 = vsyncadd [#allocation15], %s720
          %s723 = sshll.u32 [#allocation16], 4
          %s724 = int_to_ptr.vmem [resolvable:$true] %s723
          %726 = dma.hbm_to_vmem [thread:$0]  %s8, 16, %s724, [#allocation15]
        $region28: #{tpu_custom_call.1} parent=11 // pred_fallthru
          _
        // Predicated region
        $region29: #{tpu_custom_call.1} parent=11 // pred_check
          %p727 = pneg %p305
        $region30: #{tpu_custom_call.1} parent=11 // pred_check_branch
          %729 = sbr.rel (%p727) target = $region32
        $region31: #{tpu_custom_call.1} parent=11 // pred_region
          %s731 = ssub.s32 16, 16
          %732 = vsyncadd [#allocation18], %s731
          %s734 = sshll.u32 [#allocation17], 4
          %s735 = int_to_ptr.vmem [resolvable:$true] %s734
          %737 = dma.hbm_to_vmem [thread:$0]  %s9, 16, %s735, [#allocation18]
        $region32: #{tpu_custom_call.1} parent=11 // pred_fallthru
          _
        // Predicated region
        $region33: #{tpu_custom_call.1} parent=11 // pred_check
          %p738 = pneg %p326
        $region34: #{tpu_custom_call.1} parent=11 // pred_check_branch
          %740 = sbr.rel (%p738) target = $region36
        $region35: #{tpu_custom_call.1} parent=11 // pred_region
          %s742 = ssub.s32 16, 16
          %743 = vsyncadd [#allocation18], %s742
          %s745 = sshll.u32 [#allocation19], 4
          %s746 = int_to_ptr.vmem [resolvable:$true] %s745
          %748 = dma.hbm_to_vmem [thread:$0]  %s10, 16, %s746, [#allocation18]
        $region36: #{tpu_custom_call.1} parent=11 // pred_fallthru
          _
        // Predicated region
        $region37: #{tpu_custom_call.1} parent=11 // pred_check
          %p749 = pneg %p347
        $region38: #{tpu_custom_call.1} parent=11 // pred_check_branch
          %751 = sbr.rel (%p749) target = $region40
        $region39: #{tpu_custom_call.1} parent=11 // pred_region
          %s753 = ssub.s32 1024, 1024
          %754 = vsyncadd [#allocation21], %s753
          %s755 = sshll.u32 [#allocation20], 4
          %s756 = int_to_ptr.vmem [resolvable:$true] %s755
          %761 = dma.hbm_to_vmem [thread:$0]  %s11, 1024, %s756, [#allocation21], 64, 64, 4
        $region40: #{tpu_custom_call.1} parent=11 // pred_fallthru
          _
        // Predicated region
        $region41: #{tpu_custom_call.1} parent=11 // pred_check
          %p762 = pneg %p368
        $region42: #{tpu_custom_call.1} parent=11 // pred_check_branch
          %764 = sbr.rel (%p762) target = $region44
        $region43: #{tpu_custom_call.1} parent=11 // pred_region
          %s766 = ssub.s32 64, 64
          %767 = vsyncadd [#allocation21], %s766
          %s768 = sshll.u32 [#allocation22], 4
          %s769 = int_to_ptr.vmem [resolvable:$true] %s768
          %774 = dma.hbm_to_vmem [thread:$0]  %s12, 64, %s769, [#allocation21], 16, 16, 1
        $region44: #{tpu_custom_call.1} parent=11 // pred_fallthru
          _
        // Predicated region
        $region45: #{tpu_custom_call.1} parent=11 // pred_check
          %p775 = pneg %p389
        $region46: #{tpu_custom_call.1} parent=11 // pred_check_branch
          %777 = sbr.rel (%p775) target = $region48
        $region47: #{tpu_custom_call.1} parent=11 // pred_region
          %s779 = ssub.s32 256, 256
          %780 = vsyncadd [#allocation24], %s779
          %s781 = sshll.u32 [#allocation23], 4
          %s782 = int_to_ptr.vmem [resolvable:$true] %s781
          %787 = dma.hbm_to_vmem [thread:$0]  %s13, 256, %s782, [#allocation24], 64, 64, 4
        $region48: #{tpu_custom_call.1} parent=11 // pred_fallthru
          _
        // Predicated region
        $region49: #{tpu_custom_call.1} parent=11 // pred_check
          %p788 = pneg %p410
        $region50: #{tpu_custom_call.1} parent=11 // pred_check_branch
          %790 = sbr.rel (%p788) target = $region52
        $region51: #{tpu_custom_call.1} parent=11 // pred_region
          %s792 = ssub.s32 16, 16
          %793 = vsyncadd [#allocation24], %s792
          %s795 = sshll.u32 [#allocation25], 4
          %s796 = int_to_ptr.vmem [resolvable:$true] %s795
          %798 = dma.hbm_to_vmem [thread:$0]  %s14, 16, %s796, [#allocation24]
        $region52: #{tpu_custom_call.1} parent=11 // pred_fallthru
          _
        // Predicated region
        $region53: #{tpu_custom_call.1} parent=11 // pred_check
          %p799 = pneg %p431
        $region54: #{tpu_custom_call.1} parent=11 // pred_check_branch
          %801 = sbr.rel (%p799) target = $region56
        $region55: #{tpu_custom_call.1} parent=11 // pred_region
          %s803 = ssub.s32 16, 16
          %804 = vsyncadd [#allocation27], %s803
          %s806 = sshll.u32 [#allocation26], 4
          %s807 = int_to_ptr.vmem [resolvable:$true] %s806
          %809 = dma.hbm_to_vmem [thread:$0]  %s15, 16, %s807, [#allocation27]
        $region56: #{tpu_custom_call.1} parent=11 // pred_fallthru
          _
        // Predicated region
        $region57: #{tpu_custom_call.1} parent=11 // pred_check
          %p810 = pneg %p452
        $region58: #{tpu_custom_call.1} parent=11 // pred_check_branch
          %812 = sbr.rel (%p810) target = $region60
        $region59: #{tpu_custom_call.1} parent=11 // pred_region
          %s814 = ssub.s32 16, 16
          %815 = vsyncadd [#allocation27], %s814
          %s817 = sshll.u32 [#allocation28], 4
          %s818 = int_to_ptr.vmem [resolvable:$true] %s817
          %820 = dma.hbm_to_vmem [thread:$0]  %s16, 16, %s818, [#allocation27]
        $region60: #{tpu_custom_call.1} parent=11 // pred_fallthru
          _
        // Predicated region
        $region61: #{tpu_custom_call.1} parent=11 // pred_check
          %p821 = pneg %p473
        $region62: #{tpu_custom_call.1} parent=11 // pred_check_branch
          %823 = sbr.rel (%p821) target = $region64
        $region63: #{tpu_custom_call.1} parent=11 // pred_region
          %s825 = ssub.s32 256, 256
          %826 = vsyncadd [#allocation30], %s825
          %s827 = sshll.u32 [#allocation29], 4
          %s828 = int_to_ptr.vmem [resolvable:$true] %s827
          %833 = dma.hbm_to_vmem [thread:$0]  %s17, 256, %s828, [#allocation30], 64, 64, 4
        $region64: #{tpu_custom_call.1} parent=11 // pred_fallthru
          _
        // Predicated region
        $region65: #{tpu_custom_call.1} parent=11 // pred_check
          %p834 = pneg %p494
        $region66: #{tpu_custom_call.1} parent=11 // pred_check_branch
          %836 = sbr.rel (%p834) target = $region68
        $region67: #{tpu_custom_call.1} parent=11 // pred_region
          %s838 = ssub.s32 16, 16
          %839 = vsyncadd [#allocation30], %s838
          %s841 = sshll.u32 [#allocation31], 4
          %s842 = int_to_ptr.vmem [resolvable:$true] %s841
          %844 = dma.hbm_to_vmem [thread:$0]  %s18, 16, %s842, [#allocation30]
        $region68: #{tpu_custom_call.1} parent=11 // pred_fallthru
          _
        // Predicated region
        $region69: #{tpu_custom_call.1} parent=11 // pred_check
          %p845 = pneg %p515
        $region70: #{tpu_custom_call.1} parent=11 // pred_check_branch
          %847 = sbr.rel (%p845) target = $region72
        $region71: #{tpu_custom_call.1} parent=11 // pred_region
          %s849 = ssub.s32 512, 512
          %850 = vsyncadd [#allocation33], %s849
          %s851 = sshll.u32 [#allocation32], 4
          %s852 = int_to_ptr.vmem [resolvable:$true] %s851
          %857 = dma.hbm_to_vmem [thread:$0]  %s19, 512, %s852, [#allocation33], 64, 64, 4
        $region72: #{tpu_custom_call.1} parent=11 // pred_fallthru
          _
        // Predicated region
        $region73: #{tpu_custom_call.1} parent=11 // pred_check
          %p858 = pneg %p536
        $region74: #{tpu_custom_call.1} parent=11 // pred_check_branch
          %860 = sbr.rel (%p858) target = $region76
        $region75: #{tpu_custom_call.1} parent=11 // pred_region
          %s862 = ssub.s32 16, 16
          %863 = vsyncadd [#allocation33], %s862
          %s865 = sshll.u32 [#allocation34], 4
          %s866 = int_to_ptr.vmem [resolvable:$true] %s865
          %868 = dma.hbm_to_vmem [thread:$0]  %s20, 16, %s866, [#allocation33]
        $region76: #{tpu_custom_call.1} parent=11 // pred_fallthru
          _
        // Predicated region
        $region77: #{tpu_custom_call.1} parent=11 // pred_check
          %p869 = pneg %p557
        $region78: #{tpu_custom_call.1} parent=11 // pred_check_branch
          %871 = sbr.rel (%p869) target = $region80
        $region79: #{tpu_custom_call.1} parent=11 // pred_region
          %s873 = ssub.s32 16, 16
          %874 = vsyncadd [#allocation36], %s873
          %s876 = sshll.u32 [#allocation35], 4
          %s877 = int_to_ptr.vmem [resolvable:$true] %s876
          %879 = dma.hbm_to_vmem [thread:$0]  %s21, 16, %s877, [#allocation36]
        $region80: #{tpu_custom_call.1} parent=11 // pred_fallthru
          _
        // Predicated region
        $region81: #{tpu_custom_call.1} parent=11 // pred_check
          %p880 = pneg %p578
        $region82: #{tpu_custom_call.1} parent=11 // pred_check_branch
          %882 = sbr.rel (%p880) target = $region84
        $region83: #{tpu_custom_call.1} parent=11 // pred_region
          %s884 = ssub.s32 16, 16
          %885 = vsyncadd [#allocation36], %s884
          %s887 = sshll.u32 [#allocation37], 4
          %s888 = int_to_ptr.vmem [resolvable:$true] %s887
          %890 = dma.hbm_to_vmem [thread:$0]  %s22, 16, %s888, [#allocation36]
        $region84: #{tpu_custom_call.1} parent=11 // pred_fallthru
          _
      $region12: #{tpu_custom_call.1} parent=5 // pred_fallthru
        _
      %p891 = scmp.lt.s32.totalorder %s56, 2
      // Predicated region
      $region85: #{tpu_custom_call.1} parent=5 // pred_check
        %p892 = pneg %p891
      $region86: #{tpu_custom_call.1} parent=5 // pred_check_branch
        %894 = sbr.rel (%p892) target = $region88
      $region87: #{tpu_custom_call.1} parent=5 // pred_region
        // Predicated region
        $region89: #{tpu_custom_call.1} parent=87 // pred_check
          %p895 = pneg %p90
        $region90: #{tpu_custom_call.1} parent=87 // pred_check_branch
          %897 = sbr.rel (%p895) target = $region92
        $region91: #{tpu_custom_call.1} parent=87 // pred_region
          %s898 = sand.u32 %s80, 1
          %s899 = scalar_lea.sflag [#allocation3], %s898
          %s900 = sand.u32 %s80, 1
          %s901 = smul.addr %s900, 8
          %s902 = scalar_lea.vmem [#allocation2], %s901
          %s904 = ssub.s32 128, 128
          %905 = vsyncadd %s899, %s904
          %s906 = sadd.s32 %s64, %s63
          %s907 = smul.addr %s906, 128
          %s908 = scalar_lea.hbm %s0, %s907
          %s910 = sshll.u32 %s902, 4
          %s911 = int_to_ptr.vmem [resolvable:$true] %s910
          %913 = dma.hbm_to_vmem [thread:$0]  %s908, 128, %s911, %s899
        $region92: #{tpu_custom_call.1} parent=87 // pred_fallthru
          _
        // Predicated region
        $region93: #{tpu_custom_call.1} parent=87 // pred_check
          %p914 = pneg %p116
        $region94: #{tpu_custom_call.1} parent=87 // pred_check_branch
          %916 = sbr.rel (%p914) target = $region96
        $region95: #{tpu_custom_call.1} parent=87 // pred_region
          %s917 = sand.u32 %s56, 1
          %s918 = scalar_lea.sflag [#allocation6], %s917
          %s919 = sand.u32 %s106, 1
          %s920 = smul.addr %s919, 16
          %s921 = scalar_lea.vmem [#allocation5], %s920
          %s923 = ssub.s32 256, 256
          %924 = vsyncadd %s918, %s923
          %s925 = smul.addr %s63, 4
          %s926 = smul.addr %s925, 64
          %s927 = scalar_lea.hbm %s1, %s926
          %s928 = sshll.u32 %s921, 4
          %s929 = int_to_ptr.vmem [resolvable:$true] %s928
          %934 = dma.hbm_to_vmem [thread:$0]  %s927, 256, %s929, %s918, 64, 64, 4
        $region96: #{tpu_custom_call.1} parent=87 // pred_fallthru
          _
        // Predicated region
        $region97: #{tpu_custom_call.1} parent=87 // pred_check
          %p935 = pneg %p142
        $region98: #{tpu_custom_call.1} parent=87 // pred_check_branch
          %937 = sbr.rel (%p935) target = $region100
        $region99: #{tpu_custom_call.1} parent=87 // pred_region
          %s938 = sand.u32 %s56, 1
          %s939 = scalar_lea.sflag [#allocation6], %s938
          %s940 = sand.u32 %s132, 1
          %s941 = smul.addr %s940, 16
          %s942 = scalar_lea.vmem [#allocation7], %s941
          %s944 = ssub.s32 256, 256
          %945 = vsyncadd %s939, %s944
          %s946 = smul.addr %s63, 4
          %s947 = smul.addr %s946, 64
          %s948 = scalar_lea.hbm %s2, %s947
          %s949 = sshll.u32 %s942, 4
          %s950 = int_to_ptr.vmem [resolvable:$true] %s949
          %955 = dma.hbm_to_vmem [thread:$0]  %s948, 256, %s950, %s939, 64, 64, 4
        $region100: #{tpu_custom_call.1} parent=87 // pred_fallthru
          _
        // Predicated region
        $region101: #{tpu_custom_call.1} parent=87 // pred_check
          %p956 = pneg %p168
        $region102: #{tpu_custom_call.1} parent=87 // pred_check_branch
          %958 = sbr.rel (%p956) target = $region104
        $region103: #{tpu_custom_call.1} parent=87 // pred_region
          %s959 = sand.u32 %s56, 1
          %s960 = scalar_lea.sflag [#allocation9], %s959
          %s961 = sand.u32 %s158, 1
          %s962 = smul.addr %s961, 32
          %s963 = scalar_lea.vmem [#allocation8], %s962
          %s965 = ssub.s32 512, 512
          %966 = vsyncadd %s960, %s965
          %s967 = smul.addr %s63, 8
          %s968 = smul.addr %s967, 64
          %s969 = scalar_lea.hbm %s3, %s968
          %s970 = sshll.u32 %s963, 4
          %s971 = int_to_ptr.vmem [resolvable:$true] %s970
          %976 = dma.hbm_to_vmem [thread:$0]  %s969, 512, %s971, %s960, 64, 64, 4
        $region104: #{tpu_custom_call.1} parent=87 // pred_fallthru
          _
        // Predicated region
        $region105: #{tpu_custom_call.1} parent=87 // pred_check
          %p977 = pneg %p194
        $region106: #{tpu_custom_call.1} parent=87 // pred_check_branch
          %979 = sbr.rel (%p977) target = $region108
        $region107: #{tpu_custom_call.1} parent=87 // pred_region
          %s980 = sand.u32 %s56, 1
          %s981 = scalar_lea.sflag [#allocation9], %s980
          %s982 = sand.u32 %s184, 1
          %s983 = smul.addr %s982, 32
          %s984 = scalar_lea.vmem [#allocation10], %s983
          %s986 = ssub.s32 512, 512
          %987 = vsyncadd %s981, %s986
          %s988 = smul.addr %s63, 8
          %s989 = smul.addr %s988, 64
          %s990 = scalar_lea.hbm %s4, %s989
          %s991 = sshll.u32 %s984, 4
          %s992 = int_to_ptr.vmem [resolvable:$true] %s991
          %997 = dma.hbm_to_vmem [thread:$0]  %s990, 512, %s992, %s981, 64, 64, 4
        $region108: #{tpu_custom_call.1} parent=87 // pred_fallthru
          _
      $region88: #{tpu_custom_call.1} parent=5 // pred_fallthru
        _
      %p998 = scmp.le.s32.totalorder 1, %s56
      %p999 = scmp.lt.s32.totalorder %s56, 3
      %p1000 = pnand %p998, %p999
      %p1001 = pneg %p1000
      // Predicated region
      $region109: #{tpu_custom_call.1} parent=5 // pred_check
        _
      $region110: #{tpu_custom_call.1} parent=5 // pred_check_branch
        %1003 = sbr.rel (%p1000) target = $region112
      $region111: #{tpu_custom_call.1} parent=5 // pred_region
        %s1004 = ssub.s32 %s56, 1
        %s1005 = sand.u32 %s83, 1
        %s1006 = scalar_lea.sflag [#allocation3], %s1005
        %s1007 = sand.u32 %s83, 1
        %s1008 = smul.addr %s1007, 8
        %s1009 = scalar_lea.vmem [#allocation2], %s1008
        // Predicated region
        $region113: #{tpu_custom_call.1} parent=111 // pred_check
          %p1010 = pneg %p96
        $region114: #{tpu_custom_call.1} parent=111 // pred_check_branch
          %1012 = sbr.rel (%p1010) target = $region116
        $region115: #{tpu_custom_call.1} parent=111 // pred_region
          %1013 = dma.done %s1006, 128
        $region116: #{tpu_custom_call.1} parent=111 // pred_fallthru
          _
        %s1014 = sand.u32 %s61, 1
        %s1015 = scalar_lea.sflag [#allocation6], %s1014
        %s1016 = sand.u32 %s109, 1
        %s1017 = smul.addr %s1016, 16
        %s1018 = scalar_lea.vmem [#allocation5], %s1017
        // Predicated region
        $region117: #{tpu_custom_call.1} parent=111 // pred_check
          %p1019 = pneg %p122
        $region118: #{tpu_custom_call.1} parent=111 // pred_check_branch
          %1021 = sbr.rel (%p1019) target = $region120
        $region119: #{tpu_custom_call.1} parent=111 // pred_region
          %1022 = dma.done %s1015, 256
        $region120: #{tpu_custom_call.1} parent=111 // pred_fallthru
          _
        %s1023 = sand.u32 %s61, 1
        %s1024 = scalar_lea.sflag [#allocation6], %s1023
        %s1025 = sand.u32 %s135, 1
        %s1026 = smul.addr %s1025, 16
        %s1027 = scalar_lea.vmem [#allocation7], %s1026
        // Predicated region
        $region121: #{tpu_custom_call.1} parent=111 // pred_check
          %p1028 = pneg %p148
        $region122: #{tpu_custom_call.1} parent=111 // pred_check_branch
          %1030 = sbr.rel (%p1028) target = $region124
        $region123: #{tpu_custom_call.1} parent=111 // pred_region
          %1031 = dma.done %s1024, 256
        $region124: #{tpu_custom_call.1} parent=111 // pred_fallthru
          _
        %s1032 = sand.u32 %s61, 1
        %s1033 = scalar_lea.sflag [#allocation9], %s1032
        %s1034 = sand.u32 %s161, 1
        %s1035 = smul.addr %s1034, 32
        %s1036 = scalar_lea.vmem [#allocation8], %s1035
        // Predicated region
        $region125: #{tpu_custom_call.1} parent=111 // pred_check
          %p1037 = pneg %p174
        $region126: #{tpu_custom_call.1} parent=111 // pred_check_branch
          %1039 = sbr.rel (%p1037) target = $region128
        $region127: #{tpu_custom_call.1} parent=111 // pred_region
          %1040 = dma.done %s1033, 512
        $region128: #{tpu_custom_call.1} parent=111 // pred_fallthru
          _
        %s1041 = sand.u32 %s61, 1
        %s1042 = scalar_lea.sflag [#allocation9], %s1041
        %s1043 = sand.u32 %s187, 1
        %s1044 = smul.addr %s1043, 32
        %s1045 = scalar_lea.vmem [#allocation10], %s1044
        // Predicated region
        $region129: #{tpu_custom_call.1} parent=111 // pred_check
          %p1046 = pneg %p200
        $region130: #{tpu_custom_call.1} parent=111 // pred_check_branch
          %1048 = sbr.rel (%p1046) target = $region132
        $region131: #{tpu_custom_call.1} parent=111 // pred_region
          %1049 = dma.done %s1042, 512
        $region132: #{tpu_custom_call.1} parent=111 // pred_fallthru
          _
        // Predicated region
        $region133: #{tpu_custom_call.1} parent=111 // pred_check
          %p1050 = pneg %p221
        $region134: #{tpu_custom_call.1} parent=111 // pred_check_branch
          %1052 = sbr.rel (%p1050) target = $region136
        $region135: #{tpu_custom_call.1} parent=111 // pred_region
          %1053 = dma.done [#allocation12], 1024
        $region136: #{tpu_custom_call.1} parent=111 // pred_fallthru
          _
        // Predicated region
        $region137: #{tpu_custom_call.1} parent=111 // pred_check
          %p1054 = pneg %p242
        $region138: #{tpu_custom_call.1} parent=111 // pred_check_branch
          %1056 = sbr.rel (%p1054) target = $region140
        $region139: #{tpu_custom_call.1} parent=111 // pred_region
          %1057 = dma.done [#allocation12], 64
        $region140: #{tpu_custom_call.1} parent=111 // pred_fallthru
          _
        // Predicated region
        $region141: #{tpu_custom_call.1} parent=111 // pred_check
          %p1058 = pneg %p263
        $region142: #{tpu_custom_call.1} parent=111 // pred_check_branch
          %1060 = sbr.rel (%p1058) target = $region144
        $region143: #{tpu_custom_call.1} parent=111 // pred_region
          %1061 = dma.done [#allocation15], 256
        $region144: #{tpu_custom_call.1} parent=111 // pred_fallthru
          _
        // Predicated region
        $region145: #{tpu_custom_call.1} parent=111 // pred_check
          %p1062 = pneg %p284
        $region146: #{tpu_custom_call.1} parent=111 // pred_check_branch
          %1064 = sbr.rel (%p1062) target = $region148
        $region147: #{tpu_custom_call.1} parent=111 // pred_region
          %1065 = dma.done [#allocation15], 16
        $region148: #{tpu_custom_call.1} parent=111 // pred_fallthru
          _
        // Predicated region
        $region149: #{tpu_custom_call.1} parent=111 // pred_check
          %p1066 = pneg %p305
        $region150: #{tpu_custom_call.1} parent=111 // pred_check_branch
          %1068 = sbr.rel (%p1066) target = $region152
        $region151: #{tpu_custom_call.1} parent=111 // pred_region
          %1069 = dma.done [#allocation18], 16
        $region152: #{tpu_custom_call.1} parent=111 // pred_fallthru
          _
        // Predicated region
        $region153: #{tpu_custom_call.1} parent=111 // pred_check
          %p1070 = pneg %p326
        $region154: #{tpu_custom_call.1} parent=111 // pred_check_branch
          %1072 = sbr.rel (%p1070) target = $region156
        $region155: #{tpu_custom_call.1} parent=111 // pred_region
          %1073 = dma.done [#allocation18], 16
        $region156: #{tpu_custom_call.1} parent=111 // pred_fallthru
          _
        // Predicated region
        $region157: #{tpu_custom_call.1} parent=111 // pred_check
          %p1074 = pneg %p347
        $region158: #{tpu_custom_call.1} parent=111 // pred_check_branch
          %1076 = sbr.rel (%p1074) target = $region160
        $region159: #{tpu_custom_call.1} parent=111 // pred_region
          %1077 = dma.done [#allocation21], 1024
        $region160: #{tpu_custom_call.1} parent=111 // pred_fallthru
          _
        // Predicated region
        $region161: #{tpu_custom_call.1} parent=111 // pred_check
          %p1078 = pneg %p368
        $region162: #{tpu_custom_call.1} parent=111 // pred_check_branch
          %1080 = sbr.rel (%p1078) target = $region164
        $region163: #{tpu_custom_call.1} parent=111 // pred_region
          %1081 = dma.done [#allocation21], 64
        $region164: #{tpu_custom_call.1} parent=111 // pred_fallthru
          _
        // Predicated region
        $region165: #{tpu_custom_call.1} parent=111 // pred_check
          %p1082 = pneg %p389
        $region166: #{tpu_custom_call.1} parent=111 // pred_check_branch
          %1084 = sbr.rel (%p1082) target = $region168
        $region167: #{tpu_custom_call.1} parent=111 // pred_region
          %1085 = dma.done [#allocation24], 256
        $region168: #{tpu_custom_call.1} parent=111 // pred_fallthru
          _
        // Predicated region
        $region169: #{tpu_custom_call.1} parent=111 // pred_check
          %p1086 = pneg %p410
        $region170: #{tpu_custom_call.1} parent=111 // pred_check_branch
          %1088 = sbr.rel (%p1086) target = $region172
        $region171: #{tpu_custom_call.1} parent=111 // pred_region
          %1089 = dma.done [#allocation24], 16
        $region172: #{tpu_custom_call.1} parent=111 // pred_fallthru
          _
        // Predicated region
        $region173: #{tpu_custom_call.1} parent=111 // pred_check
          %p1090 = pneg %p431
        $region174: #{tpu_custom_call.1} parent=111 // pred_check_branch
          %1092 = sbr.rel (%p1090) target = $region176
        $region175: #{tpu_custom_call.1} parent=111 // pred_region
          %1093 = dma.done [#allocation27], 16
        $region176: #{tpu_custom_call.1} parent=111 // pred_fallthru
          _
        // Predicated region
        $region177: #{tpu_custom_call.1} parent=111 // pred_check
          %p1094 = pneg %p452
        $region178: #{tpu_custom_call.1} parent=111 // pred_check_branch
          %1096 = sbr.rel (%p1094) target = $region180
        $region179: #{tpu_custom_call.1} parent=111 // pred_region
          %1097 = dma.done [#allocation27], 16
        $region180: #{tpu_custom_call.1} parent=111 // pred_fallthru
          _
        // Predicated region
        $region181: #{tpu_custom_call.1} parent=111 // pred_check
          %p1098 = pneg %p473
        $region182: #{tpu_custom_call.1} parent=111 // pred_check_branch
          %1100 = sbr.rel (%p1098) target = $region184
        $region183: #{tpu_custom_call.1} parent=111 // pred_region
          %1101 = dma.done [#allocation30], 256
        $region184: #{tpu_custom_call.1} parent=111 // pred_fallthru
          _
        // Predicated region
        $region185: #{tpu_custom_call.1} parent=111 // pred_check
          %p1102 = pneg %p494
        $region186: #{tpu_custom_call.1} parent=111 // pred_check_branch
          %1104 = sbr.rel (%p1102) target = $region188
        $region187: #{tpu_custom_call.1} parent=111 // pred_region
          %1105 = dma.done [#allocation30], 16
        $region188: #{tpu_custom_call.1} parent=111 // pred_fallthru
          _
        // Predicated region
        $region189: #{tpu_custom_call.1} parent=111 // pred_check
          %p1106 = pneg %p515
        $region190: #{tpu_custom_call.1} parent=111 // pred_check_branch
          %1108 = sbr.rel (%p1106) target = $region192
        $region191: #{tpu_custom_call.1} parent=111 // pred_region
          %1109 = dma.done [#allocation33], 512
        $region192: #{tpu_custom_call.1} parent=111 // pred_fallthru
          _
        // Predicated region
        $region193: #{tpu_custom_call.1} parent=111 // pred_check
          %p1110 = pneg %p536
        $region194: #{tpu_custom_call.1} parent=111 // pred_check_branch
          %1112 = sbr.rel (%p1110) target = $region196
        $region195: #{tpu_custom_call.1} parent=111 // pred_region
          %1113 = dma.done [#allocation33], 16
        $region196: #{tpu_custom_call.1} parent=111 // pred_fallthru
          _
        // Predicated region
        $region197: #{tpu_custom_call.1} parent=111 // pred_check
          %p1114 = pneg %p557
        $region198: #{tpu_custom_call.1} parent=111 // pred_check_branch
          %1116 = sbr.rel (%p1114) target = $region200
        $region199: #{tpu_custom_call.1} parent=111 // pred_region
          %1117 = dma.done [#allocation36], 16
        $region200: #{tpu_custom_call.1} parent=111 // pred_fallthru
          _
        // Predicated region
        $region201: #{tpu_custom_call.1} parent=111 // pred_check
          %p1118 = pneg %p578
        $region202: #{tpu_custom_call.1} parent=111 // pred_check_branch
          %1120 = sbr.rel (%p1118) target = $region204
        $region203: #{tpu_custom_call.1} parent=111 // pred_region
          %1121 = dma.done [#allocation36], 16
        $region204: #{tpu_custom_call.1} parent=111 // pred_fallthru
          _
        %s1122 = sand.u32 %s83, 1
        %s1123 = scalar_lea.sflag [#allocation3], %s1122
        %s1124 = sand.u32 %s83, 1
        %s1125 = smul.addr %s1124, 8
        %s1126 = scalar_lea.vmem [#allocation2], %s1125
        %p1127 = pneg %p96
        %p1128 = pneg %p93
        %s1129 = sand.u32 %s61, 1
        %s1130 = scalar_lea.sflag [#allocation6], %s1129
        %s1131 = sand.u32 %s109, 1
        %s1132 = smul.addr %s1131, 16
        %s1133 = scalar_lea.vmem [#allocation5], %s1132
        %p1134 = pneg %p122
        %p1135 = pneg %p119
        %s1136 = sand.u32 %s61, 1
        %s1137 = scalar_lea.sflag [#allocation6], %s1136
        %s1138 = sand.u32 %s135, 1
        %s1139 = smul.addr %s1138, 16
        %s1140 = scalar_lea.vmem [#allocation7], %s1139
        %p1141 = pneg %p148
        %p1142 = pneg %p145
        %s1143 = sand.u32 %s61, 1
        %s1144 = scalar_lea.sflag [#allocation9], %s1143
        %s1145 = sand.u32 %s161, 1
        %s1146 = smul.addr %s1145, 32
        %s1147 = scalar_lea.vmem [#allocation8], %s1146
        %p1148 = pneg %p174
        %p1149 = pneg %p171
        %s1150 = sand.u32 %s61, 1
        %s1151 = scalar_lea.sflag [#allocation9], %s1150
        %s1152 = sand.u32 %s187, 1
        %s1153 = smul.addr %s1152, 32
        %s1154 = scalar_lea.vmem [#allocation10], %s1153
        %p1155 = pneg %p200
        %p1156 = pneg %p197
        %p1157 = pneg %p221
        %p1158 = pneg %p218
        %p1159 = pneg %p242
        %p1160 = pneg %p239
        %p1161 = pneg %p263
        %p1162 = pneg %p260
        %p1163 = pneg %p284
        %p1164 = pneg %p281
        %p1165 = pneg %p305
        %p1166 = pneg %p302
        %p1167 = pneg %p326
        %p1168 = pneg %p323
        %p1169 = pneg %p347
        %p1170 = pneg %p344
        %p1171 = pneg %p368
        %p1172 = pneg %p365
        %p1173 = pneg %p389
        %p1174 = pneg %p386
        %p1175 = pneg %p410
        %p1176 = pneg %p407
        %p1177 = pneg %p431
        %p1178 = pneg %p428
        %p1179 = pneg %p452
        %p1180 = pneg %p449
        %p1181 = pneg %p473
        %p1182 = pneg %p470
        %p1183 = pneg %p494
        %p1184 = pneg %p491
        %p1185 = pneg %p515
        %p1186 = pneg %p512
        %p1187 = pneg %p536
        %p1188 = pneg %p533
        %p1189 = pneg %p557
        %p1190 = pneg %p554
        %p1191 = pneg %p578
        %p1192 = pneg %p575
        %p1193 = pneg %p606
        %p1194 = pneg %p603
        %s1195 = sand.u32 %s593, 1
        %s1196 = scalar_lea.sflag [#allocation4], %s1195
        %s1197 = sand.u32 %s593, 1
        %s1198 = smul.addr %s1197, 8
        %s1199 = scalar_lea.vmem [#allocation38], %s1198
        %p1200 = pneg %p634
        %p1201 = pneg %p631
        %s1202 = sand.u32 %s61, 1
        %s1203 = scalar_lea.sflag [#allocation40], %s1202
        %s1204 = sand.u32 %s621, 1
        %s1205 = smul.addr %s1204, 8
        %s1206 = scalar_lea.vmem [#allocation39], %s1205
        %p1207 = pneg %p662
        %p1208 = pneg %p659
        %s1209 = sand.u32 %s61, 1
        %s1210 = scalar_lea.sflag [#allocation40], %s1209
        %s1211 = sand.u32 %s649, 1
        %s1212 = smul.addr %s1211, 8
        %s1213 = scalar_lea.vmem [#allocation41], %s1212
        %v1215 = vld [vmem:[%s1009] sm:$0xff]
        %v1216 = vpack.c.bf16 %v1215, %v1215
        %v1217 = vld [vmem:[%s1018] sm:$0xf]
        %v1218 = vld [vmem:[%s1018 + $0x4] sm:$0xf]
        %v1219 = vld [vmem:[%s1018 + $0x8] sm:$0xf]
        %v1220 = vld [vmem:[%s1018 + $0xc] sm:$0xf]
        %v1221 = vld [vmem:[%s1027] sm:$0xf]
        %v1222 = vld [vmem:[%s1027 + $0x4] sm:$0xf]
        %v1223 = vld [vmem:[%s1027 + $0x8] sm:$0xf]
        %v1224 = vld [vmem:[%s1027 + $0xc] sm:$0xf]
        %v1225 = vld [vmem:[#allocation11] sm:$0xf]
        %v1226 = vld [vmem:[#allocation11 + $0x4] sm:$0xf]
        %v1227 = vld [vmem:[#allocation11 + $0x8] sm:$0xf]
        %v1228 = vld [vmem:[#allocation11 + $0xc] sm:$0xf]
        %v1229 = vld [vmem:[#allocation11 + $0x10] sm:$0xf]
        %v1230 = vld [vmem:[#allocation11 + $0x14] sm:$0xf]
        %v1231 = vld [vmem:[#allocation11 + $0x18] sm:$0xf]
        %v1232 = vld [vmem:[#allocation11 + $0x1c] sm:$0xf]
        %v1233 = vld [vmem:[#allocation11 + $0x20] sm:$0xf]
        %v1234 = vld [vmem:[#allocation11 + $0x24] sm:$0xf]
        %v1235 = vld [vmem:[#allocation11 + $0x28] sm:$0xf]
        %v1236 = vld [vmem:[#allocation11 + $0x2c] sm:$0xf]
        %v1237 = vld [vmem:[#allocation11 + $0x30] sm:$0xf]
        %v1238 = vld [vmem:[#allocation11 + $0x34] sm:$0xf]
        %v1239 = vld [vmem:[#allocation11 + $0x38] sm:$0xf]
        %v1240 = vld [vmem:[#allocation11 + $0x3c] sm:$0xf]
        %v1241 = vld [vmem:[#allocation13] sm:$0x1]
        %v1242 = vld [vmem:[#allocation13 + $0x1] sm:$0x1]
        %v1243 = vld [vmem:[#allocation13 + $0x2] sm:$0x1]
        %v1244 = vld [vmem:[#allocation13 + $0x3] sm:$0x1]
        %v1245 = vld [vmem:[#allocation14] sm:$0xf]
        %v1246 = vld [vmem:[#allocation14 + $0x4] sm:$0xf]
        %v1247 = vld [vmem:[#allocation14 + $0x8] sm:$0xf]
        %v1248 = vld [vmem:[#allocation14 + $0xc] sm:$0xf]
        %v1249 = vld [vmem:[#allocation16] sm:$0x1]
        %v1250 = vld [vmem:[#allocation17] sm:$0x1]
        %v1251 = vld [vmem:[#allocation19] sm:$0x1]
        %v1256 = vlaneseq
        %v1257 = vshrl.u32 %v1256, 7
        %v1258 = vsub.s32 0, %v1257
        %v1259 = vrot.slane %v1241, %v1258
        %v1260 = vlaneseq
        %v1261 = vshrl.u32 %v1260, 7
        %v1262 = vsub.s32 0, %v1261
        %v1263 = vrot.slane %v1242, %v1262
        %v1264 = vlaneseq
        %v1265 = vshrl.u32 %v1264, 7
        %v1266 = vsub.s32 0, %v1265
        %v1267 = vrot.slane %v1243, %v1266
        %v1268 = vlaneseq
        %v1269 = vshrl.u32 %v1268, 7
        %v1270 = vsub.s32 0, %v1269
        %v1271 = vrot.slane %v1244, %v1270
        %v1280 = vunpack.c.l.b16 %v1225
        %v1281 = vunpack.c.l.b16 %v1226
        %v1282 = vunpack.c.l.b16 %v1227
        %v1283 = vunpack.c.l.b16 %v1228
        %v1284 = vpack.c.b16 %v1281, %v1280
        %v1285 = vpack.c.b16 %v1283, %v1282
        %vm1288 = vcmask 261120
        %v1290 = vsel %vm1288, %v1216, 0
        %1292 = vmatprep.subr.bf16.mxu0 0
        %1293 = vmatpush1.bf16.msra.mxu0 %v1284
        %1294 = vmatprep.subr.bf16.mxu0 0
        %1295 = vmatpush1.bf16.msra.mxu0 %v1285
        %1296 = vmatprep.subr.bf16.mxu0 0
        %1297 = vmatpush1.bf16.msra.mxu0 0
        %1298 = vmatprep.subr.bf16.mxu0 0
        %1299 = vmatpush1.bf16.msra.mxu0 0
        %1300 = vmatprep.subr.bf16.mxu0 0
        %1301 = vmatpush1.bf16.msra.mxu0 0
        %1302 = vmatprep.subr.bf16.mxu0 0
        %1303 = vmatpush1.bf16.msra.mxu0 0
        %1304 = vmatprep.subr.bf16.mxu0 0
        %1305 = vmatpush1.bf16.msra.mxu0 0
        %1306 = vmatprep.subr.bf16.mxu0 0
        %1307 = vmatpush1.bf16.msra.mxu0 0
        %1308 = vmatprep.subr.bf16.mxu0 0
        %1309 = vmatpush1.bf16.msra.mxu0 0
        %1310 = vmatprep.subr.bf16.mxu0 0
        %1311 = vmatpush1.bf16.msra.mxu0 0
        %1312 = vmatprep.subr.bf16.mxu0 0
        %1313 = vmatpush1.bf16.msra.mxu0 0
        %1314 = vmatprep.subr.bf16.mxu0 0
        %1315 = vmatpush1.bf16.msra.mxu0 0
        %1316 = vmatprep.subr.bf16.mxu0 0
        %1317 = vmatpush1.bf16.msra.mxu0 0
        %1318 = vmatprep.subr.bf16.mxu0 0
        %1319 = vmatpush1.bf16.msra.mxu0 0
        %1320 = vmatprep.subr.bf16.mxu0 0
        %1321 = vmatpush1.bf16.msra.mxu0 0
        %1322 = vmatprep.subr.bf16.mxu0 0
        %1323 = vmatpush1.bf16.msra.mxu0 0
        %1324 = vmatprep.mubr.bf16.mxu0 0
        %1325 = vmatmul.mubr.bf16.gmra.mrb[0].mxu0 %v1290
        %v1326 = vpop.f32.mrb[0].mxu0
        %v1327 = vadd.f32 %v1259, %v1326
        %v1328 = vpop.f32.mrb[0].mxu0
        %v1329 = vpop.f32.mrb[0].mxu0
        %v1330 = vpop.f32.mrb[0].mxu0
        %1331 = vdwg.mxu0
        %v1336 = vunpack.c.l.b16 %v1229
        %v1337 = vunpack.c.l.b16 %v1230
        %v1338 = vunpack.c.l.b16 %v1231
        %v1339 = vunpack.c.l.b16 %v1232
        %v1340 = vpack.c.b16 %v1337, %v1336
        %v1341 = vpack.c.b16 %v1339, %v1338
        %1344 = vmatprep.subr.bf16.mxu0 0
        %1345 = vmatpush1.bf16.msra.mxu0 %v1340
        %1346 = vmatprep.subr.bf16.mxu0 0
        %1347 = vmatpush1.bf16.msra.mxu0 %v1341
        %1348 = vmatprep.subr.bf16.mxu0 0
        %1349 = vmatpush1.bf16.msra.mxu0 0
        %1350 = vmatprep.subr.bf16.mxu0 0
        %1351 = vmatpush1.bf16.msra.mxu0 0
        %1352 = vmatprep.subr.bf16.mxu0 0
        %1353 = vmatpush1.bf16.msra.mxu0 0
        %1354 = vmatprep.subr.bf16.mxu0 0
        %1355 = vmatpush1.bf16.msra.mxu0 0
        %1356 = vmatprep.subr.bf16.mxu0 0
        %1357 = vmatpush1.bf16.msra.mxu0 0
        %1358 = vmatprep.subr.bf16.mxu0 0
        %1359 = vmatpush1.bf16.msra.mxu0 0
        %1360 = vmatprep.subr.bf16.mxu0 0
        %1361 = vmatpush1.bf16.msra.mxu0 0
        %1362 = vmatprep.subr.bf16.mxu0 0
        %1363 = vmatpush1.bf16.msra.mxu0 0
        %1364 = vmatprep.subr.bf16.mxu0 0
        %1365 = vmatpush1.bf16.msra.mxu0 0
        %1366 = vmatprep.subr.bf16.mxu0 0
        %1367 = vmatpush1.bf16.msra.mxu0 0
        %1368 = vmatprep.subr.bf16.mxu0 0
        %1369 = vmatpush1.bf16.msra.mxu0 0
        %1370 = vmatprep.subr.bf16.mxu0 0
        %1371 = vmatpush1.bf16.msra.mxu0 0
        %1372 = vmatprep.subr.bf16.mxu0 0
        %1373 = vmatpush1.bf16.msra.mxu0 0
        %1374 = vmatprep.subr.bf16.mxu0 0
        %1375 = vmatpush1.bf16.msra.mxu0 0
        %1376 = vmatprep.mubr.bf16.mxu0 0
        %1377 = vmatmul.mubr.bf16.gmra.mrb[0].mxu0 %v1290
        %v1378 = vpop.f32.mrb[0].mxu0
        %v1379 = vadd.f32 %v1263, %v1378
        %v1380 = vpop.f32.mrb[0].mxu0
        %v1381 = vpop.f32.mrb[0].mxu0
        %v1382 = vpop.f32.mrb[0].mxu0
        %1383 = vdwg.mxu0
        %v1388 = vunpack.c.l.b16 %v1233
        %v1389 = vunpack.c.l.b16 %v1234
        %v1390 = vunpack.c.l.b16 %v1235
        %v1391 = vunpack.c.l.b16 %v1236
        %v1392 = vpack.c.b16 %v1389, %v1388
        %v1393 = vpack.c.b16 %v1391, %v1390
        %1396 = vmatprep.subr.bf16.mxu0 0
        %1397 = vmatpush1.bf16.msra.mxu0 %v1392
        %1398 = vmatprep.subr.bf16.mxu0 0
        %1399 = vmatpush1.bf16.msra.mxu0 %v1393
        %1400 = vmatprep.subr.bf16.mxu0 0
        %1401 = vmatpush1.bf16.msra.mxu0 0
        %1402 = vmatprep.subr.bf16.mxu0 0
        %1403 = vmatpush1.bf16.msra.mxu0 0
        %1404 = vmatprep.subr.bf16.mxu0 0
        %1405 = vmatpush1.bf16.msra.mxu0 0
        %1406 = vmatprep.subr.bf16.mxu0 0
        %1407 = vmatpush1.bf16.msra.mxu0 0
        %1408 = vmatprep.subr.bf16.mxu0 0
        %1409 = vmatpush1.bf16.msra.mxu0 0
        %1410 = vmatprep.subr.bf16.mxu0 0
        %1411 = vmatpush1.bf16.msra.mxu0 0
        %1412 = vmatprep.subr.bf16.mxu0 0
        %1413 = vmatpush1.bf16.msra.mxu0 0
        %1414 = vmatprep.subr.bf16.mxu0 0
        %1415 = vmatpush1.bf16.msra.mxu0 0
        %1416 = vmatprep.subr.bf16.mxu0 0
        %1417 = vmatpush1.bf16.msra.mxu0 0
        %1418 = vmatprep.subr.bf16.mxu0 0
        %1419 = vmatpush1.bf16.msra.mxu0 0
        %1420 = vmatprep.subr.bf16.mxu0 0
        %1421 = vmatpush1.bf16.msra.mxu0 0
        %1422 = vmatprep.subr.bf16.mxu0 0
        %1423 = vmatpush1.bf16.msra.mxu0 0
        %1424 = vmatprep.subr.bf16.mxu0 0
        %1425 = vmatpush1.bf16.msra.mxu0 0
        %1426 = vmatprep.subr.bf16.mxu0 0
        %1427 = vmatpush1.bf16.msra.mxu0 0
        %1428 = vmatprep.mubr.bf16.mxu0 0
        %1429 = vmatmul.mubr.bf16.gmra.mrb[0].mxu0 %v1290
        %v1430 = vpop.f32.mrb[0].mxu0
        %v1431 = vadd.f32 %v1267, %v1430
        %v1432 = vpop.f32.mrb[0].mxu0
        %v1433 = vpop.f32.mrb[0].mxu0
        %v1434 = vpop.f32.mrb[0].mxu0
        %1435 = vdwg.mxu0
        %v1440 = vunpack.c.l.b16 %v1237
        %v1441 = vunpack.c.l.b16 %v1238
        %v1442 = vunpack.c.l.b16 %v1239
        %v1443 = vunpack.c.l.b16 %v1240
        %v1444 = vpack.c.b16 %v1441, %v1440
        %v1445 = vpack.c.b16 %v1443, %v1442
        %1448 = vmatprep.subr.bf16.mxu0 0
        %1449 = vmatpush1.bf16.msra.mxu0 %v1444
        %1450 = vmatprep.subr.bf16.mxu0 0
        %1451 = vmatpush1.bf16.msra.mxu0 %v1445
        %1452 = vmatprep.subr.bf16.mxu0 0
        %1453 = vmatpush1.bf16.msra.mxu0 0
        %1454 = vmatprep.subr.bf16.mxu0 0
        %1455 = vmatpush1.bf16.msra.mxu0 0
        %1456 = vmatprep.subr.bf16.mxu0 0
        %1457 = vmatpush1.bf16.msra.mxu0 0
        %1458 = vmatprep.subr.bf16.mxu0 0
        %1459 = vmatpush1.bf16.msra.mxu0 0
        %1460 = vmatprep.subr.bf16.mxu0 0
        %1461 = vmatpush1.bf16.msra.mxu0 0
        %1462 = vmatprep.subr.bf16.mxu0 0
        %1463 = vmatpush1.bf16.msra.mxu0 0
        %1464 = vmatprep.subr.bf16.mxu0 0
        %1465 = vmatpush1.bf16.msra.mxu0 0
        %1466 = vmatprep.subr.bf16.mxu0 0
        %1467 = vmatpush1.bf16.msra.mxu0 0
        %1468 = vmatprep.subr.bf16.mxu0 0
        %1469 = vmatpush1.bf16.msra.mxu0 0
        %1470 = vmatprep.subr.bf16.mxu0 0
        %1471 = vmatpush1.bf16.msra.mxu0 0
        %1472 = vmatprep.subr.bf16.mxu0 0
        %1473 = vmatpush1.bf16.msra.mxu0 0
        %1474 = vmatprep.subr.bf16.mxu0 0
        %1475 = vmatpush1.bf16.msra.mxu0 0
        %1476 = vmatprep.subr.bf16.mxu0 0
        %1477 = vmatpush1.bf16.msra.mxu0 0
        %1478 = vmatprep.subr.bf16.mxu0 0
        %1479 = vmatpush1.bf16.msra.mxu0 0
        %1480 = vmatprep.mubr.bf16.mxu0 0
        %1481 = vmatmul.mubr.bf16.gmra.mrb[0].mxu0 %v1290
        %v1482 = vpop.f32.mrb[0].mxu0
        %v1483 = vadd.f32 %v1271, %v1482
        %v1484 = vpop.f32.mrb[0].mxu0
        %v1485 = vpop.f32.mrb[0].mxu0
        %v1486 = vpop.f32.mrb[0].mxu0
        %1487 = vdwg.mxu0
        %v1488 = vmul.f32 %v1327, 0.35355338
        %v1489 = vmul.f32 %v1379, 0.35355338
        %v1490 = vmul.f32 %v1431, 0.35355338
        %v1491 = vmul.f32 %v1483, 0.35355338
        %v1492 = vpack.c.bf16 %v1488, %v1488
        %v1493 = vpack.c.bf16 %v1489, %v1489
        %v1494 = vpack.c.bf16 %v1490, %v1490
        %v1495 = vpack.c.bf16 %v1491, %v1491
        %vm1496 = vcmask 64512
        %v1498 = vsel %vm1496, %v1492, 0
        %v1501 = vsel %vm1496, %v1217, 0
        %1503 = vmatprep.subr.bf16.mxu0 0
        %1504 = vmatpush1.bf16.xpose.msra.mxu0 %v1501
        %1505 = vmatprep.subr.bf16.mxu0 0
        %1506 = vmatpush1.bf16.xpose.msra.mxu0 0
        %1507 = vmatprep.subr.bf16.mxu0 0
        %1508 = vmatpush1.bf16.xpose.msra.mxu0 0
        %1509 = vmatprep.subr.bf16.mxu0 0
        %1510 = vmatpush1.bf16.xpose.msra.mxu0 0
        %1511 = vmatprep.subr.bf16.mxu0 0
        %1512 = vmatpush1.bf16.xpose.msra.mxu0 0
        %1513 = vmatprep.subr.bf16.mxu0 0
        %1514 = vmatpush1.bf16.xpose.msra.mxu0 0
        %1515 = vmatprep.subr.bf16.mxu0 0
        %1516 = vmatpush1.bf16.xpose.msra.mxu0 0
        %1517 = vmatprep.subr.bf16.mxu0 0
        %1518 = vmatpush1.bf16.xpose.msra.mxu0 0
        %1519 = vmatprep.subr.bf16.mxu0 0
        %1520 = vmatpush1.bf16.xpose.msra.mxu0 0
        %1521 = vmatprep.subr.bf16.mxu0 0
        %1522 = vmatpush1.bf16.xpose.msra.mxu0 0
        %1523 = vmatprep.subr.bf16.mxu0 0
        %1524 = vmatpush1.bf16.xpose.msra.mxu0 0
        %1525 = vmatprep.subr.bf16.mxu0 0
        %1526 = vmatpush1.bf16.xpose.msra.mxu0 0
        %1527 = vmatprep.subr.bf16.mxu0 0
        %1528 = vmatpush1.bf16.xpose.msra.mxu0 0
        %1529 = vmatprep.subr.bf16.mxu0 0
        %1530 = vmatpush1.bf16.xpose.msra.mxu0 0
        %1531 = vmatprep.subr.bf16.mxu0 0
        %1532 = vmatpush1.bf16.xpose.msra.mxu0 0
        %1533 = vmatprep.subr.bf16.mxu0 0
        %1534 = vmatpush1.bf16.xpose.msra.mxu0 0
        %1535 = vmatprep.mubr.bf16.mxu0 0
        %1536 = vmatmul.mubr.bf16.gmra.mrb[0].mxu0 %v1498
        %v1537 = vpop.f32.mrb[0].mxu0
        %v1538 = vadd.f32 0.0, %v1537
        %v1539 = vpop.f32.mrb[0].mxu0
        %v1540 = vpop.f32.mrb[0].mxu0
        %v1541 = vpop.f32.mrb[0].mxu0
        %1542 = vdwg.mxu0
        %v1544 = vsel %vm1496, %v1493, 0
        %v1547 = vsel %vm1496, %v1218, 0
        %1549 = vmatprep.subr.bf16.mxu0 0
        %1550 = vmatpush1.bf16.xpose.msra.mxu0 %v1547
        %1551 = vmatprep.subr.bf16.mxu0 0
        %1552 = vmatpush1.bf16.xpose.msra.mxu0 0
        %1553 = vmatprep.subr.bf16.mxu0 0
        %1554 = vmatpush1.bf16.xpose.msra.mxu0 0
        %1555 = vmatprep.subr.bf16.mxu0 0
        %1556 = vmatpush1.bf16.xpose.msra.mxu0 0
        %1557 = vmatprep.subr.bf16.mxu0 0
        %1558 = vmatpush1.bf16.xpose.msra.mxu0 0
        %1559 = vmatprep.subr.bf16.mxu0 0
        %1560 = vmatpush1.bf16.xpose.msra.mxu0 0
        %1561 = vmatprep.subr.bf16.mxu0 0
        %1562 = vmatpush1.bf16.xpose.msra.mxu0 0
        %1563 = vmatprep.subr.bf16.mxu0 0
        %1564 = vmatpush1.bf16.xpose.msra.mxu0 0
        %1565 = vmatprep.subr.bf16.mxu0 0
        %1566 = vmatpush1.bf16.xpose.msra.mxu0 0
        %1567 = vmatprep.subr.bf16.mxu0 0
        %1568 = vmatpush1.bf16.xpose.msra.mxu0 0
        %1569 = vmatprep.subr.bf16.mxu0 0
        %1570 = vmatpush1.bf16.xpose.msra.mxu0 0
        %1571 = vmatprep.subr.bf16.mxu0 0
        %1572 = vmatpush1.bf16.xpose.msra.mxu0 0
        %1573 = vmatprep.subr.bf16.mxu0 0
        %1574 = vmatpush1.bf16.xpose.msra.mxu0 0
        %1575 = vmatprep.subr.bf16.mxu0 0
        %1576 = vmatpush1.bf16.xpose.msra.mxu0 0
        %1577 = vmatprep.subr.bf16.mxu0 0
        %1578 = vmatpush1.bf16.xpose.msra.mxu0 0
        %1579 = vmatprep.subr.bf16.mxu0 0
        %1580 = vmatpush1.bf16.xpose.msra.mxu0 0
        %1581 = vmatprep.mubr.bf16.mxu0 0
        %1582 = vmatmul.mubr.bf16.gmra.mrb[0].mxu0 %v1544
        %v1583 = vpop.f32.mrb[0].mxu0
        %v1584 = vadd.f32 0.0, %v1583
        %v1585 = vpop.f32.mrb[0].mxu0
        %v1586 = vpop.f32.mrb[0].mxu0
        %v1587 = vpop.f32.mrb[0].mxu0
        %1588 = vdwg.mxu0
        %v1590 = vsel %vm1496, %v1494, 0
        %v1593 = vsel %vm1496, %v1219, 0
        %1595 = vmatprep.subr.bf16.mxu0 0
        %1596 = vmatpush1.bf16.xpose.msra.mxu0 %v1593
        %1597 = vmatprep.subr.bf16.mxu0 0
        %1598 = vmatpush1.bf16.xpose.msra.mxu0 0
        %1599 = vmatprep.subr.bf16.mxu0 0
        %1600 = vmatpush1.bf16.xpose.msra.mxu0 0
        %1601 = vmatprep.subr.bf16.mxu0 0
        %1602 = vmatpush1.bf16.xpose.msra.mxu0 0
        %1603 = vmatprep.subr.bf16.mxu0 0
        %1604 = vmatpush1.bf16.xpose.msra.mxu0 0
        %1605 = vmatprep.subr.bf16.mxu0 0
        %1606 = vmatpush1.bf16.xpose.msra.mxu0 0
        %1607 = vmatprep.subr.bf16.mxu0 0
        %1608 = vmatpush1.bf16.xpose.msra.mxu0 0
        %1609 = vmatprep.subr.bf16.mxu0 0
        %1610 = vmatpush1.bf16.xpose.msra.mxu0 0
        %1611 = vmatprep.subr.bf16.mxu0 0
        %1612 = vmatpush1.bf16.xpose.msra.mxu0 0
        %1613 = vmatprep.subr.bf16.mxu0 0
        %1614 = vmatpush1.bf16.xpose.msra.mxu0 0
        %1615 = vmatprep.subr.bf16.mxu0 0
        %1616 = vmatpush1.bf16.xpose.msra.mxu0 0
        %1617 = vmatprep.subr.bf16.mxu0 0
        %1618 = vmatpush1.bf16.xpose.msra.mxu0 0
        %1619 = vmatprep.subr.bf16.mxu0 0
        %1620 = vmatpush1.bf16.xpose.msra.mxu0 0
        %1621 = vmatprep.subr.bf16.mxu0 0
        %1622 = vmatpush1.bf16.xpose.msra.mxu0 0
        %1623 = vmatprep.subr.bf16.mxu0 0
        %1624 = vmatpush1.bf16.xpose.msra.mxu0 0
        %1625 = vmatprep.subr.bf16.mxu0 0
        %1626 = vmatpush1.bf16.xpose.msra.mxu0 0
        %1627 = vmatprep.mubr.bf16.mxu0 0
        %1628 = vmatmul.mubr.bf16.gmra.mrb[0].mxu0 %v1590
        %v1629 = vpop.f32.mrb[0].mxu0
        %v1630 = vadd.f32 0.0, %v1629
        %v1631 = vpop.f32.mrb[0].mxu0
        %v1632 = vpop.f32.mrb[0].mxu0
        %v1633 = vpop.f32.mrb[0].mxu0
        %1634 = vdwg.mxu0
        %v1636 = vsel %vm1496, %v1495, 0
        %v1639 = vsel %vm1496, %v1220, 0
        %1641 = vmatprep.subr.bf16.mxu0 0
        %1642 = vmatpush1.bf16.xpose.msra.mxu0 %v1639
        %1643 = vmatprep.subr.bf16.mxu0 0
        %1644 = vmatpush1.bf16.xpose.msra.mxu0 0
        %1645 = vmatprep.subr.bf16.mxu0 0
        %1646 = vmatpush1.bf16.xpose.msra.mxu0 0
        %1647 = vmatprep.subr.bf16.mxu0 0
        %1648 = vmatpush1.bf16.xpose.msra.mxu0 0
        %1649 = vmatprep.subr.bf16.mxu0 0
        %1650 = vmatpush1.bf16.xpose.msra.mxu0 0
        %1651 = vmatprep.subr.bf16.mxu0 0
        %1652 = vmatpush1.bf16.xpose.msra.mxu0 0
        %1653 = vmatprep.subr.bf16.mxu0 0
        %1654 = vmatpush1.bf16.xpose.msra.mxu0 0
        %1655 = vmatprep.subr.bf16.mxu0 0
        %1656 = vmatpush1.bf16.xpose.msra.mxu0 0
        %1657 = vmatprep.subr.bf16.mxu0 0
        %1658 = vmatpush1.bf16.xpose.msra.mxu0 0
        %1659 = vmatprep.subr.bf16.mxu0 0
        %1660 = vmatpush1.bf16.xpose.msra.mxu0 0
        %1661 = vmatprep.subr.bf16.mxu0 0
        %1662 = vmatpush1.bf16.xpose.msra.mxu0 0
        %1663 = vmatprep.subr.bf16.mxu0 0
        %1664 = vmatpush1.bf16.xpose.msra.mxu0 0
        %1665 = vmatprep.subr.bf16.mxu0 0
        %1666 = vmatpush1.bf16.xpose.msra.mxu0 0
        %1667 = vmatprep.subr.bf16.mxu0 0
        %1668 = vmatpush1.bf16.xpose.msra.mxu0 0
        %1669 = vmatprep.subr.bf16.mxu0 0
        %1670 = vmatpush1.bf16.xpose.msra.mxu0 0
        %1671 = vmatprep.subr.bf16.mxu0 0
        %1672 = vmatpush1.bf16.xpose.msra.mxu0 0
        %1673 = vmatprep.mubr.bf16.mxu0 0
        %1674 = vmatmul.mubr.bf16.gmra.mrb[0].mxu0 %v1636
        %v1675 = vpop.f32.mrb[0].mxu0
        %v1676 = vadd.f32 0.0, %v1675
        %v1677 = vpop.f32.mrb[0].mxu0
        %v1678 = vpop.f32.mrb[0].mxu0
        %v1679 = vpop.f32.mrb[0].mxu0
        %1680 = vdwg.mxu0
        %v1681 = vsel %vm1496, %v1538, -inf
        %1682 = vmax.xlane.f32.xlu0 %v1681
        %v1683 = vpop.xlane.xlu0 %1682
        %v1684 = vsel %vm1496, %v1584, -inf
        %1685 = vmax.xlane.f32.xlu0 %v1684
        %v1686 = vpop.xlane.xlu0 %1685
        %v1687 = vsel %vm1496, %v1630, -inf
        %1688 = vmax.xlane.f32.xlu0 %v1687
        %v1689 = vpop.xlane.xlu0 %1688
        %v1690 = vsel %vm1496, %v1676, -inf
        %1691 = vmax.xlane.f32.xlu0 %v1690
        %v1692 = vpop.xlane.xlu0 %1691
        %v1693 = vsub.f32 %v1538, %v1683
        %v1694 = vsub.f32 %v1584, %v1686
        %v1695 = vsub.f32 %v1630, %v1689
        %v1696 = vsub.f32 %v1676, %v1692
        %v1697 = vmul.f32 %v1693, 1.442695
        %v1698 = vpow.pop %v1697
        %v1699 = vmul.f32 %v1694, 1.442695
        %v1700 = vpow.pop %v1699
        %v1701 = vmul.f32 %v1695, 1.442695
        %v1702 = vpow.pop %v1701
        %v1703 = vmul.f32 %v1696, 1.442695
        %v1704 = vpow.pop %v1703
        %v1705 = vsel %vm1496, %v1698, 0.0
        %1706 = vadd.xlane.f32.xlu0 %v1705
        %v1707 = vpop.xlane.xlu0 %1706
        %v1708 = vsel %vm1496, %v1700, 0.0
        %1709 = vadd.xlane.f32.xlu0 %v1708
        %v1710 = vpop.xlane.xlu0 %1709
        %v1711 = vsel %vm1496, %v1702, 0.0
        %1712 = vadd.xlane.f32.xlu0 %v1711
        %v1713 = vpop.xlane.xlu0 %1712
        %v1714 = vsel %vm1496, %v1704, 0.0
        %1715 = vadd.xlane.f32.xlu0 %v1714
        %v1716 = vpop.xlane.xlu0 %1715
        %v1717 = vrcp.pop %v1707
        %v1718 = vrcp.pop %v1710
        %v1719 = vrcp.pop %v1713
        %v1720 = vrcp.pop %v1716
        %v1721 = vmul.f32 %v1698, %v1717
        %v1722 = vmul.f32 %v1700, %v1718
        %v1723 = vmul.f32 %v1702, %v1719
        %v1724 = vmul.f32 %v1704, %v1720
        %v1725 = vpack.c.bf16 %v1721, %v1721
        %v1726 = vpack.c.bf16 %v1722, %v1722
        %v1727 = vpack.c.bf16 %v1723, %v1723
        %v1728 = vpack.c.bf16 %v1724, %v1724
        %v1730 = vsel %vm1496, %v1725, 0
        %vm1732 = vcmask 1043456
        %v1734 = vsel %vm1732, %v1221, 0
        %1736 = vmatprep.subr.bf16.mxu0 0
        %1737 = vmatpush1.bf16.msra.mxu0 %v1734
        %1738 = vmatprep.subr.bf16.mxu0 0
        %1739 = vmatpush1.bf16.msra.mxu0 0
        %1740 = vmatprep.subr.bf16.mxu0 0
        %1741 = vmatpush1.bf16.msra.mxu0 0
        %1742 = vmatprep.subr.bf16.mxu0 0
        %1743 = vmatpush1.bf16.msra.mxu0 0
        %1744 = vmatprep.subr.bf16.mxu0 0
        %1745 = vmatpush1.bf16.msra.mxu0 0
        %1746 = vmatprep.subr.bf16.mxu0 0
        %1747 = vmatpush1.bf16.msra.mxu0 0
        %1748 = vmatprep.subr.bf16.mxu0 0
        %1749 = vmatpush1.bf16.msra.mxu0 0
        %1750 = vmatprep.subr.bf16.mxu0 0
        %1751 = vmatpush1.bf16.msra.mxu0 0
        %1752 = vmatprep.subr.bf16.mxu0 0
        %1753 = vmatpush1.bf16.msra.mxu0 0
        %1754 = vmatprep.subr.bf16.mxu0 0
        %1755 = vmatpush1.bf16.msra.mxu0 0
        %1756 = vmatprep.subr.bf16.mxu0 0
        %1757 = vmatpush1.bf16.msra.mxu0 0
        %1758 = vmatprep.subr.bf16.mxu0 0
        %1759 = vmatpush1.bf16.msra.mxu0 0
        %1760 = vmatprep.subr.bf16.mxu0 0
        %1761 = vmatpush1.bf16.msra.mxu0 0
        %1762 = vmatprep.subr.bf16.mxu0 0
        %1763 = vmatpush1.bf16.msra.mxu0 0
        %1764 = vmatprep.subr.bf16.mxu0 0
        %1765 = vmatpush1.bf16.msra.mxu0 0
        %1766 = vmatprep.subr.bf16.mxu0 0
        %1767 = vmatpush1.bf16.msra.mxu0 0
        %1768 = vmatprep.mubr.bf16.mxu0 0
        %1769 = vmatmul.mubr.bf16.gmra.mrb[0].mxu0 %v1730
        %v1770 = vpop.f32.mrb[0].mxu0
        %v1771 = vadd.f32 0.0, %v1770
        %v1772 = vpop.f32.mrb[0].mxu0
        %v1773 = vpop.f32.mrb[0].mxu0
        %v1774 = vpop.f32.mrb[0].mxu0
        %1775 = vdwg.mxu0
        %v1777 = vsel %vm1496, %v1726, 0
        %v1780 = vsel %vm1732, %v1222, 0
        %1782 = vmatprep.subr.bf16.mxu0 0
        %1783 = vmatpush1.bf16.msra.mxu0 %v1780
        %1784 = vmatprep.subr.bf16.mxu0 0
        %1785 = vmatpush1.bf16.msra.mxu0 0
        %1786 = vmatprep.subr.bf16.mxu0 0
        %1787 = vmatpush1.bf16.msra.mxu0 0
        %1788 = vmatprep.subr.bf16.mxu0 0
        %1789 = vmatpush1.bf16.msra.mxu0 0
        %1790 = vmatprep.subr.bf16.mxu0 0
        %1791 = vmatpush1.bf16.msra.mxu0 0
        %1792 = vmatprep.subr.bf16.mxu0 0
        %1793 = vmatpush1.bf16.msra.mxu0 0
        %1794 = vmatprep.subr.bf16.mxu0 0
        %1795 = vmatpush1.bf16.msra.mxu0 0
        %1796 = vmatprep.subr.bf16.mxu0 0
        %1797 = vmatpush1.bf16.msra.mxu0 0
        %1798 = vmatprep.subr.bf16.mxu0 0
        %1799 = vmatpush1.bf16.msra.mxu0 0
        %1800 = vmatprep.subr.bf16.mxu0 0
        %1801 = vmatpush1.bf16.msra.mxu0 0
        %1802 = vmatprep.subr.bf16.mxu0 0
        %1803 = vmatpush1.bf16.msra.mxu0 0
        %1804 = vmatprep.subr.bf16.mxu0 0
        %1805 = vmatpush1.bf16.msra.mxu0 0
        %1806 = vmatprep.subr.bf16.mxu0 0
        %1807 = vmatpush1.bf16.msra.mxu0 0
        %1808 = vmatprep.subr.bf16.mxu0 0
        %1809 = vmatpush1.bf16.msra.mxu0 0
        %1810 = vmatprep.subr.bf16.mxu0 0
        %1811 = vmatpush1.bf16.msra.mxu0 0
        %1812 = vmatprep.subr.bf16.mxu0 0
        %1813 = vmatpush1.bf16.msra.mxu0 0
        %1814 = vmatprep.mubr.bf16.mxu0 0
        %1815 = vmatmul.mubr.bf16.gmra.mrb[0].mxu0 %v1777
        %v1816 = vpop.f32.mrb[0].mxu0
        %v1817 = vadd.f32 0.0, %v1816
        %v1818 = vpop.f32.mrb[0].mxu0
        %v1819 = vpop.f32.mrb[0].mxu0
        %v1820 = vpop.f32.mrb[0].mxu0
        %1821 = vdwg.mxu0
        %v1823 = vsel %vm1496, %v1727, 0
        %v1826 = vsel %vm1732, %v1223, 0
        %1828 = vmatprep.subr.bf16.mxu0 0
        %1829 = vmatpush1.bf16.msra.mxu0 %v1826
        %1830 = vmatprep.subr.bf16.mxu0 0
        %1831 = vmatpush1.bf16.msra.mxu0 0
        %1832 = vmatprep.subr.bf16.mxu0 0
        %1833 = vmatpush1.bf16.msra.mxu0 0
        %1834 = vmatprep.subr.bf16.mxu0 0
        %1835 = vmatpush1.bf16.msra.mxu0 0
        %1836 = vmatprep.subr.bf16.mxu0 0
        %1837 = vmatpush1.bf16.msra.mxu0 0
        %1838 = vmatprep.subr.bf16.mxu0 0
        %1839 = vmatpush1.bf16.msra.mxu0 0
        %1840 = vmatprep.subr.bf16.mxu0 0
        %1841 = vmatpush1.bf16.msra.mxu0 0
        %1842 = vmatprep.subr.bf16.mxu0 0
        %1843 = vmatpush1.bf16.msra.mxu0 0
        %1844 = vmatprep.subr.bf16.mxu0 0
        %1845 = vmatpush1.bf16.msra.mxu0 0
        %1846 = vmatprep.subr.bf16.mxu0 0
        %1847 = vmatpush1.bf16.msra.mxu0 0
        %1848 = vmatprep.subr.bf16.mxu0 0
        %1849 = vmatpush1.bf16.msra.mxu0 0
        %1850 = vmatprep.subr.bf16.mxu0 0
        %1851 = vmatpush1.bf16.msra.mxu0 0
        %1852 = vmatprep.subr.bf16.mxu0 0
        %1853 = vmatpush1.bf16.msra.mxu0 0
        %1854 = vmatprep.subr.bf16.mxu0 0
        %1855 = vmatpush1.bf16.msra.mxu0 0
        %1856 = vmatprep.subr.bf16.mxu0 0
        %1857 = vmatpush1.bf16.msra.mxu0 0
        %1858 = vmatprep.subr.bf16.mxu0 0
        %1859 = vmatpush1.bf16.msra.mxu0 0
        %1860 = vmatprep.mubr.bf16.mxu0 0
        %1861 = vmatmul.mubr.bf16.gmra.mrb[0].mxu0 %v1823
        %v1862 = vpop.f32.mrb[0].mxu0
        %v1863 = vadd.f32 0.0, %v1862
        %v1864 = vpop.f32.mrb[0].mxu0
        %v1865 = vpop.f32.mrb[0].mxu0
        %v1866 = vpop.f32.mrb[0].mxu0
        %1867 = vdwg.mxu0
        %v1869 = vsel %vm1496, %v1728, 0
        %v1872 = vsel %vm1732, %v1224, 0
        %1874 = vmatprep.subr.bf16.mxu0 0
        %1875 = vmatpush1.bf16.msra.mxu0 %v1872
        %1876 = vmatprep.subr.bf16.mxu0 0
        %1877 = vmatpush1.bf16.msra.mxu0 0
        %1878 = vmatprep.subr.bf16.mxu0 0
        %1879 = vmatpush1.bf16.msra.mxu0 0
        %1880 = vmatprep.subr.bf16.mxu0 0
        %1881 = vmatpush1.bf16.msra.mxu0 0
        %1882 = vmatprep.subr.bf16.mxu0 0
        %1883 = vmatpush1.bf16.msra.mxu0 0
        %1884 = vmatprep.subr.bf16.mxu0 0
        %1885 = vmatpush1.bf16.msra.mxu0 0
        %1886 = vmatprep.subr.bf16.mxu0 0
        %1887 = vmatpush1.bf16.msra.mxu0 0
        %1888 = vmatprep.subr.bf16.mxu0 0
        %1889 = vmatpush1.bf16.msra.mxu0 0
        %1890 = vmatprep.subr.bf16.mxu0 0
        %1891 = vmatpush1.bf16.msra.mxu0 0
        %1892 = vmatprep.subr.bf16.mxu0 0
        %1893 = vmatpush1.bf16.msra.mxu0 0
        %1894 = vmatprep.subr.bf16.mxu0 0
        %1895 = vmatpush1.bf16.msra.mxu0 0
        %1896 = vmatprep.subr.bf16.mxu0 0
        %1897 = vmatpush1.bf16.msra.mxu0 0
        %1898 = vmatprep.subr.bf16.mxu0 0
        %1899 = vmatpush1.bf16.msra.mxu0 0
        %1900 = vmatprep.subr.bf16.mxu0 0
        %1901 = vmatpush1.bf16.msra.mxu0 0
        %1902 = vmatprep.subr.bf16.mxu0 0
        %1903 = vmatpush1.bf16.msra.mxu0 0
        %1904 = vmatprep.subr.bf16.mxu0 0
        %1905 = vmatpush1.bf16.msra.mxu0 0
        %1906 = vmatprep.mubr.bf16.mxu0 0
        %1907 = vmatmul.mubr.bf16.gmra.mrb[0].mxu0 %v1869
        %v1908 = vpop.f32.mrb[0].mxu0
        %v1909 = vadd.f32 0.0, %v1908
        %v1910 = vpop.f32.mrb[0].mxu0
        %v1911 = vpop.f32.mrb[0].mxu0
        %v1912 = vpop.f32.mrb[0].mxu0
        %1913 = vdwg.mxu0
        %v1915 = vlaneseq
        %v1916 = vshrl.u32 %v1915, 7
        %v1917 = vsub.s32 0, %v1916
        %v1918 = vrot.slane %v1249, %v1917
        %v1920 = vadd.f32 %v1918, %v1215
        %v1921 = vpack.c.bf16 %v1771, %v1771
        %v1923 = vsel %vm1496, %v1921, 0
        %v1926 = vsel %vm1732, %v1245, 0
        %1928 = vmatprep.subr.bf16.mxu0 0
        %1929 = vmatpush1.bf16.msra.mxu0 %v1926
        %1930 = vmatprep.subr.bf16.mxu0 0
        %1931 = vmatpush1.bf16.msra.mxu0 0
        %1932 = vmatprep.subr.bf16.mxu0 0
        %1933 = vmatpush1.bf16.msra.mxu0 0
        %1934 = vmatprep.subr.bf16.mxu0 0
        %1935 = vmatpush1.bf16.msra.mxu0 0
        %1936 = vmatprep.subr.bf16.mxu0 0
        %1937 = vmatpush1.bf16.msra.mxu0 0
        %1938 = vmatprep.subr.bf16.mxu0 0
        %1939 = vmatpush1.bf16.msra.mxu0 0
        %1940 = vmatprep.subr.bf16.mxu0 0
        %1941 = vmatpush1.bf16.msra.mxu0 0
        %1942 = vmatprep.subr.bf16.mxu0 0
        %1943 = vmatpush1.bf16.msra.mxu0 0
        %1944 = vmatprep.subr.bf16.mxu0 0
        %1945 = vmatpush1.bf16.msra.mxu0 0
        %1946 = vmatprep.subr.bf16.mxu0 0
        %1947 = vmatpush1.bf16.msra.mxu0 0
        %1948 = vmatprep.subr.bf16.mxu0 0
        %1949 = vmatpush1.bf16.msra.mxu0 0
        %1950 = vmatprep.subr.bf16.mxu0 0
        %1951 = vmatpush1.bf16.msra.mxu0 0
        %1952 = vmatprep.subr.bf16.mxu0 0
        %1953 = vmatpush1.bf16.msra.mxu0 0
        %1954 = vmatprep.subr.bf16.mxu0 0
        %1955 = vmatpush1.bf16.msra.mxu0 0
        %1956 = vmatprep.subr.bf16.mxu0 0
        %1957 = vmatpush1.bf16.msra.mxu0 0
        %1958 = vmatprep.subr.bf16.mxu0 0
        %1959 = vmatpush1.bf16.msra.mxu0 0
        %1960 = vmatprep.mubr.bf16.mxu0 0
        %1961 = vmatmul.mubr.bf16.gmra.mrb[0].mxu0 %v1923
        %v1962 = vpop.f32.mrb[0].mxu0
        %v1963 = vadd.f32 0.0, %v1962
        %v1964 = vpop.f32.mrb[0].mxu0
        %v1965 = vpop.f32.mrb[0].mxu0
        %v1966 = vpop.f32.mrb[0].mxu0
        %1967 = vdwg.mxu0
        %v1968 = vadd.f32 %v1920, %v1963
        %v1969 = vpack.c.bf16 %v1817, %v1817
        %v1971 = vsel %vm1496, %v1969, 0
        %v1974 = vsel %vm1732, %v1246, 0
        %1976 = vmatprep.subr.bf16.mxu0 0
        %1977 = vmatpush1.bf16.msra.mxu0 %v1974
        %1978 = vmatprep.subr.bf16.mxu0 0
        %1979 = vmatpush1.bf16.msra.mxu0 0
        %1980 = vmatprep.subr.bf16.mxu0 0
        %1981 = vmatpush1.bf16.msra.mxu0 0
        %1982 = vmatprep.subr.bf16.mxu0 0
        %1983 = vmatpush1.bf16.msra.mxu0 0
        %1984 = vmatprep.subr.bf16.mxu0 0
        %1985 = vmatpush1.bf16.msra.mxu0 0
        %1986 = vmatprep.subr.bf16.mxu0 0
        %1987 = vmatpush1.bf16.msra.mxu0 0
        %1988 = vmatprep.subr.bf16.mxu0 0
        %1989 = vmatpush1.bf16.msra.mxu0 0
        %1990 = vmatprep.subr.bf16.mxu0 0
        %1991 = vmatpush1.bf16.msra.mxu0 0
        %1992 = vmatprep.subr.bf16.mxu0 0
        %1993 = vmatpush1.bf16.msra.mxu0 0
        %1994 = vmatprep.subr.bf16.mxu0 0
        %1995 = vmatpush1.bf16.msra.mxu0 0
        %1996 = vmatprep.subr.bf16.mxu0 0
        %1997 = vmatpush1.bf16.msra.mxu0 0
        %1998 = vmatprep.subr.bf16.mxu0 0
        %1999 = vmatpush1.bf16.msra.mxu0 0
        %2000 = vmatprep.subr.bf16.mxu0 0
        %2001 = vmatpush1.bf16.msra.mxu0 0
        %2002 = vmatprep.subr.bf16.mxu0 0
        %2003 = vmatpush1.bf16.msra.mxu0 0
        %2004 = vmatprep.subr.bf16.mxu0 0
        %2005 = vmatpush1.bf16.msra.mxu0 0
        %2006 = vmatprep.subr.bf16.mxu0 0
        %2007 = vmatpush1.bf16.msra.mxu0 0
        %2008 = vmatprep.mubr.bf16.mxu0 0
        %2009 = vmatmul.mubr.bf16.gmra.mrb[0].mxu0 %v1971
        %v2010 = vpop.f32.mrb[0].mxu0
        %v2011 = vadd.f32 0.0, %v2010
        %v2012 = vpop.f32.mrb[0].mxu0
        %v2013 = vpop.f32.mrb[0].mxu0
        %v2014 = vpop.f32.mrb[0].mxu0
        %2015 = vdwg.mxu0
        %v2016 = vadd.f32 %v1968, %v2011
        %v2017 = vpack.c.bf16 %v1863, %v1863
        %v2019 = vsel %vm1496, %v2017, 0
        %v2022 = vsel %vm1732, %v1247, 0
        %2024 = vmatprep.subr.bf16.mxu0 0
        %2025 = vmatpush1.bf16.msra.mxu0 %v2022
        %2026 = vmatprep.subr.bf16.mxu0 0
        %2027 = vmatpush1.bf16.msra.mxu0 0
        %2028 = vmatprep.subr.bf16.mxu0 0
        %2029 = vmatpush1.bf16.msra.mxu0 0
        %2030 = vmatprep.subr.bf16.mxu0 0
        %2031 = vmatpush1.bf16.msra.mxu0 0
        %2032 = vmatprep.subr.bf16.mxu0 0
        %2033 = vmatpush1.bf16.msra.mxu0 0
        %2034 = vmatprep.subr.bf16.mxu0 0
        %2035 = vmatpush1.bf16.msra.mxu0 0
        %2036 = vmatprep.subr.bf16.mxu0 0
        %2037 = vmatpush1.bf16.msra.mxu0 0
        %2038 = vmatprep.subr.bf16.mxu0 0
        %2039 = vmatpush1.bf16.msra.mxu0 0
        %2040 = vmatprep.subr.bf16.mxu0 0
        %2041 = vmatpush1.bf16.msra.mxu0 0
        %2042 = vmatprep.subr.bf16.mxu0 0
        %2043 = vmatpush1.bf16.msra.mxu0 0
        %2044 = vmatprep.subr.bf16.mxu0 0
        %2045 = vmatpush1.bf16.msra.mxu0 0
        %2046 = vmatprep.subr.bf16.mxu0 0
        %2047 = vmatpush1.bf16.msra.mxu0 0
        %2048 = vmatprep.subr.bf16.mxu0 0
        %2049 = vmatpush1.bf16.msra.mxu0 0
        %2050 = vmatprep.subr.bf16.mxu0 0
        %2051 = vmatpush1.bf16.msra.mxu0 0
        %2052 = vmatprep.subr.bf16.mxu0 0
        %2053 = vmatpush1.bf16.msra.mxu0 0
        %2054 = vmatprep.subr.bf16.mxu0 0
        %2055 = vmatpush1.bf16.msra.mxu0 0
        %2056 = vmatprep.mubr.bf16.mxu0 0
        %2057 = vmatmul.mubr.bf16.gmra.mrb[0].mxu0 %v2019
        %v2058 = vpop.f32.mrb[0].mxu0
        %v2059 = vadd.f32 0.0, %v2058
        %v2060 = vpop.f32.mrb[0].mxu0
        %v2061 = vpop.f32.mrb[0].mxu0
        %v2062 = vpop.f32.mrb[0].mxu0
        %2063 = vdwg.mxu0
        %v2064 = vadd.f32 %v2016, %v2059
        %v2065 = vpack.c.bf16 %v1909, %v1909
        %v2067 = vsel %vm1496, %v2065, 0
        %v2070 = vsel %vm1732, %v1248, 0
        %2072 = vmatprep.subr.bf16.mxu0 0
        %2073 = vmatpush1.bf16.msra.mxu0 %v2070
        %2074 = vmatprep.subr.bf16.mxu0 0
        %2075 = vmatpush1.bf16.msra.mxu0 0
        %2076 = vmatprep.subr.bf16.mxu0 0
        %2077 = vmatpush1.bf16.msra.mxu0 0
        %2078 = vmatprep.subr.bf16.mxu0 0
        %2079 = vmatpush1.bf16.msra.mxu0 0
        %2080 = vmatprep.subr.bf16.mxu0 0
        %2081 = vmatpush1.bf16.msra.mxu0 0
        %2082 = vmatprep.subr.bf16.mxu0 0
        %2083 = vmatpush1.bf16.msra.mxu0 0
        %2084 = vmatprep.subr.bf16.mxu0 0
        %2085 = vmatpush1.bf16.msra.mxu0 0
        %2086 = vmatprep.subr.bf16.mxu0 0
        %2087 = vmatpush1.bf16.msra.mxu0 0
        %2088 = vmatprep.subr.bf16.mxu0 0
        %2089 = vmatpush1.bf16.msra.mxu0 0
        %2090 = vmatprep.subr.bf16.mxu0 0
        %2091 = vmatpush1.bf16.msra.mxu0 0
        %2092 = vmatprep.subr.bf16.mxu0 0
        %2093 = vmatpush1.bf16.msra.mxu0 0
        %2094 = vmatprep.subr.bf16.mxu0 0
        %2095 = vmatpush1.bf16.msra.mxu0 0
        %2096 = vmatprep.subr.bf16.mxu0 0
        %2097 = vmatpush1.bf16.msra.mxu0 0
        %2098 = vmatprep.subr.bf16.mxu0 0
        %2099 = vmatpush1.bf16.msra.mxu0 0
        %2100 = vmatprep.subr.bf16.mxu0 0
        %2101 = vmatpush1.bf16.msra.mxu0 0
        %2102 = vmatprep.subr.bf16.mxu0 0
        %2103 = vmatpush1.bf16.msra.mxu0 0
        %2104 = vmatprep.mubr.bf16.mxu0 0
        %2105 = vmatmul.mubr.bf16.gmra.mrb[0].mxu0 %v2067
        %v2106 = vpop.f32.mrb[0].mxu0
        %v2107 = vadd.f32 0.0, %v2106
        %v2108 = vpop.f32.mrb[0].mxu0
        %v2109 = vpop.f32.mrb[0].mxu0
        %v2110 = vpop.f32.mrb[0].mxu0
        %2111 = vdwg.mxu0
        %v2112 = vadd.f32 %v2064, %v2107
        %v2113 = vsel %vm1288, %v2112, 0.0
        %2114 = vadd.xlane.f32.xlu0 %v2113
        %v2115 = vpop.xlane.xlu0 %2114
        %v2116 = vrcp.pop 32.0
        %v2117 = vmul.f32 %v2115, %v2116
        %v2118 = vsub.f32 %v2112, %v2117
        %v2119 = vmul.f32 %v2118, %v2118
        %v2120 = vsel %vm1288, %v2119, 0.0
        %2121 = vadd.xlane.f32.xlu0 %v2120
        %v2122 = vpop.xlane.xlu0 %2121
        %v2123 = vmul.f32 %v2122, %v2116
        %v2125 = vlaneseq
        %v2126 = vshrl.u32 %v2125, 7
        %v2127 = vsub.s32 0, %v2126
        %v2128 = vrot.slane %v1250, %v2127
        %v2130 = vmul.f32 %v2128, %v2118
        %v2131 = vadd.f32 %v2123, 1e-12
        %v2132 = vrsqrt.pop %v2131
        %v2133 = vmul.f32 %v2130, %v2132
        %v2135 = vlaneseq
        %v2136 = vshrl.u32 %v2135, 7
        %v2137 = vsub.s32 0, %v2136
        %v2138 = vrot.slane %v1251, %v2137
        %v2140 = vadd.f32 %v2133, %v2138
        %v2141 = vsel %vm1496, %v1721, 0.0
        %v2142 = vsel %vm1496, %v1722, 0.0
        %v2143 = vadd.f32 %v2141, %v2142
        %v2144 = vsel %vm1496, %v1723, 0.0
        %v2145 = vadd.f32 %v2143, %v2144
        %v2146 = vsel %vm1496, %v1724, 0.0
        %v2147 = vadd.f32 %v2145, %v2146
        %v2148 = vrcp.pop 4.0
        %v2149 = vmul.f32 %v2147, %v2148
        %v2150 = vpack.c.bf16 %v2140, %v2140
        %v2151 = vld [vmem:[%s1036] sm:$0xf]
        %v2152 = vld [vmem:[%s1036 + $0x4] sm:$0xf]
        %v2153 = vld [vmem:[%s1036 + $0x8] sm:$0xf]
        %v2154 = vld [vmem:[%s1036 + $0xc] sm:$0xf]
        %v2155 = vld [vmem:[%s1036 + $0x10] sm:$0xf]
        %v2156 = vld [vmem:[%s1036 + $0x14] sm:$0xf]
        %v2157 = vld [vmem:[%s1036 + $0x18] sm:$0xf]
        %v2158 = vld [vmem:[%s1036 + $0x1c] sm:$0xf]
        %v2159 = vld [vmem:[%s1045] sm:$0xf]
        %v2160 = vld [vmem:[%s1045 + $0x4] sm:$0xf]
        %v2161 = vld [vmem:[%s1045 + $0x8] sm:$0xf]
        %v2162 = vld [vmem:[%s1045 + $0xc] sm:$0xf]
        %v2163 = vld [vmem:[%s1045 + $0x10] sm:$0xf]
        %v2164 = vld [vmem:[%s1045 + $0x14] sm:$0xf]
        %v2165 = vld [vmem:[%s1045 + $0x18] sm:$0xf]
        %v2166 = vld [vmem:[%s1045 + $0x1c] sm:$0xf]
        %v2167 = vld [vmem:[#allocation20] sm:$0xf]
        %v2168 = vld [vmem:[#allocation20 + $0x4] sm:$0xf]
        %v2169 = vld [vmem:[#allocation20 + $0x8] sm:$0xf]
        %v2170 = vld [vmem:[#allocation20 + $0xc] sm:$0xf]
        %v2171 = vld [vmem:[#allocation20 + $0x10] sm:$0xf]
        %v2172 = vld [vmem:[#allocation20 + $0x14] sm:$0xf]
        %v2173 = vld [vmem:[#allocation20 + $0x18] sm:$0xf]
        %v2174 = vld [vmem:[#allocation20 + $0x1c] sm:$0xf]
        %v2175 = vld [vmem:[#allocation20 + $0x20] sm:$0xf]
        %v2176 = vld [vmem:[#allocation20 + $0x24] sm:$0xf]
        %v2177 = vld [vmem:[#allocation20 + $0x28] sm:$0xf]
        %v2178 = vld [vmem:[#allocation20 + $0x2c] sm:$0xf]
        %v2179 = vld [vmem:[#allocation20 + $0x30] sm:$0xf]
        %v2180 = vld [vmem:[#allocation20 + $0x34] sm:$0xf]
        %v2181 = vld [vmem:[#allocation20 + $0x38] sm:$0xf]
        %v2182 = vld [vmem:[#allocation20 + $0x3c] sm:$0xf]
        %v2183 = vld [vmem:[#allocation22] sm:$0x1]
        %v2184 = vld [vmem:[#allocation22 + $0x1] sm:$0x1]
        %v2185 = vld [vmem:[#allocation22 + $0x2] sm:$0x1]
        %v2186 = vld [vmem:[#allocation22 + $0x3] sm:$0x1]
        %v2187 = vld [vmem:[#allocation23] sm:$0xf]
        %v2188 = vld [vmem:[#allocation23 + $0x4] sm:$0xf]
        %v2189 = vld [vmem:[#allocation23 + $0x8] sm:$0xf]
        %v2190 = vld [vmem:[#allocation23 + $0xc] sm:$0xf]
        %v2191 = vld [vmem:[#allocation25] sm:$0x1]
        %v2192 = vld [vmem:[#allocation26] sm:$0x1]
        %v2193 = vld [vmem:[#allocation28] sm:$0x1]
        %v2198 = vlaneseq
        %v2199 = vshrl.u32 %v2198, 7
        %v2200 = vsub.s32 0, %v2199
        %v2201 = vrot.slane %v2183, %v2200
        %v2202 = vlaneseq
        %v2203 = vshrl.u32 %v2202, 7
        %v2204 = vsub.s32 0, %v2203
        %v2205 = vrot.slane %v2184, %v2204
        %v2206 = vlaneseq
        %v2207 = vshrl.u32 %v2206, 7
        %v2208 = vsub.s32 0, %v2207
        %v2209 = vrot.slane %v2185, %v2208
        %v2210 = vlaneseq
        %v2211 = vshrl.u32 %v2210, 7
        %v2212 = vsub.s32 0, %v2211
        %v2213 = vrot.slane %v2186, %v2212
        %v2222 = vunpack.c.l.b16 %v2167
        %v2223 = vunpack.c.l.b16 %v2168
        %v2224 = vunpack.c.l.b16 %v2169
        %v2225 = vunpack.c.l.b16 %v2170
        %v2226 = vpack.c.b16 %v2223, %v2222
        %v2227 = vpack.c.b16 %v2225, %v2224
        %v2231 = vsel %vm1288, %v2150, 0
        %2233 = vmatprep.subr.bf16.mxu0 0
        %2234 = vmatpush1.bf16.msra.mxu0 %v2226
        %2235 = vmatprep.subr.bf16.mxu0 0
        %2236 = vmatpush1.bf16.msra.mxu0 %v2227
        %2237 = vmatprep.subr.bf16.mxu0 0
        %2238 = vmatpush1.bf16.msra.mxu0 0
        %2239 = vmatprep.subr.bf16.mxu0 0
        %2240 = vmatpush1.bf16.msra.mxu0 0
        %2241 = vmatprep.subr.bf16.mxu0 0
        %2242 = vmatpush1.bf16.msra.mxu0 0
        %2243 = vmatprep.subr.bf16.mxu0 0
        %2244 = vmatpush1.bf16.msra.mxu0 0
        %2245 = vmatprep.subr.bf16.mxu0 0
        %2246 = vmatpush1.bf16.msra.mxu0 0
        %2247 = vmatprep.subr.bf16.mxu0 0
        %2248 = vmatpush1.bf16.msra.mxu0 0
        %2249 = vmatprep.subr.bf16.mxu0 0
        %2250 = vmatpush1.bf16.msra.mxu0 0
        %2251 = vmatprep.subr.bf16.mxu0 0
        %2252 = vmatpush1.bf16.msra.mxu0 0
        %2253 = vmatprep.subr.bf16.mxu0 0
        %2254 = vmatpush1.bf16.msra.mxu0 0
        %2255 = vmatprep.subr.bf16.mxu0 0
        %2256 = vmatpush1.bf16.msra.mxu0 0
        %2257 = vmatprep.subr.bf16.mxu0 0
        %2258 = vmatpush1.bf16.msra.mxu0 0
        %2259 = vmatprep.subr.bf16.mxu0 0
        %2260 = vmatpush1.bf16.msra.mxu0 0
        %2261 = vmatprep.subr.bf16.mxu0 0
        %2262 = vmatpush1.bf16.msra.mxu0 0
        %2263 = vmatprep.subr.bf16.mxu0 0
        %2264 = vmatpush1.bf16.msra.mxu0 0
        %2265 = vmatprep.mubr.bf16.mxu0 0
        %2266 = vmatmul.mubr.bf16.gmra.mrb[0].mxu0 %v2231
        %v2267 = vpop.f32.mrb[0].mxu0
        %v2268 = vadd.f32 %v2201, %v2267
        %v2269 = vpop.f32.mrb[0].mxu0
        %v2270 = vpop.f32.mrb[0].mxu0
        %v2271 = vpop.f32.mrb[0].mxu0
        %2272 = vdwg.mxu0
        %v2277 = vunpack.c.l.b16 %v2171
        %v2278 = vunpack.c.l.b16 %v2172
        %v2279 = vunpack.c.l.b16 %v2173
        %v2280 = vunpack.c.l.b16 %v2174
        %v2281 = vpack.c.b16 %v2278, %v2277
        %v2282 = vpack.c.b16 %v2280, %v2279
        %2285 = vmatprep.subr.bf16.mxu0 0
        %2286 = vmatpush1.bf16.msra.mxu0 %v2281
        %2287 = vmatprep.subr.bf16.mxu0 0
        %2288 = vmatpush1.bf16.msra.mxu0 %v2282
        %2289 = vmatprep.subr.bf16.mxu0 0
        %2290 = vmatpush1.bf16.msra.mxu0 0
        %2291 = vmatprep.subr.bf16.mxu0 0
        %2292 = vmatpush1.bf16.msra.mxu0 0
        %2293 = vmatprep.subr.bf16.mxu0 0
        %2294 = vmatpush1.bf16.msra.mxu0 0
        %2295 = vmatprep.subr.bf16.mxu0 0
        %2296 = vmatpush1.bf16.msra.mxu0 0
        %2297 = vmatprep.subr.bf16.mxu0 0
        %2298 = vmatpush1.bf16.msra.mxu0 0
        %2299 = vmatprep.subr.bf16.mxu0 0
        %2300 = vmatpush1.bf16.msra.mxu0 0
        %2301 = vmatprep.subr.bf16.mxu0 0
        %2302 = vmatpush1.bf16.msra.mxu0 0
        %2303 = vmatprep.subr.bf16.mxu0 0
        %2304 = vmatpush1.bf16.msra.mxu0 0
        %2305 = vmatprep.subr.bf16.mxu0 0
        %2306 = vmatpush1.bf16.msra.mxu0 0
        %2307 = vmatprep.subr.bf16.mxu0 0
        %2308 = vmatpush1.bf16.msra.mxu0 0
        %2309 = vmatprep.subr.bf16.mxu0 0
        %2310 = vmatpush1.bf16.msra.mxu0 0
        %2311 = vmatprep.subr.bf16.mxu0 0
        %2312 = vmatpush1.bf16.msra.mxu0 0
        %2313 = vmatprep.subr.bf16.mxu0 0
        %2314 = vmatpush1.bf16.msra.mxu0 0
        %2315 = vmatprep.subr.bf16.mxu0 0
        %2316 = vmatpush1.bf16.msra.mxu0 0
        %2317 = vmatprep.mubr.bf16.mxu0 0
        %2318 = vmatmul.mubr.bf16.gmra.mrb[0].mxu0 %v2231
        %v2319 = vpop.f32.mrb[0].mxu0
        %v2320 = vadd.f32 %v2205, %v2319
        %v2321 = vpop.f32.mrb[0].mxu0
        %v2322 = vpop.f32.mrb[0].mxu0
        %v2323 = vpop.f32.mrb[0].mxu0
        %2324 = vdwg.mxu0
        %v2329 = vunpack.c.l.b16 %v2175
        %v2330 = vunpack.c.l.b16 %v2176
        %v2331 = vunpack.c.l.b16 %v2177
        %v2332 = vunpack.c.l.b16 %v2178
        %v2333 = vpack.c.b16 %v2330, %v2329
        %v2334 = vpack.c.b16 %v2332, %v2331
        %2337 = vmatprep.subr.bf16.mxu0 0
        %2338 = vmatpush1.bf16.msra.mxu0 %v2333
        %2339 = vmatprep.subr.bf16.mxu0 0
        %2340 = vmatpush1.bf16.msra.mxu0 %v2334
        %2341 = vmatprep.subr.bf16.mxu0 0
        %2342 = vmatpush1.bf16.msra.mxu0 0
        %2343 = vmatprep.subr.bf16.mxu0 0
        %2344 = vmatpush1.bf16.msra.mxu0 0
        %2345 = vmatprep.subr.bf16.mxu0 0
        %2346 = vmatpush1.bf16.msra.mxu0 0
        %2347 = vmatprep.subr.bf16.mxu0 0
        %2348 = vmatpush1.bf16.msra.mxu0 0
        %2349 = vmatprep.subr.bf16.mxu0 0
        %2350 = vmatpush1.bf16.msra.mxu0 0
        %2351 = vmatprep.subr.bf16.mxu0 0
        %2352 = vmatpush1.bf16.msra.mxu0 0
        %2353 = vmatprep.subr.bf16.mxu0 0
        %2354 = vmatpush1.bf16.msra.mxu0 0
        %2355 = vmatprep.subr.bf16.mxu0 0
        %2356 = vmatpush1.bf16.msra.mxu0 0
        %2357 = vmatprep.subr.bf16.mxu0 0
        %2358 = vmatpush1.bf16.msra.mxu0 0
        %2359 = vmatprep.subr.bf16.mxu0 0
        %2360 = vmatpush1.bf16.msra.mxu0 0
        %2361 = vmatprep.subr.bf16.mxu0 0
        %2362 = vmatpush1.bf16.msra.mxu0 0
        %2363 = vmatprep.subr.bf16.mxu0 0
        %2364 = vmatpush1.bf16.msra.mxu0 0
        %2365 = vmatprep.subr.bf16.mxu0 0
        %2366 = vmatpush1.bf16.msra.mxu0 0
        %2367 = vmatprep.subr.bf16.mxu0 0
        %2368 = vmatpush1.bf16.msra.mxu0 0
        %2369 = vmatprep.mubr.bf16.mxu0 0
        %2370 = vmatmul.mubr.bf16.gmra.mrb[0].mxu0 %v2231
        %v2371 = vpop.f32.mrb[0].mxu0
        %v2372 = vadd.f32 %v2209, %v2371
        %v2373 = vpop.f32.mrb[0].mxu0
        %v2374 = vpop.f32.mrb[0].mxu0
        %v2375 = vpop.f32.mrb[0].mxu0
        %2376 = vdwg.mxu0
        %v2381 = vunpack.c.l.b16 %v2179
        %v2382 = vunpack.c.l.b16 %v2180
        %v2383 = vunpack.c.l.b16 %v2181
        %v2384 = vunpack.c.l.b16 %v2182
        %v2385 = vpack.c.b16 %v2382, %v2381
        %v2386 = vpack.c.b16 %v2384, %v2383
        %2389 = vmatprep.subr.bf16.mxu0 0
        %2390 = vmatpush1.bf16.msra.mxu0 %v2385
        %2391 = vmatprep.subr.bf16.mxu0 0
        %2392 = vmatpush1.bf16.msra.mxu0 %v2386
        %2393 = vmatprep.subr.bf16.mxu0 0
        %2394 = vmatpush1.bf16.msra.mxu0 0
        %2395 = vmatprep.subr.bf16.mxu0 0
        %2396 = vmatpush1.bf16.msra.mxu0 0
        %2397 = vmatprep.subr.bf16.mxu0 0
        %2398 = vmatpush1.bf16.msra.mxu0 0
        %2399 = vmatprep.subr.bf16.mxu0 0
        %2400 = vmatpush1.bf16.msra.mxu0 0
        %2401 = vmatprep.subr.bf16.mxu0 0
        %2402 = vmatpush1.bf16.msra.mxu0 0
        %2403 = vmatprep.subr.bf16.mxu0 0
        %2404 = vmatpush1.bf16.msra.mxu0 0
        %2405 = vmatprep.subr.bf16.mxu0 0
        %2406 = vmatpush1.bf16.msra.mxu0 0
        %2407 = vmatprep.subr.bf16.mxu0 0
        %2408 = vmatpush1.bf16.msra.mxu0 0
        %2409 = vmatprep.subr.bf16.mxu0 0
        %2410 = vmatpush1.bf16.msra.mxu0 0
        %2411 = vmatprep.subr.bf16.mxu0 0
        %2412 = vmatpush1.bf16.msra.mxu0 0
        %2413 = vmatprep.subr.bf16.mxu0 0
        %2414 = vmatpush1.bf16.msra.mxu0 0
        %2415 = vmatprep.subr.bf16.mxu0 0
        %2416 = vmatpush1.bf16.msra.mxu0 0
        %2417 = vmatprep.subr.bf16.mxu0 0
        %2418 = vmatpush1.bf16.msra.mxu0 0
        %2419 = vmatprep.subr.bf16.mxu0 0
        %2420 = vmatpush1.bf16.msra.mxu0 0
        %2421 = vmatprep.mubr.bf16.mxu0 0
        %2422 = vmatmul.mubr.bf16.gmra.mrb[0].mxu0 %v2231
        %v2423 = vpop.f32.mrb[0].mxu0
        %v2424 = vadd.f32 %v2213, %v2423
        %v2425 = vpop.f32.mrb[0].mxu0
        %v2426 = vpop.f32.mrb[0].mxu0
        %v2427 = vpop.f32.mrb[0].mxu0
        %2428 = vdwg.mxu0
        %v2429 = vmul.f32 %v2268, 0.35355338
        %v2430 = vmul.f32 %v2320, 0.35355338
        %v2431 = vmul.f32 %v2372, 0.35355338
        %v2432 = vmul.f32 %v2424, 0.35355338
        %v2433 = vpack.c.bf16 %v2429, %v2429
        %v2434 = vpack.c.bf16 %v2430, %v2430
        %v2435 = vpack.c.bf16 %v2431, %v2431
        %v2436 = vpack.c.bf16 %v2432, %v2432
        %v2439 = vunpack.c.l.b16 %v2151
        %v2440 = vunpack.c.l.b16 %v2152
        %v2441 = vpack.c.b16 %v2440, %v2439
        %v2443 = vsel %vm1496, %v2433, 0
        %v2446 = vsel %vm1496, %v2441, 0
        %2448 = vmatprep.subr.bf16.mxu0 0
        %2449 = vmatpush1.bf16.xpose.msra.mxu0 %v2446
        %2450 = vmatprep.subr.bf16.mxu0 0
        %2451 = vmatpush1.bf16.xpose.msra.mxu0 0
        %2452 = vmatprep.subr.bf16.mxu0 0
        %2453 = vmatpush1.bf16.xpose.msra.mxu0 0
        %2454 = vmatprep.subr.bf16.mxu0 0
        %2455 = vmatpush1.bf16.xpose.msra.mxu0 0
        %2456 = vmatprep.subr.bf16.mxu0 0
        %2457 = vmatpush1.bf16.xpose.msra.mxu0 0
        %2458 = vmatprep.subr.bf16.mxu0 0
        %2459 = vmatpush1.bf16.xpose.msra.mxu0 0
        %2460 = vmatprep.subr.bf16.mxu0 0
        %2461 = vmatpush1.bf16.xpose.msra.mxu0 0
        %2462 = vmatprep.subr.bf16.mxu0 0
        %2463 = vmatpush1.bf16.xpose.msra.mxu0 0
        %2464 = vmatprep.subr.bf16.mxu0 0
        %2465 = vmatpush1.bf16.xpose.msra.mxu0 0
        %2466 = vmatprep.subr.bf16.mxu0 0
        %2467 = vmatpush1.bf16.xpose.msra.mxu0 0
        %2468 = vmatprep.subr.bf16.mxu0 0
        %2469 = vmatpush1.bf16.xpose.msra.mxu0 0
        %2470 = vmatprep.subr.bf16.mxu0 0
        %2471 = vmatpush1.bf16.xpose.msra.mxu0 0
        %2472 = vmatprep.subr.bf16.mxu0 0
        %2473 = vmatpush1.bf16.xpose.msra.mxu0 0
        %2474 = vmatprep.subr.bf16.mxu0 0
        %2475 = vmatpush1.bf16.xpose.msra.mxu0 0
        %2476 = vmatprep.subr.bf16.mxu0 0
        %2477 = vmatpush1.bf16.xpose.msra.mxu0 0
        %2478 = vmatprep.subr.bf16.mxu0 0
        %2479 = vmatpush1.bf16.xpose.msra.mxu0 0
        %2480 = vmatprep.mubr.bf16.mxu0 0
        %2481 = vmatmul.mubr.bf16.gmra.mrb[0].mxu0 %v2443
        %v2482 = vpop.f32.mrb[0].mxu0
        %v2483 = vadd.f32 0.0, %v2482
        %v2484 = vpop.f32.mrb[0].mxu0
        %v2485 = vpop.f32.mrb[0].mxu0
        %v2486 = vpop.f32.mrb[0].mxu0
        %2487 = vdwg.mxu0
        %v2490 = vunpack.c.l.b16 %v2153
        %v2491 = vunpack.c.l.b16 %v2154
        %v2492 = vpack.c.b16 %v2491, %v2490
        %v2494 = vsel %vm1496, %v2434, 0
        %v2497 = vsel %vm1496, %v2492, 0
        %2499 = vmatprep.subr.bf16.mxu0 0
        %2500 = vmatpush1.bf16.xpose.msra.mxu0 %v2497
        %2501 = vmatprep.subr.bf16.mxu0 0
        %2502 = vmatpush1.bf16.xpose.msra.mxu0 0
        %2503 = vmatprep.subr.bf16.mxu0 0
        %2504 = vmatpush1.bf16.xpose.msra.mxu0 0
        %2505 = vmatprep.subr.bf16.mxu0 0
        %2506 = vmatpush1.bf16.xpose.msra.mxu0 0
        %2507 = vmatprep.subr.bf16.mxu0 0
        %2508 = vmatpush1.bf16.xpose.msra.mxu0 0
        %2509 = vmatprep.subr.bf16.mxu0 0
        %2510 = vmatpush1.bf16.xpose.msra.mxu0 0
        %2511 = vmatprep.subr.bf16.mxu0 0
        %2512 = vmatpush1.bf16.xpose.msra.mxu0 0
        %2513 = vmatprep.subr.bf16.mxu0 0
        %2514 = vmatpush1.bf16.xpose.msra.mxu0 0
        %2515 = vmatprep.subr.bf16.mxu0 0
        %2516 = vmatpush1.bf16.xpose.msra.mxu0 0
        %2517 = vmatprep.subr.bf16.mxu0 0
        %2518 = vmatpush1.bf16.xpose.msra.mxu0 0
        %2519 = vmatprep.subr.bf16.mxu0 0
        %2520 = vmatpush1.bf16.xpose.msra.mxu0 0
        %2521 = vmatprep.subr.bf16.mxu0 0
        %2522 = vmatpush1.bf16.xpose.msra.mxu0 0
        %2523 = vmatprep.subr.bf16.mxu0 0
        %2524 = vmatpush1.bf16.xpose.msra.mxu0 0
        %2525 = vmatprep.subr.bf16.mxu0 0
        %2526 = vmatpush1.bf16.xpose.msra.mxu0 0
        %2527 = vmatprep.subr.bf16.mxu0 0
        %2528 = vmatpush1.bf16.xpose.msra.mxu0 0
        %2529 = vmatprep.subr.bf16.mxu0 0
        %2530 = vmatpush1.bf16.xpose.msra.mxu0 0
        %2531 = vmatprep.mubr.bf16.mxu0 0
        %2532 = vmatmul.mubr.bf16.gmra.mrb[0].mxu0 %v2494
        %v2533 = vpop.f32.mrb[0].mxu0
        %v2534 = vadd.f32 0.0, %v2533
        %v2535 = vpop.f32.mrb[0].mxu0
        %v2536 = vpop.f32.mrb[0].mxu0
        %v2537 = vpop.f32.mrb[0].mxu0
        %2538 = vdwg.mxu0
        %v2541 = vunpack.c.l.b16 %v2155
        %v2542 = vunpack.c.l.b16 %v2156
        %v2543 = vpack.c.b16 %v2542, %v2541
        %v2545 = vsel %vm1496, %v2435, 0
        %v2548 = vsel %vm1496, %v2543, 0
        %2550 = vmatprep.subr.bf16.mxu0 0
        %2551 = vmatpush1.bf16.xpose.msra.mxu0 %v2548
        %2552 = vmatprep.subr.bf16.mxu0 0
        %2553 = vmatpush1.bf16.xpose.msra.mxu0 0
        %2554 = vmatprep.subr.bf16.mxu0 0
        %2555 = vmatpush1.bf16.xpose.msra.mxu0 0
        %2556 = vmatprep.subr.bf16.mxu0 0
        %2557 = vmatpush1.bf16.xpose.msra.mxu0 0
        %2558 = vmatprep.subr.bf16.mxu0 0
        %2559 = vmatpush1.bf16.xpose.msra.mxu0 0
        %2560 = vmatprep.subr.bf16.mxu0 0
        %2561 = vmatpush1.bf16.xpose.msra.mxu0 0
        %2562 = vmatprep.subr.bf16.mxu0 0
        %2563 = vmatpush1.bf16.xpose.msra.mxu0 0
        %2564 = vmatprep.subr.bf16.mxu0 0
        %2565 = vmatpush1.bf16.xpose.msra.mxu0 0
        %2566 = vmatprep.subr.bf16.mxu0 0
        %2567 = vmatpush1.bf16.xpose.msra.mxu0 0
        %2568 = vmatprep.subr.bf16.mxu0 0
        %2569 = vmatpush1.bf16.xpose.msra.mxu0 0
        %2570 = vmatprep.subr.bf16.mxu0 0
        %2571 = vmatpush1.bf16.xpose.msra.mxu0 0
        %2572 = vmatprep.subr.bf16.mxu0 0
        %2573 = vmatpush1.bf16.xpose.msra.mxu0 0
        %2574 = vmatprep.subr.bf16.mxu0 0
        %2575 = vmatpush1.bf16.xpose.msra.mxu0 0
        %2576 = vmatprep.subr.bf16.mxu0 0
        %2577 = vmatpush1.bf16.xpose.msra.mxu0 0
        %2578 = vmatprep.subr.bf16.mxu0 0
        %2579 = vmatpush1.bf16.xpose.msra.mxu0 0
        %2580 = vmatprep.subr.bf16.mxu0 0
        %2581 = vmatpush1.bf16.xpose.msra.mxu0 0
        %2582 = vmatprep.mubr.bf16.mxu0 0
        %2583 = vmatmul.mubr.bf16.gmra.mrb[0].mxu0 %v2545
        %v2584 = vpop.f32.mrb[0].mxu0
        %v2585 = vadd.f32 0.0, %v2584
        %v2586 = vpop.f32.mrb[0].mxu0
        %v2587 = vpop.f32.mrb[0].mxu0
        %v2588 = vpop.f32.mrb[0].mxu0
        %2589 = vdwg.mxu0
        %v2592 = vunpack.c.l.b16 %v2157
        %v2593 = vunpack.c.l.b16 %v2158
        %v2594 = vpack.c.b16 %v2593, %v2592
        %v2596 = vsel %vm1496, %v2436, 0
        %v2599 = vsel %vm1496, %v2594, 0
        %2601 = vmatprep.subr.bf16.mxu0 0
        %2602 = vmatpush1.bf16.xpose.msra.mxu0 %v2599
        %2603 = vmatprep.subr.bf16.mxu0 0
        %2604 = vmatpush1.bf16.xpose.msra.mxu0 0
        %2605 = vmatprep.subr.bf16.mxu0 0
        %2606 = vmatpush1.bf16.xpose.msra.mxu0 0
        %2607 = vmatprep.subr.bf16.mxu0 0
        %2608 = vmatpush1.bf16.xpose.msra.mxu0 0
        %2609 = vmatprep.subr.bf16.mxu0 0
        %2610 = vmatpush1.bf16.xpose.msra.mxu0 0
        %2611 = vmatprep.subr.bf16.mxu0 0
        %2612 = vmatpush1.bf16.xpose.msra.mxu0 0
        %2613 = vmatprep.subr.bf16.mxu0 0
        %2614 = vmatpush1.bf16.xpose.msra.mxu0 0
        %2615 = vmatprep.subr.bf16.mxu0 0
        %2616 = vmatpush1.bf16.xpose.msra.mxu0 0
        %2617 = vmatprep.subr.bf16.mxu0 0
        %2618 = vmatpush1.bf16.xpose.msra.mxu0 0
        %2619 = vmatprep.subr.bf16.mxu0 0
        %2620 = vmatpush1.bf16.xpose.msra.mxu0 0
        %2621 = vmatprep.subr.bf16.mxu0 0
        %2622 = vmatpush1.bf16.xpose.msra.mxu0 0
        %2623 = vmatprep.subr.bf16.mxu0 0
        %2624 = vmatpush1.bf16.xpose.msra.mxu0 0
        %2625 = vmatprep.subr.bf16.mxu0 0
        %2626 = vmatpush1.bf16.xpose.msra.mxu0 0
        %2627 = vmatprep.subr.bf16.mxu0 0
        %2628 = vmatpush1.bf16.xpose.msra.mxu0 0
        %2629 = vmatprep.subr.bf16.mxu0 0
        %2630 = vmatpush1.bf16.xpose.msra.mxu0 0
        %2631 = vmatprep.subr.bf16.mxu0 0
        %2632 = vmatpush1.bf16.xpose.msra.mxu0 0
        %2633 = vmatprep.mubr.bf16.mxu0 0
        %2634 = vmatmul.mubr.bf16.gmra.mrb[0].mxu0 %v2596
        %v2635 = vpop.f32.mrb[0].mxu0
        %v2636 = vadd.f32 0.0, %v2635
        %v2637 = vpop.f32.mrb[0].mxu0
        %v2638 = vpop.f32.mrb[0].mxu0
        %v2639 = vpop.f32.mrb[0].mxu0
        %2640 = vdwg.mxu0
        %vm2641 = vcmask 130048
        %v2642 = vsel %vm2641, %v2483, -inf
        %2643 = vmax.xlane.f32.xlu0 %v2642
        %v2644 = vpop.xlane.xlu0 %2643
        %v2645 = vsel %vm2641, %v2534, -inf
        %2646 = vmax.xlane.f32.xlu0 %v2645
        %v2647 = vpop.xlane.xlu0 %2646
        %v2648 = vsel %vm2641, %v2585, -inf
        %2649 = vmax.xlane.f32.xlu0 %v2648
        %v2650 = vpop.xlane.xlu0 %2649
        %v2651 = vsel %vm2641, %v2636, -inf
        %2652 = vmax.xlane.f32.xlu0 %v2651
        %v2653 = vpop.xlane.xlu0 %2652
        %v2654 = vsub.f32 %v2483, %v2644
        %v2655 = vsub.f32 %v2534, %v2647
        %v2656 = vsub.f32 %v2585, %v2650
        %v2657 = vsub.f32 %v2636, %v2653
        %v2658 = vmul.f32 %v2654, 1.442695
        %v2659 = vpow.pop %v2658
        %v2660 = vmul.f32 %v2655, 1.442695
        %v2661 = vpow.pop %v2660
        %v2662 = vmul.f32 %v2656, 1.442695
        %v2663 = vpow.pop %v2662
        %v2664 = vmul.f32 %v2657, 1.442695
        %v2665 = vpow.pop %v2664
        %v2666 = vsel %vm2641, %v2659, 0.0
        %2667 = vadd.xlane.f32.xlu0 %v2666
        %v2668 = vpop.xlane.xlu0 %2667
        %v2669 = vsel %vm2641, %v2661, 0.0
        %2670 = vadd.xlane.f32.xlu0 %v2669
        %v2671 = vpop.xlane.xlu0 %2670
        %v2672 = vsel %vm2641, %v2663, 0.0
        %2673 = vadd.xlane.f32.xlu0 %v2672
        %v2674 = vpop.xlane.xlu0 %2673
        %v2675 = vsel %vm2641, %v2665, 0.0
        %2676 = vadd.xlane.f32.xlu0 %v2675
        %v2677 = vpop.xlane.xlu0 %2676
        %v2678 = vrcp.pop %v2668
        %v2679 = vrcp.pop %v2671
        %v2680 = vrcp.pop %v2674
        %v2681 = vrcp.pop %v2677
        %v2682 = vmul.f32 %v2659, %v2678
        %v2683 = vmul.f32 %v2661, %v2679
        %v2684 = vmul.f32 %v2663, %v2680
        %v2685 = vmul.f32 %v2665, %v2681
        %v2686 = vpack.c.bf16 %v2682, %v2682
        %v2687 = vpack.c.bf16 %v2683, %v2683
        %v2688 = vpack.c.bf16 %v2684, %v2684
        %v2689 = vpack.c.bf16 %v2685, %v2685
        %v2692 = vunpack.c.l.b16 %v2159
        %v2693 = vunpack.c.l.b16 %v2160
        %v2694 = vpack.c.b16 %v2693, %v2692
        %v2697 = vsel %vm2641, %v2686, 0
        %2699 = vmatprep.subr.bf16.mxu0 0
        %2700 = vmatpush1.bf16.msra.mxu0 %v2694
        %2701 = vmatprep.subr.bf16.mxu0 0
        %2702 = vmatpush1.bf16.msra.mxu0 0
        %2703 = vmatprep.subr.bf16.mxu0 0
        %2704 = vmatpush1.bf16.msra.mxu0 0
        %2705 = vmatprep.subr.bf16.mxu0 0
        %2706 = vmatpush1.bf16.msra.mxu0 0
        %2707 = vmatprep.subr.bf16.mxu0 0
        %2708 = vmatpush1.bf16.msra.mxu0 0
        %2709 = vmatprep.subr.bf16.mxu0 0
        %2710 = vmatpush1.bf16.msra.mxu0 0
        %2711 = vmatprep.subr.bf16.mxu0 0
        %2712 = vmatpush1.bf16.msra.mxu0 0
        %2713 = vmatprep.subr.bf16.mxu0 0
        %2714 = vmatpush1.bf16.msra.mxu0 0
        %2715 = vmatprep.subr.bf16.mxu0 0
        %2716 = vmatpush1.bf16.msra.mxu0 0
        %2717 = vmatprep.subr.bf16.mxu0 0
        %2718 = vmatpush1.bf16.msra.mxu0 0
        %2719 = vmatprep.subr.bf16.mxu0 0
        %2720 = vmatpush1.bf16.msra.mxu0 0
        %2721 = vmatprep.subr.bf16.mxu0 0
        %2722 = vmatpush1.bf16.msra.mxu0 0
        %2723 = vmatprep.subr.bf16.mxu0 0
        %2724 = vmatpush1.bf16.msra.mxu0 0
        %2725 = vmatprep.subr.bf16.mxu0 0
        %2726 = vmatpush1.bf16.msra.mxu0 0
        %2727 = vmatprep.subr.bf16.mxu0 0
        %2728 = vmatpush1.bf16.msra.mxu0 0
        %2729 = vmatprep.subr.bf16.mxu0 0
        %2730 = vmatpush1.bf16.msra.mxu0 0
        %2731 = vmatprep.mubr.bf16.mxu0 0
        %2732 = vmatmul.mubr.bf16.gmra.mrb[0].mxu0 %v2697
        %v2733 = vpop.f32.mrb[0].mxu0
        %v2734 = vadd.f32 0.0, %v2733
        %v2735 = vpop.f32.mrb[0].mxu0
        %v2736 = vpop.f32.mrb[0].mxu0
        %v2737 = vpop.f32.mrb[0].mxu0
        %2738 = vdwg.mxu0
        %v2741 = vunpack.c.l.b16 %v2161
        %v2742 = vunpack.c.l.b16 %v2162
        %v2743 = vpack.c.b16 %v2742, %v2741
        %v2746 = vsel %vm2641, %v2687, 0
        %2748 = vmatprep.subr.bf16.mxu0 0
        %2749 = vmatpush1.bf16.msra.mxu0 %v2743
        %2750 = vmatprep.subr.bf16.mxu0 0
        %2751 = vmatpush1.bf16.msra.mxu0 0
        %2752 = vmatprep.subr.bf16.mxu0 0
        %2753 = vmatpush1.bf16.msra.mxu0 0
        %2754 = vmatprep.subr.bf16.mxu0 0
        %2755 = vmatpush1.bf16.msra.mxu0 0
        %2756 = vmatprep.subr.bf16.mxu0 0
        %2757 = vmatpush1.bf16.msra.mxu0 0
        %2758 = vmatprep.subr.bf16.mxu0 0
        %2759 = vmatpush1.bf16.msra.mxu0 0
        %2760 = vmatprep.subr.bf16.mxu0 0
        %2761 = vmatpush1.bf16.msra.mxu0 0
        %2762 = vmatprep.subr.bf16.mxu0 0
        %2763 = vmatpush1.bf16.msra.mxu0 0
        %2764 = vmatprep.subr.bf16.mxu0 0
        %2765 = vmatpush1.bf16.msra.mxu0 0
        %2766 = vmatprep.subr.bf16.mxu0 0
        %2767 = vmatpush1.bf16.msra.mxu0 0
        %2768 = vmatprep.subr.bf16.mxu0 0
        %2769 = vmatpush1.bf16.msra.mxu0 0
        %2770 = vmatprep.subr.bf16.mxu0 0
        %2771 = vmatpush1.bf16.msra.mxu0 0
        %2772 = vmatprep.subr.bf16.mxu0 0
        %2773 = vmatpush1.bf16.msra.mxu0 0
        %2774 = vmatprep.subr.bf16.mxu0 0
        %2775 = vmatpush1.bf16.msra.mxu0 0
        %2776 = vmatprep.subr.bf16.mxu0 0
        %2777 = vmatpush1.bf16.msra.mxu0 0
        %2778 = vmatprep.subr.bf16.mxu0 0
        %2779 = vmatpush1.bf16.msra.mxu0 0
        %2780 = vmatprep.mubr.bf16.mxu0 0
        %2781 = vmatmul.mubr.bf16.gmra.mrb[0].mxu0 %v2746
        %v2782 = vpop.f32.mrb[0].mxu0
        %v2783 = vadd.f32 0.0, %v2782
        %v2784 = vpop.f32.mrb[0].mxu0
        %v2785 = vpop.f32.mrb[0].mxu0
        %v2786 = vpop.f32.mrb[0].mxu0
        %2787 = vdwg.mxu0
        %v2790 = vunpack.c.l.b16 %v2163
        %v2791 = vunpack.c.l.b16 %v2164
        %v2792 = vpack.c.b16 %v2791, %v2790
        %v2795 = vsel %vm2641, %v2688, 0
        %2797 = vmatprep.subr.bf16.mxu0 0
        %2798 = vmatpush1.bf16.msra.mxu0 %v2792
        %2799 = vmatprep.subr.bf16.mxu0 0
        %2800 = vmatpush1.bf16.msra.mxu0 0
        %2801 = vmatprep.subr.bf16.mxu0 0
        %2802 = vmatpush1.bf16.msra.mxu0 0
        %2803 = vmatprep.subr.bf16.mxu0 0
        %2804 = vmatpush1.bf16.msra.mxu0 0
        %2805 = vmatprep.subr.bf16.mxu0 0
        %2806 = vmatpush1.bf16.msra.mxu0 0
        %2807 = vmatprep.subr.bf16.mxu0 0
        %2808 = vmatpush1.bf16.msra.mxu0 0
        %2809 = vmatprep.subr.bf16.mxu0 0
        %2810 = vmatpush1.bf16.msra.mxu0 0
        %2811 = vmatprep.subr.bf16.mxu0 0
        %2812 = vmatpush1.bf16.msra.mxu0 0
        %2813 = vmatprep.subr.bf16.mxu0 0
        %2814 = vmatpush1.bf16.msra.mxu0 0
        %2815 = vmatprep.subr.bf16.mxu0 0
        %2816 = vmatpush1.bf16.msra.mxu0 0
        %2817 = vmatprep.subr.bf16.mxu0 0
        %2818 = vmatpush1.bf16.msra.mxu0 0
        %2819 = vmatprep.subr.bf16.mxu0 0
        %2820 = vmatpush1.bf16.msra.mxu0 0
        %2821 = vmatprep.subr.bf16.mxu0 0
        %2822 = vmatpush1.bf16.msra.mxu0 0
        %2823 = vmatprep.subr.bf16.mxu0 0
        %2824 = vmatpush1.bf16.msra.mxu0 0
        %2825 = vmatprep.subr.bf16.mxu0 0
        %2826 = vmatpush1.bf16.msra.mxu0 0
        %2827 = vmatprep.subr.bf16.mxu0 0
        %2828 = vmatpush1.bf16.msra.mxu0 0
        %2829 = vmatprep.mubr.bf16.mxu0 0
        %2830 = vmatmul.mubr.bf16.gmra.mrb[0].mxu0 %v2795
        %v2831 = vpop.f32.mrb[0].mxu0
        %v2832 = vadd.f32 0.0, %v2831
        %v2833 = vpop.f32.mrb[0].mxu0
        %v2834 = vpop.f32.mrb[0].mxu0
        %v2835 = vpop.f32.mrb[0].mxu0
        %2836 = vdwg.mxu0
        %v2839 = vunpack.c.l.b16 %v2165
        %v2840 = vunpack.c.l.b16 %v2166
        %v2841 = vpack.c.b16 %v2840, %v2839
        %v2844 = vsel %vm2641, %v2689, 0
        %2846 = vmatprep.subr.bf16.mxu0 0
        %2847 = vmatpush1.bf16.msra.mxu0 %v2841
        %2848 = vmatprep.subr.bf16.mxu0 0
        %2849 = vmatpush1.bf16.msra.mxu0 0
        %2850 = vmatprep.subr.bf16.mxu0 0
        %2851 = vmatpush1.bf16.msra.mxu0 0
        %2852 = vmatprep.subr.bf16.mxu0 0
        %2853 = vmatpush1.bf16.msra.mxu0 0
        %2854 = vmatprep.subr.bf16.mxu0 0
        %2855 = vmatpush1.bf16.msra.mxu0 0
        %2856 = vmatprep.subr.bf16.mxu0 0
        %2857 = vmatpush1.bf16.msra.mxu0 0
        %2858 = vmatprep.subr.bf16.mxu0 0
        %2859 = vmatpush1.bf16.msra.mxu0 0
        %2860 = vmatprep.subr.bf16.mxu0 0
        %2861 = vmatpush1.bf16.msra.mxu0 0
        %2862 = vmatprep.subr.bf16.mxu0 0
        %2863 = vmatpush1.bf16.msra.mxu0 0
        %2864 = vmatprep.subr.bf16.mxu0 0
        %2865 = vmatpush1.bf16.msra.mxu0 0
        %2866 = vmatprep.subr.bf16.mxu0 0
        %2867 = vmatpush1.bf16.msra.mxu0 0
        %2868 = vmatprep.subr.bf16.mxu0 0
        %2869 = vmatpush1.bf16.msra.mxu0 0
        %2870 = vmatprep.subr.bf16.mxu0 0
        %2871 = vmatpush1.bf16.msra.mxu0 0
        %2872 = vmatprep.subr.bf16.mxu0 0
        %2873 = vmatpush1.bf16.msra.mxu0 0
        %2874 = vmatprep.subr.bf16.mxu0 0
        %2875 = vmatpush1.bf16.msra.mxu0 0
        %2876 = vmatprep.subr.bf16.mxu0 0
        %2877 = vmatpush1.bf16.msra.mxu0 0
        %2878 = vmatprep.mubr.bf16.mxu0 0
        %2879 = vmatmul.mubr.bf16.gmra.mrb[0].mxu0 %v2844
        %v2880 = vpop.f32.mrb[0].mxu0
        %v2881 = vadd.f32 0.0, %v2880
        %v2882 = vpop.f32.mrb[0].mxu0
        %v2883 = vpop.f32.mrb[0].mxu0
        %v2884 = vpop.f32.mrb[0].mxu0
        %2885 = vdwg.mxu0
        %v2887 = vlaneseq
        %v2888 = vshrl.u32 %v2887, 7
        %v2889 = vsub.s32 0, %v2888
        %v2890 = vrot.slane %v2191, %v2889
        %v2892 = vadd.f32 %v2890, %v2140
        %v2893 = vpack.c.bf16 %v2734, %v2734
        %v2895 = vsel %vm1496, %v2893, 0
        %v2898 = vsel %vm1732, %v2187, 0
        %2900 = vmatprep.subr.bf16.mxu0 0
        %2901 = vmatpush1.bf16.msra.mxu0 %v2898
        %2902 = vmatprep.subr.bf16.mxu0 0
        %2903 = vmatpush1.bf16.msra.mxu0 0
        %2904 = vmatprep.subr.bf16.mxu0 0
        %2905 = vmatpush1.bf16.msra.mxu0 0
        %2906 = vmatprep.subr.bf16.mxu0 0
        %2907 = vmatpush1.bf16.msra.mxu0 0
        %2908 = vmatprep.subr.bf16.mxu0 0
        %2909 = vmatpush1.bf16.msra.mxu0 0
        %2910 = vmatprep.subr.bf16.mxu0 0
        %2911 = vmatpush1.bf16.msra.mxu0 0
        %2912 = vmatprep.subr.bf16.mxu0 0
        %2913 = vmatpush1.bf16.msra.mxu0 0
        %2914 = vmatprep.subr.bf16.mxu0 0
        %2915 = vmatpush1.bf16.msra.mxu0 0
        %2916 = vmatprep.subr.bf16.mxu0 0
        %2917 = vmatpush1.bf16.msra.mxu0 0
        %2918 = vmatprep.subr.bf16.mxu0 0
        %2919 = vmatpush1.bf16.msra.mxu0 0
        %2920 = vmatprep.subr.bf16.mxu0 0
        %2921 = vmatpush1.bf16.msra.mxu0 0
        %2922 = vmatprep.subr.bf16.mxu0 0
        %2923 = vmatpush1.bf16.msra.mxu0 0
        %2924 = vmatprep.subr.bf16.mxu0 0
        %2925 = vmatpush1.bf16.msra.mxu0 0
        %2926 = vmatprep.subr.bf16.mxu0 0
        %2927 = vmatpush1.bf16.msra.mxu0 0
        %2928 = vmatprep.subr.bf16.mxu0 0
        %2929 = vmatpush1.bf16.msra.mxu0 0
        %2930 = vmatprep.subr.bf16.mxu0 0
        %2931 = vmatpush1.bf16.msra.mxu0 0
        %2932 = vmatprep.mubr.bf16.mxu0 0
        %2933 = vmatmul.mubr.bf16.gmra.mrb[0].mxu0 %v2895
        %v2934 = vpop.f32.mrb[0].mxu0
        %v2935 = vadd.f32 0.0, %v2934
        %v2936 = vpop.f32.mrb[0].mxu0
        %v2937 = vpop.f32.mrb[0].mxu0
        %v2938 = vpop.f32.mrb[0].mxu0
        %2939 = vdwg.mxu0
        %v2940 = vadd.f32 %v2892, %v2935
        %v2941 = vpack.c.bf16 %v2783, %v2783
        %v2943 = vsel %vm1496, %v2941, 0
        %v2946 = vsel %vm1732, %v2188, 0
        %2948 = vmatprep.subr.bf16.mxu0 0
        %2949 = vmatpush1.bf16.msra.mxu0 %v2946
        %2950 = vmatprep.subr.bf16.mxu0 0
        %2951 = vmatpush1.bf16.msra.mxu0 0
        %2952 = vmatprep.subr.bf16.mxu0 0
        %2953 = vmatpush1.bf16.msra.mxu0 0
        %2954 = vmatprep.subr.bf16.mxu0 0
        %2955 = vmatpush1.bf16.msra.mxu0 0
        %2956 = vmatprep.subr.bf16.mxu0 0
        %2957 = vmatpush1.bf16.msra.mxu0 0
        %2958 = vmatprep.subr.bf16.mxu0 0
        %2959 = vmatpush1.bf16.msra.mxu0 0
        %2960 = vmatprep.subr.bf16.mxu0 0
        %2961 = vmatpush1.bf16.msra.mxu0 0
        %2962 = vmatprep.subr.bf16.mxu0 0
        %2963 = vmatpush1.bf16.msra.mxu0 0
        %2964 = vmatprep.subr.bf16.mxu0 0
        %2965 = vmatpush1.bf16.msra.mxu0 0
        %2966 = vmatprep.subr.bf16.mxu0 0
        %2967 = vmatpush1.bf16.msra.mxu0 0
        %2968 = vmatprep.subr.bf16.mxu0 0
        %2969 = vmatpush1.bf16.msra.mxu0 0
        %2970 = vmatprep.subr.bf16.mxu0 0
        %2971 = vmatpush1.bf16.msra.mxu0 0
        %2972 = vmatprep.subr.bf16.mxu0 0
        %2973 = vmatpush1.bf16.msra.mxu0 0
        %2974 = vmatprep.subr.bf16.mxu0 0
        %2975 = vmatpush1.bf16.msra.mxu0 0
        %2976 = vmatprep.subr.bf16.mxu0 0
        %2977 = vmatpush1.bf16.msra.mxu0 0
        %2978 = vmatprep.subr.bf16.mxu0 0
        %2979 = vmatpush1.bf16.msra.mxu0 0
        %2980 = vmatprep.mubr.bf16.mxu0 0
        %2981 = vmatmul.mubr.bf16.gmra.mrb[0].mxu0 %v2943
        %v2982 = vpop.f32.mrb[0].mxu0
        %v2983 = vadd.f32 0.0, %v2982
        %v2984 = vpop.f32.mrb[0].mxu0
        %v2985 = vpop.f32.mrb[0].mxu0
        %v2986 = vpop.f32.mrb[0].mxu0
        %2987 = vdwg.mxu0
        %v2988 = vadd.f32 %v2940, %v2983
        %v2989 = vpack.c.bf16 %v2832, %v2832
        %v2991 = vsel %vm1496, %v2989, 0
        %v2994 = vsel %vm1732, %v2189, 0
        %2996 = vmatprep.subr.bf16.mxu0 0
        %2997 = vmatpush1.bf16.msra.mxu0 %v2994
        %2998 = vmatprep.subr.bf16.mxu0 0
        %2999 = vmatpush1.bf16.msra.mxu0 0
        %3000 = vmatprep.subr.bf16.mxu0 0
        %3001 = vmatpush1.bf16.msra.mxu0 0
        %3002 = vmatprep.subr.bf16.mxu0 0
        %3003 = vmatpush1.bf16.msra.mxu0 0
        %3004 = vmatprep.subr.bf16.mxu0 0
        %3005 = vmatpush1.bf16.msra.mxu0 0
        %3006 = vmatprep.subr.bf16.mxu0 0
        %3007 = vmatpush1.bf16.msra.mxu0 0
        %3008 = vmatprep.subr.bf16.mxu0 0
        %3009 = vmatpush1.bf16.msra.mxu0 0
        %3010 = vmatprep.subr.bf16.mxu0 0
        %3011 = vmatpush1.bf16.msra.mxu0 0
        %3012 = vmatprep.subr.bf16.mxu0 0
        %3013 = vmatpush1.bf16.msra.mxu0 0
        %3014 = vmatprep.subr.bf16.mxu0 0
        %3015 = vmatpush1.bf16.msra.mxu0 0
        %3016 = vmatprep.subr.bf16.mxu0 0
        %3017 = vmatpush1.bf16.msra.mxu0 0
        %3018 = vmatprep.subr.bf16.mxu0 0
        %3019 = vmatpush1.bf16.msra.mxu0 0
        %3020 = vmatprep.subr.bf16.mxu0 0
        %3021 = vmatpush1.bf16.msra.mxu0 0
        %3022 = vmatprep.subr.bf16.mxu0 0
        %3023 = vmatpush1.bf16.msra.mxu0 0
        %3024 = vmatprep.subr.bf16.mxu0 0
        %3025 = vmatpush1.bf16.msra.mxu0 0
        %3026 = vmatprep.subr.bf16.mxu0 0
        %3027 = vmatpush1.bf16.msra.mxu0 0
        %3028 = vmatprep.mubr.bf16.mxu0 0
        %3029 = vmatmul.mubr.bf16.gmra.mrb[0].mxu0 %v2991
        %v3030 = vpop.f32.mrb[0].mxu0
        %v3031 = vadd.f32 0.0, %v3030
        %v3032 = vpop.f32.mrb[0].mxu0
        %v3033 = vpop.f32.mrb[0].mxu0
        %v3034 = vpop.f32.mrb[0].mxu0
        %3035 = vdwg.mxu0
        %v3036 = vadd.f32 %v2988, %v3031
        %v3037 = vpack.c.bf16 %v2881, %v2881
        %v3039 = vsel %vm1496, %v3037, 0
        %v3042 = vsel %vm1732, %v2190, 0
        %3044 = vmatprep.subr.bf16.mxu0 0
        %3045 = vmatpush1.bf16.msra.mxu0 %v3042
        %3046 = vmatprep.subr.bf16.mxu0 0
        %3047 = vmatpush1.bf16.msra.mxu0 0
        %3048 = vmatprep.subr.bf16.mxu0 0
        %3049 = vmatpush1.bf16.msra.mxu0 0
        %3050 = vmatprep.subr.bf16.mxu0 0
        %3051 = vmatpush1.bf16.msra.mxu0 0
        %3052 = vmatprep.subr.bf16.mxu0 0
        %3053 = vmatpush1.bf16.msra.mxu0 0
        %3054 = vmatprep.subr.bf16.mxu0 0
        %3055 = vmatpush1.bf16.msra.mxu0 0
        %3056 = vmatprep.subr.bf16.mxu0 0
        %3057 = vmatpush1.bf16.msra.mxu0 0
        %3058 = vmatprep.subr.bf16.mxu0 0
        %3059 = vmatpush1.bf16.msra.mxu0 0
        %3060 = vmatprep.subr.bf16.mxu0 0
        %3061 = vmatpush1.bf16.msra.mxu0 0
        %3062 = vmatprep.subr.bf16.mxu0 0
        %3063 = vmatpush1.bf16.msra.mxu0 0
        %3064 = vmatprep.subr.bf16.mxu0 0
        %3065 = vmatpush1.bf16.msra.mxu0 0
        %3066 = vmatprep.subr.bf16.mxu0 0
        %3067 = vmatpush1.bf16.msra.mxu0 0
        %3068 = vmatprep.subr.bf16.mxu0 0
        %3069 = vmatpush1.bf16.msra.mxu0 0
        %3070 = vmatprep.subr.bf16.mxu0 0
        %3071 = vmatpush1.bf16.msra.mxu0 0
        %3072 = vmatprep.subr.bf16.mxu0 0
        %3073 = vmatpush1.bf16.msra.mxu0 0
        %3074 = vmatprep.subr.bf16.mxu0 0
        %3075 = vmatpush1.bf16.msra.mxu0 0
        %3076 = vmatprep.mubr.bf16.mxu0 0
        %3077 = vmatmul.mubr.bf16.gmra.mrb[0].mxu0 %v3039
        %v3078 = vpop.f32.mrb[0].mxu0
        %v3079 = vadd.f32 0.0, %v3078
        %v3080 = vpop.f32.mrb[0].mxu0
        %v3081 = vpop.f32.mrb[0].mxu0
        %v3082 = vpop.f32.mrb[0].mxu0
        %3083 = vdwg.mxu0
        %v3084 = vadd.f32 %v3036, %v3079
        %v3085 = vsel %vm1288, %v3084, 0.0
        %3086 = vadd.xlane.f32.xlu0 %v3085
        %v3087 = vpop.xlane.xlu0 %3086
        %v3088 = vmul.f32 %v3087, %v2116
        %v3089 = vsub.f32 %v3084, %v3088
        %v3090 = vmul.f32 %v3089, %v3089
        %v3091 = vsel %vm1288, %v3090, 0.0
        %3092 = vadd.xlane.f32.xlu0 %v3091
        %v3093 = vpop.xlane.xlu0 %3092
        %v3094 = vmul.f32 %v3093, %v2116
        %v3096 = vlaneseq
        %v3097 = vshrl.u32 %v3096, 7
        %v3098 = vsub.s32 0, %v3097
        %v3099 = vrot.slane %v2192, %v3098
        %v3101 = vmul.f32 %v3099, %v3089
        %v3102 = vadd.f32 %v3094, 1e-12
        %v3103 = vrsqrt.pop %v3102
        %v3104 = vmul.f32 %v3101, %v3103
        %v3106 = vlaneseq
        %v3107 = vshrl.u32 %v3106, 7
        %v3108 = vsub.s32 0, %v3107
        %v3109 = vrot.slane %v2193, %v3108
        %v3111 = vadd.f32 %v3104, %v3109
        %v3112 = vsel %vm2641, %v2682, 0.0
        %v3113 = vsel %vm2641, %v2683, 0.0
        %v3114 = vadd.f32 %v3112, %v3113
        %v3115 = vsel %vm2641, %v2684, 0.0
        %v3116 = vadd.f32 %v3114, %v3115
        %v3117 = vsel %vm2641, %v2685, 0.0
        %v3118 = vadd.f32 %v3116, %v3117
        %v3119 = vmul.f32 %v3118, %v2148
        %v3120 = vpack.c.bf16 %v3111, %v3111
        %v3121 = vld [vmem:[#allocation29] sm:$0xf]
        %v3122 = vld [vmem:[#allocation29 + $0x4] sm:$0xf]
        %v3123 = vld [vmem:[#allocation29 + $0x8] sm:$0xf]
        %v3124 = vld [vmem:[#allocation29 + $0xc] sm:$0xf]
        %v3125 = vld [vmem:[#allocation31] sm:$0x1]
        %v3127 = vlaneseq
        %v3128 = vshrl.u32 %v3127, 7
        %v3129 = vsub.s32 0, %v3128
        %v3130 = vrot.slane %v3125, %v3129
        %v3136 = vunpack.c.l.b16 %v3121
        %v3137 = vunpack.c.l.b16 %v3122
        %v3138 = vunpack.c.l.b16 %v3123
        %v3139 = vunpack.c.l.b16 %v3124
        %v3140 = vpack.c.b16 %v3137, %v3136
        %v3141 = vpack.c.b16 %v3139, %v3138
        %v3145 = vsel %vm1288, %v3120, 0
        %3147 = vmatprep.subr.bf16.mxu0 0
        %3148 = vmatpush1.bf16.msra.mxu0 %v3140
        %3149 = vmatprep.subr.bf16.mxu0 0
        %3150 = vmatpush1.bf16.msra.mxu0 %v3141
        %3151 = vmatprep.subr.bf16.mxu0 0
        %3152 = vmatpush1.bf16.msra.mxu0 0
        %3153 = vmatprep.subr.bf16.mxu0 0
        %3154 = vmatpush1.bf16.msra.mxu0 0
        %3155 = vmatprep.subr.bf16.mxu0 0
        %3156 = vmatpush1.bf16.msra.mxu0 0
        %3157 = vmatprep.subr.bf16.mxu0 0
        %3158 = vmatpush1.bf16.msra.mxu0 0
        %3159 = vmatprep.subr.bf16.mxu0 0
        %3160 = vmatpush1.bf16.msra.mxu0 0
        %3161 = vmatprep.subr.bf16.mxu0 0
        %3162 = vmatpush1.bf16.msra.mxu0 0
        %3163 = vmatprep.subr.bf16.mxu0 0
        %3164 = vmatpush1.bf16.msra.mxu0 0
        %3165 = vmatprep.subr.bf16.mxu0 0
        %3166 = vmatpush1.bf16.msra.mxu0 0
        %3167 = vmatprep.subr.bf16.mxu0 0
        %3168 = vmatpush1.bf16.msra.mxu0 0
        %3169 = vmatprep.subr.bf16.mxu0 0
        %3170 = vmatpush1.bf16.msra.mxu0 0
        %3171 = vmatprep.subr.bf16.mxu0 0
        %3172 = vmatpush1.bf16.msra.mxu0 0
        %3173 = vmatprep.subr.bf16.mxu0 0
        %3174 = vmatpush1.bf16.msra.mxu0 0
        %3175 = vmatprep.subr.bf16.mxu0 0
        %3176 = vmatpush1.bf16.msra.mxu0 0
        %3177 = vmatprep.subr.bf16.mxu0 0
        %3178 = vmatpush1.bf16.msra.mxu0 0
        %3179 = vmatprep.mubr.bf16.mxu0 0
        %3180 = vmatmul.mubr.bf16.gmra.mrb[0].mxu0 %v3145
        %v3181 = vpop.f32.mrb[0].mxu0
        %v3182 = vadd.f32 %v3130, %v3181
        %v3183 = vpop.f32.mrb[0].mxu0
        %v3184 = vpop.f32.mrb[0].mxu0
        %v3185 = vpop.f32.mrb[0].mxu0
        %3186 = vdwg.mxu0
        %v3187 = vmax.f32 %v3182, 0.0
        %v3188 = vpack.c.bf16 %v3187, %v3187
        %v3189 = vld [vmem:[#allocation32] sm:$0xf]
        %v3190 = vld [vmem:[#allocation32 + $0x4] sm:$0xf]
        %v3191 = vld [vmem:[#allocation32 + $0x8] sm:$0xf]
        %v3192 = vld [vmem:[#allocation32 + $0xc] sm:$0xf]
        %v3193 = vld [vmem:[#allocation32 + $0x10] sm:$0xf]
        %v3194 = vld [vmem:[#allocation32 + $0x14] sm:$0xf]
        %v3195 = vld [vmem:[#allocation32 + $0x18] sm:$0xf]
        %v3196 = vld [vmem:[#allocation32 + $0x1c] sm:$0xf]
        %v3197 = vld [vmem:[#allocation34] sm:$0x1]
        %v3199 = vlaneseq
        %v3200 = vshrl.u32 %v3199, 7
        %v3201 = vsub.s32 0, %v3200
        %v3202 = vrot.slane %v3197, %v3201
        %v3212 = vunpack.c.l.b16 %v3189
        %v3213 = vunpack.c.l.b16 %v3190
        %v3214 = vunpack.c.l.b16 %v3191
        %v3215 = vunpack.c.l.b16 %v3192
        %v3216 = vunpack.c.l.b16 %v3193
        %v3217 = vunpack.c.l.b16 %v3194
        %v3218 = vunpack.c.l.b16 %v3195
        %v3219 = vunpack.c.l.b16 %v3196
        %v3220 = vpack.c.b16 %v3213, %v3212
        %v3221 = vpack.c.b16 %v3215, %v3214
        %v3222 = vpack.c.b16 %v3217, %v3216
        %v3223 = vpack.c.b16 %v3219, %v3218
        %vm3228 = vcmask 523264
        %v3230 = vsel %vm3228, %v3188, 0
        %3232 = vmatprep.subr.bf16.mxu0 0
        %3233 = vmatpush1.bf16.msra.mxu0 %v3220
        %3234 = vmatprep.subr.bf16.mxu0 0
        %3235 = vmatpush1.bf16.msra.mxu0 %v3221
        %3236 = vmatprep.subr.bf16.mxu0 0
        %3237 = vmatpush1.bf16.msra.mxu0 %v3222
        %3238 = vmatprep.subr.bf16.mxu0 0
        %3239 = vmatpush1.bf16.msra.mxu0 %v3223
        %3240 = vmatprep.subr.bf16.mxu0 0
        %3241 = vmatpush1.bf16.msra.mxu0 0
        %3242 = vmatprep.subr.bf16.mxu0 0
        %3243 = vmatpush1.bf16.msra.mxu0 0
        %3244 = vmatprep.subr.bf16.mxu0 0
        %3245 = vmatpush1.bf16.msra.mxu0 0
        %3246 = vmatprep.subr.bf16.mxu0 0
        %3247 = vmatpush1.bf16.msra.mxu0 0
        %3248 = vmatprep.subr.bf16.mxu0 0
        %3249 = vmatpush1.bf16.msra.mxu0 0
        %3250 = vmatprep.subr.bf16.mxu0 0
        %3251 = vmatpush1.bf16.msra.mxu0 0
        %3252 = vmatprep.subr.bf16.mxu0 0
        %3253 = vmatpush1.bf16.msra.mxu0 0
        %3254 = vmatprep.subr.bf16.mxu0 0
        %3255 = vmatpush1.bf16.msra.mxu0 0
        %3256 = vmatprep.subr.bf16.mxu0 0
        %3257 = vmatpush1.bf16.msra.mxu0 0
        %3258 = vmatprep.subr.bf16.mxu0 0
        %3259 = vmatpush1.bf16.msra.mxu0 0
        %3260 = vmatprep.subr.bf16.mxu0 0
        %3261 = vmatpush1.bf16.msra.mxu0 0
        %3262 = vmatprep.subr.bf16.mxu0 0
        %3263 = vmatpush1.bf16.msra.mxu0 0
        %3264 = vmatprep.mubr.bf16.mxu0 0
        %3265 = vmatmul.mubr.bf16.gmra.mrb[0].mxu0 %v3230
        %v3266 = vpop.f32.mrb[0].mxu0
        %v3267 = vadd.f32 %v3202, %v3266
        %v3268 = vpop.f32.mrb[0].mxu0
        %v3269 = vpop.f32.mrb[0].mxu0
        %v3270 = vpop.f32.mrb[0].mxu0
        %3271 = vdwg.mxu0
        %v3272 = vld [vmem:[#allocation35] sm:$0x1]
        %v3273 = vld [vmem:[#allocation37] sm:$0x1]
        %v3274 = vsel %vm1288, %v3267, 0.0
        %3275 = vadd.xlane.f32.xlu0 %v3274
        %v3276 = vpop.xlane.xlu0 %3275
        %v3277 = vmul.f32 %v3276, %v2116
        %v3278 = vsub.f32 %v3267, %v3277
        %v3279 = vmul.f32 %v3278, %v3278
        %v3280 = vsel %vm1288, %v3279, 0.0
        %3281 = vadd.xlane.f32.xlu0 %v3280
        %v3282 = vpop.xlane.xlu0 %3281
        %v3283 = vmul.f32 %v3282, %v2116
        %v3285 = vlaneseq
        %v3286 = vshrl.u32 %v3285, 7
        %v3287 = vsub.s32 0, %v3286
        %v3288 = vrot.slane %v3272, %v3287
        %v3290 = vmul.f32 %v3288, %v3278
        %v3291 = vadd.f32 %v3283, 1e-12
        %v3292 = vrsqrt.pop %v3291
        %v3293 = vmul.f32 %v3290, %v3292
        %v3295 = vlaneseq
        %v3296 = vshrl.u32 %v3295, 7
        %v3297 = vsub.s32 0, %v3296
        %v3298 = vrot.slane %v3273, %v3297
        %v3300 = vadd.f32 %v3293, %v3298
        %3301 = vst.msk [vmem:[%s1199] sm:$0xff] %vm1288, %v3300
        %3302 = vst.msk [vmem:[%s1206] sm:$0xff] %vm1496, %v2149
        %3303 = vst.msk [vmem:[%s1213] sm:$0xff] %vm2641, %v3119
        %s3304 = sand.u32 %s593, 1
        %s3305 = scalar_lea.sflag [#allocation4], %s3304
        %s3306 = sand.u32 %s593, 1
        %s3307 = smul.addr %s3306, 8
        %s3308 = scalar_lea.vmem [#allocation38], %s3307
        %s3309 = sand.u32 %s61, 1
        %s3310 = scalar_lea.sflag [#allocation40], %s3309
        %s3311 = sand.u32 %s621, 1
        %s3312 = smul.addr %s3311, 8
        %s3313 = scalar_lea.vmem [#allocation39], %s3312
        %s3314 = sand.u32 %s61, 1
        %s3315 = scalar_lea.sflag [#allocation40], %s3314
        %s3316 = sand.u32 %s649, 1
        %s3317 = smul.addr %s3316, 8
        %s3318 = scalar_lea.vmem [#allocation41], %s3317
        // Predicated region
        $region205: #{tpu_custom_call.1} parent=111 // pred_check
          %p3319 = pneg %p603
        $region206: #{tpu_custom_call.1} parent=111 // pred_check_branch
          %3321 = sbr.rel (%p3319) target = $region208
        $region207: #{tpu_custom_call.1} parent=111 // pred_region
          %s3323 = ssub.s32 128, 128
          %3324 = vsyncadd %s3305, %s3323
          %s3325 = sadd.s32 %s66, %s65
          %s3326 = smul.addr %s3325, 128
          %s3327 = scalar_lea.hbm %s23, %s3326
          %s3329 = sshll.u32 %s3308, 4
          %s3330 = int_to_ptr.vmem [resolvable:$true] %s3329
          %3332 = dma.vmem_to_hbm [thread:$0]  %s3330, 128, %s3327, %s3305
        $region208: #{tpu_custom_call.1} parent=111 // pred_fallthru
          _
        // Predicated region
        $region209: #{tpu_custom_call.1} parent=111 // pred_check
          %p3333 = pneg %p631
        $region210: #{tpu_custom_call.1} parent=111 // pred_check_branch
          %3335 = sbr.rel (%p3333) target = $region212
        $region211: #{tpu_custom_call.1} parent=111 // pred_region
          %s3337 = ssub.s32 128, 128
          %3338 = vsyncadd %s3310, %s3337
          %s3339 = sadd.s32 %s66, %s65
          %s3340 = smul.addr %s3339, 128
          %s3341 = scalar_lea.hbm %s24, %s3340
          %s3343 = sshll.u32 %s3313, 4
          %s3344 = int_to_ptr.vmem [resolvable:$true] %s3343
          %3346 = dma.vmem_to_hbm [thread:$0]  %s3344, 128, %s3341, %s3310
        $region212: #{tpu_custom_call.1} parent=111 // pred_fallthru
          _
        // Predicated region
        $region213: #{tpu_custom_call.1} parent=111 // pred_check
          %p3347 = pneg %p659
        $region214: #{tpu_custom_call.1} parent=111 // pred_check_branch
          %3349 = sbr.rel (%p3347) target = $region216
        $region215: #{tpu_custom_call.1} parent=111 // pred_region
          %s3351 = ssub.s32 128, 128
          %3352 = vsyncadd %s3315, %s3351
          %s3353 = sadd.s32 %s66, %s65
          %s3354 = smul.addr %s3353, 128
          %s3355 = scalar_lea.hbm %s25, %s3354
          %s3357 = sshll.u32 %s3318, 4
          %s3358 = int_to_ptr.vmem [resolvable:$true] %s3357
          %3360 = dma.vmem_to_hbm [thread:$0]  %s3358, 128, %s3355, %s3315
        $region216: #{tpu_custom_call.1} parent=111 // pred_fallthru
          _
      $region112: #{tpu_custom_call.1} parent=5 // pred_fallthru
        _
      %p3361 = scmp.le.s32.totalorder 2, %s56
      // Predicated region
      $region217: #{tpu_custom_call.1} parent=5 // pred_check
        %p3362 = pneg %p3361
      $region218: #{tpu_custom_call.1} parent=5 // pred_check_branch
        %3364 = sbr.rel (%p3362) target = $region220
      $region219: #{tpu_custom_call.1} parent=5 // pred_region
        %s3365 = ssub.s32 %s56, 2
        // Predicated region
        $region221: #{tpu_custom_call.1} parent=219 // pred_check
          %p3366 = pneg %p609
        $region222: #{tpu_custom_call.1} parent=219 // pred_check_branch
          %3368 = sbr.rel (%p3366) target = $region224
        $region223: #{tpu_custom_call.1} parent=219 // pred_region
          %s3369 = sand.u32 %s594, 1
          %s3370 = scalar_lea.sflag [#allocation4], %s3369
          %s3371 = sand.u32 %s594, 1
          %s3372 = smul.addr %s3371, 8
          %s3373 = scalar_lea.vmem [#allocation38], %s3372
          %3374 = dma.done %s3370, 128
        $region224: #{tpu_custom_call.1} parent=219 // pred_fallthru
          _
        // Predicated region
        $region225: #{tpu_custom_call.1} parent=219 // pred_check
          %p3375 = pneg %p637
        $region226: #{tpu_custom_call.1} parent=219 // pred_check_branch
          %3377 = sbr.rel (%p3375) target = $region228
        $region227: #{tpu_custom_call.1} parent=219 // pred_region
          %s3378 = sand.u32 %s62, 1
          %s3379 = scalar_lea.sflag [#allocation40], %s3378
          %s3380 = sand.u32 %s622, 1
          %s3381 = smul.addr %s3380, 8
          %s3382 = scalar_lea.vmem [#allocation39], %s3381
          %3383 = dma.done %s3379, 128
        $region228: #{tpu_custom_call.1} parent=219 // pred_fallthru
          _
        // Predicated region
        $region229: #{tpu_custom_call.1} parent=219 // pred_check
          %p3384 = pneg %p665
        $region230: #{tpu_custom_call.1} parent=219 // pred_check_branch
          %3386 = sbr.rel (%p3384) target = $region232
        $region231: #{tpu_custom_call.1} parent=219 // pred_region
          %s3387 = sand.u32 %s62, 1
          %s3388 = scalar_lea.sflag [#allocation40], %s3387
          %s3389 = sand.u32 %s650, 1
          %s3390 = smul.addr %s3389, 8
          %s3391 = scalar_lea.vmem [#allocation41], %s3390
          %3392 = dma.done %s3388, 128
        $region232: #{tpu_custom_call.1} parent=219 // pred_fallthru
          _
      $region220: #{tpu_custom_call.1} parent=5 // pred_fallthru
        _
    $region6: #{tpu_custom_call.1} parent=1 // loop_footer
      %s60 = sadd.s32 1, %s56
    $region7: #{tpu_custom_call.1} parent=1 // loop_footer_branch
      %55 = sbr.rel target = $region3
    $region8: #{tpu_custom_call.1} parent=1 // loop_exit
      _
    %3393 = vsyncpa [#allocation3], 1
    %s3394 = scalar_lea.sflag [#allocation3], 1
    %3395 = vsyncpa %s3394, 1
    %3396 = vsyncpa [#allocation6], 1
    %s3397 = scalar_lea.sflag [#allocation6], 1
    %3398 = vsyncpa %s3397, 1
    %3399 = vsyncpa [#allocation9], 1
    %s3400 = scalar_lea.sflag [#allocation9], 1
    %3401 = vsyncpa %s3400, 1
    %3402 = vsyncpa [#allocation12], 1
    %3403 = vsyncpa [#allocation15], 1
    %3404 = vsyncpa [#allocation18], 1
    %3405 = vsyncpa [#allocation21], 1
    %3406 = vsyncpa [#allocation24], 1
    %3407 = vsyncpa [#allocation27], 1
    %3408 = vsyncpa [#allocation30], 1
    %3409 = vsyncpa [#allocation33], 1
    %3410 = vsyncpa [#allocation36], 1
    %3411 = vsyncpa [#allocation4], 1
    %s3412 = scalar_lea.sflag [#allocation4], 1
    %3413 = vsyncpa %s3412, 1
    %3414 = vsyncpa [#allocation40], 1
    %s3415 = scalar_lea.sflag [#allocation40], 1
    %3416 = vsyncpa %s3415, 1

</llo_original>
